<compile_context>
chip_gen: v7x
topology: tpu7x:2x2x1
jax: 0.10.0
libtpu: 0.0.40
codegen_flags: <defaults>
</compile_context>

<pallas_src>
import functools

import jax
import jax.numpy as jnp
from jax.experimental import pallas as pl
from jax.experimental.pallas import tpu as pltpu


D_IN, D1, D2, D3, D_OUT = 28 * 28, 1024, 512, 256, 1
NEG_SLOPE = 0.2


def _leaky_relu(x):
    # Single vmax per element (identical to where(x>0, x, 0.2x) for slope < 1).
    return jnp.maximum(x, NEG_SLOPE * x)


def discriminator_kernel(x_ref,
                         w1_ref, b1_ref,
                         w2_ref, b2_ref,
                         w3_ref, b3_ref,
                         w4_ref, b4_ref,
                         o_ref):
    # In-kernel VPU cast of the f32 x tile -> bf16 (hides under the matmul).
    x = x_ref[...].astype(jnp.bfloat16)

    # Layer 1: Linear(784 -> 1024) + LeakyReLU(0.2)   (Dropout = identity)
    h = jnp.dot(x, w1_ref[...], preferred_element_type=jnp.float32)
    h = _leaky_relu(h + b1_ref[...])

    # Layer 2: Linear(1024 -> 512) + LeakyReLU(0.2)
    h = jnp.dot(h.astype(jnp.bfloat16), w2_ref[...],
                preferred_element_type=jnp.float32)
    h = _leaky_relu(h + b2_ref[...])

    # Layer 3: Linear(512 -> 256) + LeakyReLU(0.2)
    h = jnp.dot(h.astype(jnp.bfloat16), w3_ref[...],
                preferred_element_type=jnp.float32)
    h = _leaky_relu(h + b3_ref[...])

    # Output: Linear(256 -> 1) + Sigmoid.
    # N=1 matmul wastes the MXU -> VPU broadcast multiply by the [1, 256]
    # weight row, then a lane reduction (XLU) over features.
    logits = jnp.sum(h * w4_ref[...], axis=-1, keepdims=True) + b4_ref[...]
    o_ref[...] = jax.nn.sigmoid(logits)


@functools.partial(jax.jit, static_argnames=("batch_tile",))
def discriminator_forward(x, params, batch_tile=256):
    """x: [B, 784] float32; params: dict of fp32 weights/biases. Returns [B, 1]."""
    B = x.shape[0]

    # Pick a legal batch tile: either the full batch, or a multiple of 8.
    bt = min(batch_tile, B)
    if bt < B and bt % 8 != 0:
        bt = max(8, (bt // 8) * 8)
    num_tiles = pl.cdiv(B, bt)
    B_pad = num_tiles * bt

    # x stays f32 (cast happens inside the kernel); pad only if needed.
    x_in = x
    if B_pad != B:
        x_in = jnp.pad(x_in, ((0, B_pad - B), (0, 0)))

    w1 = params["w1"].astype(jnp.bfloat16)
    w2 = params["w2"].astype(jnp.bfloat16)
    w3 = params["w3"].astype(jnp.bfloat16)
    w4 = params["w4"].reshape(1, D3).astype(jnp.float32)   # row layout for VPU
    b1, b2, b3 = params["b1"], params["b2"], params["b3"]
    b4 = params["b4"].reshape(1, D_OUT)

    def x_map(i):
        return (i, 0)

    def full_map(i):
        return (0, 0)

    def const_spec(shape):
        # Constant-index operands: single-buffered (no point double-buffering
        # something that never changes across the grid).
        return pl.BlockSpec(shape, full_map, pipeline_mode=pl.Buffered(1))

    out = pl.pallas_call(
        discriminator_kernel,
        out_shape=jax.ShapeDtypeStruct((B_pad, D_OUT), jnp.float32),
        grid_spec=pltpu.PrefetchScalarGridSpec(
            num_scalar_prefetch=0,
            grid=(num_tiles,),
            in_specs=[
                pl.BlockSpec((bt, D_IN), x_map),
                const_spec((D_IN, D1)),
                const_spec((1, D1)),
                const_spec((D1, D2)),
                const_spec((1, D2)),
                const_spec((D2, D3)),
                const_spec((1, D3)),
                const_spec((1, D3)),      # w4 as a [1, 256] row
                const_spec((1, D_OUT)),
            ],
            out_specs=pl.BlockSpec((bt, D_OUT), x_map),
        ),
        compiler_params=pltpu.CompilerParams(
            dimension_semantics=("parallel",),
            vmem_limit_bytes=32 << 20,   # v7x-safe (64 MiB physical per TC)
        ),
    )(x_in, w1, b1, w2, b2, w3, b3, w4, b4)

    return out[:B]


def init_params(key):
    """Deterministic init matching torch.nn.Linear default U(-1/sqrt(fan_in), +)."""
    params = {}
    dims = [(D_IN, D1), (D1, D2), (D2, D3), (D3, D_OUT)]
    for idx, (fan_in, fan_out) in enumerate(dims, start=1):
        key, kw, kb = jax.random.split(key, 3)
        bound = 1.0 / jnp.sqrt(float(fan_in))
        # stored as [in, out] (transpose of torch's [out, in]) so kernel does x @ W
        params[f"w{idx}"] = jax.random.uniform(
            kw, (fan_in, fan_out), jnp.float32, minval=-bound, maxval=bound)
        params[f"b{idx}"] = jax.random.uniform(
            kb, (1, fan_out), jnp.float32, minval=-bound, maxval=bound)
    return params


def reference_forward(x, params):
    """Plain-JAX reference at the same (bf16-in / f32-accumulate) precision."""
    xb = x.astype(jnp.bfloat16)
    w1 = params["w1"].astype(jnp.bfloat16)
    w2 = params["w2"].astype(jnp.bfloat16)
    w3 = params["w3"].astype(jnp.bfloat16)
    h = jnp.dot(xb, w1, preferred_element_type=jnp.float32)
    h = _leaky_relu(h + params["b1"])
    h = jnp.dot(h.astype(jnp.bfloat16), w2, preferred_element_type=jnp.float32)
    h = _leaky_relu(h + params["b2"])
    h = jnp.dot(h.astype(jnp.bfloat16), w3, preferred_element_type=jnp.float32)
    h = _leaky_relu(h + params["b3"])
    w4_row = params["w4"].reshape(1, D3)
    logits = jnp.sum(h * w4_row, axis=-1, keepdims=True) + params["b4"].reshape(1, D_OUT)
    return jax.nn.sigmoid(logits)


if __name__ == "__main__":
    key = jax.random.PRNGKey(0)
    key, kx = jax.random.split(key)

    B = 256                              # grid=1 at bt=256 (no duplicated weight fetch)
    x = jax.random.normal(kx, (B, D_IN), dtype=jnp.float32)
    params = init_params(key)

    out = discriminator_forward(x, params, batch_tile=256)
    out = jax.block_until_ready(out)

    ref = reference_forward(x, params)
    assert out.shape == (B, D_OUT), out.shape
    max_err = float(jnp.max(jnp.abs(out - ref)))
    assert jnp.allclose(out, ref, atol=1e-3, rtol=1e-3), max_err

    # Also exercise the multi-tile / padded-batch path (B not a multiple of bt).
    B2 = 300
    key, kx2 = jax.random.split(key)
    x2 = jax.random.normal(kx2, (B2, D_IN), dtype=jnp.float32)
    out2 = jax.block_until_ready(discriminator_forward(x2, params, batch_tile=128))
    ref2 = reference_forward(x2, params)
    assert out2.shape == (B2, D_OUT), out2.shape
    assert jnp.allclose(out2, ref2, atol=1e-3, rtol=1e-3), \
        float(jnp.max(jnp.abs(out2 - ref2)))

    print("KERNEL_OK")
</pallas_src>

<mosaic_0001>
module attributes {stable_mosaic.version = 11 : i64} {
  func.func @discriminator_kernel(%arg0: i32, %arg1: memref<256x784xf32, #tpu.memory_space<vmem>>, %arg2: memref<784x1024xbf16, #tpu.memory_space<vmem>>, %arg3: memref<1x1024xf32, #tpu.memory_space<vmem>>, %arg4: memref<1024x512xbf16, #tpu.memory_space<vmem>>, %arg5: memref<1x512xf32, #tpu.memory_space<vmem>>, %arg6: memref<512x256xbf16, #tpu.memory_space<vmem>>, %arg7: memref<1x256xf32, #tpu.memory_space<vmem>>, %arg8: memref<1x256xf32, #tpu.memory_space<vmem>>, %arg9: memref<1x1xf32, #tpu.memory_space<vmem>>, %arg10: memref<256x1xf32, #tpu.memory_space<vmem>>) attributes {dimension_semantics = [#tpu.dimension_semantics<parallel>], iteration_bounds = array<i64: 1>, scalar_prefetch = 0 : i64, scratch_operands = 0 : i64, tpu.core_type = #tpu.core_type<tc>, window_params = [{transform_indices = @transform_0, window_bounds = array<i64: 256, 784>}, {pipeline_mode = #tpu.pipeline_mode<synchronous>, transform_indices = @transform_1, window_bounds = array<i64: 784, 1024>}, {pipeline_mode = #tpu.pipeline_mode<synchronous>, transform_indices = @transform_2, window_bounds = array<i64: 1, 1024>}, {pipeline_mode = #tpu.pipeline_mode<synchronous>, transform_indices = @transform_3, window_bounds = array<i64: 1024, 512>}, {pipeline_mode = #tpu.pipeline_mode<synchronous>, transform_indices = @transform_4, window_bounds = array<i64: 1, 512>}, {pipeline_mode = #tpu.pipeline_mode<synchronous>, transform_indices = @transform_5, window_bounds = array<i64: 512, 256>}, {pipeline_mode = #tpu.pipeline_mode<synchronous>, transform_indices = @transform_6, window_bounds = array<i64: 1, 256>}, {pipeline_mode = #tpu.pipeline_mode<synchronous>, transform_indices = @transform_7, window_bounds = array<i64: 1, 256>}, {pipeline_mode = #tpu.pipeline_mode<synchronous>, transform_indices = @transform_8, window_bounds = array<i64: 1, 1>}, {transform_indices = @transform_9, window_bounds = array<i64: 256, 1>}]} {
    %c0 = arith.constant 0 : index
    %c0_0 = arith.constant 0 : index
    %0 = vector.load %arg1[%c0, %c0_0] : memref<256x784xf32, #tpu.memory_space<vmem>>, vector<256x784xf32>
    %1 = arith.truncf %0 : vector<256x784xf32> to vector<256x784xbf16>
    %c0_1 = arith.constant 0 : index
    %c0_2 = arith.constant 0 : index
    %2 = vector.load %arg2[%c0_1, %c0_2] : memref<784x1024xbf16, #tpu.memory_space<vmem>>, vector<784x1024xbf16>
    %cst = arith.constant dense<0.000000e+00> : vector<256x1024xf32>
    %3 = tpu.matmul %1, %2, %cst {dimension_numbers = #tpu.dot_dimension_numbers<[1], [0], [0], [1], [0, 0, 1, 1], [], []>} : vector<256x784xbf16>, vector<784x1024xbf16>, vector<256x1024xf32> -> vector<256x1024xf32>
    %c0_3 = arith.constant 0 : index
    %c0_4 = arith.constant 0 : index
    %4 = vector.load %arg3[%c0_3, %c0_4] : memref<1x1024xf32, #tpu.memory_space<vmem>>, vector<1x1024xf32>
    %5 = vector.broadcast %4 : vector<1x1024xf32> to vector<256x1024xf32>
    %6 = arith.addf %3, %5 : vector<256x1024xf32>
    %cst_5 = arith.constant 2.000000e-01 : f32
    %7 = vector.broadcast %cst_5 : f32 to vector<256x1024xf32>
    %8 = arith.mulf %7, %6 : vector<256x1024xf32>
    %9 = arith.maximumf %6, %8 : vector<256x1024xf32>
    %10 = arith.truncf %9 : vector<256x1024xf32> to vector<256x1024xbf16>
    %c0_6 = arith.constant 0 : index
    %c0_7 = arith.constant 0 : index
    %11 = vector.load %arg4[%c0_6, %c0_7] : memref<1024x512xbf16, #tpu.memory_space<vmem>>, vector<1024x512xbf16>
    %cst_8 = arith.constant dense<0.000000e+00> : vector<256x512xf32>
    %12 = tpu.matmul %10, %11, %cst_8 {dimension_numbers = #tpu.dot_dimension_numbers<[1], [0], [0], [1], [0, 0, 1, 1], [], []>} : vector<256x1024xbf16>, vector<1024x512xbf16>, vector<256x512xf32> -> vector<256x512xf32>
    %c0_9 = arith.constant 0 : index
    %c0_10 = arith.constant 0 : index
    %13 = vector.load %arg5[%c0_9, %c0_10] : memref<1x512xf32, #tpu.memory_space<vmem>>, vector<1x512xf32>
    %14 = vector.broadcast %13 : vector<1x512xf32> to vector<256x512xf32>
    %15 = arith.addf %12, %14 : vector<256x512xf32>
    %cst_11 = arith.constant 2.000000e-01 : f32
    %16 = vector.broadcast %cst_11 : f32 to vector<256x512xf32>
    %17 = arith.mulf %16, %15 : vector<256x512xf32>
    %18 = arith.maximumf %15, %17 : vector<256x512xf32>
    %19 = arith.truncf %18 : vector<256x512xf32> to vector<256x512xbf16>
    %c0_12 = arith.constant 0 : index
    %c0_13 = arith.constant 0 : index
    %20 = vector.load %arg6[%c0_12, %c0_13] : memref<512x256xbf16, #tpu.memory_space<vmem>>, vector<512x256xbf16>
    %cst_14 = arith.constant dense<0.000000e+00> : vector<256x256xf32>
    %21 = tpu.matmul %19, %20, %cst_14 {dimension_numbers = #tpu.dot_dimension_numbers<[1], [0], [0], [1], [0, 0, 1, 1], [], []>} : vector<256x512xbf16>, vector<512x256xbf16>, vector<256x256xf32> -> vector<256x256xf32>
    %c0_15 = arith.constant 0 : index
    %c0_16 = arith.constant 0 : index
    %22 = vector.load %arg7[%c0_15, %c0_16] : memref<1x256xf32, #tpu.memory_space<vmem>>, vector<1x256xf32>
    %23 = vector.broadcast %22 : vector<1x256xf32> to vector<256x256xf32>
    %24 = arith.addf %21, %23 : vector<256x256xf32>
    %cst_17 = arith.constant 2.000000e-01 : f32
    %25 = vector.broadcast %cst_17 : f32 to vector<256x256xf32>
    %26 = arith.mulf %25, %24 : vector<256x256xf32>
    %27 = arith.maximumf %24, %26 : vector<256x256xf32>
    %c0_18 = arith.constant 0 : index
    %c0_19 = arith.constant 0 : index
    %28 = vector.load %arg8[%c0_18, %c0_19] : memref<1x256xf32, #tpu.memory_space<vmem>>, vector<1x256xf32>
    %29 = vector.broadcast %28 : vector<1x256xf32> to vector<256x256xf32>
    %30 = arith.mulf %27, %29 : vector<256x256xf32>
    %cst_20 = arith.constant dense<0.000000e+00> : vector<256xf32>
    %31 = vector.multi_reduction <add>, %30, %cst_20 [1] : vector<256x256xf32> to vector<256xf32>
    %32 = vector.shape_cast %31 : vector<256xf32> to vector<256x1xf32>
    %c0_21 = arith.constant 0 : index
    %c0_22 = arith.constant 0 : index
    %33 = vector.load %arg9[%c0_21, %c0_22] : memref<1x1xf32, #tpu.memory_space<vmem>>, vector<1x1xf32>
    %34 = vector.broadcast %33 : vector<1x1xf32> to vector<256x1xf32>
    %35 = arith.addf %32, %34 : vector<256x1xf32>
    %36 = arith.negf %35 : vector<256x1xf32>
    %37 = math.exp %36 : vector<256x1xf32>
    %cst_23 = arith.constant 1.000000e+00 : f32
    %38 = vector.broadcast %cst_23 : f32 to vector<256x1xf32>
    %39 = arith.addf %38, %37 : vector<256x1xf32>
    %40 = arith.divf %38, %39 : vector<256x1xf32>
    %c0_24 = arith.constant 0 : index
    %c0_25 = arith.constant 0 : index
    %41 = vector.load %arg10[%c0_24, %c0_25] : memref<256x1xf32, #tpu.memory_space<vmem>>, vector<256x1xf32>
    tpu.vector_store %arg10[%c0_24, %c0_25], %40 {strides = array<i32>} : memref<256x1xf32, #tpu.memory_space<vmem>>, vector<256x1xf32>,
    return
  }
  func.func @transform_0(%arg0: i32) -> (i32, i32) {
    %c0_i32 = arith.constant 0 : i32
    %c0_i32_0 = arith.constant 0 : i32
    return %arg0, %c0_i32 : i32, i32
  }
  func.func @transform_1(%arg0: i32) -> (i32, i32) {
    %c0_i32 = arith.constant 0 : i32
    %c0_i32_0 = arith.constant 0 : i32
    %c0_i32_1 = arith.constant 0 : i32
    return %c0_i32, %c0_i32_0 : i32, i32
  }
  func.func @transform_2(%arg0: i32) -> (i32, i32) {
    %c0_i32 = arith.constant 0 : i32
    %c0_i32_0 = arith.constant 0 : i32
    %c0_i32_1 = arith.constant 0 : i32
    return %c0_i32, %c0_i32_0 : i32, i32
  }
  func.func @transform_3(%arg0: i32) -> (i32, i32) {
    %c0_i32 = arith.constant 0 : i32
    %c0_i32_0 = arith.constant 0 : i32
    %c0_i32_1 = arith.constant 0 : i32
    return %c0_i32, %c0_i32_0 : i32, i32
  }
  func.func @transform_4(%arg0: i32) -> (i32, i32) {
    %c0_i32 = arith.constant 0 : i32
    %c0_i32_0 = arith.constant 0 : i32
    %c0_i32_1 = arith.constant 0 : i32
    return %c0_i32, %c0_i32_0 : i32, i32
  }
  func.func @transform_5(%arg0: i32) -> (i32, i32) {
    %c0_i32 = arith.constant 0 : i32
    %c0_i32_0 = arith.constant 0 : i32
    %c0_i32_1 = arith.constant 0 : i32
    return %c0_i32, %c0_i32_0 : i32, i32
  }
  func.func @transform_6(%arg0: i32) -> (i32, i32) {
    %c0_i32 = arith.constant 0 : i32
    %c0_i32_0 = arith.constant 0 : i32
    %c0_i32_1 = arith.constant 0 : i32
    return %c0_i32, %c0_i32_0 : i32, i32
  }
  func.func @transform_7(%arg0: i32) -> (i32, i32) {
    %c0_i32 = arith.constant 0 : i32
    %c0_i32_0 = arith.constant 0 : i32
    %c0_i32_1 = arith.constant 0 : i32
    return %c0_i32, %c0_i32_0 : i32, i32
  }
  func.func @transform_8(%arg0: i32) -> (i32, i32) {
    %c0_i32 = arith.constant 0 : i32
    %c0_i32_0 = arith.constant 0 : i32
    %c0_i32_1 = arith.constant 0 : i32
    return %c0_i32, %c0_i32_0 : i32, i32
  }
  func.func @transform_9(%arg0: i32) -> (i32, i32) {
    %c0_i32 = arith.constant 0 : i32
    %c0_i32_0 = arith.constant 0 : i32
    return %arg0, %c0_i32 : i32, i32
  }
}

</mosaic_0001>

<llo_original>
// kernel: discriminator_forward.1
$region0: #{discriminator_forward.1}
  #allocation0 [shape = 'u32[]', space=smem, size = 0x4, offset = 0x4, fixed_abs, tag = 'smem constant byte address 0x4 - core index']
  #allocation1 [shape = 'u32[144,128]{1,0:T(1,128)}', space=vmem, size = 0x12000, scoped, tag = 'internal scratch']
  #allocation2 [shape = 'f32[1,1]{1,0:T(1,128)S(1)}', space=vmem, size = 0x200, scoped, tag = 'scoped memory for discriminator_forward.1']
  %s0 = inlined_call_operand.vmem [shape: f32[256,784], index: 0, kind: input, shape index: {}]
  %s1 = inlined_call_operand.vmem [shape: bf16[784,1024], index: 1, kind: input, shape index: {}]
  %s2 = inlined_call_operand.vmem [shape: f32[1,1024], index: 2, kind: input, shape index: {}]
  %s3 = inlined_call_operand.vmem [shape: bf16[1024,512], index: 3, kind: input, shape index: {}]
  %s4 = inlined_call_operand.vmem [shape: f32[1,512], index: 4, kind: input, shape index: {}]
  %s5 = inlined_call_operand.vmem [shape: bf16[512,256], index: 5, kind: input, shape index: {}]
  %s6 = inlined_call_operand.vmem [shape: f32[1,256], index: 6, kind: input, shape index: {}]
  %s7 = inlined_call_operand.vmem [shape: f32[1,256], index: 7, kind: input, shape index: {}]
  %s8 = inlined_call_operand.<no memory space> [shape: f32[1,1], index: 8, kind: input, shape index: {}]
  %s9 = inlined_call_operand.vmem [shape: f32[256,1], index: 9, kind: output, shape index: {}]
  %s10 = sld [smem:[#allocation0]]
  $region46: #{discriminator_forward.1} parent=0
    _
  %s12 = ssub.s32 1, %s10
  %s13 = scalar_select 0, %s12, %s10
  %v14 = vstv %s8
  %15 = vst [vmem:[#allocation2] sm:$0x1] %v14
  // Predicated region
  $region2: #{discriminator_forward.1} parent=0 // pred_check
    _
  $region3: #{discriminator_forward.1} parent=0 // pred_check_branch
    %17 = sbr.rel (0) target = $region5
  $region4: #{discriminator_forward.1} parent=0 // pred_region
    _
  $region5: #{discriminator_forward.1} parent=0 // pred_fallthru
    _
  // Predicated region
  $region6: #{discriminator_forward.1} parent=0 // pred_check
    _
  $region7: #{discriminator_forward.1} parent=0 // pred_check_branch
    %19 = sbr.rel (0) target = $region9
  $region8: #{discriminator_forward.1} parent=0 // pred_region
    _
  $region9: #{discriminator_forward.1} parent=0 // pred_fallthru
    _
  // Predicated region
  $region10: #{discriminator_forward.1} parent=0 // pred_check
    _
  $region11: #{discriminator_forward.1} parent=0 // pred_check_branch
    %21 = sbr.rel (0) target = $region13
  $region12: #{discriminator_forward.1} parent=0 // pred_region
    _
  $region13: #{discriminator_forward.1} parent=0 // pred_fallthru
    _
  // Predicated region
  $region14: #{discriminator_forward.1} parent=0 // pred_check
    _
  $region15: #{discriminator_forward.1} parent=0 // pred_check_branch
    %23 = sbr.rel (0) target = $region17
  $region16: #{discriminator_forward.1} parent=0 // pred_region
    _
  $region17: #{discriminator_forward.1} parent=0 // pred_fallthru
    _
  // Predicated region
  $region18: #{discriminator_forward.1} parent=0 // pred_check
    _
  $region19: #{discriminator_forward.1} parent=0 // pred_check_branch
    %25 = sbr.rel (0) target = $region21
  $region20: #{discriminator_forward.1} parent=0 // pred_region
    _
  $region21: #{discriminator_forward.1} parent=0 // pred_fallthru
    _
  // Predicated region
  $region22: #{discriminator_forward.1} parent=0 // pred_check
    _
  $region23: #{discriminator_forward.1} parent=0 // pred_check_branch
    %27 = sbr.rel (0) target = $region25
  $region24: #{discriminator_forward.1} parent=0 // pred_region
    _
  $region25: #{discriminator_forward.1} parent=0 // pred_fallthru
    _
  // Predicated region
  $region26: #{discriminator_forward.1} parent=0 // pred_check
    _
  $region27: #{discriminator_forward.1} parent=0 // pred_check_branch
    %29 = sbr.rel (0) target = $region29
  $region28: #{discriminator_forward.1} parent=0 // pred_region
    _
  $region29: #{discriminator_forward.1} parent=0 // pred_fallthru
    _
  // Predicated region
  $region30: #{discriminator_forward.1} parent=0 // pred_check
    _
  $region31: #{discriminator_forward.1} parent=0 // pred_check_branch
    %31 = sbr.rel (0) target = $region33
  $region32: #{discriminator_forward.1} parent=0 // pred_region
    _
  $region33: #{discriminator_forward.1} parent=0 // pred_fallthru
    _
  // Predicated region
  $region34: #{discriminator_forward.1} parent=0 // pred_check
    _
  $region35: #{discriminator_forward.1} parent=0 // pred_check_branch
    %33 = sbr.rel (0) target = $region37
  $region36: #{discriminator_forward.1} parent=0 // pred_region
    _
  $region37: #{discriminator_forward.1} parent=0 // pred_fallthru
    _
  %v35 = vld [vmem:[%s0] sm:$0xff]
  %v36 = vld [vmem:[%s0 + $0x8] sm:$0xff]
  %v37 = vld [vmem:[%s0 + $0x10] sm:$0xff]
  %v38 = vld [vmem:[%s0 + $0x18] sm:$0xff]
  %v39 = vld [vmem:[%s0 + $0x20] sm:$0xff]
  %v40 = vld [vmem:[%s0 + $0x28] sm:$0xff]
  %v41 = vld [vmem:[%s0 + $0x30] sm:$0xff]
  %v42 = vld [vmem:[%s0 + $0x38] sm:$0xff]
  %v43 = vld [vmem:[%s0 + $0x40] sm:$0xff]
  %v44 = vld [vmem:[%s0 + $0x48] sm:$0xff]
  %v45 = vld [vmem:[%s0 + $0x50] sm:$0xff]
  %v46 = vld [vmem:[%s0 + $0x58] sm:$0xff]
  %v47 = vld [vmem:[%s0 + $0x60] sm:$0xff]
  %v48 = vld [vmem:[%s0 + $0x68] sm:$0xff]
  %v49 = vld [vmem:[%s0 + $0x70] sm:$0xff]
  %v50 = vld [vmem:[%s0 + $0x78] sm:$0xff]
  %v51 = vld [vmem:[%s0 + $0x80] sm:$0xff]
  %v52 = vld [vmem:[%s0 + $0x88] sm:$0xff]
  %v53 = vld [vmem:[%s0 + $0x90] sm:$0xff]
  %v54 = vld [vmem:[%s0 + $0x98] sm:$0xff]
  %v55 = vld [vmem:[%s0 + $0xa0] sm:$0xff]
  %v56 = vld [vmem:[%s0 + $0xa8] sm:$0xff]
  %v57 = vld [vmem:[%s0 + $0xb0] sm:$0xff]
  %v58 = vld [vmem:[%s0 + $0xb8] sm:$0xff]
  %v59 = vld [vmem:[%s0 + $0xc0] sm:$0xff]
  %v60 = vld [vmem:[%s0 + $0xc8] sm:$0xff]
  %v61 = vld [vmem:[%s0 + $0xd0] sm:$0xff]
  %v62 = vld [vmem:[%s0 + $0xd8] sm:$0xff]
  %v63 = vld [vmem:[%s0 + $0xe0] sm:$0xff]
  %v64 = vld [vmem:[%s0 + $0xe8] sm:$0xff]
  %v65 = vld [vmem:[%s0 + $0xf0] sm:$0xff]
  %v66 = vld [vmem:[%s0 + $0xf8] sm:$0xff]
  %v67 = vld [vmem:[%s0 + $0x100] sm:$0xff]
  %v68 = vld [vmem:[%s0 + $0x108] sm:$0xff]
  %v69 = vld [vmem:[%s0 + $0x110] sm:$0xff]
  %v70 = vld [vmem:[%s0 + $0x118] sm:$0xff]
  %v71 = vld [vmem:[%s0 + $0x120] sm:$0xff]
  %v72 = vld [vmem:[%s0 + $0x128] sm:$0xff]
  %v73 = vld [vmem:[%s0 + $0x130] sm:$0xff]
  %v74 = vld [vmem:[%s0 + $0x138] sm:$0xff]
  %v75 = vld [vmem:[%s0 + $0x140] sm:$0xff]
  %v76 = vld [vmem:[%s0 + $0x148] sm:$0xff]
  %v77 = vld [vmem:[%s0 + $0x150] sm:$0xff]
  %v78 = vld [vmem:[%s0 + $0x158] sm:$0xff]
  %v79 = vld [vmem:[%s0 + $0x160] sm:$0xff]
  %v80 = vld [vmem:[%s0 + $0x168] sm:$0xff]
  %v81 = vld [vmem:[%s0 + $0x170] sm:$0xff]
  %v82 = vld [vmem:[%s0 + $0x178] sm:$0xff]
  %v83 = vld [vmem:[%s0 + $0x180] sm:$0xff]
  %v84 = vld [vmem:[%s0 + $0x188] sm:$0xff]
  %v85 = vld [vmem:[%s0 + $0x190] sm:$0xff]
  %v86 = vld [vmem:[%s0 + $0x198] sm:$0xff]
  %v87 = vld [vmem:[%s0 + $0x1a0] sm:$0xff]
  %v88 = vld [vmem:[%s0 + $0x1a8] sm:$0xff]
  %v89 = vld [vmem:[%s0 + $0x1b0] sm:$0xff]
  %v90 = vld [vmem:[%s0 + $0x1b8] sm:$0xff]
  %v91 = vld [vmem:[%s0 + $0x1c0] sm:$0xff]
  %v92 = vld [vmem:[%s0 + $0x1c8] sm:$0xff]
  %v93 = vld [vmem:[%s0 + $0x1d0] sm:$0xff]
  %v94 = vld [vmem:[%s0 + $0x1d8] sm:$0xff]
  %v95 = vld [vmem:[%s0 + $0x1e0] sm:$0xff]
  %v96 = vld [vmem:[%s0 + $0x1e8] sm:$0xff]
  %v97 = vld [vmem:[%s0 + $0x1f0] sm:$0xff]
  %v98 = vld [vmem:[%s0 + $0x1f8] sm:$0xff]
  %v99 = vld [vmem:[%s0 + $0x200] sm:$0xff]
  %v100 = vld [vmem:[%s0 + $0x208] sm:$0xff]
  %v101 = vld [vmem:[%s0 + $0x210] sm:$0xff]
  %v102 = vld [vmem:[%s0 + $0x218] sm:$0xff]
  %v103 = vld [vmem:[%s0 + $0x220] sm:$0xff]
  %v104 = vld [vmem:[%s0 + $0x228] sm:$0xff]
  %v105 = vld [vmem:[%s0 + $0x230] sm:$0xff]
  %v106 = vld [vmem:[%s0 + $0x238] sm:$0xff]
  %v107 = vld [vmem:[%s0 + $0x240] sm:$0xff]
  %v108 = vld [vmem:[%s0 + $0x248] sm:$0xff]
  %v109 = vld [vmem:[%s0 + $0x250] sm:$0xff]
  %v110 = vld [vmem:[%s0 + $0x258] sm:$0xff]
  %v111 = vld [vmem:[%s0 + $0x260] sm:$0xff]
  %v112 = vld [vmem:[%s0 + $0x268] sm:$0xff]
  %v113 = vld [vmem:[%s0 + $0x270] sm:$0xff]
  %v114 = vld [vmem:[%s0 + $0x278] sm:$0xff]
  %v115 = vld [vmem:[%s0 + $0x280] sm:$0xff]
  %v116 = vld [vmem:[%s0 + $0x288] sm:$0xff]
  %v117 = vld [vmem:[%s0 + $0x290] sm:$0xff]
  %v118 = vld [vmem:[%s0 + $0x298] sm:$0xff]
  %v119 = vld [vmem:[%s0 + $0x2a0] sm:$0xff]
  %v120 = vld [vmem:[%s0 + $0x2a8] sm:$0xff]
  %v121 = vld [vmem:[%s0 + $0x2b0] sm:$0xff]
  %v122 = vld [vmem:[%s0 + $0x2b8] sm:$0xff]
  %v123 = vld [vmem:[%s0 + $0x2c0] sm:$0xff]
  %v124 = vld [vmem:[%s0 + $0x2c8] sm:$0xff]
  %v125 = vld [vmem:[%s0 + $0x2d0] sm:$0xff]
  %v126 = vld [vmem:[%s0 + $0x2d8] sm:$0xff]
  %v127 = vld [vmem:[%s0 + $0x2e0] sm:$0xff]
  %v128 = vld [vmem:[%s0 + $0x2e8] sm:$0xff]
  %v129 = vld [vmem:[%s0 + $0x2f0] sm:$0xff]
  %v130 = vld [vmem:[%s0 + $0x2f8] sm:$0xff]
  %v131 = vld [vmem:[%s0 + $0x300] sm:$0xff]
  %v132 = vld [vmem:[%s0 + $0x308] sm:$0xff]
  %v133 = vld [vmem:[%s0 + $0x310] sm:$0xff]
  %v134 = vld [vmem:[%s0 + $0x318] sm:$0xff]
  %v135 = vld [vmem:[%s0 + $0x320] sm:$0xff]
  %v136 = vld [vmem:[%s0 + $0x328] sm:$0xff]
  %v137 = vld [vmem:[%s0 + $0x330] sm:$0xff]
  %v138 = vld [vmem:[%s0 + $0x338] sm:$0xff]
  %v139 = vld [vmem:[%s0 + $0x340] sm:$0xff]
  %v140 = vld [vmem:[%s0 + $0x348] sm:$0xff]
  %v141 = vld [vmem:[%s0 + $0x350] sm:$0xff]
  %v142 = vld [vmem:[%s0 + $0x358] sm:$0xff]
  %v143 = vld [vmem:[%s0 + $0x360] sm:$0xff]
  %v144 = vld [vmem:[%s0 + $0x368] sm:$0xff]
  %v145 = vld [vmem:[%s0 + $0x370] sm:$0xff]
  %v146 = vld [vmem:[%s0 + $0x378] sm:$0xff]
  %v147 = vld [vmem:[%s0 + $0x380] sm:$0xff]
  %v148 = vld [vmem:[%s0 + $0x388] sm:$0xff]
  %v149 = vld [vmem:[%s0 + $0x390] sm:$0xff]
  %v150 = vld [vmem:[%s0 + $0x398] sm:$0xff]
  %v151 = vld [vmem:[%s0 + $0x3a0] sm:$0xff]
  %v152 = vld [vmem:[%s0 + $0x3a8] sm:$0xff]
  %v153 = vld [vmem:[%s0 + $0x3b0] sm:$0xff]
  %v154 = vld [vmem:[%s0 + $0x3b8] sm:$0xff]
  %v155 = vld [vmem:[%s0 + $0x3c0] sm:$0xff]
  %v156 = vld [vmem:[%s0 + $0x3c8] sm:$0xff]
  %v157 = vld [vmem:[%s0 + $0x3d0] sm:$0xff]
  %v158 = vld [vmem:[%s0 + $0x3d8] sm:$0xff]
  %v159 = vld [vmem:[%s0 + $0x3e0] sm:$0xff]
  %v160 = vld [vmem:[%s0 + $0x3e8] sm:$0xff]
  %v161 = vld [vmem:[%s0 + $0x3f0] sm:$0xff]
  %v162 = vld [vmem:[%s0 + $0x3f8] sm:$0xff]
  %v163 = vld [vmem:[%s0 + $0x400] sm:$0xff]
  %v164 = vld [vmem:[%s0 + $0x408] sm:$0xff]
  %v165 = vld [vmem:[%s0 + $0x410] sm:$0xff]
  %v166 = vld [vmem:[%s0 + $0x418] sm:$0xff]
  %v167 = vld [vmem:[%s0 + $0x420] sm:$0xff]
  %v168 = vld [vmem:[%s0 + $0x428] sm:$0xff]
  %v169 = vld [vmem:[%s0 + $0x430] sm:$0xff]
  %v170 = vld [vmem:[%s0 + $0x438] sm:$0xff]
  %v171 = vld [vmem:[%s0 + $0x440] sm:$0xff]
  %v172 = vld [vmem:[%s0 + $0x448] sm:$0xff]
  %v173 = vld [vmem:[%s0 + $0x450] sm:$0xff]
  %v174 = vld [vmem:[%s0 + $0x458] sm:$0xff]
  %v175 = vld [vmem:[%s0 + $0x460] sm:$0xff]
  %v176 = vld [vmem:[%s0 + $0x468] sm:$0xff]
  %v177 = vld [vmem:[%s0 + $0x470] sm:$0xff]
  %v178 = vld [vmem:[%s0 + $0x478] sm:$0xff]
  %v179 = vld [vmem:[%s0 + $0x480] sm:$0xff]
  %v180 = vld [vmem:[%s0 + $0x488] sm:$0xff]
  %v181 = vld [vmem:[%s0 + $0x490] sm:$0xff]
  %v182 = vld [vmem:[%s0 + $0x498] sm:$0xff]
  %v183 = vld [vmem:[%s0 + $0x4a0] sm:$0xff]
  %v184 = vld [vmem:[%s0 + $0x4a8] sm:$0xff]
  %v185 = vld [vmem:[%s0 + $0x4b0] sm:$0xff]
  %v186 = vld [vmem:[%s0 + $0x4b8] sm:$0xff]
  %v187 = vld [vmem:[%s0 + $0x4c0] sm:$0xff]
  %v188 = vld [vmem:[%s0 + $0x4c8] sm:$0xff]
  %v189 = vld [vmem:[%s0 + $0x4d0] sm:$0xff]
  %v190 = vld [vmem:[%s0 + $0x4d8] sm:$0xff]
  %v191 = vld [vmem:[%s0 + $0x4e0] sm:$0xff]
  %v192 = vld [vmem:[%s0 + $0x4e8] sm:$0xff]
  %v193 = vld [vmem:[%s0 + $0x4f0] sm:$0xff]
  %v194 = vld [vmem:[%s0 + $0x4f8] sm:$0xff]
  %v195 = vld [vmem:[%s0 + $0x500] sm:$0xff]
  %v196 = vld [vmem:[%s0 + $0x508] sm:$0xff]
  %v197 = vld [vmem:[%s0 + $0x510] sm:$0xff]
  %v198 = vld [vmem:[%s0 + $0x518] sm:$0xff]
  %v199 = vld [vmem:[%s0 + $0x520] sm:$0xff]
  %v200 = vld [vmem:[%s0 + $0x528] sm:$0xff]
  %v201 = vld [vmem:[%s0 + $0x530] sm:$0xff]
  %v202 = vld [vmem:[%s0 + $0x538] sm:$0xff]
  %v203 = vld [vmem:[%s0 + $0x540] sm:$0xff]
  %v204 = vld [vmem:[%s0 + $0x548] sm:$0xff]
  %v205 = vld [vmem:[%s0 + $0x550] sm:$0xff]
  %v206 = vld [vmem:[%s0 + $0x558] sm:$0xff]
  %v207 = vld [vmem:[%s0 + $0x560] sm:$0xff]
  %v208 = vld [vmem:[%s0 + $0x568] sm:$0xff]
  %v209 = vld [vmem:[%s0 + $0x570] sm:$0xff]
  %v210 = vld [vmem:[%s0 + $0x578] sm:$0xff]
  %v211 = vld [vmem:[%s0 + $0x580] sm:$0xff]
  %v212 = vld [vmem:[%s0 + $0x588] sm:$0xff]
  %v213 = vld [vmem:[%s0 + $0x590] sm:$0xff]
  %v214 = vld [vmem:[%s0 + $0x598] sm:$0xff]
  %v215 = vld [vmem:[%s0 + $0x5a0] sm:$0xff]
  %v216 = vld [vmem:[%s0 + $0x5a8] sm:$0xff]
  %v217 = vld [vmem:[%s0 + $0x5b0] sm:$0xff]
  %v218 = vld [vmem:[%s0 + $0x5b8] sm:$0xff]
  %v219 = vld [vmem:[%s0 + $0x5c0] sm:$0xff]
  %v220 = vld [vmem:[%s0 + $0x5c8] sm:$0xff]
  %v221 = vld [vmem:[%s0 + $0x5d0] sm:$0xff]
  %v222 = vld [vmem:[%s0 + $0x5d8] sm:$0xff]
  %v223 = vld [vmem:[%s0 + $0x5e0] sm:$0xff]
  %v224 = vld [vmem:[%s0 + $0x5e8] sm:$0xff]
  %v225 = vld [vmem:[%s0 + $0x5f0] sm:$0xff]
  %v226 = vld [vmem:[%s0 + $0x5f8] sm:$0xff]
  %v227 = vld [vmem:[%s0 + $0x600] sm:$0xff]
  %v228 = vld [vmem:[%s0 + $0x608] sm:$0xff]
  %v229 = vld [vmem:[%s0 + $0x610] sm:$0xff]
  %v230 = vld [vmem:[%s0 + $0x618] sm:$0xff]
  %v231 = vld [vmem:[%s0 + $0x620] sm:$0xff]
  %v232 = vld [vmem:[%s0 + $0x628] sm:$0xff]
  %v233 = vld [vmem:[%s0 + $0x630] sm:$0xff]
  %v234 = vld [vmem:[%s0 + $0x638] sm:$0xff]
  %v235 = vld [vmem:[%s0 + $0x640] sm:$0xff]
  %v236 = vld [vmem:[%s0 + $0x648] sm:$0xff]
  %v237 = vld [vmem:[%s0 + $0x650] sm:$0xff]
  %v238 = vld [vmem:[%s0 + $0x658] sm:$0xff]
  %v239 = vld [vmem:[%s0 + $0x660] sm:$0xff]
  %v240 = vld [vmem:[%s0 + $0x668] sm:$0xff]
  %v241 = vld [vmem:[%s0 + $0x670] sm:$0xff]
  %v242 = vld [vmem:[%s0 + $0x678] sm:$0xff]
  %v243 = vld [vmem:[%s0 + $0x680] sm:$0xff]
  %v244 = vld [vmem:[%s0 + $0x688] sm:$0xff]
  %v245 = vld [vmem:[%s0 + $0x690] sm:$0xff]
  %v246 = vld [vmem:[%s0 + $0x698] sm:$0xff]
  %v247 = vld [vmem:[%s0 + $0x6a0] sm:$0xff]
  %v248 = vld [vmem:[%s0 + $0x6a8] sm:$0xff]
  %v249 = vld [vmem:[%s0 + $0x6b0] sm:$0xff]
  %v250 = vld [vmem:[%s0 + $0x6b8] sm:$0xff]
  %v251 = vld [vmem:[%s0 + $0x6c0] sm:$0xff]
  %v252 = vld [vmem:[%s0 + $0x6c8] sm:$0xff]
  %v253 = vld [vmem:[%s0 + $0x6d0] sm:$0xff]
  %v254 = vld [vmem:[%s0 + $0x6d8] sm:$0xff]
  %v255 = vld [vmem:[%s0 + $0x6e0] sm:$0xff]
  %v256 = vld [vmem:[%s0 + $0x6e8] sm:$0xff]
  %v257 = vld [vmem:[%s0 + $0x6f0] sm:$0xff]
  %v258 = vld [vmem:[%s0 + $0x6f8] sm:$0xff]
  %v259 = vpack.c.bf16 %v42, %v35
  %v260 = vpack.c.bf16 %v43, %v36
  %v261 = vpack.c.bf16 %v44, %v37
  %v262 = vpack.c.bf16 %v45, %v38
  %v263 = vpack.c.bf16 %v46, %v39
  %v264 = vpack.c.bf16 %v47, %v40
  %v265 = vpack.c.bf16 %v48, %v41
  %v266 = vpack.c.bf16 %v56, %v49
  %v267 = vpack.c.bf16 %v57, %v50
  %v268 = vpack.c.bf16 %v58, %v51
  %v269 = vpack.c.bf16 %v59, %v52
  %v270 = vpack.c.bf16 %v60, %v53
  %v271 = vpack.c.bf16 %v61, %v54
  %v272 = vpack.c.bf16 %v62, %v55
  %v273 = vpack.c.bf16 %v70, %v63
  %v274 = vpack.c.bf16 %v71, %v64
  %v275 = vpack.c.bf16 %v72, %v65
  %v276 = vpack.c.bf16 %v73, %v66
  %v277 = vpack.c.bf16 %v74, %v67
  %v278 = vpack.c.bf16 %v75, %v68
  %v279 = vpack.c.bf16 %v76, %v69
  %v280 = vpack.c.bf16 %v84, %v77
  %v281 = vpack.c.bf16 %v85, %v78
  %v282 = vpack.c.bf16 %v86, %v79
  %v283 = vpack.c.bf16 %v87, %v80
  %v284 = vpack.c.bf16 %v88, %v81
  %v285 = vpack.c.bf16 %v89, %v82
  %v286 = vpack.c.bf16 %v90, %v83
  %v287 = vpack.c.bf16 %v98, %v91
  %v288 = vpack.c.bf16 %v99, %v92
  %v289 = vpack.c.bf16 %v100, %v93
  %v290 = vpack.c.bf16 %v101, %v94
  %v291 = vpack.c.bf16 %v102, %v95
  %v292 = vpack.c.bf16 %v103, %v96
  %v293 = vpack.c.bf16 %v104, %v97
  %v294 = vpack.c.bf16 %v112, %v105
  %v295 = vpack.c.bf16 %v113, %v106
  %v296 = vpack.c.bf16 %v114, %v107
  %v297 = vpack.c.bf16 %v115, %v108
  %v298 = vpack.c.bf16 %v116, %v109
  %v299 = vpack.c.bf16 %v117, %v110
  %v300 = vpack.c.bf16 %v118, %v111
  %v301 = vpack.c.bf16 %v126, %v119
  %v302 = vpack.c.bf16 %v127, %v120
  %v303 = vpack.c.bf16 %v128, %v121
  %v304 = vpack.c.bf16 %v129, %v122
  %v305 = vpack.c.bf16 %v130, %v123
  %v306 = vpack.c.bf16 %v131, %v124
  %v307 = vpack.c.bf16 %v132, %v125
  %v308 = vpack.c.bf16 %v140, %v133
  %v309 = vpack.c.bf16 %v141, %v134
  %v310 = vpack.c.bf16 %v142, %v135
  %v311 = vpack.c.bf16 %v143, %v136
  %v312 = vpack.c.bf16 %v144, %v137
  %v313 = vpack.c.bf16 %v145, %v138
  %v314 = vpack.c.bf16 %v146, %v139
  %v315 = vpack.c.bf16 %v154, %v147
  %v316 = vpack.c.bf16 %v155, %v148
  %v317 = vpack.c.bf16 %v156, %v149
  %v318 = vpack.c.bf16 %v157, %v150
  %v319 = vpack.c.bf16 %v158, %v151
  %v320 = vpack.c.bf16 %v159, %v152
  %v321 = vpack.c.bf16 %v160, %v153
  %v322 = vpack.c.bf16 %v168, %v161
  %v323 = vpack.c.bf16 %v169, %v162
  %v324 = vpack.c.bf16 %v170, %v163
  %v325 = vpack.c.bf16 %v171, %v164
  %v326 = vpack.c.bf16 %v172, %v165
  %v327 = vpack.c.bf16 %v173, %v166
  %v328 = vpack.c.bf16 %v174, %v167
  %v329 = vpack.c.bf16 %v182, %v175
  %v330 = vpack.c.bf16 %v183, %v176
  %v331 = vpack.c.bf16 %v184, %v177
  %v332 = vpack.c.bf16 %v185, %v178
  %v333 = vpack.c.bf16 %v186, %v179
  %v334 = vpack.c.bf16 %v187, %v180
  %v335 = vpack.c.bf16 %v188, %v181
  %v336 = vpack.c.bf16 %v196, %v189
  %v337 = vpack.c.bf16 %v197, %v190
  %v338 = vpack.c.bf16 %v198, %v191
  %v339 = vpack.c.bf16 %v199, %v192
  %v340 = vpack.c.bf16 %v200, %v193
  %v341 = vpack.c.bf16 %v201, %v194
  %v342 = vpack.c.bf16 %v202, %v195
  %v343 = vpack.c.bf16 %v210, %v203
  %v344 = vpack.c.bf16 %v211, %v204
  %v345 = vpack.c.bf16 %v212, %v205
  %v346 = vpack.c.bf16 %v213, %v206
  %v347 = vpack.c.bf16 %v214, %v207
  %v348 = vpack.c.bf16 %v215, %v208
  %v349 = vpack.c.bf16 %v216, %v209
  %v350 = vpack.c.bf16 %v224, %v217
  %v351 = vpack.c.bf16 %v225, %v218
  %v352 = vpack.c.bf16 %v226, %v219
  %v353 = vpack.c.bf16 %v227, %v220
  %v354 = vpack.c.bf16 %v228, %v221
  %v355 = vpack.c.bf16 %v229, %v222
  %v356 = vpack.c.bf16 %v230, %v223
  %v357 = vpack.c.bf16 %v238, %v231
  %v358 = vpack.c.bf16 %v239, %v232
  %v359 = vpack.c.bf16 %v240, %v233
  %v360 = vpack.c.bf16 %v241, %v234
  %v361 = vpack.c.bf16 %v242, %v235
  %v362 = vpack.c.bf16 %v243, %v236
  %v363 = vpack.c.bf16 %v244, %v237
  %v364 = vpack.c.bf16 %v252, %v245
  %v365 = vpack.c.bf16 %v253, %v246
  %v366 = vpack.c.bf16 %v254, %v247
  %v367 = vpack.c.bf16 %v255, %v248
  %v368 = vpack.c.bf16 %v256, %v249
  %v369 = vpack.c.bf16 %v257, %v250
  %v370 = vpack.c.bf16 %v258, %v251
  %v371 = vld [vmem:[%s1] sm:$0xff]
  %v372 = vld [vmem:[%s1 + $0x8] sm:$0xff]
  %v373 = vld [vmem:[%s1 + $0x10] sm:$0xff]
  %v374 = vld [vmem:[%s1 + $0x18] sm:$0xff]
  %v375 = vld [vmem:[%s1 + $0x20] sm:$0xff]
  %v376 = vld [vmem:[%s1 + $0x28] sm:$0xff]
  %v377 = vld [vmem:[%s1 + $0x30] sm:$0xff]
  %v378 = vld [vmem:[%s1 + $0x38] sm:$0xff]
  %v379 = vld [vmem:[%s1 + $0x40] sm:$0xff]
  %v380 = vld [vmem:[%s1 + $0x48] sm:$0xff]
  %v381 = vld [vmem:[%s1 + $0x50] sm:$0xff]
  %v382 = vld [vmem:[%s1 + $0x58] sm:$0xff]
  %v383 = vld [vmem:[%s1 + $0x60] sm:$0xff]
  %v384 = vld [vmem:[%s1 + $0x68] sm:$0xff]
  %v385 = vld [vmem:[%s1 + $0x70] sm:$0xff]
  %v386 = vld [vmem:[%s1 + $0x78] sm:$0xff]
  %v387 = vld [vmem:[%s1 + $0x80] sm:$0xff]
  %v388 = vld [vmem:[%s1 + $0x88] sm:$0xff]
  %v389 = vld [vmem:[%s1 + $0x90] sm:$0xff]
  %v390 = vld [vmem:[%s1 + $0x98] sm:$0xff]
  %v391 = vld [vmem:[%s1 + $0xa0] sm:$0xff]
  %v392 = vld [vmem:[%s1 + $0xa8] sm:$0xff]
  %v393 = vld [vmem:[%s1 + $0xb0] sm:$0xff]
  %v394 = vld [vmem:[%s1 + $0xb8] sm:$0xff]
  %v395 = vld [vmem:[%s1 + $0xc0] sm:$0xff]
  %v396 = vld [vmem:[%s1 + $0xc8] sm:$0xff]
  %v397 = vld [vmem:[%s1 + $0xd0] sm:$0xff]
  %v398 = vld [vmem:[%s1 + $0xd8] sm:$0xff]
  %v399 = vld [vmem:[%s1 + $0xe0] sm:$0xff]
  %v400 = vld [vmem:[%s1 + $0xe8] sm:$0xff]
  %v401 = vld [vmem:[%s1 + $0xf0] sm:$0xff]
  %v402 = vld [vmem:[%s1 + $0xf8] sm:$0xff]
  %v403 = vld [vmem:[%s1 + $0x100] sm:$0xff]
  %v404 = vld [vmem:[%s1 + $0x108] sm:$0xff]
  %v405 = vld [vmem:[%s1 + $0x110] sm:$0xff]
  %v406 = vld [vmem:[%s1 + $0x118] sm:$0xff]
  %v407 = vld [vmem:[%s1 + $0x120] sm:$0xff]
  %v408 = vld [vmem:[%s1 + $0x128] sm:$0xff]
  %v409 = vld [vmem:[%s1 + $0x130] sm:$0xff]
  %v410 = vld [vmem:[%s1 + $0x138] sm:$0xff]
  %v411 = vld [vmem:[%s1 + $0x140] sm:$0xff]
  %v412 = vld [vmem:[%s1 + $0x148] sm:$0xff]
  %v413 = vld [vmem:[%s1 + $0x150] sm:$0xff]
  %v414 = vld [vmem:[%s1 + $0x158] sm:$0xff]
  %v415 = vld [vmem:[%s1 + $0x160] sm:$0xff]
  %v416 = vld [vmem:[%s1 + $0x168] sm:$0xff]
  %v417 = vld [vmem:[%s1 + $0x170] sm:$0xff]
  %v418 = vld [vmem:[%s1 + $0x178] sm:$0xff]
  %v419 = vld [vmem:[%s1 + $0x180] sm:$0xff]
  %v420 = vld [vmem:[%s1 + $0x188] sm:$0xff]
  %v421 = vld [vmem:[%s1 + $0x190] sm:$0xff]
  %v422 = vld [vmem:[%s1 + $0x198] sm:$0xff]
  %v423 = vld [vmem:[%s1 + $0x1a0] sm:$0xff]
  %v424 = vld [vmem:[%s1 + $0x1a8] sm:$0xff]
  %v425 = vld [vmem:[%s1 + $0x1b0] sm:$0xff]
  %v426 = vld [vmem:[%s1 + $0x1b8] sm:$0xff]
  %v427 = vld [vmem:[%s1 + $0x1c0] sm:$0xff]
  %v428 = vld [vmem:[%s1 + $0x1c8] sm:$0xff]
  %v429 = vld [vmem:[%s1 + $0x1d0] sm:$0xff]
  %v430 = vld [vmem:[%s1 + $0x1d8] sm:$0xff]
  %v431 = vld [vmem:[%s1 + $0x1e0] sm:$0xff]
  %v432 = vld [vmem:[%s1 + $0x1e8] sm:$0xff]
  %v433 = vld [vmem:[%s1 + $0x1f0] sm:$0xff]
  %v434 = vld [vmem:[%s1 + $0x1f8] sm:$0xff]
  %v435 = vld [vmem:[%s1 + $0x200] sm:$0xff]
  %v436 = vld [vmem:[%s1 + $0x208] sm:$0xff]
  %v437 = vld [vmem:[%s1 + $0x210] sm:$0xff]
  %v438 = vld [vmem:[%s1 + $0x218] sm:$0xff]
  %v439 = vld [vmem:[%s1 + $0x220] sm:$0xff]
  %v440 = vld [vmem:[%s1 + $0x228] sm:$0xff]
  %v441 = vld [vmem:[%s1 + $0x230] sm:$0xff]
  %v442 = vld [vmem:[%s1 + $0x238] sm:$0xff]
  %v443 = vld [vmem:[%s1 + $0x240] sm:$0xff]
  %v444 = vld [vmem:[%s1 + $0x248] sm:$0xff]
  %v445 = vld [vmem:[%s1 + $0x250] sm:$0xff]
  %v446 = vld [vmem:[%s1 + $0x258] sm:$0xff]
  %v447 = vld [vmem:[%s1 + $0x260] sm:$0xff]
  %v448 = vld [vmem:[%s1 + $0x268] sm:$0xff]
  %v449 = vld [vmem:[%s1 + $0x270] sm:$0xff]
  %v450 = vld [vmem:[%s1 + $0x278] sm:$0xff]
  %v451 = vld [vmem:[%s1 + $0x280] sm:$0xff]
  %v452 = vld [vmem:[%s1 + $0x288] sm:$0xff]
  %v453 = vld [vmem:[%s1 + $0x290] sm:$0xff]
  %v454 = vld [vmem:[%s1 + $0x298] sm:$0xff]
  %v455 = vld [vmem:[%s1 + $0x2a0] sm:$0xff]
  %v456 = vld [vmem:[%s1 + $0x2a8] sm:$0xff]
  %v457 = vld [vmem:[%s1 + $0x2b0] sm:$0xff]
  %v458 = vld [vmem:[%s1 + $0x2b8] sm:$0xff]
  %v459 = vld [vmem:[%s1 + $0x2c0] sm:$0xff]
  %v460 = vld [vmem:[%s1 + $0x2c8] sm:$0xff]
  %v461 = vld [vmem:[%s1 + $0x2d0] sm:$0xff]
  %v462 = vld [vmem:[%s1 + $0x2d8] sm:$0xff]
  %v463 = vld [vmem:[%s1 + $0x2e0] sm:$0xff]
  %v464 = vld [vmem:[%s1 + $0x2e8] sm:$0xff]
  %v465 = vld [vmem:[%s1 + $0x2f0] sm:$0xff]
  %v466 = vld [vmem:[%s1 + $0x2f8] sm:$0xff]
  %v467 = vld [vmem:[%s1 + $0x300] sm:$0xff]
  %v468 = vld [vmem:[%s1 + $0x308] sm:$0xff]
  %v469 = vld [vmem:[%s1 + $0x310] sm:$0xff]
  %v470 = vld [vmem:[%s1 + $0x318] sm:$0xff]
  %v471 = vld [vmem:[%s1 + $0x320] sm:$0xff]
  %v472 = vld [vmem:[%s1 + $0x328] sm:$0xff]
  %v473 = vld [vmem:[%s1 + $0x330] sm:$0xff]
  %v474 = vld [vmem:[%s1 + $0x338] sm:$0xff]
  %v475 = vld [vmem:[%s1 + $0x340] sm:$0xff]
  %v476 = vld [vmem:[%s1 + $0x348] sm:$0xff]
  %v477 = vld [vmem:[%s1 + $0x350] sm:$0xff]
  %v478 = vld [vmem:[%s1 + $0x358] sm:$0xff]
  %v479 = vld [vmem:[%s1 + $0x360] sm:$0xff]
  %v480 = vld [vmem:[%s1 + $0x368] sm:$0xff]
  %v481 = vld [vmem:[%s1 + $0x370] sm:$0xff]
  %v482 = vld [vmem:[%s1 + $0x378] sm:$0xff]
  %v483 = vld [vmem:[%s1 + $0x380] sm:$0xff]
  %v484 = vld [vmem:[%s1 + $0x388] sm:$0xff]
  %v485 = vld [vmem:[%s1 + $0x390] sm:$0xff]
  %v486 = vld [vmem:[%s1 + $0x398] sm:$0xff]
  %v487 = vld [vmem:[%s1 + $0x3a0] sm:$0xff]
  %v488 = vld [vmem:[%s1 + $0x3a8] sm:$0xff]
  %v489 = vld [vmem:[%s1 + $0x3b0] sm:$0xff]
  %v490 = vld [vmem:[%s1 + $0x3b8] sm:$0xff]
  %v491 = vld [vmem:[%s1 + $0x3c0] sm:$0xff]
  %v492 = vld [vmem:[%s1 + $0x3c8] sm:$0xff]
  %v493 = vld [vmem:[%s1 + $0x3d0] sm:$0xff]
  %v494 = vld [vmem:[%s1 + $0x3d8] sm:$0xff]
  %v495 = vld [vmem:[%s1 + $0x3e0] sm:$0xff]
  %v496 = vld [vmem:[%s1 + $0x3e8] sm:$0xff]
  %v497 = vld [vmem:[%s1 + $0x3f0] sm:$0xff]
  %v498 = vld [vmem:[%s1 + $0x3f8] sm:$0xff]
  %v499 = vld [vmem:[%s1 + $0x400] sm:$0xff]
  %v500 = vld [vmem:[%s1 + $0x408] sm:$0xff]
  %v501 = vld [vmem:[%s1 + $0x410] sm:$0xff]
  %v502 = vld [vmem:[%s1 + $0x418] sm:$0xff]
  %v503 = vld [vmem:[%s1 + $0x420] sm:$0xff]
  %v504 = vld [vmem:[%s1 + $0x428] sm:$0xff]
  %v505 = vld [vmem:[%s1 + $0x430] sm:$0xff]
  %v506 = vld [vmem:[%s1 + $0x438] sm:$0xff]
  %v507 = vld [vmem:[%s1 + $0x440] sm:$0xff]
  %v508 = vld [vmem:[%s1 + $0x448] sm:$0xff]
  %v509 = vld [vmem:[%s1 + $0x450] sm:$0xff]
  %v510 = vld [vmem:[%s1 + $0x458] sm:$0xff]
  %v511 = vld [vmem:[%s1 + $0x460] sm:$0xff]
  %v512 = vld [vmem:[%s1 + $0x468] sm:$0xff]
  %v513 = vld [vmem:[%s1 + $0x470] sm:$0xff]
  %v514 = vld [vmem:[%s1 + $0x478] sm:$0xff]
  %v515 = vld [vmem:[%s1 + $0x480] sm:$0xff]
  %v516 = vld [vmem:[%s1 + $0x488] sm:$0xff]
  %v517 = vld [vmem:[%s1 + $0x490] sm:$0xff]
  %v518 = vld [vmem:[%s1 + $0x498] sm:$0xff]
  %v519 = vld [vmem:[%s1 + $0x4a0] sm:$0xff]
  %v520 = vld [vmem:[%s1 + $0x4a8] sm:$0xff]
  %v521 = vld [vmem:[%s1 + $0x4b0] sm:$0xff]
  %v522 = vld [vmem:[%s1 + $0x4b8] sm:$0xff]
  %v523 = vld [vmem:[%s1 + $0x4c0] sm:$0xff]
  %v524 = vld [vmem:[%s1 + $0x4c8] sm:$0xff]
  %v525 = vld [vmem:[%s1 + $0x4d0] sm:$0xff]
  %v526 = vld [vmem:[%s1 + $0x4d8] sm:$0xff]
  %v527 = vld [vmem:[%s1 + $0x4e0] sm:$0xff]
  %v528 = vld [vmem:[%s1 + $0x4e8] sm:$0xff]
  %v529 = vld [vmem:[%s1 + $0x4f0] sm:$0xff]
  %v530 = vld [vmem:[%s1 + $0x4f8] sm:$0xff]
  %v531 = vld [vmem:[%s1 + $0x500] sm:$0xff]
  %v532 = vld [vmem:[%s1 + $0x508] sm:$0xff]
  %v533 = vld [vmem:[%s1 + $0x510] sm:$0xff]
  %v534 = vld [vmem:[%s1 + $0x518] sm:$0xff]
  %v535 = vld [vmem:[%s1 + $0x520] sm:$0xff]
  %v536 = vld [vmem:[%s1 + $0x528] sm:$0xff]
  %v537 = vld [vmem:[%s1 + $0x530] sm:$0xff]
  %v538 = vld [vmem:[%s1 + $0x538] sm:$0xff]
  %v539 = vld [vmem:[%s1 + $0x540] sm:$0xff]
  %v540 = vld [vmem:[%s1 + $0x548] sm:$0xff]
  %v541 = vld [vmem:[%s1 + $0x550] sm:$0xff]
  %v542 = vld [vmem:[%s1 + $0x558] sm:$0xff]
  %v543 = vld [vmem:[%s1 + $0x560] sm:$0xff]
  %v544 = vld [vmem:[%s1 + $0x568] sm:$0xff]
  %v545 = vld [vmem:[%s1 + $0x570] sm:$0xff]
  %v546 = vld [vmem:[%s1 + $0x578] sm:$0xff]
  %v547 = vld [vmem:[%s1 + $0x580] sm:$0xff]
  %v548 = vld [vmem:[%s1 + $0x588] sm:$0xff]
  %v549 = vld [vmem:[%s1 + $0x590] sm:$0xff]
  %v550 = vld [vmem:[%s1 + $0x598] sm:$0xff]
  %v551 = vld [vmem:[%s1 + $0x5a0] sm:$0xff]
  %v552 = vld [vmem:[%s1 + $0x5a8] sm:$0xff]
  %v553 = vld [vmem:[%s1 + $0x5b0] sm:$0xff]
  %v554 = vld [vmem:[%s1 + $0x5b8] sm:$0xff]
  %v555 = vld [vmem:[%s1 + $0x5c0] sm:$0xff]
  %v556 = vld [vmem:[%s1 + $0x5c8] sm:$0xff]
  %v557 = vld [vmem:[%s1 + $0x5d0] sm:$0xff]
  %v558 = vld [vmem:[%s1 + $0x5d8] sm:$0xff]
  %v559 = vld [vmem:[%s1 + $0x5e0] sm:$0xff]
  %v560 = vld [vmem:[%s1 + $0x5e8] sm:$0xff]
  %v561 = vld [vmem:[%s1 + $0x5f0] sm:$0xff]
  %v562 = vld [vmem:[%s1 + $0x5f8] sm:$0xff]
  %v563 = vld [vmem:[%s1 + $0x600] sm:$0xff]
  %v564 = vld [vmem:[%s1 + $0x608] sm:$0xff]
  %v565 = vld [vmem:[%s1 + $0x610] sm:$0xff]
  %v566 = vld [vmem:[%s1 + $0x618] sm:$0xff]
  %v567 = vld [vmem:[%s1 + $0x620] sm:$0xff]
  %v568 = vld [vmem:[%s1 + $0x628] sm:$0xff]
  %v569 = vld [vmem:[%s1 + $0x630] sm:$0xff]
  %v570 = vld [vmem:[%s1 + $0x638] sm:$0xff]
  %v571 = vld [vmem:[%s1 + $0x640] sm:$0xff]
  %v572 = vld [vmem:[%s1 + $0x648] sm:$0xff]
  %v573 = vld [vmem:[%s1 + $0x650] sm:$0xff]
  %v574 = vld [vmem:[%s1 + $0x658] sm:$0xff]
  %v575 = vld [vmem:[%s1 + $0x660] sm:$0xff]
  %v576 = vld [vmem:[%s1 + $0x668] sm:$0xff]
  %v577 = vld [vmem:[%s1 + $0x670] sm:$0xff]
  %v578 = vld [vmem:[%s1 + $0x678] sm:$0xff]
  %v579 = vld [vmem:[%s1 + $0x680] sm:$0xff]
  %v580 = vld [vmem:[%s1 + $0x688] sm:$0xff]
  %v581 = vld [vmem:[%s1 + $0x690] sm:$0xff]
  %v582 = vld [vmem:[%s1 + $0x698] sm:$0xff]
  %v583 = vld [vmem:[%s1 + $0x6a0] sm:$0xff]
  %v584 = vld [vmem:[%s1 + $0x6a8] sm:$0xff]
  %v585 = vld [vmem:[%s1 + $0x6b0] sm:$0xff]
  %v586 = vld [vmem:[%s1 + $0x6b8] sm:$0xff]
  %v587 = vld [vmem:[%s1 + $0x6c0] sm:$0xff]
  %v588 = vld [vmem:[%s1 + $0x6c8] sm:$0xff]
  %v589 = vld [vmem:[%s1 + $0x6d0] sm:$0xff]
  %v590 = vld [vmem:[%s1 + $0x6d8] sm:$0xff]
  %v591 = vld [vmem:[%s1 + $0x6e0] sm:$0xff]
  %v592 = vld [vmem:[%s1 + $0x6e8] sm:$0xff]
  %v593 = vld [vmem:[%s1 + $0x6f0] sm:$0xff]
  %v594 = vld [vmem:[%s1 + $0x6f8] sm:$0xff]
  %v595 = vld [vmem:[%s1 + $0x700] sm:$0xff]
  %v596 = vld [vmem:[%s1 + $0x708] sm:$0xff]
  %v597 = vld [vmem:[%s1 + $0x710] sm:$0xff]
  %v598 = vld [vmem:[%s1 + $0x718] sm:$0xff]
  %v599 = vld [vmem:[%s1 + $0x720] sm:$0xff]
  %v600 = vld [vmem:[%s1 + $0x728] sm:$0xff]
  %v601 = vld [vmem:[%s1 + $0x730] sm:$0xff]
  %v602 = vld [vmem:[%s1 + $0x738] sm:$0xff]
  %v603 = vld [vmem:[%s1 + $0x740] sm:$0xff]
  %v604 = vld [vmem:[%s1 + $0x748] sm:$0xff]
  %v605 = vld [vmem:[%s1 + $0x750] sm:$0xff]
  %v606 = vld [vmem:[%s1 + $0x758] sm:$0xff]
  %v607 = vld [vmem:[%s1 + $0x760] sm:$0xff]
  %v608 = vld [vmem:[%s1 + $0x768] sm:$0xff]
  %v609 = vld [vmem:[%s1 + $0x770] sm:$0xff]
  %v610 = vld [vmem:[%s1 + $0x778] sm:$0xff]
  %v611 = vld [vmem:[%s1 + $0x780] sm:$0xff]
  %v612 = vld [vmem:[%s1 + $0x788] sm:$0xff]
  %v613 = vld [vmem:[%s1 + $0x790] sm:$0xff]
  %v614 = vld [vmem:[%s1 + $0x798] sm:$0xff]
  %v615 = vld [vmem:[%s1 + $0x7a0] sm:$0xff]
  %v616 = vld [vmem:[%s1 + $0x7a8] sm:$0xff]
  %v617 = vld [vmem:[%s1 + $0x7b0] sm:$0xff]
  %v618 = vld [vmem:[%s1 + $0x7b8] sm:$0xff]
  %v619 = vld [vmem:[%s1 + $0x7c0] sm:$0xff]
  %v620 = vld [vmem:[%s1 + $0x7c8] sm:$0xff]
  %v621 = vld [vmem:[%s1 + $0x7d0] sm:$0xff]
  %v622 = vld [vmem:[%s1 + $0x7d8] sm:$0xff]
  %v623 = vld [vmem:[%s1 + $0x7e0] sm:$0xff]
  %v624 = vld [vmem:[%s1 + $0x7e8] sm:$0xff]
  %v625 = vld [vmem:[%s1 + $0x7f0] sm:$0xff]
  %v626 = vld [vmem:[%s1 + $0x7f8] sm:$0xff]
  %v627 = vld [vmem:[%s1 + $0x800] sm:$0xff]
  %v628 = vld [vmem:[%s1 + $0x808] sm:$0xff]
  %v629 = vld [vmem:[%s1 + $0x810] sm:$0xff]
  %v630 = vld [vmem:[%s1 + $0x818] sm:$0xff]
  %v631 = vld [vmem:[%s1 + $0x820] sm:$0xff]
  %v632 = vld [vmem:[%s1 + $0x828] sm:$0xff]
  %v633 = vld [vmem:[%s1 + $0x830] sm:$0xff]
  %v634 = vld [vmem:[%s1 + $0x838] sm:$0xff]
  %v635 = vld [vmem:[%s1 + $0x840] sm:$0xff]
  %v636 = vld [vmem:[%s1 + $0x848] sm:$0xff]
  %v637 = vld [vmem:[%s1 + $0x850] sm:$0xff]
  %v638 = vld [vmem:[%s1 + $0x858] sm:$0xff]
  %v639 = vld [vmem:[%s1 + $0x860] sm:$0xff]
  %v640 = vld [vmem:[%s1 + $0x868] sm:$0xff]
  %v641 = vld [vmem:[%s1 + $0x870] sm:$0xff]
  %v642 = vld [vmem:[%s1 + $0x878] sm:$0xff]
  %v643 = vld [vmem:[%s1 + $0x880] sm:$0xff]
  %v644 = vld [vmem:[%s1 + $0x888] sm:$0xff]
  %v645 = vld [vmem:[%s1 + $0x890] sm:$0xff]
  %v646 = vld [vmem:[%s1 + $0x898] sm:$0xff]
  %v647 = vld [vmem:[%s1 + $0x8a0] sm:$0xff]
  %v648 = vld [vmem:[%s1 + $0x8a8] sm:$0xff]
  %v649 = vld [vmem:[%s1 + $0x8b0] sm:$0xff]
  %v650 = vld [vmem:[%s1 + $0x8b8] sm:$0xff]
  %v651 = vld [vmem:[%s1 + $0x8c0] sm:$0xff]
  %v652 = vld [vmem:[%s1 + $0x8c8] sm:$0xff]
  %v653 = vld [vmem:[%s1 + $0x8d0] sm:$0xff]
  %v654 = vld [vmem:[%s1 + $0x8d8] sm:$0xff]
  %v655 = vld [vmem:[%s1 + $0x8e0] sm:$0xff]
  %v656 = vld [vmem:[%s1 + $0x8e8] sm:$0xff]
  %v657 = vld [vmem:[%s1 + $0x8f0] sm:$0xff]
  %v658 = vld [vmem:[%s1 + $0x8f8] sm:$0xff]
  %v659 = vld [vmem:[%s1 + $0x900] sm:$0xff]
  %v660 = vld [vmem:[%s1 + $0x908] sm:$0xff]
  %v661 = vld [vmem:[%s1 + $0x910] sm:$0xff]
  %v662 = vld [vmem:[%s1 + $0x918] sm:$0xff]
  %v663 = vld [vmem:[%s1 + $0x920] sm:$0xff]
  %v664 = vld [vmem:[%s1 + $0x928] sm:$0xff]
  %v665 = vld [vmem:[%s1 + $0x930] sm:$0xff]
  %v666 = vld [vmem:[%s1 + $0x938] sm:$0xff]
  %v667 = vld [vmem:[%s1 + $0x940] sm:$0xff]
  %v668 = vld [vmem:[%s1 + $0x948] sm:$0xff]
  %v669 = vld [vmem:[%s1 + $0x950] sm:$0xff]
  %v670 = vld [vmem:[%s1 + $0x958] sm:$0xff]
  %v671 = vld [vmem:[%s1 + $0x960] sm:$0xff]
  %v672 = vld [vmem:[%s1 + $0x968] sm:$0xff]
  %v673 = vld [vmem:[%s1 + $0x970] sm:$0xff]
  %v674 = vld [vmem:[%s1 + $0x978] sm:$0xff]
  %v675 = vld [vmem:[%s1 + $0x980] sm:$0xff]
  %v676 = vld [vmem:[%s1 + $0x988] sm:$0xff]
  %v677 = vld [vmem:[%s1 + $0x990] sm:$0xff]
  %v678 = vld [vmem:[%s1 + $0x998] sm:$0xff]
  %v679 = vld [vmem:[%s1 + $0x9a0] sm:$0xff]
  %v680 = vld [vmem:[%s1 + $0x9a8] sm:$0xff]
  %v681 = vld [vmem:[%s1 + $0x9b0] sm:$0xff]
  %v682 = vld [vmem:[%s1 + $0x9b8] sm:$0xff]
  %v683 = vld [vmem:[%s1 + $0x9c0] sm:$0xff]
  %v684 = vld [vmem:[%s1 + $0x9c8] sm:$0xff]
  %v685 = vld [vmem:[%s1 + $0x9d0] sm:$0xff]
  %v686 = vld [vmem:[%s1 + $0x9d8] sm:$0xff]
  %v687 = vld [vmem:[%s1 + $0x9e0] sm:$0xff]
  %v688 = vld [vmem:[%s1 + $0x9e8] sm:$0xff]
  %v689 = vld [vmem:[%s1 + $0x9f0] sm:$0xff]
  %v690 = vld [vmem:[%s1 + $0x9f8] sm:$0xff]
  %v691 = vld [vmem:[%s1 + $0xa00] sm:$0xff]
  %v692 = vld [vmem:[%s1 + $0xa08] sm:$0xff]
  %v693 = vld [vmem:[%s1 + $0xa10] sm:$0xff]
  %v694 = vld [vmem:[%s1 + $0xa18] sm:$0xff]
  %v695 = vld [vmem:[%s1 + $0xa20] sm:$0xff]
  %v696 = vld [vmem:[%s1 + $0xa28] sm:$0xff]
  %v697 = vld [vmem:[%s1 + $0xa30] sm:$0xff]
  %v698 = vld [vmem:[%s1 + $0xa38] sm:$0xff]
  %v699 = vld [vmem:[%s1 + $0xa40] sm:$0xff]
  %v700 = vld [vmem:[%s1 + $0xa48] sm:$0xff]
  %v701 = vld [vmem:[%s1 + $0xa50] sm:$0xff]
  %v702 = vld [vmem:[%s1 + $0xa58] sm:$0xff]
  %v703 = vld [vmem:[%s1 + $0xa60] sm:$0xff]
  %v704 = vld [vmem:[%s1 + $0xa68] sm:$0xff]
  %v705 = vld [vmem:[%s1 + $0xa70] sm:$0xff]
  %v706 = vld [vmem:[%s1 + $0xa78] sm:$0xff]
  %v707 = vld [vmem:[%s1 + $0xa80] sm:$0xff]
  %v708 = vld [vmem:[%s1 + $0xa88] sm:$0xff]
  %v709 = vld [vmem:[%s1 + $0xa90] sm:$0xff]
  %v710 = vld [vmem:[%s1 + $0xa98] sm:$0xff]
  %v711 = vld [vmem:[%s1 + $0xaa0] sm:$0xff]
  %v712 = vld [vmem:[%s1 + $0xaa8] sm:$0xff]
  %v713 = vld [vmem:[%s1 + $0xab0] sm:$0xff]
  %v714 = vld [vmem:[%s1 + $0xab8] sm:$0xff]
  %v715 = vld [vmem:[%s1 + $0xac0] sm:$0xff]
  %v716 = vld [vmem:[%s1 + $0xac8] sm:$0xff]
  %v717 = vld [vmem:[%s1 + $0xad0] sm:$0xff]
  %v718 = vld [vmem:[%s1 + $0xad8] sm:$0xff]
  %v719 = vld [vmem:[%s1 + $0xae0] sm:$0xff]
  %v720 = vld [vmem:[%s1 + $0xae8] sm:$0xff]
  %v721 = vld [vmem:[%s1 + $0xaf0] sm:$0xff]
  %v722 = vld [vmem:[%s1 + $0xaf8] sm:$0xff]
  %v723 = vld [vmem:[%s1 + $0xb00] sm:$0xff]
  %v724 = vld [vmem:[%s1 + $0xb08] sm:$0xff]
  %v725 = vld [vmem:[%s1 + $0xb10] sm:$0xff]
  %v726 = vld [vmem:[%s1 + $0xb18] sm:$0xff]
  %v727 = vld [vmem:[%s1 + $0xb20] sm:$0xff]
  %v728 = vld [vmem:[%s1 + $0xb28] sm:$0xff]
  %v729 = vld [vmem:[%s1 + $0xb30] sm:$0xff]
  %v730 = vld [vmem:[%s1 + $0xb38] sm:$0xff]
  %v731 = vld [vmem:[%s1 + $0xb40] sm:$0xff]
  %v732 = vld [vmem:[%s1 + $0xb48] sm:$0xff]
  %v733 = vld [vmem:[%s1 + $0xb50] sm:$0xff]
  %v734 = vld [vmem:[%s1 + $0xb58] sm:$0xff]
  %v735 = vld [vmem:[%s1 + $0xb60] sm:$0xff]
  %v736 = vld [vmem:[%s1 + $0xb68] sm:$0xff]
  %v737 = vld [vmem:[%s1 + $0xb70] sm:$0xff]
  %v738 = vld [vmem:[%s1 + $0xb78] sm:$0xff]
  %v739 = vld [vmem:[%s1 + $0xb80] sm:$0xff]
  %v740 = vld [vmem:[%s1 + $0xb88] sm:$0xff]
  %v741 = vld [vmem:[%s1 + $0xb90] sm:$0xff]
  %v742 = vld [vmem:[%s1 + $0xb98] sm:$0xff]
  %v743 = vld [vmem:[%s1 + $0xba0] sm:$0xff]
  %v744 = vld [vmem:[%s1 + $0xba8] sm:$0xff]
  %v745 = vld [vmem:[%s1 + $0xbb0] sm:$0xff]
  %v746 = vld [vmem:[%s1 + $0xbb8] sm:$0xff]
  %v747 = vld [vmem:[%s1 + $0xbc0] sm:$0xff]
  %v748 = vld [vmem:[%s1 + $0xbc8] sm:$0xff]
  %v749 = vld [vmem:[%s1 + $0xbd0] sm:$0xff]
  %v750 = vld [vmem:[%s1 + $0xbd8] sm:$0xff]
  %v751 = vld [vmem:[%s1 + $0xbe0] sm:$0xff]
  %v752 = vld [vmem:[%s1 + $0xbe8] sm:$0xff]
  %v753 = vld [vmem:[%s1 + $0xbf0] sm:$0xff]
  %v754 = vld [vmem:[%s1 + $0xbf8] sm:$0xff]
  %v755 = vld [vmem:[%s1 + $0xc00] sm:$0xff]
  %v756 = vld [vmem:[%s1 + $0xc08] sm:$0xff]
  %v757 = vld [vmem:[%s1 + $0xc10] sm:$0xff]
  %v758 = vld [vmem:[%s1 + $0xc18] sm:$0xff]
  %v759 = vld [vmem:[%s1 + $0xc20] sm:$0xff]
  %v760 = vld [vmem:[%s1 + $0xc28] sm:$0xff]
  %v761 = vld [vmem:[%s1 + $0xc30] sm:$0xff]
  %v762 = vld [vmem:[%s1 + $0xc38] sm:$0xff]
  %v763 = vld [vmem:[%s2] sm:$0xff]
  %v765 = vlaneseq
  %v766 = vshrl.u32 %v765, 7
  %v767 = vsub.s32 0, %v766
  %v768 = vrot.slane %v763, %v767
  %v769 = vlaneseq
  %v770 = vshrl.u32 %v769, 7
  %v771 = vsub.s32 1, %v770
  %v772 = vrot.slane %v763, %v771
  %v773 = vlaneseq
  %v774 = vshrl.u32 %v773, 7
  %v775 = vsub.s32 2, %v774
  %v776 = vrot.slane %v763, %v775
  %v777 = vlaneseq
  %v778 = vshrl.u32 %v777, 7
  %v779 = vsub.s32 3, %v778
  %v780 = vrot.slane %v763, %v779
  %v781 = vlaneseq
  %v782 = vshrl.u32 %v781, 7
  %v783 = vsub.s32 4, %v782
  %v784 = vrot.slane %v763, %v783
  %v785 = vlaneseq
  %v786 = vshrl.u32 %v785, 7
  %v787 = vsub.s32 5, %v786
  %v788 = vrot.slane %v763, %v787
  %v789 = vlaneseq
  %v790 = vshrl.u32 %v789, 7
  %v791 = vsub.s32 6, %v790
  %v792 = vrot.slane %v763, %v791
  %v793 = vlaneseq
  %v794 = vshrl.u32 %v793, 7
  %v795 = vsub.s32 7, %v794
  %v796 = vrot.slane %v763, %v795
  %v1197 = vunpack.c.l.b16 %v371
  %v1198 = vunpack.c.h.b16 %v371
  %v1199 = vunpack.c.l.b16 %v372
  %v1200 = vunpack.c.h.b16 %v372
  %v1201 = vunpack.c.l.b16 %v373
  %v1202 = vunpack.c.h.b16 %v373
  %v1203 = vunpack.c.l.b16 %v374
  %v1204 = vunpack.c.h.b16 %v374
  %v1205 = vunpack.c.l.b16 %v375
  %v1206 = vunpack.c.h.b16 %v375
  %v1207 = vunpack.c.l.b16 %v376
  %v1208 = vunpack.c.h.b16 %v376
  %v1209 = vunpack.c.l.b16 %v377
  %v1210 = vunpack.c.h.b16 %v377
  %v1211 = vunpack.c.l.b16 %v378
  %v1212 = vunpack.c.h.b16 %v378
  %v1213 = vunpack.c.l.b16 %v379
  %v1214 = vunpack.c.h.b16 %v379
  %v1215 = vunpack.c.l.b16 %v380
  %v1216 = vunpack.c.h.b16 %v380
  %v1217 = vunpack.c.l.b16 %v381
  %v1218 = vunpack.c.h.b16 %v381
  %v1219 = vunpack.c.l.b16 %v382
  %v1220 = vunpack.c.h.b16 %v382
  %v1221 = vunpack.c.l.b16 %v383
  %v1222 = vunpack.c.h.b16 %v383
  %v1223 = vunpack.c.l.b16 %v384
  %v1224 = vunpack.c.h.b16 %v384
  %v1225 = vunpack.c.l.b16 %v385
  %v1226 = vunpack.c.h.b16 %v385
  %v1227 = vunpack.c.l.b16 %v386
  %v1228 = vunpack.c.h.b16 %v386
  %v1229 = vunpack.c.l.b16 %v387
  %v1230 = vunpack.c.h.b16 %v387
  %v1231 = vunpack.c.l.b16 %v388
  %v1232 = vunpack.c.h.b16 %v388
  %v1233 = vunpack.c.l.b16 %v389
  %v1234 = vunpack.c.h.b16 %v389
  %v1235 = vunpack.c.l.b16 %v390
  %v1236 = vunpack.c.h.b16 %v390
  %v1237 = vunpack.c.l.b16 %v391
  %v1238 = vunpack.c.h.b16 %v391
  %v1239 = vunpack.c.l.b16 %v392
  %v1240 = vunpack.c.h.b16 %v392
  %v1241 = vunpack.c.l.b16 %v393
  %v1242 = vunpack.c.h.b16 %v393
  %v1243 = vunpack.c.l.b16 %v394
  %v1244 = vunpack.c.h.b16 %v394
  %v1245 = vunpack.c.l.b16 %v395
  %v1246 = vunpack.c.h.b16 %v395
  %v1247 = vunpack.c.l.b16 %v396
  %v1248 = vunpack.c.h.b16 %v396
  %v1249 = vunpack.c.l.b16 %v397
  %v1250 = vunpack.c.h.b16 %v397
  %v1251 = vunpack.c.l.b16 %v398
  %v1252 = vunpack.c.h.b16 %v398
  %v1253 = vunpack.c.l.b16 %v399
  %v1254 = vunpack.c.h.b16 %v399
  %v1255 = vunpack.c.l.b16 %v400
  %v1256 = vunpack.c.h.b16 %v400
  %v1257 = vunpack.c.l.b16 %v401
  %v1258 = vunpack.c.h.b16 %v401
  %v1259 = vunpack.c.l.b16 %v402
  %v1260 = vunpack.c.h.b16 %v402
  %v1261 = vunpack.c.l.b16 %v403
  %v1262 = vunpack.c.h.b16 %v403
  %v1263 = vunpack.c.l.b16 %v404
  %v1264 = vunpack.c.h.b16 %v404
  %v1265 = vunpack.c.l.b16 %v405
  %v1266 = vunpack.c.h.b16 %v405
  %v1267 = vunpack.c.l.b16 %v406
  %v1268 = vunpack.c.h.b16 %v406
  %v1269 = vunpack.c.l.b16 %v407
  %v1270 = vunpack.c.h.b16 %v407
  %v1271 = vunpack.c.l.b16 %v408
  %v1272 = vunpack.c.h.b16 %v408
  %v1273 = vunpack.c.l.b16 %v409
  %v1274 = vunpack.c.h.b16 %v409
  %v1275 = vunpack.c.l.b16 %v410
  %v1276 = vunpack.c.h.b16 %v410
  %v1277 = vunpack.c.l.b16 %v411
  %v1278 = vunpack.c.h.b16 %v411
  %v1279 = vunpack.c.l.b16 %v412
  %v1280 = vunpack.c.h.b16 %v412
  %v1281 = vunpack.c.l.b16 %v413
  %v1282 = vunpack.c.h.b16 %v413
  %v1283 = vunpack.c.l.b16 %v414
  %v1284 = vunpack.c.h.b16 %v414
  %v1285 = vunpack.c.l.b16 %v415
  %v1286 = vunpack.c.h.b16 %v415
  %v1287 = vunpack.c.l.b16 %v416
  %v1288 = vunpack.c.h.b16 %v416
  %v1289 = vunpack.c.l.b16 %v417
  %v1290 = vunpack.c.h.b16 %v417
  %v1291 = vunpack.c.l.b16 %v418
  %v1292 = vunpack.c.h.b16 %v418
  %v1293 = vunpack.c.l.b16 %v419
  %v1294 = vunpack.c.h.b16 %v419
  %v1295 = vunpack.c.l.b16 %v420
  %v1296 = vunpack.c.h.b16 %v420
  %v1297 = vunpack.c.l.b16 %v421
  %v1298 = vunpack.c.h.b16 %v421
  %v1299 = vunpack.c.l.b16 %v422
  %v1300 = vunpack.c.h.b16 %v422
  %v1301 = vunpack.c.l.b16 %v423
  %v1302 = vunpack.c.h.b16 %v423
  %v1303 = vunpack.c.l.b16 %v424
  %v1304 = vunpack.c.h.b16 %v424
  %v1305 = vunpack.c.l.b16 %v425
  %v1306 = vunpack.c.h.b16 %v425
  %v1307 = vunpack.c.l.b16 %v426
  %v1308 = vunpack.c.h.b16 %v426
  %v1309 = vunpack.c.l.b16 %v427
  %v1310 = vunpack.c.h.b16 %v427
  %v1311 = vunpack.c.l.b16 %v428
  %v1312 = vunpack.c.h.b16 %v428
  %v1313 = vunpack.c.l.b16 %v429
  %v1314 = vunpack.c.h.b16 %v429
  %v1315 = vunpack.c.l.b16 %v430
  %v1316 = vunpack.c.h.b16 %v430
  %v1317 = vunpack.c.l.b16 %v431
  %v1318 = vunpack.c.h.b16 %v431
  %v1319 = vunpack.c.l.b16 %v432
  %v1320 = vunpack.c.h.b16 %v432
  %v1321 = vunpack.c.l.b16 %v433
  %v1322 = vunpack.c.h.b16 %v433
  %v1323 = vunpack.c.l.b16 %v434
  %v1324 = vunpack.c.h.b16 %v434
  %v1325 = vunpack.c.l.b16 %v435
  %v1326 = vunpack.c.h.b16 %v435
  %v1327 = vunpack.c.l.b16 %v436
  %v1328 = vunpack.c.h.b16 %v436
  %v1329 = vunpack.c.l.b16 %v437
  %v1330 = vunpack.c.h.b16 %v437
  %v1331 = vunpack.c.l.b16 %v438
  %v1332 = vunpack.c.h.b16 %v438
  %v1333 = vunpack.c.l.b16 %v439
  %v1334 = vunpack.c.h.b16 %v439
  %v1335 = vunpack.c.l.b16 %v440
  %v1336 = vunpack.c.h.b16 %v440
  %v1337 = vunpack.c.l.b16 %v441
  %v1338 = vunpack.c.h.b16 %v441
  %v1339 = vunpack.c.l.b16 %v442
  %v1340 = vunpack.c.h.b16 %v442
  %v1341 = vunpack.c.l.b16 %v443
  %v1342 = vunpack.c.h.b16 %v443
  %v1343 = vunpack.c.l.b16 %v444
  %v1344 = vunpack.c.h.b16 %v444
  %v1345 = vunpack.c.l.b16 %v445
  %v1346 = vunpack.c.h.b16 %v445
  %v1347 = vunpack.c.l.b16 %v446
  %v1348 = vunpack.c.h.b16 %v446
  %v1349 = vunpack.c.l.b16 %v447
  %v1350 = vunpack.c.h.b16 %v447
  %v1351 = vunpack.c.l.b16 %v448
  %v1352 = vunpack.c.h.b16 %v448
  %v1353 = vunpack.c.l.b16 %v449
  %v1354 = vunpack.c.h.b16 %v449
  %v1355 = vunpack.c.l.b16 %v450
  %v1356 = vunpack.c.h.b16 %v450
  %v1357 = vunpack.c.l.b16 %v451
  %v1358 = vunpack.c.h.b16 %v451
  %v1359 = vunpack.c.l.b16 %v452
  %v1360 = vunpack.c.h.b16 %v452
  %v1361 = vunpack.c.l.b16 %v453
  %v1362 = vunpack.c.h.b16 %v453
  %v1363 = vunpack.c.l.b16 %v454
  %v1364 = vunpack.c.h.b16 %v454
  %v1365 = vunpack.c.l.b16 %v455
  %v1366 = vunpack.c.h.b16 %v455
  %v1367 = vunpack.c.l.b16 %v456
  %v1368 = vunpack.c.h.b16 %v456
  %v1369 = vunpack.c.l.b16 %v457
  %v1370 = vunpack.c.h.b16 %v457
  %v1371 = vunpack.c.l.b16 %v458
  %v1372 = vunpack.c.h.b16 %v458
  %v1373 = vunpack.c.l.b16 %v459
  %v1374 = vunpack.c.h.b16 %v459
  %v1375 = vunpack.c.l.b16 %v460
  %v1376 = vunpack.c.h.b16 %v460
  %v1377 = vunpack.c.l.b16 %v461
  %v1378 = vunpack.c.h.b16 %v461
  %v1379 = vunpack.c.l.b16 %v462
  %v1380 = vunpack.c.h.b16 %v462
  %v1381 = vunpack.c.l.b16 %v463
  %v1382 = vunpack.c.h.b16 %v463
  %v1383 = vunpack.c.l.b16 %v464
  %v1384 = vunpack.c.h.b16 %v464
  %v1385 = vunpack.c.l.b16 %v465
  %v1386 = vunpack.c.h.b16 %v465
  %v1387 = vunpack.c.l.b16 %v466
  %v1388 = vunpack.c.h.b16 %v466
  %v1389 = vunpack.c.l.b16 %v467
  %v1390 = vunpack.c.h.b16 %v467
  %v1391 = vunpack.c.l.b16 %v468
  %v1392 = vunpack.c.h.b16 %v468
  %v1393 = vunpack.c.l.b16 %v469
  %v1394 = vunpack.c.h.b16 %v469
  %v1395 = vunpack.c.l.b16 %v470
  %v1396 = vunpack.c.h.b16 %v470
  %v1397 = vunpack.c.l.b16 %v471
  %v1398 = vunpack.c.h.b16 %v471
  %v1399 = vunpack.c.l.b16 %v472
  %v1400 = vunpack.c.h.b16 %v472
  %v1401 = vunpack.c.l.b16 %v473
  %v1402 = vunpack.c.h.b16 %v473
  %v1403 = vunpack.c.l.b16 %v474
  %v1404 = vunpack.c.h.b16 %v474
  %v1405 = vunpack.c.l.b16 %v475
  %v1406 = vunpack.c.h.b16 %v475
  %v1407 = vunpack.c.l.b16 %v476
  %v1408 = vunpack.c.h.b16 %v476
  %v1409 = vunpack.c.l.b16 %v477
  %v1410 = vunpack.c.h.b16 %v477
  %v1411 = vunpack.c.l.b16 %v478
  %v1412 = vunpack.c.h.b16 %v478
  %v1413 = vunpack.c.l.b16 %v479
  %v1414 = vunpack.c.h.b16 %v479
  %v1415 = vunpack.c.l.b16 %v480
  %v1416 = vunpack.c.h.b16 %v480
  %v1417 = vunpack.c.l.b16 %v481
  %v1418 = vunpack.c.h.b16 %v481
  %v1419 = vunpack.c.l.b16 %v482
  %v1420 = vunpack.c.h.b16 %v482
  %v1421 = vunpack.c.l.b16 %v483
  %v1422 = vunpack.c.h.b16 %v483
  %v1423 = vunpack.c.l.b16 %v484
  %v1424 = vunpack.c.h.b16 %v484
  %v1425 = vunpack.c.l.b16 %v485
  %v1426 = vunpack.c.h.b16 %v485
  %v1427 = vunpack.c.l.b16 %v486
  %v1428 = vunpack.c.h.b16 %v486
  %v1429 = vunpack.c.l.b16 %v487
  %v1430 = vunpack.c.h.b16 %v487
  %v1431 = vunpack.c.l.b16 %v488
  %v1432 = vunpack.c.h.b16 %v488
  %v1433 = vunpack.c.l.b16 %v489
  %v1434 = vunpack.c.h.b16 %v489
  %v1435 = vunpack.c.l.b16 %v490
  %v1436 = vunpack.c.h.b16 %v490
  %v1437 = vunpack.c.l.b16 %v491
  %v1438 = vunpack.c.h.b16 %v491
  %v1439 = vunpack.c.l.b16 %v492
  %v1440 = vunpack.c.h.b16 %v492
  %v1441 = vunpack.c.l.b16 %v493
  %v1442 = vunpack.c.h.b16 %v493
  %v1443 = vunpack.c.l.b16 %v494
  %v1444 = vunpack.c.h.b16 %v494
  %v1445 = vunpack.c.l.b16 %v495
  %v1446 = vunpack.c.h.b16 %v495
  %v1447 = vunpack.c.l.b16 %v496
  %v1448 = vunpack.c.h.b16 %v496
  %v1449 = vunpack.c.l.b16 %v497
  %v1450 = vunpack.c.h.b16 %v497
  %v1451 = vunpack.c.l.b16 %v498
  %v1452 = vunpack.c.h.b16 %v498
  %v1453 = vunpack.c.l.b16 %v499
  %v1454 = vunpack.c.h.b16 %v499
  %v1455 = vunpack.c.l.b16 %v500
  %v1456 = vunpack.c.h.b16 %v500
  %v1457 = vunpack.c.l.b16 %v501
  %v1458 = vunpack.c.h.b16 %v501
  %v1459 = vunpack.c.l.b16 %v502
  %v1460 = vunpack.c.h.b16 %v502
  %v1461 = vunpack.c.l.b16 %v503
  %v1462 = vunpack.c.h.b16 %v503
  %v1463 = vunpack.c.l.b16 %v504
  %v1464 = vunpack.c.h.b16 %v504
  %v1465 = vunpack.c.l.b16 %v505
  %v1466 = vunpack.c.h.b16 %v505
  %v1467 = vunpack.c.l.b16 %v506
  %v1468 = vunpack.c.h.b16 %v506
  %v1469 = vunpack.c.l.b16 %v507
  %v1470 = vunpack.c.h.b16 %v507
  %v1471 = vunpack.c.l.b16 %v508
  %v1472 = vunpack.c.h.b16 %v508
  %v1473 = vunpack.c.l.b16 %v509
  %v1474 = vunpack.c.h.b16 %v509
  %v1475 = vunpack.c.l.b16 %v510
  %v1476 = vunpack.c.h.b16 %v510
  %v1477 = vunpack.c.l.b16 %v511
  %v1478 = vunpack.c.h.b16 %v511
  %v1479 = vunpack.c.l.b16 %v512
  %v1480 = vunpack.c.h.b16 %v512
  %v1481 = vunpack.c.l.b16 %v513
  %v1482 = vunpack.c.h.b16 %v513
  %v1483 = vunpack.c.l.b16 %v514
  %v1484 = vunpack.c.h.b16 %v514
  %v1485 = vunpack.c.l.b16 %v515
  %v1486 = vunpack.c.h.b16 %v515
  %v1487 = vunpack.c.l.b16 %v516
  %v1488 = vunpack.c.h.b16 %v516
  %v1489 = vunpack.c.l.b16 %v517
  %v1490 = vunpack.c.h.b16 %v517
  %v1491 = vunpack.c.l.b16 %v518
  %v1492 = vunpack.c.h.b16 %v518
  %v1493 = vunpack.c.l.b16 %v519
  %v1494 = vunpack.c.h.b16 %v519
  %v1495 = vunpack.c.l.b16 %v520
  %v1496 = vunpack.c.h.b16 %v520
  %v1497 = vunpack.c.l.b16 %v521
  %v1498 = vunpack.c.h.b16 %v521
  %v1499 = vunpack.c.l.b16 %v522
  %v1500 = vunpack.c.h.b16 %v522
  %v1501 = vunpack.c.l.b16 %v523
  %v1502 = vunpack.c.h.b16 %v523
  %v1503 = vunpack.c.l.b16 %v524
  %v1504 = vunpack.c.h.b16 %v524
  %v1505 = vunpack.c.l.b16 %v525
  %v1506 = vunpack.c.h.b16 %v525
  %v1507 = vunpack.c.l.b16 %v526
  %v1508 = vunpack.c.h.b16 %v526
  %v1509 = vunpack.c.l.b16 %v527
  %v1510 = vunpack.c.h.b16 %v527
  %v1511 = vunpack.c.l.b16 %v528
  %v1512 = vunpack.c.h.b16 %v528
  %v1513 = vunpack.c.l.b16 %v529
  %v1514 = vunpack.c.h.b16 %v529
  %v1515 = vunpack.c.l.b16 %v530
  %v1516 = vunpack.c.h.b16 %v530
  %v1517 = vunpack.c.l.b16 %v531
  %v1518 = vunpack.c.h.b16 %v531
  %v1519 = vunpack.c.l.b16 %v532
  %v1520 = vunpack.c.h.b16 %v532
  %v1521 = vunpack.c.l.b16 %v533
  %v1522 = vunpack.c.h.b16 %v533
  %v1523 = vunpack.c.l.b16 %v534
  %v1524 = vunpack.c.h.b16 %v534
  %v1525 = vunpack.c.l.b16 %v535
  %v1526 = vunpack.c.h.b16 %v535
  %v1527 = vunpack.c.l.b16 %v536
  %v1528 = vunpack.c.h.b16 %v536
  %v1529 = vunpack.c.l.b16 %v537
  %v1530 = vunpack.c.h.b16 %v537
  %v1531 = vunpack.c.l.b16 %v538
  %v1532 = vunpack.c.h.b16 %v538
  %v1533 = vunpack.c.l.b16 %v539
  %v1534 = vunpack.c.h.b16 %v539
  %v1535 = vunpack.c.l.b16 %v540
  %v1536 = vunpack.c.h.b16 %v540
  %v1537 = vunpack.c.l.b16 %v541
  %v1538 = vunpack.c.h.b16 %v541
  %v1539 = vunpack.c.l.b16 %v542
  %v1540 = vunpack.c.h.b16 %v542
  %v1541 = vunpack.c.l.b16 %v543
  %v1542 = vunpack.c.h.b16 %v543
  %v1543 = vunpack.c.l.b16 %v544
  %v1544 = vunpack.c.h.b16 %v544
  %v1545 = vunpack.c.l.b16 %v545
  %v1546 = vunpack.c.h.b16 %v545
  %v1547 = vunpack.c.l.b16 %v546
  %v1548 = vunpack.c.h.b16 %v546
  %v1549 = vunpack.c.l.b16 %v547
  %v1550 = vunpack.c.h.b16 %v547
  %v1551 = vunpack.c.l.b16 %v548
  %v1552 = vunpack.c.h.b16 %v548
  %v1553 = vunpack.c.l.b16 %v549
  %v1554 = vunpack.c.h.b16 %v549
  %v1555 = vunpack.c.l.b16 %v550
  %v1556 = vunpack.c.h.b16 %v550
  %v1557 = vunpack.c.l.b16 %v551
  %v1558 = vunpack.c.h.b16 %v551
  %v1559 = vunpack.c.l.b16 %v552
  %v1560 = vunpack.c.h.b16 %v552
  %v1561 = vunpack.c.l.b16 %v553
  %v1562 = vunpack.c.h.b16 %v553
  %v1563 = vunpack.c.l.b16 %v554
  %v1564 = vunpack.c.h.b16 %v554
  %v1565 = vunpack.c.l.b16 %v555
  %v1566 = vunpack.c.h.b16 %v555
  %v1567 = vunpack.c.l.b16 %v556
  %v1568 = vunpack.c.h.b16 %v556
  %v1569 = vunpack.c.l.b16 %v557
  %v1570 = vunpack.c.h.b16 %v557
  %v1571 = vunpack.c.l.b16 %v558
  %v1572 = vunpack.c.h.b16 %v558
  %v1573 = vunpack.c.l.b16 %v559
  %v1574 = vunpack.c.h.b16 %v559
  %v1575 = vunpack.c.l.b16 %v560
  %v1576 = vunpack.c.h.b16 %v560
  %v1577 = vunpack.c.l.b16 %v561
  %v1578 = vunpack.c.h.b16 %v561
  %v1579 = vunpack.c.l.b16 %v562
  %v1580 = vunpack.c.h.b16 %v562
  %v1581 = vunpack.c.l.b16 %v563
  %v1582 = vunpack.c.h.b16 %v563
  %v1583 = vunpack.c.l.b16 %v564
  %v1584 = vunpack.c.h.b16 %v564
  %v1585 = vunpack.c.l.b16 %v565
  %v1586 = vunpack.c.h.b16 %v565
  %v1587 = vunpack.c.l.b16 %v566
  %v1588 = vunpack.c.h.b16 %v566
  %v1589 = vunpack.c.l.b16 %v567
  %v1590 = vunpack.c.h.b16 %v567
  %v1591 = vunpack.c.l.b16 %v568
  %v1592 = vunpack.c.h.b16 %v568
  %v1593 = vunpack.c.l.b16 %v569
  %v1594 = vunpack.c.h.b16 %v569
  %v1595 = vunpack.c.l.b16 %v570
  %v1596 = vunpack.c.h.b16 %v570
  %v1597 = vunpack.c.l.b16 %v571
  %v1598 = vunpack.c.h.b16 %v571
  %v1599 = vunpack.c.l.b16 %v572
  %v1600 = vunpack.c.h.b16 %v572
  %v1601 = vunpack.c.l.b16 %v573
  %v1602 = vunpack.c.h.b16 %v573
  %v1603 = vunpack.c.l.b16 %v574
  %v1604 = vunpack.c.h.b16 %v574
  %v1605 = vunpack.c.l.b16 %v575
  %v1606 = vunpack.c.h.b16 %v575
  %v1607 = vunpack.c.l.b16 %v576
  %v1608 = vunpack.c.h.b16 %v576
  %v1609 = vunpack.c.l.b16 %v577
  %v1610 = vunpack.c.h.b16 %v577
  %v1611 = vunpack.c.l.b16 %v578
  %v1612 = vunpack.c.h.b16 %v578
  %v1613 = vunpack.c.l.b16 %v579
  %v1614 = vunpack.c.h.b16 %v579
  %v1615 = vunpack.c.l.b16 %v580
  %v1616 = vunpack.c.h.b16 %v580
  %v1617 = vunpack.c.l.b16 %v581
  %v1618 = vunpack.c.h.b16 %v581
  %v1619 = vunpack.c.l.b16 %v582
  %v1620 = vunpack.c.h.b16 %v582
  %v1621 = vunpack.c.l.b16 %v583
  %v1622 = vunpack.c.h.b16 %v583
  %v1623 = vunpack.c.l.b16 %v584
  %v1624 = vunpack.c.h.b16 %v584
  %v1625 = vunpack.c.l.b16 %v585
  %v1626 = vunpack.c.h.b16 %v585
  %v1627 = vunpack.c.l.b16 %v586
  %v1628 = vunpack.c.h.b16 %v586
  %v1629 = vunpack.c.l.b16 %v587
  %v1630 = vunpack.c.h.b16 %v587
  %v1631 = vunpack.c.l.b16 %v588
  %v1632 = vunpack.c.h.b16 %v588
  %v1633 = vunpack.c.l.b16 %v589
  %v1634 = vunpack.c.h.b16 %v589
  %v1635 = vunpack.c.l.b16 %v590
  %v1636 = vunpack.c.h.b16 %v590
  %v1637 = vunpack.c.l.b16 %v591
  %v1638 = vunpack.c.h.b16 %v591
  %v1639 = vunpack.c.l.b16 %v592
  %v1640 = vunpack.c.h.b16 %v592
  %v1641 = vunpack.c.l.b16 %v593
  %v1642 = vunpack.c.h.b16 %v593
  %v1643 = vunpack.c.l.b16 %v594
  %v1644 = vunpack.c.h.b16 %v594
  %v1645 = vunpack.c.l.b16 %v595
  %v1646 = vunpack.c.h.b16 %v595
  %v1647 = vunpack.c.l.b16 %v596
  %v1648 = vunpack.c.h.b16 %v596
  %v1649 = vunpack.c.l.b16 %v597
  %v1650 = vunpack.c.h.b16 %v597
  %v1651 = vunpack.c.l.b16 %v598
  %v1652 = vunpack.c.h.b16 %v598
  %v1653 = vunpack.c.l.b16 %v599
  %v1654 = vunpack.c.h.b16 %v599
  %v1655 = vunpack.c.l.b16 %v600
  %v1656 = vunpack.c.h.b16 %v600
  %v1657 = vunpack.c.l.b16 %v601
  %v1658 = vunpack.c.h.b16 %v601
  %v1659 = vunpack.c.l.b16 %v602
  %v1660 = vunpack.c.h.b16 %v602
  %v1661 = vunpack.c.l.b16 %v603
  %v1662 = vunpack.c.h.b16 %v603
  %v1663 = vunpack.c.l.b16 %v604
  %v1664 = vunpack.c.h.b16 %v604
  %v1665 = vunpack.c.l.b16 %v605
  %v1666 = vunpack.c.h.b16 %v605
  %v1667 = vunpack.c.l.b16 %v606
  %v1668 = vunpack.c.h.b16 %v606
  %v1669 = vunpack.c.l.b16 %v607
  %v1670 = vunpack.c.h.b16 %v607
  %v1671 = vunpack.c.l.b16 %v608
  %v1672 = vunpack.c.h.b16 %v608
  %v1673 = vunpack.c.l.b16 %v609
  %v1674 = vunpack.c.h.b16 %v609
  %v1675 = vunpack.c.l.b16 %v610
  %v1676 = vunpack.c.h.b16 %v610
  %v1677 = vunpack.c.l.b16 %v611
  %v1678 = vunpack.c.h.b16 %v611
  %v1679 = vunpack.c.l.b16 %v612
  %v1680 = vunpack.c.h.b16 %v612
  %v1681 = vunpack.c.l.b16 %v613
  %v1682 = vunpack.c.h.b16 %v613
  %v1683 = vunpack.c.l.b16 %v614
  %v1684 = vunpack.c.h.b16 %v614
  %v1685 = vunpack.c.l.b16 %v615
  %v1686 = vunpack.c.h.b16 %v615
  %v1687 = vunpack.c.l.b16 %v616
  %v1688 = vunpack.c.h.b16 %v616
  %v1689 = vunpack.c.l.b16 %v617
  %v1690 = vunpack.c.h.b16 %v617
  %v1691 = vunpack.c.l.b16 %v618
  %v1692 = vunpack.c.h.b16 %v618
  %v1693 = vunpack.c.l.b16 %v619
  %v1694 = vunpack.c.h.b16 %v619
  %v1695 = vunpack.c.l.b16 %v620
  %v1696 = vunpack.c.h.b16 %v620
  %v1697 = vunpack.c.l.b16 %v621
  %v1698 = vunpack.c.h.b16 %v621
  %v1699 = vunpack.c.l.b16 %v622
  %v1700 = vunpack.c.h.b16 %v622
  %v1701 = vunpack.c.l.b16 %v623
  %v1702 = vunpack.c.h.b16 %v623
  %v1703 = vunpack.c.l.b16 %v624
  %v1704 = vunpack.c.h.b16 %v624
  %v1705 = vunpack.c.l.b16 %v625
  %v1706 = vunpack.c.h.b16 %v625
  %v1707 = vunpack.c.l.b16 %v626
  %v1708 = vunpack.c.h.b16 %v626
  %v1709 = vunpack.c.l.b16 %v627
  %v1710 = vunpack.c.h.b16 %v627
  %v1711 = vunpack.c.l.b16 %v628
  %v1712 = vunpack.c.h.b16 %v628
  %v1713 = vunpack.c.l.b16 %v629
  %v1714 = vunpack.c.h.b16 %v629
  %v1715 = vunpack.c.l.b16 %v630
  %v1716 = vunpack.c.h.b16 %v630
  %v1717 = vunpack.c.l.b16 %v631
  %v1718 = vunpack.c.h.b16 %v631
  %v1719 = vunpack.c.l.b16 %v632
  %v1720 = vunpack.c.h.b16 %v632
  %v1721 = vunpack.c.l.b16 %v633
  %v1722 = vunpack.c.h.b16 %v633
  %v1723 = vunpack.c.l.b16 %v634
  %v1724 = vunpack.c.h.b16 %v634
  %v1725 = vunpack.c.l.b16 %v635
  %v1726 = vunpack.c.h.b16 %v635
  %v1727 = vunpack.c.l.b16 %v636
  %v1728 = vunpack.c.h.b16 %v636
  %v1729 = vunpack.c.l.b16 %v637
  %v1730 = vunpack.c.h.b16 %v637
  %v1731 = vunpack.c.l.b16 %v638
  %v1732 = vunpack.c.h.b16 %v638
  %v1733 = vunpack.c.l.b16 %v639
  %v1734 = vunpack.c.h.b16 %v639
  %v1735 = vunpack.c.l.b16 %v640
  %v1736 = vunpack.c.h.b16 %v640
  %v1737 = vunpack.c.l.b16 %v641
  %v1738 = vunpack.c.h.b16 %v641
  %v1739 = vunpack.c.l.b16 %v642
  %v1740 = vunpack.c.h.b16 %v642
  %v1741 = vunpack.c.l.b16 %v643
  %v1742 = vunpack.c.h.b16 %v643
  %v1743 = vunpack.c.l.b16 %v644
  %v1744 = vunpack.c.h.b16 %v644
  %v1745 = vunpack.c.l.b16 %v645
  %v1746 = vunpack.c.h.b16 %v645
  %v1747 = vunpack.c.l.b16 %v646
  %v1748 = vunpack.c.h.b16 %v646
  %v1749 = vunpack.c.l.b16 %v647
  %v1750 = vunpack.c.h.b16 %v647
  %v1751 = vunpack.c.l.b16 %v648
  %v1752 = vunpack.c.h.b16 %v648
  %v1753 = vunpack.c.l.b16 %v649
  %v1754 = vunpack.c.h.b16 %v649
  %v1755 = vunpack.c.l.b16 %v650
  %v1756 = vunpack.c.h.b16 %v650
  %v1757 = vunpack.c.l.b16 %v651
  %v1758 = vunpack.c.h.b16 %v651
  %v1759 = vunpack.c.l.b16 %v652
  %v1760 = vunpack.c.h.b16 %v652
  %v1761 = vunpack.c.l.b16 %v653
  %v1762 = vunpack.c.h.b16 %v653
  %v1763 = vunpack.c.l.b16 %v654
  %v1764 = vunpack.c.h.b16 %v654
  %v1765 = vunpack.c.l.b16 %v655
  %v1766 = vunpack.c.h.b16 %v655
  %v1767 = vunpack.c.l.b16 %v656
  %v1768 = vunpack.c.h.b16 %v656
  %v1769 = vunpack.c.l.b16 %v657
  %v1770 = vunpack.c.h.b16 %v657
  %v1771 = vunpack.c.l.b16 %v658
  %v1772 = vunpack.c.h.b16 %v658
  %v1773 = vunpack.c.l.b16 %v659
  %v1774 = vunpack.c.h.b16 %v659
  %v1775 = vunpack.c.l.b16 %v660
  %v1776 = vunpack.c.h.b16 %v660
  %v1777 = vunpack.c.l.b16 %v661
  %v1778 = vunpack.c.h.b16 %v661
  %v1779 = vunpack.c.l.b16 %v662
  %v1780 = vunpack.c.h.b16 %v662
  %v1781 = vunpack.c.l.b16 %v663
  %v1782 = vunpack.c.h.b16 %v663
  %v1783 = vunpack.c.l.b16 %v664
  %v1784 = vunpack.c.h.b16 %v664
  %v1785 = vunpack.c.l.b16 %v665
  %v1786 = vunpack.c.h.b16 %v665
  %v1787 = vunpack.c.l.b16 %v666
  %v1788 = vunpack.c.h.b16 %v666
  %v1789 = vunpack.c.l.b16 %v667
  %v1790 = vunpack.c.h.b16 %v667
  %v1791 = vunpack.c.l.b16 %v668
  %v1792 = vunpack.c.h.b16 %v668
  %v1793 = vunpack.c.l.b16 %v669
  %v1794 = vunpack.c.h.b16 %v669
  %v1795 = vunpack.c.l.b16 %v670
  %v1796 = vunpack.c.h.b16 %v670
  %v1797 = vunpack.c.l.b16 %v671
  %v1798 = vunpack.c.h.b16 %v671
  %v1799 = vunpack.c.l.b16 %v672
  %v1800 = vunpack.c.h.b16 %v672
  %v1801 = vunpack.c.l.b16 %v673
  %v1802 = vunpack.c.h.b16 %v673
  %v1803 = vunpack.c.l.b16 %v674
  %v1804 = vunpack.c.h.b16 %v674
  %v1805 = vunpack.c.l.b16 %v675
  %v1806 = vunpack.c.h.b16 %v675
  %v1807 = vunpack.c.l.b16 %v676
  %v1808 = vunpack.c.h.b16 %v676
  %v1809 = vunpack.c.l.b16 %v677
  %v1810 = vunpack.c.h.b16 %v677
  %v1811 = vunpack.c.l.b16 %v678
  %v1812 = vunpack.c.h.b16 %v678
  %v1813 = vunpack.c.l.b16 %v679
  %v1814 = vunpack.c.h.b16 %v679
  %v1815 = vunpack.c.l.b16 %v680
  %v1816 = vunpack.c.h.b16 %v680
  %v1817 = vunpack.c.l.b16 %v681
  %v1818 = vunpack.c.h.b16 %v681
  %v1819 = vunpack.c.l.b16 %v682
  %v1820 = vunpack.c.h.b16 %v682
  %v1821 = vunpack.c.l.b16 %v683
  %v1822 = vunpack.c.h.b16 %v683
  %v1823 = vunpack.c.l.b16 %v684
  %v1824 = vunpack.c.h.b16 %v684
  %v1825 = vunpack.c.l.b16 %v685
  %v1826 = vunpack.c.h.b16 %v685
  %v1827 = vunpack.c.l.b16 %v686
  %v1828 = vunpack.c.h.b16 %v686
  %v1829 = vunpack.c.l.b16 %v687
  %v1830 = vunpack.c.h.b16 %v687
  %v1831 = vunpack.c.l.b16 %v688
  %v1832 = vunpack.c.h.b16 %v688
  %v1833 = vunpack.c.l.b16 %v689
  %v1834 = vunpack.c.h.b16 %v689
  %v1835 = vunpack.c.l.b16 %v690
  %v1836 = vunpack.c.h.b16 %v690
  %v1837 = vunpack.c.l.b16 %v691
  %v1838 = vunpack.c.h.b16 %v691
  %v1839 = vunpack.c.l.b16 %v692
  %v1840 = vunpack.c.h.b16 %v692
  %v1841 = vunpack.c.l.b16 %v693
  %v1842 = vunpack.c.h.b16 %v693
  %v1843 = vunpack.c.l.b16 %v694
  %v1844 = vunpack.c.h.b16 %v694
  %v1845 = vunpack.c.l.b16 %v695
  %v1846 = vunpack.c.h.b16 %v695
  %v1847 = vunpack.c.l.b16 %v696
  %v1848 = vunpack.c.h.b16 %v696
  %v1849 = vunpack.c.l.b16 %v697
  %v1850 = vunpack.c.h.b16 %v697
  %v1851 = vunpack.c.l.b16 %v698
  %v1852 = vunpack.c.h.b16 %v698
  %v1853 = vunpack.c.l.b16 %v699
  %v1854 = vunpack.c.h.b16 %v699
  %v1855 = vunpack.c.l.b16 %v700
  %v1856 = vunpack.c.h.b16 %v700
  %v1857 = vunpack.c.l.b16 %v701
  %v1858 = vunpack.c.h.b16 %v701
  %v1859 = vunpack.c.l.b16 %v702
  %v1860 = vunpack.c.h.b16 %v702
  %v1861 = vunpack.c.l.b16 %v703
  %v1862 = vunpack.c.h.b16 %v703
  %v1863 = vunpack.c.l.b16 %v704
  %v1864 = vunpack.c.h.b16 %v704
  %v1865 = vunpack.c.l.b16 %v705
  %v1866 = vunpack.c.h.b16 %v705
  %v1867 = vunpack.c.l.b16 %v706
  %v1868 = vunpack.c.h.b16 %v706
  %v1869 = vunpack.c.l.b16 %v707
  %v1870 = vunpack.c.h.b16 %v707
  %v1871 = vunpack.c.l.b16 %v708
  %v1872 = vunpack.c.h.b16 %v708
  %v1873 = vunpack.c.l.b16 %v709
  %v1874 = vunpack.c.h.b16 %v709
  %v1875 = vunpack.c.l.b16 %v710
  %v1876 = vunpack.c.h.b16 %v710
  %v1877 = vunpack.c.l.b16 %v711
  %v1878 = vunpack.c.h.b16 %v711
  %v1879 = vunpack.c.l.b16 %v712
  %v1880 = vunpack.c.h.b16 %v712
  %v1881 = vunpack.c.l.b16 %v713
  %v1882 = vunpack.c.h.b16 %v713
  %v1883 = vunpack.c.l.b16 %v714
  %v1884 = vunpack.c.h.b16 %v714
  %v1885 = vunpack.c.l.b16 %v715
  %v1886 = vunpack.c.h.b16 %v715
  %v1887 = vunpack.c.l.b16 %v716
  %v1888 = vunpack.c.h.b16 %v716
  %v1889 = vunpack.c.l.b16 %v717
  %v1890 = vunpack.c.h.b16 %v717
  %v1891 = vunpack.c.l.b16 %v718
  %v1892 = vunpack.c.h.b16 %v718
  %v1893 = vunpack.c.l.b16 %v719
  %v1894 = vunpack.c.h.b16 %v719
  %v1895 = vunpack.c.l.b16 %v720
  %v1896 = vunpack.c.h.b16 %v720
  %v1897 = vunpack.c.l.b16 %v721
  %v1898 = vunpack.c.h.b16 %v721
  %v1899 = vunpack.c.l.b16 %v722
  %v1900 = vunpack.c.h.b16 %v722
  %v1901 = vunpack.c.l.b16 %v723
  %v1902 = vunpack.c.h.b16 %v723
  %v1903 = vunpack.c.l.b16 %v724
  %v1904 = vunpack.c.h.b16 %v724
  %v1905 = vunpack.c.l.b16 %v725
  %v1906 = vunpack.c.h.b16 %v725
  %v1907 = vunpack.c.l.b16 %v726
  %v1908 = vunpack.c.h.b16 %v726
  %v1909 = vunpack.c.l.b16 %v727
  %v1910 = vunpack.c.h.b16 %v727
  %v1911 = vunpack.c.l.b16 %v728
  %v1912 = vunpack.c.h.b16 %v728
  %v1913 = vunpack.c.l.b16 %v729
  %v1914 = vunpack.c.h.b16 %v729
  %v1915 = vunpack.c.l.b16 %v730
  %v1916 = vunpack.c.h.b16 %v730
  %v1917 = vunpack.c.l.b16 %v731
  %v1918 = vunpack.c.h.b16 %v731
  %v1919 = vunpack.c.l.b16 %v732
  %v1920 = vunpack.c.h.b16 %v732
  %v1921 = vunpack.c.l.b16 %v733
  %v1922 = vunpack.c.h.b16 %v733
  %v1923 = vunpack.c.l.b16 %v734
  %v1924 = vunpack.c.h.b16 %v734
  %v1925 = vunpack.c.l.b16 %v735
  %v1926 = vunpack.c.h.b16 %v735
  %v1927 = vunpack.c.l.b16 %v736
  %v1928 = vunpack.c.h.b16 %v736
  %v1929 = vunpack.c.l.b16 %v737
  %v1930 = vunpack.c.h.b16 %v737
  %v1931 = vunpack.c.l.b16 %v738
  %v1932 = vunpack.c.h.b16 %v738
  %v1933 = vunpack.c.l.b16 %v739
  %v1934 = vunpack.c.h.b16 %v739
  %v1935 = vunpack.c.l.b16 %v740
  %v1936 = vunpack.c.h.b16 %v740
  %v1937 = vunpack.c.l.b16 %v741
  %v1938 = vunpack.c.h.b16 %v741
  %v1939 = vunpack.c.l.b16 %v742
  %v1940 = vunpack.c.h.b16 %v742
  %v1941 = vunpack.c.l.b16 %v743
  %v1942 = vunpack.c.h.b16 %v743
  %v1943 = vunpack.c.l.b16 %v744
  %v1944 = vunpack.c.h.b16 %v744
  %v1945 = vunpack.c.l.b16 %v745
  %v1946 = vunpack.c.h.b16 %v745
  %v1947 = vunpack.c.l.b16 %v746
  %v1948 = vunpack.c.h.b16 %v746
  %v1949 = vunpack.c.l.b16 %v747
  %v1950 = vunpack.c.h.b16 %v747
  %v1951 = vunpack.c.l.b16 %v748
  %v1952 = vunpack.c.h.b16 %v748
  %v1953 = vunpack.c.l.b16 %v749
  %v1954 = vunpack.c.h.b16 %v749
  %v1955 = vunpack.c.l.b16 %v750
  %v1956 = vunpack.c.h.b16 %v750
  %v1957 = vunpack.c.l.b16 %v751
  %v1958 = vunpack.c.h.b16 %v751
  %v1959 = vunpack.c.l.b16 %v752
  %v1960 = vunpack.c.h.b16 %v752
  %v1961 = vunpack.c.l.b16 %v753
  %v1962 = vunpack.c.h.b16 %v753
  %v1963 = vunpack.c.l.b16 %v754
  %v1964 = vunpack.c.h.b16 %v754
  %v1965 = vunpack.c.l.b16 %v755
  %v1966 = vunpack.c.h.b16 %v755
  %v1967 = vunpack.c.l.b16 %v756
  %v1968 = vunpack.c.h.b16 %v756
  %v1969 = vunpack.c.l.b16 %v757
  %v1970 = vunpack.c.h.b16 %v757
  %v1971 = vunpack.c.l.b16 %v758
  %v1972 = vunpack.c.h.b16 %v758
  %v1973 = vunpack.c.l.b16 %v759
  %v1974 = vunpack.c.h.b16 %v759
  %v1975 = vunpack.c.l.b16 %v760
  %v1976 = vunpack.c.h.b16 %v760
  %v1977 = vunpack.c.l.b16 %v761
  %v1978 = vunpack.c.h.b16 %v761
  %v1979 = vunpack.c.l.b16 %v762
  %v1980 = vunpack.c.h.b16 %v762
  %v1981 = vpack.c.b16 %v1205, %v1197
  %v1982 = vpack.c.b16 %v1206, %v1198
  %v1983 = vpack.c.b16 %v1207, %v1199
  %v1984 = vpack.c.b16 %v1208, %v1200
  %v1985 = vpack.c.b16 %v1209, %v1201
  %v1986 = vpack.c.b16 %v1210, %v1202
  %v1987 = vpack.c.b16 %v1211, %v1203
  %v1988 = vpack.c.b16 %v1212, %v1204
  %v1989 = vpack.c.b16 %v1221, %v1213
  %v1990 = vpack.c.b16 %v1222, %v1214
  %v1991 = vpack.c.b16 %v1223, %v1215
  %v1992 = vpack.c.b16 %v1224, %v1216
  %v1993 = vpack.c.b16 %v1225, %v1217
  %v1994 = vpack.c.b16 %v1226, %v1218
  %v1995 = vpack.c.b16 %v1227, %v1219
  %v1996 = vpack.c.b16 %v1228, %v1220
  %v1997 = vpack.c.b16 %v1237, %v1229
  %v1998 = vpack.c.b16 %v1238, %v1230
  %v1999 = vpack.c.b16 %v1239, %v1231
  %v2000 = vpack.c.b16 %v1240, %v1232
  %v2001 = vpack.c.b16 %v1241, %v1233
  %v2002 = vpack.c.b16 %v1242, %v1234
  %v2003 = vpack.c.b16 %v1243, %v1235
  %v2004 = vpack.c.b16 %v1244, %v1236
  %v2005 = vpack.c.b16 %v1253, %v1245
  %v2006 = vpack.c.b16 %v1254, %v1246
  %v2007 = vpack.c.b16 %v1255, %v1247
  %v2008 = vpack.c.b16 %v1256, %v1248
  %v2009 = vpack.c.b16 %v1257, %v1249
  %v2010 = vpack.c.b16 %v1258, %v1250
  %v2011 = vpack.c.b16 %v1259, %v1251
  %v2012 = vpack.c.b16 %v1260, %v1252
  %v2013 = vpack.c.b16 %v1269, %v1261
  %v2014 = vpack.c.b16 %v1270, %v1262
  %v2015 = vpack.c.b16 %v1271, %v1263
  %v2016 = vpack.c.b16 %v1272, %v1264
  %v2017 = vpack.c.b16 %v1273, %v1265
  %v2018 = vpack.c.b16 %v1274, %v1266
  %v2019 = vpack.c.b16 %v1275, %v1267
  %v2020 = vpack.c.b16 %v1276, %v1268
  %v2021 = vpack.c.b16 %v1285, %v1277
  %v2022 = vpack.c.b16 %v1286, %v1278
  %v2023 = vpack.c.b16 %v1287, %v1279
  %v2024 = vpack.c.b16 %v1288, %v1280
  %v2025 = vpack.c.b16 %v1289, %v1281
  %v2026 = vpack.c.b16 %v1290, %v1282
  %v2027 = vpack.c.b16 %v1291, %v1283
  %v2028 = vpack.c.b16 %v1292, %v1284
  %v2029 = vpack.c.b16 %v1301, %v1293
  %v2030 = vpack.c.b16 %v1302, %v1294
  %v2031 = vpack.c.b16 %v1303, %v1295
  %v2032 = vpack.c.b16 %v1304, %v1296
  %v2033 = vpack.c.b16 %v1305, %v1297
  %v2034 = vpack.c.b16 %v1306, %v1298
  %v2035 = vpack.c.b16 %v1307, %v1299
  %v2036 = vpack.c.b16 %v1308, %v1300
  %v2037 = vpack.c.b16 %v1317, %v1309
  %v2038 = vpack.c.b16 %v1318, %v1310
  %v2039 = vpack.c.b16 %v1319, %v1311
  %v2040 = vpack.c.b16 %v1320, %v1312
  %v2041 = vpack.c.b16 %v1321, %v1313
  %v2042 = vpack.c.b16 %v1322, %v1314
  %v2043 = vpack.c.b16 %v1323, %v1315
  %v2044 = vpack.c.b16 %v1324, %v1316
  %v2045 = vpack.c.b16 %v1333, %v1325
  %v2046 = vpack.c.b16 %v1334, %v1326
  %v2047 = vpack.c.b16 %v1335, %v1327
  %v2048 = vpack.c.b16 %v1336, %v1328
  %v2049 = vpack.c.b16 %v1337, %v1329
  %v2050 = vpack.c.b16 %v1338, %v1330
  %v2051 = vpack.c.b16 %v1339, %v1331
  %v2052 = vpack.c.b16 %v1340, %v1332
  %v2053 = vpack.c.b16 %v1349, %v1341
  %v2054 = vpack.c.b16 %v1350, %v1342
  %v2055 = vpack.c.b16 %v1351, %v1343
  %v2056 = vpack.c.b16 %v1352, %v1344
  %v2057 = vpack.c.b16 %v1353, %v1345
  %v2058 = vpack.c.b16 %v1354, %v1346
  %v2059 = vpack.c.b16 %v1355, %v1347
  %v2060 = vpack.c.b16 %v1356, %v1348
  %v2061 = vpack.c.b16 %v1365, %v1357
  %v2062 = vpack.c.b16 %v1366, %v1358
  %v2063 = vpack.c.b16 %v1367, %v1359
  %v2064 = vpack.c.b16 %v1368, %v1360
  %v2065 = vpack.c.b16 %v1369, %v1361
  %v2066 = vpack.c.b16 %v1370, %v1362
  %v2067 = vpack.c.b16 %v1371, %v1363
  %v2068 = vpack.c.b16 %v1372, %v1364
  %v2069 = vpack.c.b16 %v1381, %v1373
  %v2070 = vpack.c.b16 %v1382, %v1374
  %v2071 = vpack.c.b16 %v1383, %v1375
  %v2072 = vpack.c.b16 %v1384, %v1376
  %v2073 = vpack.c.b16 %v1385, %v1377
  %v2074 = vpack.c.b16 %v1386, %v1378
  %v2075 = vpack.c.b16 %v1387, %v1379
  %v2076 = vpack.c.b16 %v1388, %v1380
  %v2077 = vpack.c.b16 %v1397, %v1389
  %v2078 = vpack.c.b16 %v1398, %v1390
  %v2079 = vpack.c.b16 %v1399, %v1391
  %v2080 = vpack.c.b16 %v1400, %v1392
  %v2081 = vpack.c.b16 %v1401, %v1393
  %v2082 = vpack.c.b16 %v1402, %v1394
  %v2083 = vpack.c.b16 %v1403, %v1395
  %v2084 = vpack.c.b16 %v1404, %v1396
  %v2085 = vpack.c.b16 %v1413, %v1405
  %v2086 = vpack.c.b16 %v1414, %v1406
  %v2087 = vpack.c.b16 %v1415, %v1407
  %v2088 = vpack.c.b16 %v1416, %v1408
  %v2089 = vpack.c.b16 %v1417, %v1409
  %v2090 = vpack.c.b16 %v1418, %v1410
  %v2091 = vpack.c.b16 %v1419, %v1411
  %v2092 = vpack.c.b16 %v1420, %v1412
  %v2093 = vpack.c.b16 %v1429, %v1421
  %v2094 = vpack.c.b16 %v1430, %v1422
  %v2095 = vpack.c.b16 %v1431, %v1423
  %v2096 = vpack.c.b16 %v1432, %v1424
  %v2097 = vpack.c.b16 %v1433, %v1425
  %v2098 = vpack.c.b16 %v1434, %v1426
  %v2099 = vpack.c.b16 %v1435, %v1427
  %v2100 = vpack.c.b16 %v1436, %v1428
  %v2101 = vpack.c.b16 %v1445, %v1437
  %v2102 = vpack.c.b16 %v1446, %v1438
  %v2103 = vpack.c.b16 %v1447, %v1439
  %v2104 = vpack.c.b16 %v1448, %v1440
  %v2105 = vpack.c.b16 %v1449, %v1441
  %v2106 = vpack.c.b16 %v1450, %v1442
  %v2107 = vpack.c.b16 %v1451, %v1443
  %v2108 = vpack.c.b16 %v1452, %v1444
  %v2109 = vpack.c.b16 %v1461, %v1453
  %v2110 = vpack.c.b16 %v1462, %v1454
  %v2111 = vpack.c.b16 %v1463, %v1455
  %v2112 = vpack.c.b16 %v1464, %v1456
  %v2113 = vpack.c.b16 %v1465, %v1457
  %v2114 = vpack.c.b16 %v1466, %v1458
  %v2115 = vpack.c.b16 %v1467, %v1459
  %v2116 = vpack.c.b16 %v1468, %v1460
  %v2117 = vpack.c.b16 %v1477, %v1469
  %v2118 = vpack.c.b16 %v1478, %v1470
  %v2119 = vpack.c.b16 %v1479, %v1471
  %v2120 = vpack.c.b16 %v1480, %v1472
  %v2121 = vpack.c.b16 %v1481, %v1473
  %v2122 = vpack.c.b16 %v1482, %v1474
  %v2123 = vpack.c.b16 %v1483, %v1475
  %v2124 = vpack.c.b16 %v1484, %v1476
  %v2125 = vpack.c.b16 %v1493, %v1485
  %v2126 = vpack.c.b16 %v1494, %v1486
  %v2127 = vpack.c.b16 %v1495, %v1487
  %v2128 = vpack.c.b16 %v1496, %v1488
  %v2129 = vpack.c.b16 %v1497, %v1489
  %v2130 = vpack.c.b16 %v1498, %v1490
  %v2131 = vpack.c.b16 %v1499, %v1491
  %v2132 = vpack.c.b16 %v1500, %v1492
  %v2133 = vpack.c.b16 %v1509, %v1501
  %v2134 = vpack.c.b16 %v1510, %v1502
  %v2135 = vpack.c.b16 %v1511, %v1503
  %v2136 = vpack.c.b16 %v1512, %v1504
  %v2137 = vpack.c.b16 %v1513, %v1505
  %v2138 = vpack.c.b16 %v1514, %v1506
  %v2139 = vpack.c.b16 %v1515, %v1507
  %v2140 = vpack.c.b16 %v1516, %v1508
  %v2141 = vpack.c.b16 %v1525, %v1517
  %v2142 = vpack.c.b16 %v1526, %v1518
  %v2143 = vpack.c.b16 %v1527, %v1519
  %v2144 = vpack.c.b16 %v1528, %v1520
  %v2145 = vpack.c.b16 %v1529, %v1521
  %v2146 = vpack.c.b16 %v1530, %v1522
  %v2147 = vpack.c.b16 %v1531, %v1523
  %v2148 = vpack.c.b16 %v1532, %v1524
  %v2149 = vpack.c.b16 %v1541, %v1533
  %v2150 = vpack.c.b16 %v1542, %v1534
  %v2151 = vpack.c.b16 %v1543, %v1535
  %v2152 = vpack.c.b16 %v1544, %v1536
  %v2153 = vpack.c.b16 %v1545, %v1537
  %v2154 = vpack.c.b16 %v1546, %v1538
  %v2155 = vpack.c.b16 %v1547, %v1539
  %v2156 = vpack.c.b16 %v1548, %v1540
  %v2157 = vpack.c.b16 %v1557, %v1549
  %v2158 = vpack.c.b16 %v1558, %v1550
  %v2159 = vpack.c.b16 %v1559, %v1551
  %v2160 = vpack.c.b16 %v1560, %v1552
  %v2161 = vpack.c.b16 %v1561, %v1553
  %v2162 = vpack.c.b16 %v1562, %v1554
  %v2163 = vpack.c.b16 %v1563, %v1555
  %v2164 = vpack.c.b16 %v1564, %v1556
  %v2165 = vpack.c.b16 %v1573, %v1565
  %v2166 = vpack.c.b16 %v1574, %v1566
  %v2167 = vpack.c.b16 %v1575, %v1567
  %v2168 = vpack.c.b16 %v1576, %v1568
  %v2169 = vpack.c.b16 %v1577, %v1569
  %v2170 = vpack.c.b16 %v1578, %v1570
  %v2171 = vpack.c.b16 %v1579, %v1571
  %v2172 = vpack.c.b16 %v1580, %v1572
  %v2173 = vpack.c.b16 %v1589, %v1581
  %v2174 = vpack.c.b16 %v1590, %v1582
  %v2175 = vpack.c.b16 %v1591, %v1583
  %v2176 = vpack.c.b16 %v1592, %v1584
  %v2177 = vpack.c.b16 %v1593, %v1585
  %v2178 = vpack.c.b16 %v1594, %v1586
  %v2179 = vpack.c.b16 %v1595, %v1587
  %v2180 = vpack.c.b16 %v1596, %v1588
  %v2181 = vpack.c.b16 %v1605, %v1597
  %v2182 = vpack.c.b16 %v1606, %v1598
  %v2183 = vpack.c.b16 %v1607, %v1599
  %v2184 = vpack.c.b16 %v1608, %v1600
  %v2185 = vpack.c.b16 %v1609, %v1601
  %v2186 = vpack.c.b16 %v1610, %v1602
  %v2187 = vpack.c.b16 %v1611, %v1603
  %v2188 = vpack.c.b16 %v1612, %v1604
  %v2189 = vpack.c.b16 %v1621, %v1613
  %v2190 = vpack.c.b16 %v1622, %v1614
  %v2191 = vpack.c.b16 %v1623, %v1615
  %v2192 = vpack.c.b16 %v1624, %v1616
  %v2193 = vpack.c.b16 %v1625, %v1617
  %v2194 = vpack.c.b16 %v1626, %v1618
  %v2195 = vpack.c.b16 %v1627, %v1619
  %v2196 = vpack.c.b16 %v1628, %v1620
  %v2197 = vpack.c.b16 %v1637, %v1629
  %v2198 = vpack.c.b16 %v1638, %v1630
  %v2199 = vpack.c.b16 %v1639, %v1631
  %v2200 = vpack.c.b16 %v1640, %v1632
  %v2201 = vpack.c.b16 %v1641, %v1633
  %v2202 = vpack.c.b16 %v1642, %v1634
  %v2203 = vpack.c.b16 %v1643, %v1635
  %v2204 = vpack.c.b16 %v1644, %v1636
  %v2205 = vpack.c.b16 %v1653, %v1645
  %v2206 = vpack.c.b16 %v1654, %v1646
  %v2207 = vpack.c.b16 %v1655, %v1647
  %v2208 = vpack.c.b16 %v1656, %v1648
  %v2209 = vpack.c.b16 %v1657, %v1649
  %v2210 = vpack.c.b16 %v1658, %v1650
  %v2211 = vpack.c.b16 %v1659, %v1651
  %v2212 = vpack.c.b16 %v1660, %v1652
  %v2213 = vpack.c.b16 %v1669, %v1661
  %v2214 = vpack.c.b16 %v1670, %v1662
  %v2215 = vpack.c.b16 %v1671, %v1663
  %v2216 = vpack.c.b16 %v1672, %v1664
  %v2217 = vpack.c.b16 %v1673, %v1665
  %v2218 = vpack.c.b16 %v1674, %v1666
  %v2219 = vpack.c.b16 %v1675, %v1667
  %v2220 = vpack.c.b16 %v1676, %v1668
  %v2221 = vpack.c.b16 %v1685, %v1677
  %v2222 = vpack.c.b16 %v1686, %v1678
  %v2223 = vpack.c.b16 %v1687, %v1679
  %v2224 = vpack.c.b16 %v1688, %v1680
  %v2225 = vpack.c.b16 %v1689, %v1681
  %v2226 = vpack.c.b16 %v1690, %v1682
  %v2227 = vpack.c.b16 %v1691, %v1683
  %v2228 = vpack.c.b16 %v1692, %v1684
  %v2229 = vpack.c.b16 %v1701, %v1693
  %v2230 = vpack.c.b16 %v1702, %v1694
  %v2231 = vpack.c.b16 %v1703, %v1695
  %v2232 = vpack.c.b16 %v1704, %v1696
  %v2233 = vpack.c.b16 %v1705, %v1697
  %v2234 = vpack.c.b16 %v1706, %v1698
  %v2235 = vpack.c.b16 %v1707, %v1699
  %v2236 = vpack.c.b16 %v1708, %v1700
  %v2237 = vpack.c.b16 %v1717, %v1709
  %v2238 = vpack.c.b16 %v1718, %v1710
  %v2239 = vpack.c.b16 %v1719, %v1711
  %v2240 = vpack.c.b16 %v1720, %v1712
  %v2241 = vpack.c.b16 %v1721, %v1713
  %v2242 = vpack.c.b16 %v1722, %v1714
  %v2243 = vpack.c.b16 %v1723, %v1715
  %v2244 = vpack.c.b16 %v1724, %v1716
  %v2245 = vpack.c.b16 %v1733, %v1725
  %v2246 = vpack.c.b16 %v1734, %v1726
  %v2247 = vpack.c.b16 %v1735, %v1727
  %v2248 = vpack.c.b16 %v1736, %v1728
  %v2249 = vpack.c.b16 %v1737, %v1729
  %v2250 = vpack.c.b16 %v1738, %v1730
  %v2251 = vpack.c.b16 %v1739, %v1731
  %v2252 = vpack.c.b16 %v1740, %v1732
  %v2253 = vpack.c.b16 %v1749, %v1741
  %v2254 = vpack.c.b16 %v1750, %v1742
  %v2255 = vpack.c.b16 %v1751, %v1743
  %v2256 = vpack.c.b16 %v1752, %v1744
  %v2257 = vpack.c.b16 %v1753, %v1745
  %v2258 = vpack.c.b16 %v1754, %v1746
  %v2259 = vpack.c.b16 %v1755, %v1747
  %v2260 = vpack.c.b16 %v1756, %v1748
  %v2261 = vpack.c.b16 %v1765, %v1757
  %v2262 = vpack.c.b16 %v1766, %v1758
  %v2263 = vpack.c.b16 %v1767, %v1759
  %v2264 = vpack.c.b16 %v1768, %v1760
  %v2265 = vpack.c.b16 %v1769, %v1761
  %v2266 = vpack.c.b16 %v1770, %v1762
  %v2267 = vpack.c.b16 %v1771, %v1763
  %v2268 = vpack.c.b16 %v1772, %v1764
  %v2269 = vpack.c.b16 %v1781, %v1773
  %v2270 = vpack.c.b16 %v1782, %v1774
  %v2271 = vpack.c.b16 %v1783, %v1775
  %v2272 = vpack.c.b16 %v1784, %v1776
  %v2273 = vpack.c.b16 %v1785, %v1777
  %v2274 = vpack.c.b16 %v1786, %v1778
  %v2275 = vpack.c.b16 %v1787, %v1779
  %v2276 = vpack.c.b16 %v1788, %v1780
  %v2277 = vpack.c.b16 %v1797, %v1789
  %v2278 = vpack.c.b16 %v1798, %v1790
  %v2279 = vpack.c.b16 %v1799, %v1791
  %v2280 = vpack.c.b16 %v1800, %v1792
  %v2281 = vpack.c.b16 %v1801, %v1793
  %v2282 = vpack.c.b16 %v1802, %v1794
  %v2283 = vpack.c.b16 %v1803, %v1795
  %v2284 = vpack.c.b16 %v1804, %v1796
  %v2285 = vpack.c.b16 %v1813, %v1805
  %v2286 = vpack.c.b16 %v1814, %v1806
  %v2287 = vpack.c.b16 %v1815, %v1807
  %v2288 = vpack.c.b16 %v1816, %v1808
  %v2289 = vpack.c.b16 %v1817, %v1809
  %v2290 = vpack.c.b16 %v1818, %v1810
  %v2291 = vpack.c.b16 %v1819, %v1811
  %v2292 = vpack.c.b16 %v1820, %v1812
  %v2293 = vpack.c.b16 %v1829, %v1821
  %v2294 = vpack.c.b16 %v1830, %v1822
  %v2295 = vpack.c.b16 %v1831, %v1823
  %v2296 = vpack.c.b16 %v1832, %v1824
  %v2297 = vpack.c.b16 %v1833, %v1825
  %v2298 = vpack.c.b16 %v1834, %v1826
  %v2299 = vpack.c.b16 %v1835, %v1827
  %v2300 = vpack.c.b16 %v1836, %v1828
  %v2301 = vpack.c.b16 %v1845, %v1837
  %v2302 = vpack.c.b16 %v1846, %v1838
  %v2303 = vpack.c.b16 %v1847, %v1839
  %v2304 = vpack.c.b16 %v1848, %v1840
  %v2305 = vpack.c.b16 %v1849, %v1841
  %v2306 = vpack.c.b16 %v1850, %v1842
  %v2307 = vpack.c.b16 %v1851, %v1843
  %v2308 = vpack.c.b16 %v1852, %v1844
  %v2309 = vpack.c.b16 %v1861, %v1853
  %v2310 = vpack.c.b16 %v1862, %v1854
  %v2311 = vpack.c.b16 %v1863, %v1855
  %v2312 = vpack.c.b16 %v1864, %v1856
  %v2313 = vpack.c.b16 %v1865, %v1857
  %v2314 = vpack.c.b16 %v1866, %v1858
  %v2315 = vpack.c.b16 %v1867, %v1859
  %v2316 = vpack.c.b16 %v1868, %v1860
  %v2317 = vpack.c.b16 %v1877, %v1869
  %v2318 = vpack.c.b16 %v1878, %v1870
  %v2319 = vpack.c.b16 %v1879, %v1871
  %v2320 = vpack.c.b16 %v1880, %v1872
  %v2321 = vpack.c.b16 %v1881, %v1873
  %v2322 = vpack.c.b16 %v1882, %v1874
  %v2323 = vpack.c.b16 %v1883, %v1875
  %v2324 = vpack.c.b16 %v1884, %v1876
  %v2325 = vpack.c.b16 %v1893, %v1885
  %v2326 = vpack.c.b16 %v1894, %v1886
  %v2327 = vpack.c.b16 %v1895, %v1887
  %v2328 = vpack.c.b16 %v1896, %v1888
  %v2329 = vpack.c.b16 %v1897, %v1889
  %v2330 = vpack.c.b16 %v1898, %v1890
  %v2331 = vpack.c.b16 %v1899, %v1891
  %v2332 = vpack.c.b16 %v1900, %v1892
  %v2333 = vpack.c.b16 %v1909, %v1901
  %v2334 = vpack.c.b16 %v1910, %v1902
  %v2335 = vpack.c.b16 %v1911, %v1903
  %v2336 = vpack.c.b16 %v1912, %v1904
  %v2337 = vpack.c.b16 %v1913, %v1905
  %v2338 = vpack.c.b16 %v1914, %v1906
  %v2339 = vpack.c.b16 %v1915, %v1907
  %v2340 = vpack.c.b16 %v1916, %v1908
  %v2341 = vpack.c.b16 %v1925, %v1917
  %v2342 = vpack.c.b16 %v1926, %v1918
  %v2343 = vpack.c.b16 %v1927, %v1919
  %v2344 = vpack.c.b16 %v1928, %v1920
  %v2345 = vpack.c.b16 %v1929, %v1921
  %v2346 = vpack.c.b16 %v1930, %v1922
  %v2347 = vpack.c.b16 %v1931, %v1923
  %v2348 = vpack.c.b16 %v1932, %v1924
  %v2349 = vpack.c.b16 %v1941, %v1933
  %v2350 = vpack.c.b16 %v1942, %v1934
  %v2351 = vpack.c.b16 %v1943, %v1935
  %v2352 = vpack.c.b16 %v1944, %v1936
  %v2353 = vpack.c.b16 %v1945, %v1937
  %v2354 = vpack.c.b16 %v1946, %v1938
  %v2355 = vpack.c.b16 %v1947, %v1939
  %v2356 = vpack.c.b16 %v1948, %v1940
  %v2357 = vpack.c.b16 %v1957, %v1949
  %v2358 = vpack.c.b16 %v1958, %v1950
  %v2359 = vpack.c.b16 %v1959, %v1951
  %v2360 = vpack.c.b16 %v1960, %v1952
  %v2361 = vpack.c.b16 %v1961, %v1953
  %v2362 = vpack.c.b16 %v1962, %v1954
  %v2363 = vpack.c.b16 %v1963, %v1955
  %v2364 = vpack.c.b16 %v1964, %v1956
  %v2365 = vpack.c.b16 %v1973, %v1965
  %v2366 = vpack.c.b16 %v1974, %v1966
  %v2367 = vpack.c.b16 %v1975, %v1967
  %v2368 = vpack.c.b16 %v1976, %v1968
  %v2369 = vpack.c.b16 %v1977, %v1969
  %v2370 = vpack.c.b16 %v1978, %v1970
  %v2371 = vpack.c.b16 %v1979, %v1971
  %v2372 = vpack.c.b16 %v1980, %v1972
  %vm2765 = vcmask 130048
  %v2767 = vsel %vm2765, %v265, 0
  %v2770 = vsel %vm2765, %v272, 0
  %v2773 = vsel %vm2765, %v279, 0
  %v2776 = vsel %vm2765, %v286, 0
  %v2779 = vsel %vm2765, %v293, 0
  %v2782 = vsel %vm2765, %v300, 0
  %v2785 = vsel %vm2765, %v307, 0
  %v2788 = vsel %vm2765, %v314, 0
  %v2791 = vsel %vm2765, %v321, 0
  %v2794 = vsel %vm2765, %v328, 0
  %v2797 = vsel %vm2765, %v335, 0
  %v2800 = vsel %vm2765, %v342, 0
  %v2803 = vsel %vm2765, %v349, 0
  %v2806 = vsel %vm2765, %v356, 0
  %v2809 = vsel %vm2765, %v363, 0
  %v2812 = vsel %vm2765, %v370, 0
  %2814 = vmatprep.subr.bf16.mxu0 %v1982
  %2815 = vmatpush1.bf16.msra.mxu0 %v1981
  %2816 = vmatprep.subr.bf16.mxu0 %v1990
  %2817 = vmatpush1.bf16.msra.mxu0 %v1989
  %2818 = vmatprep.subr.bf16.mxu0 %v1998
  %2819 = vmatpush1.bf16.msra.mxu0 %v1997
  %2820 = vmatprep.subr.bf16.mxu0 %v2006
  %2821 = vmatpush1.bf16.msra.mxu0 %v2005
  %2822 = vmatprep.subr.bf16.mxu0 %v2014
  %2823 = vmatpush1.bf16.msra.mxu0 %v2013
  %2824 = vmatprep.subr.bf16.mxu0 %v2022
  %2825 = vmatpush1.bf16.msra.mxu0 %v2021
  %2826 = vmatprep.subr.bf16.mxu0 %v2030
  %2827 = vmatpush1.bf16.msra.mxu0 %v2029
  %2828 = vmatprep.subr.bf16.mxu0 %v2038
  %2829 = vmatpush1.bf16.msra.mxu0 %v2037
  %2830 = vmatprep.subr.bf16.mxu0 %v2046
  %2831 = vmatpush1.bf16.msra.mxu0 %v2045
  %2832 = vmatprep.subr.bf16.mxu0 %v2054
  %2833 = vmatpush1.bf16.msra.mxu0 %v2053
  %2834 = vmatprep.subr.bf16.mxu0 %v2062
  %2835 = vmatpush1.bf16.msra.mxu0 %v2061
  %2836 = vmatprep.subr.bf16.mxu0 %v2070
  %2837 = vmatpush1.bf16.msra.mxu0 %v2069
  %2838 = vmatprep.subr.bf16.mxu0 %v2078
  %2839 = vmatpush1.bf16.msra.mxu0 %v2077
  %2840 = vmatprep.subr.bf16.mxu0 %v2086
  %2841 = vmatpush1.bf16.msra.mxu0 %v2085
  %2842 = vmatprep.subr.bf16.mxu0 %v2094
  %2843 = vmatpush1.bf16.msra.mxu0 %v2093
  %2844 = vmatprep.subr.bf16.mxu0 %v2102
  %2845 = vmatpush1.bf16.msra.mxu0 %v2101
  %2846 = vmatprep.mubr.bf16.mxu0 %v260
  %2847 = vmatmul.mubr.bf16.gmra.mrb[0].mxu0 %v259
  %v2848 = vpop.f32.mrb[0].mxu0
  %v2849 = vadd.f32 %v768, %v2848
  %v2850 = vpop.f32.mrb[0].mxu0
  %v2851 = vadd.f32 %v772, %v2850
  %v2852 = vpop.f32.mrb[0].mxu0
  %v2853 = vadd.f32 %v768, %v2852
  %v2854 = vpop.f32.mrb[0].mxu0
  %v2855 = vadd.f32 %v772, %v2854
  %2856 = vmatprep.mubr.bf16.mxu0 %v267
  %2857 = vmatmul.mubr.bf16.gmra.mrb[0].mxu0 %v266
  %v2858 = vpop.f32.mrb[0].mxu0
  %v2859 = vadd.f32 %v768, %v2858
  %v2860 = vpop.f32.mrb[0].mxu0
  %v2861 = vadd.f32 %v772, %v2860
  %v2862 = vpop.f32.mrb[0].mxu0
  %v2863 = vadd.f32 %v768, %v2862
  %v2864 = vpop.f32.mrb[0].mxu0
  %v2865 = vadd.f32 %v772, %v2864
  %2866 = vmatprep.mubr.bf16.mxu0 %v274
  %2867 = vmatmul.mubr.bf16.gmra.mrb[0].mxu0 %v273
  %v2868 = vpop.f32.mrb[0].mxu0
  %v2869 = vadd.f32 %v768, %v2868
  %v2870 = vpop.f32.mrb[0].mxu0
  %v2871 = vadd.f32 %v772, %v2870
  %v2872 = vpop.f32.mrb[0].mxu0
  %v2873 = vadd.f32 %v768, %v2872
  %v2874 = vpop.f32.mrb[0].mxu0
  %v2875 = vadd.f32 %v772, %v2874
  %2876 = vmatprep.mubr.bf16.mxu0 %v281
  %2877 = vmatmul.mubr.bf16.gmra.mrb[0].mxu0 %v280
  %v2878 = vpop.f32.mrb[0].mxu0
  %v2879 = vadd.f32 %v768, %v2878
  %v2880 = vpop.f32.mrb[0].mxu0
  %v2881 = vadd.f32 %v772, %v2880
  %v2882 = vpop.f32.mrb[0].mxu0
  %v2883 = vadd.f32 %v768, %v2882
  %v2884 = vpop.f32.mrb[0].mxu0
  %v2885 = vadd.f32 %v772, %v2884
  %2886 = vmatprep.mubr.bf16.mxu0 %v288
  %2887 = vmatmul.mubr.bf16.gmra.mrb[0].mxu0 %v287
  %v2888 = vpop.f32.mrb[0].mxu0
  %v2889 = vadd.f32 %v768, %v2888
  %v2890 = vpop.f32.mrb[0].mxu0
  %v2891 = vadd.f32 %v772, %v2890
  %v2892 = vpop.f32.mrb[0].mxu0
  %v2893 = vadd.f32 %v768, %v2892
  %v2894 = vpop.f32.mrb[0].mxu0
  %v2895 = vadd.f32 %v772, %v2894
  %2896 = vmatprep.mubr.bf16.mxu0 %v295
  %2897 = vmatmul.mubr.bf16.gmra.mrb[0].mxu0 %v294
  %v2898 = vpop.f32.mrb[0].mxu0
  %v2899 = vadd.f32 %v768, %v2898
  %v2900 = vpop.f32.mrb[0].mxu0
  %v2901 = vadd.f32 %v772, %v2900
  %v2902 = vpop.f32.mrb[0].mxu0
  %v2903 = vadd.f32 %v768, %v2902
  %v2904 = vpop.f32.mrb[0].mxu0
  %v2905 = vadd.f32 %v772, %v2904
  %2906 = vmatprep.mubr.bf16.mxu0 %v302
  %2907 = vmatmul.mubr.bf16.gmra.mrb[0].mxu0 %v301
  %v2908 = vpop.f32.mrb[0].mxu0
  %v2909 = vadd.f32 %v768, %v2908
  %v2910 = vpop.f32.mrb[0].mxu0
  %v2911 = vadd.f32 %v772, %v2910
  %v2912 = vpop.f32.mrb[0].mxu0
  %v2913 = vadd.f32 %v768, %v2912
  %v2914 = vpop.f32.mrb[0].mxu0
  %v2915 = vadd.f32 %v772, %v2914
  %2916 = vmatprep.mubr.bf16.mxu0 %v309
  %2917 = vmatmul.mubr.bf16.gmra.mrb[0].mxu0 %v308
  %v2918 = vpop.f32.mrb[0].mxu0
  %v2919 = vadd.f32 %v768, %v2918
  %v2920 = vpop.f32.mrb[0].mxu0
  %v2921 = vadd.f32 %v772, %v2920
  %v2922 = vpop.f32.mrb[0].mxu0
  %v2923 = vadd.f32 %v768, %v2922
  %v2924 = vpop.f32.mrb[0].mxu0
  %v2925 = vadd.f32 %v772, %v2924
  %2926 = vmatprep.mubr.bf16.mxu0 %v316
  %2927 = vmatmul.mubr.bf16.gmra.mrb[0].mxu0 %v315
  %v2928 = vpop.f32.mrb[0].mxu0
  %v2929 = vadd.f32 %v768, %v2928
  %v2930 = vpop.f32.mrb[0].mxu0
  %v2931 = vadd.f32 %v772, %v2930
  %v2932 = vpop.f32.mrb[0].mxu0
  %v2933 = vadd.f32 %v768, %v2932
  %v2934 = vpop.f32.mrb[0].mxu0
  %v2935 = vadd.f32 %v772, %v2934
  %2936 = vmatprep.mubr.bf16.mxu0 %v323
  %2937 = vmatmul.mubr.bf16.gmra.mrb[0].mxu0 %v322
  %v2938 = vpop.f32.mrb[0].mxu0
  %v2939 = vadd.f32 %v768, %v2938
  %v2940 = vpop.f32.mrb[0].mxu0
  %v2941 = vadd.f32 %v772, %v2940
  %v2942 = vpop.f32.mrb[0].mxu0
  %v2943 = vadd.f32 %v768, %v2942
  %v2944 = vpop.f32.mrb[0].mxu0
  %v2945 = vadd.f32 %v772, %v2944
  %2946 = vmatprep.mubr.bf16.mxu0 %v330
  %2947 = vmatmul.mubr.bf16.gmra.mrb[0].mxu0 %v329
  %v2948 = vpop.f32.mrb[0].mxu0
  %v2949 = vadd.f32 %v768, %v2948
  %v2950 = vpop.f32.mrb[0].mxu0
  %v2951 = vadd.f32 %v772, %v2950
  %v2952 = vpop.f32.mrb[0].mxu0
  %v2953 = vadd.f32 %v768, %v2952
  %v2954 = vpop.f32.mrb[0].mxu0
  %v2955 = vadd.f32 %v772, %v2954
  %2956 = vmatprep.mubr.bf16.mxu0 %v337
  %2957 = vmatmul.mubr.bf16.gmra.mrb[0].mxu0 %v336
  %v2958 = vpop.f32.mrb[0].mxu0
  %v2959 = vadd.f32 %v768, %v2958
  %v2960 = vpop.f32.mrb[0].mxu0
  %v2961 = vadd.f32 %v772, %v2960
  %v2962 = vpop.f32.mrb[0].mxu0
  %v2963 = vadd.f32 %v768, %v2962
  %v2964 = vpop.f32.mrb[0].mxu0
  %v2965 = vadd.f32 %v772, %v2964
  %2966 = vmatprep.mubr.bf16.mxu0 %v344
  %2967 = vmatmul.mubr.bf16.gmra.mrb[0].mxu0 %v343
  %v2968 = vpop.f32.mrb[0].mxu0
  %v2969 = vadd.f32 %v768, %v2968
  %v2970 = vpop.f32.mrb[0].mxu0
  %v2971 = vadd.f32 %v772, %v2970
  %v2972 = vpop.f32.mrb[0].mxu0
  %v2973 = vadd.f32 %v768, %v2972
  %v2974 = vpop.f32.mrb[0].mxu0
  %v2975 = vadd.f32 %v772, %v2974
  %2976 = vmatprep.mubr.bf16.mxu0 %v351
  %2977 = vmatmul.mubr.bf16.gmra.mrb[0].mxu0 %v350
  %v2978 = vpop.f32.mrb[0].mxu0
  %v2979 = vadd.f32 %v768, %v2978
  %v2980 = vpop.f32.mrb[0].mxu0
  %v2981 = vadd.f32 %v772, %v2980
  %v2982 = vpop.f32.mrb[0].mxu0
  %v2983 = vadd.f32 %v768, %v2982
  %v2984 = vpop.f32.mrb[0].mxu0
  %v2985 = vadd.f32 %v772, %v2984
  %2986 = vmatprep.mubr.bf16.mxu0 %v358
  %2987 = vmatmul.mubr.bf16.gmra.mrb[0].mxu0 %v357
  %v2988 = vpop.f32.mrb[0].mxu0
  %v2989 = vadd.f32 %v768, %v2988
  %v2990 = vpop.f32.mrb[0].mxu0
  %v2991 = vadd.f32 %v772, %v2990
  %v2992 = vpop.f32.mrb[0].mxu0
  %v2993 = vadd.f32 %v768, %v2992
  %v2994 = vpop.f32.mrb[0].mxu0
  %v2995 = vadd.f32 %v772, %v2994
  %2996 = vmatprep.mubr.bf16.mxu0 %v365
  %2997 = vmatmul.mubr.bf16.gmra.mrb[0].mxu0 %v364
  %v2998 = vpop.f32.mrb[0].mxu0
  %v2999 = vadd.f32 %v768, %v2998
  %v3000 = vpop.f32.mrb[0].mxu0
  %v3001 = vadd.f32 %v772, %v3000
  %v3002 = vpop.f32.mrb[0].mxu0
  %v3003 = vadd.f32 %v768, %v3002
  %v3004 = vpop.f32.mrb[0].mxu0
  %v3005 = vadd.f32 %v772, %v3004
  %3006 = vdwg.mxu0
  %3007 = vmatprep.subr.bf16.mxu0 %v2110
  %3008 = vmatpush1.bf16.msra.mxu0 %v2109
  %3009 = vmatprep.subr.bf16.mxu0 %v2118
  %3010 = vmatpush1.bf16.msra.mxu0 %v2117
  %3011 = vmatprep.subr.bf16.mxu0 %v2126
  %3012 = vmatpush1.bf16.msra.mxu0 %v2125
  %3013 = vmatprep.subr.bf16.mxu0 %v2134
  %3014 = vmatpush1.bf16.msra.mxu0 %v2133
  %3015 = vmatprep.subr.bf16.mxu0 %v2142
  %3016 = vmatpush1.bf16.msra.mxu0 %v2141
  %3017 = vmatprep.subr.bf16.mxu0 %v2150
  %3018 = vmatpush1.bf16.msra.mxu0 %v2149
  %3019 = vmatprep.subr.bf16.mxu0 %v2158
  %3020 = vmatpush1.bf16.msra.mxu0 %v2157
  %3021 = vmatprep.subr.bf16.mxu0 %v2166
  %3022 = vmatpush1.bf16.msra.mxu0 %v2165
  %3023 = vmatprep.subr.bf16.mxu0 %v2174
  %3024 = vmatpush1.bf16.msra.mxu0 %v2173
  %3025 = vmatprep.subr.bf16.mxu0 %v2182
  %3026 = vmatpush1.bf16.msra.mxu0 %v2181
  %3027 = vmatprep.subr.bf16.mxu0 %v2190
  %3028 = vmatpush1.bf16.msra.mxu0 %v2189
  %3029 = vmatprep.subr.bf16.mxu0 %v2198
  %3030 = vmatpush1.bf16.msra.mxu0 %v2197
  %3031 = vmatprep.subr.bf16.mxu0 %v2206
  %3032 = vmatpush1.bf16.msra.mxu0 %v2205
  %3033 = vmatprep.subr.bf16.mxu0 %v2214
  %3034 = vmatpush1.bf16.msra.mxu0 %v2213
  %3035 = vmatprep.subr.bf16.mxu0 %v2222
  %3036 = vmatpush1.bf16.msra.mxu0 %v2221
  %3037 = vmatprep.subr.bf16.mxu0 %v2230
  %3038 = vmatpush1.bf16.msra.mxu0 %v2229
  %3039 = vmatprep.mubr.bf16.mxu0 %v262
  %3040 = vmatmul.mubr.bf16.gmra.mrb[0].mxu0 %v261
  %v3041 = vpop.f32.mrb[0].mxu0
  %v3042 = vadd.f32 %v2849, %v3041
  %v3043 = vpop.f32.mrb[0].mxu0
  %v3044 = vadd.f32 %v2851, %v3043
  %v3045 = vpop.f32.mrb[0].mxu0
  %v3046 = vadd.f32 %v2853, %v3045
  %v3047 = vpop.f32.mrb[0].mxu0
  %v3048 = vadd.f32 %v2855, %v3047
  %3049 = vmatprep.mubr.bf16.mxu0 %v269
  %3050 = vmatmul.mubr.bf16.gmra.mrb[0].mxu0 %v268
  %v3051 = vpop.f32.mrb[0].mxu0
  %v3052 = vadd.f32 %v2859, %v3051
  %v3053 = vpop.f32.mrb[0].mxu0
  %v3054 = vadd.f32 %v2861, %v3053
  %v3055 = vpop.f32.mrb[0].mxu0
  %v3056 = vadd.f32 %v2863, %v3055
  %v3057 = vpop.f32.mrb[0].mxu0
  %v3058 = vadd.f32 %v2865, %v3057
  %3059 = vmatprep.mubr.bf16.mxu0 %v276
  %3060 = vmatmul.mubr.bf16.gmra.mrb[0].mxu0 %v275
  %v3061 = vpop.f32.mrb[0].mxu0
  %v3062 = vadd.f32 %v2869, %v3061
  %v3063 = vpop.f32.mrb[0].mxu0
  %v3064 = vadd.f32 %v2871, %v3063
  %v3065 = vpop.f32.mrb[0].mxu0
  %v3066 = vadd.f32 %v2873, %v3065
  %v3067 = vpop.f32.mrb[0].mxu0
  %v3068 = vadd.f32 %v2875, %v3067
  %3069 = vmatprep.mubr.bf16.mxu0 %v283
  %3070 = vmatmul.mubr.bf16.gmra.mrb[0].mxu0 %v282
  %v3071 = vpop.f32.mrb[0].mxu0
  %v3072 = vadd.f32 %v2879, %v3071
  %v3073 = vpop.f32.mrb[0].mxu0
  %v3074 = vadd.f32 %v2881, %v3073
  %v3075 = vpop.f32.mrb[0].mxu0
  %v3076 = vadd.f32 %v2883, %v3075
  %v3077 = vpop.f32.mrb[0].mxu0
  %v3078 = vadd.f32 %v2885, %v3077
  %3079 = vmatprep.mubr.bf16.mxu0 %v290
  %3080 = vmatmul.mubr.bf16.gmra.mrb[0].mxu0 %v289
  %v3081 = vpop.f32.mrb[0].mxu0
  %v3082 = vadd.f32 %v2889, %v3081
  %v3083 = vpop.f32.mrb[0].mxu0
  %v3084 = vadd.f32 %v2891, %v3083
  %v3085 = vpop.f32.mrb[0].mxu0
  %v3086 = vadd.f32 %v2893, %v3085
  %v3087 = vpop.f32.mrb[0].mxu0
  %v3088 = vadd.f32 %v2895, %v3087
  %3089 = vmatprep.mubr.bf16.mxu0 %v297
  %3090 = vmatmul.mubr.bf16.gmra.mrb[0].mxu0 %v296
  %v3091 = vpop.f32.mrb[0].mxu0
  %v3092 = vadd.f32 %v2899, %v3091
  %v3093 = vpop.f32.mrb[0].mxu0
  %v3094 = vadd.f32 %v2901, %v3093
  %v3095 = vpop.f32.mrb[0].mxu0
  %v3096 = vadd.f32 %v2903, %v3095
  %v3097 = vpop.f32.mrb[0].mxu0
  %v3098 = vadd.f32 %v2905, %v3097
  %3099 = vmatprep.mubr.bf16.mxu0 %v304
  %3100 = vmatmul.mubr.bf16.gmra.mrb[0].mxu0 %v303
  %v3101 = vpop.f32.mrb[0].mxu0
  %v3102 = vadd.f32 %v2909, %v3101
  %v3103 = vpop.f32.mrb[0].mxu0
  %v3104 = vadd.f32 %v2911, %v3103
  %v3105 = vpop.f32.mrb[0].mxu0
  %v3106 = vadd.f32 %v2913, %v3105
  %v3107 = vpop.f32.mrb[0].mxu0
  %v3108 = vadd.f32 %v2915, %v3107
  %3109 = vmatprep.mubr.bf16.mxu0 %v311
  %3110 = vmatmul.mubr.bf16.gmra.mrb[0].mxu0 %v310
  %v3111 = vpop.f32.mrb[0].mxu0
  %v3112 = vadd.f32 %v2919, %v3111
  %v3113 = vpop.f32.mrb[0].mxu0
  %v3114 = vadd.f32 %v2921, %v3113
  %v3115 = vpop.f32.mrb[0].mxu0
  %v3116 = vadd.f32 %v2923, %v3115
  %v3117 = vpop.f32.mrb[0].mxu0
  %v3118 = vadd.f32 %v2925, %v3117
  %3119 = vmatprep.mubr.bf16.mxu0 %v318
  %3120 = vmatmul.mubr.bf16.gmra.mrb[0].mxu0 %v317
  %v3121 = vpop.f32.mrb[0].mxu0
  %v3122 = vadd.f32 %v2929, %v3121
  %v3123 = vpop.f32.mrb[0].mxu0
  %v3124 = vadd.f32 %v2931, %v3123
  %v3125 = vpop.f32.mrb[0].mxu0
  %v3126 = vadd.f32 %v2933, %v3125
  %v3127 = vpop.f32.mrb[0].mxu0
  %v3128 = vadd.f32 %v2935, %v3127
  %3129 = vmatprep.mubr.bf16.mxu0 %v325
  %3130 = vmatmul.mubr.bf16.gmra.mrb[0].mxu0 %v324
  %v3131 = vpop.f32.mrb[0].mxu0
  %v3132 = vadd.f32 %v2939, %v3131
  %v3133 = vpop.f32.mrb[0].mxu0
  %v3134 = vadd.f32 %v2941, %v3133
  %v3135 = vpop.f32.mrb[0].mxu0
  %v3136 = vadd.f32 %v2943, %v3135
  %v3137 = vpop.f32.mrb[0].mxu0
  %v3138 = vadd.f32 %v2945, %v3137
  %3139 = vmatprep.mubr.bf16.mxu0 %v332
  %3140 = vmatmul.mubr.bf16.gmra.mrb[0].mxu0 %v331
  %v3141 = vpop.f32.mrb[0].mxu0
  %v3142 = vadd.f32 %v2949, %v3141
  %v3143 = vpop.f32.mrb[0].mxu0
  %v3144 = vadd.f32 %v2951, %v3143
  %v3145 = vpop.f32.mrb[0].mxu0
  %v3146 = vadd.f32 %v2953, %v3145
  %v3147 = vpop.f32.mrb[0].mxu0
  %v3148 = vadd.f32 %v2955, %v3147
  %3149 = vmatprep.mubr.bf16.mxu0 %v339
  %3150 = vmatmul.mubr.bf16.gmra.mrb[0].mxu0 %v338
  %v3151 = vpop.f32.mrb[0].mxu0
  %v3152 = vadd.f32 %v2959, %v3151
  %v3153 = vpop.f32.mrb[0].mxu0
  %v3154 = vadd.f32 %v2961, %v3153
  %v3155 = vpop.f32.mrb[0].mxu0
  %v3156 = vadd.f32 %v2963, %v3155
  %v3157 = vpop.f32.mrb[0].mxu0
  %v3158 = vadd.f32 %v2965, %v3157
  %3159 = vmatprep.mubr.bf16.mxu0 %v346
  %3160 = vmatmul.mubr.bf16.gmra.mrb[0].mxu0 %v345
  %v3161 = vpop.f32.mrb[0].mxu0
  %v3162 = vadd.f32 %v2969, %v3161
  %v3163 = vpop.f32.mrb[0].mxu0
  %v3164 = vadd.f32 %v2971, %v3163
  %v3165 = vpop.f32.mrb[0].mxu0
  %v3166 = vadd.f32 %v2973, %v3165
  %v3167 = vpop.f32.mrb[0].mxu0
  %v3168 = vadd.f32 %v2975, %v3167
  %3169 = vmatprep.mubr.bf16.mxu0 %v353
  %3170 = vmatmul.mubr.bf16.gmra.mrb[0].mxu0 %v352
  %v3171 = vpop.f32.mrb[0].mxu0
  %v3172 = vadd.f32 %v2979, %v3171
  %v3173 = vpop.f32.mrb[0].mxu0
  %v3174 = vadd.f32 %v2981, %v3173
  %v3175 = vpop.f32.mrb[0].mxu0
  %v3176 = vadd.f32 %v2983, %v3175
  %v3177 = vpop.f32.mrb[0].mxu0
  %v3178 = vadd.f32 %v2985, %v3177
  %3179 = vmatprep.mubr.bf16.mxu0 %v360
  %3180 = vmatmul.mubr.bf16.gmra.mrb[0].mxu0 %v359
  %v3181 = vpop.f32.mrb[0].mxu0
  %v3182 = vadd.f32 %v2989, %v3181
  %v3183 = vpop.f32.mrb[0].mxu0
  %v3184 = vadd.f32 %v2991, %v3183
  %v3185 = vpop.f32.mrb[0].mxu0
  %v3186 = vadd.f32 %v2993, %v3185
  %v3187 = vpop.f32.mrb[0].mxu0
  %v3188 = vadd.f32 %v2995, %v3187
  %3189 = vmatprep.mubr.bf16.mxu0 %v367
  %3190 = vmatmul.mubr.bf16.gmra.mrb[0].mxu0 %v366
  %v3191 = vpop.f32.mrb[0].mxu0
  %v3192 = vadd.f32 %v2999, %v3191
  %v3193 = vpop.f32.mrb[0].mxu0
  %v3194 = vadd.f32 %v3001, %v3193
  %v3195 = vpop.f32.mrb[0].mxu0
  %v3196 = vadd.f32 %v3003, %v3195
  %v3197 = vpop.f32.mrb[0].mxu0
  %v3198 = vadd.f32 %v3005, %v3197
  %3199 = vdwg.mxu0
  %3200 = vmatprep.subr.bf16.mxu0 %v2238
  %3201 = vmatpush1.bf16.msra.mxu0 %v2237
  %3202 = vmatprep.subr.bf16.mxu0 %v2246
  %3203 = vmatpush1.bf16.msra.mxu0 %v2245
  %3204 = vmatprep.subr.bf16.mxu0 %v2254
  %3205 = vmatpush1.bf16.msra.mxu0 %v2253
  %3206 = vmatprep.subr.bf16.mxu0 %v2262
  %3207 = vmatpush1.bf16.msra.mxu0 %v2261
  %3208 = vmatprep.subr.bf16.mxu0 %v2270
  %3209 = vmatpush1.bf16.msra.mxu0 %v2269
  %3210 = vmatprep.subr.bf16.mxu0 %v2278
  %3211 = vmatpush1.bf16.msra.mxu0 %v2277
  %3212 = vmatprep.subr.bf16.mxu0 %v2286
  %3213 = vmatpush1.bf16.msra.mxu0 %v2285
  %3214 = vmatprep.subr.bf16.mxu0 %v2294
  %3215 = vmatpush1.bf16.msra.mxu0 %v2293
  %3216 = vmatprep.subr.bf16.mxu0 %v2302
  %3217 = vmatpush1.bf16.msra.mxu0 %v2301
  %3218 = vmatprep.subr.bf16.mxu0 %v2310
  %3219 = vmatpush1.bf16.msra.mxu0 %v2309
  %3220 = vmatprep.subr.bf16.mxu0 %v2318
  %3221 = vmatpush1.bf16.msra.mxu0 %v2317
  %3222 = vmatprep.subr.bf16.mxu0 %v2326
  %3223 = vmatpush1.bf16.msra.mxu0 %v2325
  %3224 = vmatprep.subr.bf16.mxu0 %v2334
  %3225 = vmatpush1.bf16.msra.mxu0 %v2333
  %3226 = vmatprep.subr.bf16.mxu0 %v2342
  %3227 = vmatpush1.bf16.msra.mxu0 %v2341
  %3228 = vmatprep.subr.bf16.mxu0 %v2350
  %3229 = vmatpush1.bf16.msra.mxu0 %v2349
  %3230 = vmatprep.subr.bf16.mxu0 %v2358
  %3231 = vmatpush1.bf16.msra.mxu0 %v2357
  %3232 = vmatprep.mubr.bf16.mxu0 %v264
  %3233 = vmatmul.mubr.bf16.gmra.mrb[0].mxu0 %v263
  %v3234 = vpop.f32.mrb[0].mxu0
  %v3235 = vadd.f32 %v3042, %v3234
  %v3236 = vpop.f32.mrb[0].mxu0
  %v3237 = vadd.f32 %v3044, %v3236
  %v3238 = vpop.f32.mrb[0].mxu0
  %v3239 = vadd.f32 %v3046, %v3238
  %v3240 = vpop.f32.mrb[0].mxu0
  %v3241 = vadd.f32 %v3048, %v3240
  %3242 = vmatprep.mubr.bf16.mxu0 %v271
  %3243 = vmatmul.mubr.bf16.gmra.mrb[0].mxu0 %v270
  %v3244 = vpop.f32.mrb[0].mxu0
  %v3245 = vadd.f32 %v3052, %v3244
  %v3246 = vpop.f32.mrb[0].mxu0
  %v3247 = vadd.f32 %v3054, %v3246
  %v3248 = vpop.f32.mrb[0].mxu0
  %v3249 = vadd.f32 %v3056, %v3248
  %v3250 = vpop.f32.mrb[0].mxu0
  %v3251 = vadd.f32 %v3058, %v3250
  %3252 = vmatprep.mubr.bf16.mxu0 %v278
  %3253 = vmatmul.mubr.bf16.gmra.mrb[0].mxu0 %v277
  %v3254 = vpop.f32.mrb[0].mxu0
  %v3255 = vadd.f32 %v3062, %v3254
  %v3256 = vpop.f32.mrb[0].mxu0
  %v3257 = vadd.f32 %v3064, %v3256
  %v3258 = vpop.f32.mrb[0].mxu0
  %v3259 = vadd.f32 %v3066, %v3258
  %v3260 = vpop.f32.mrb[0].mxu0
  %v3261 = vadd.f32 %v3068, %v3260
  %3262 = vmatprep.mubr.bf16.mxu0 %v285
  %3263 = vmatmul.mubr.bf16.gmra.mrb[0].mxu0 %v284
  %v3264 = vpop.f32.mrb[0].mxu0
  %v3265 = vadd.f32 %v3072, %v3264
  %v3266 = vpop.f32.mrb[0].mxu0
  %v3267 = vadd.f32 %v3074, %v3266
  %v3268 = vpop.f32.mrb[0].mxu0
  %v3269 = vadd.f32 %v3076, %v3268
  %v3270 = vpop.f32.mrb[0].mxu0
  %v3271 = vadd.f32 %v3078, %v3270
  %3272 = vmatprep.mubr.bf16.mxu0 %v292
  %3273 = vmatmul.mubr.bf16.gmra.mrb[0].mxu0 %v291
  %v3274 = vpop.f32.mrb[0].mxu0
  %v3275 = vadd.f32 %v3082, %v3274
  %v3276 = vpop.f32.mrb[0].mxu0
  %v3277 = vadd.f32 %v3084, %v3276
  %v3278 = vpop.f32.mrb[0].mxu0
  %v3279 = vadd.f32 %v3086, %v3278
  %v3280 = vpop.f32.mrb[0].mxu0
  %v3281 = vadd.f32 %v3088, %v3280
  %3282 = vmatprep.mubr.bf16.mxu0 %v299
  %3283 = vmatmul.mubr.bf16.gmra.mrb[0].mxu0 %v298
  %v3284 = vpop.f32.mrb[0].mxu0
  %v3285 = vadd.f32 %v3092, %v3284
  %v3286 = vpop.f32.mrb[0].mxu0
  %v3287 = vadd.f32 %v3094, %v3286
  %v3288 = vpop.f32.mrb[0].mxu0
  %v3289 = vadd.f32 %v3096, %v3288
  %v3290 = vpop.f32.mrb[0].mxu0
  %v3291 = vadd.f32 %v3098, %v3290
  %3292 = vmatprep.mubr.bf16.mxu0 %v306
  %3293 = vmatmul.mubr.bf16.gmra.mrb[0].mxu0 %v305
  %v3294 = vpop.f32.mrb[0].mxu0
  %v3295 = vadd.f32 %v3102, %v3294
  %v3296 = vpop.f32.mrb[0].mxu0
  %v3297 = vadd.f32 %v3104, %v3296
  %v3298 = vpop.f32.mrb[0].mxu0
  %v3299 = vadd.f32 %v3106, %v3298
  %v3300 = vpop.f32.mrb[0].mxu0
  %v3301 = vadd.f32 %v3108, %v3300
  %3302 = vmatprep.mubr.bf16.mxu0 %v313
  %3303 = vmatmul.mubr.bf16.gmra.mrb[0].mxu0 %v312
  %v3304 = vpop.f32.mrb[0].mxu0
  %v3305 = vadd.f32 %v3112, %v3304
  %v3306 = vpop.f32.mrb[0].mxu0
  %v3307 = vadd.f32 %v3114, %v3306
  %v3308 = vpop.f32.mrb[0].mxu0
  %v3309 = vadd.f32 %v3116, %v3308
  %v3310 = vpop.f32.mrb[0].mxu0
  %v3311 = vadd.f32 %v3118, %v3310
  %3312 = vmatprep.mubr.bf16.mxu0 %v320
  %3313 = vmatmul.mubr.bf16.gmra.mrb[0].mxu0 %v319
  %v3314 = vpop.f32.mrb[0].mxu0
  %v3315 = vadd.f32 %v3122, %v3314
  %v3316 = vpop.f32.mrb[0].mxu0
  %v3317 = vadd.f32 %v3124, %v3316
  %v3318 = vpop.f32.mrb[0].mxu0
  %v3319 = vadd.f32 %v3126, %v3318
  %v3320 = vpop.f32.mrb[0].mxu0
  %v3321 = vadd.f32 %v3128, %v3320
  %3322 = vmatprep.mubr.bf16.mxu0 %v327
  %3323 = vmatmul.mubr.bf16.gmra.mrb[0].mxu0 %v326
  %v3324 = vpop.f32.mrb[0].mxu0
  %v3325 = vadd.f32 %v3132, %v3324
  %v3326 = vpop.f32.mrb[0].mxu0
  %v3327 = vadd.f32 %v3134, %v3326
  %v3328 = vpop.f32.mrb[0].mxu0
  %v3329 = vadd.f32 %v3136, %v3328
  %v3330 = vpop.f32.mrb[0].mxu0
  %v3331 = vadd.f32 %v3138, %v3330
  %3332 = vmatprep.mubr.bf16.mxu0 %v334
  %3333 = vmatmul.mubr.bf16.gmra.mrb[0].mxu0 %v333
  %v3334 = vpop.f32.mrb[0].mxu0
  %v3335 = vadd.f32 %v3142, %v3334
  %v3336 = vpop.f32.mrb[0].mxu0
  %v3337 = vadd.f32 %v3144, %v3336
  %v3338 = vpop.f32.mrb[0].mxu0
  %v3339 = vadd.f32 %v3146, %v3338
  %v3340 = vpop.f32.mrb[0].mxu0
  %v3341 = vadd.f32 %v3148, %v3340
  %3342 = vmatprep.mubr.bf16.mxu0 %v341
  %3343 = vmatmul.mubr.bf16.gmra.mrb[0].mxu0 %v340
  %v3344 = vpop.f32.mrb[0].mxu0
  %v3345 = vadd.f32 %v3152, %v3344
  %v3346 = vpop.f32.mrb[0].mxu0
  %v3347 = vadd.f32 %v3154, %v3346
  %v3348 = vpop.f32.mrb[0].mxu0
  %v3349 = vadd.f32 %v3156, %v3348
  %v3350 = vpop.f32.mrb[0].mxu0
  %v3351 = vadd.f32 %v3158, %v3350
  %3352 = vmatprep.mubr.bf16.mxu0 %v348
  %3353 = vmatmul.mubr.bf16.gmra.mrb[0].mxu0 %v347
  %v3354 = vpop.f32.mrb[0].mxu0
  %v3355 = vadd.f32 %v3162, %v3354
  %v3356 = vpop.f32.mrb[0].mxu0
  %v3357 = vadd.f32 %v3164, %v3356
  %v3358 = vpop.f32.mrb[0].mxu0
  %v3359 = vadd.f32 %v3166, %v3358
  %v3360 = vpop.f32.mrb[0].mxu0
  %v3361 = vadd.f32 %v3168, %v3360
  %3362 = vmatprep.mubr.bf16.mxu0 %v355
  %3363 = vmatmul.mubr.bf16.gmra.mrb[0].mxu0 %v354
  %v3364 = vpop.f32.mrb[0].mxu0
  %v3365 = vadd.f32 %v3172, %v3364
  %v3366 = vpop.f32.mrb[0].mxu0
  %v3367 = vadd.f32 %v3174, %v3366
  %v3368 = vpop.f32.mrb[0].mxu0
  %v3369 = vadd.f32 %v3176, %v3368
  %v3370 = vpop.f32.mrb[0].mxu0
  %v3371 = vadd.f32 %v3178, %v3370
  %3372 = vmatprep.mubr.bf16.mxu0 %v362
  %3373 = vmatmul.mubr.bf16.gmra.mrb[0].mxu0 %v361
  %v3374 = vpop.f32.mrb[0].mxu0
  %v3375 = vadd.f32 %v3182, %v3374
  %v3376 = vpop.f32.mrb[0].mxu0
  %v3377 = vadd.f32 %v3184, %v3376
  %v3378 = vpop.f32.mrb[0].mxu0
  %v3379 = vadd.f32 %v3186, %v3378
  %v3380 = vpop.f32.mrb[0].mxu0
  %v3381 = vadd.f32 %v3188, %v3380
  %3382 = vmatprep.mubr.bf16.mxu0 %v369
  %3383 = vmatmul.mubr.bf16.gmra.mrb[0].mxu0 %v368
  %v3384 = vpop.f32.mrb[0].mxu0
  %v3385 = vadd.f32 %v3192, %v3384
  %v3386 = vpop.f32.mrb[0].mxu0
  %v3387 = vadd.f32 %v3194, %v3386
  %v3388 = vpop.f32.mrb[0].mxu0
  %v3389 = vadd.f32 %v3196, %v3388
  %v3390 = vpop.f32.mrb[0].mxu0
  %v3391 = vadd.f32 %v3198, %v3390
  %3392 = vdwg.mxu0
  %3393 = vmatprep.subr.bf16.mxu0 %v2366
  %3394 = vmatpush1.bf16.msra.mxu0 %v2365
  %3395 = vmatprep.subr.bf16.mxu0 0
  %3396 = vmatpush1.bf16.msra.mxu0 0
  %3397 = vmatprep.subr.bf16.mxu0 0
  %3398 = vmatpush1.bf16.msra.mxu0 0
  %3399 = vmatprep.subr.bf16.mxu0 0
  %3400 = vmatpush1.bf16.msra.mxu0 0
  %3401 = vmatprep.subr.bf16.mxu0 0
  %3402 = vmatpush1.bf16.msra.mxu0 0
  %3403 = vmatprep.subr.bf16.mxu0 0
  %3404 = vmatpush1.bf16.msra.mxu0 0
  %3405 = vmatprep.subr.bf16.mxu0 0
  %3406 = vmatpush1.bf16.msra.mxu0 0
  %3407 = vmatprep.subr.bf16.mxu0 0
  %3408 = vmatpush1.bf16.msra.mxu0 0
  %3409 = vmatprep.subr.bf16.mxu0 0
  %3410 = vmatpush1.bf16.msra.mxu0 0
  %3411 = vmatprep.subr.bf16.mxu0 0
  %3412 = vmatpush1.bf16.msra.mxu0 0
  %3413 = vmatprep.subr.bf16.mxu0 0
  %3414 = vmatpush1.bf16.msra.mxu0 0
  %3415 = vmatprep.subr.bf16.mxu0 0
  %3416 = vmatpush1.bf16.msra.mxu0 0
  %3417 = vmatprep.subr.bf16.mxu0 0
  %3418 = vmatpush1.bf16.msra.mxu0 0
  %3419 = vmatprep.subr.bf16.mxu0 0
  %3420 = vmatpush1.bf16.msra.mxu0 0
  %3421 = vmatprep.subr.bf16.mxu0 0
  %3422 = vmatpush1.bf16.msra.mxu0 0
  %3423 = vmatprep.subr.bf16.mxu0 0
  %3424 = vmatpush1.bf16.msra.mxu0 0
  %3425 = vmatprep.mubr.bf16.mxu0 0
  %3426 = vmatmul.mubr.bf16.gmra.mrb[0].mxu0 %v2767
  %v3427 = vpop.f32.mrb[0].mxu0
  %v3428 = vadd.f32 %v3235, %v3427
  %v3429 = vpop.f32.mrb[0].mxu0
  %v3430 = vadd.f32 %v3237, %v3429
  %v3431 = vpop.f32.mrb[0].mxu0
  %v3432 = vadd.f32 %v3239, %v3431
  %v3433 = vpop.f32.mrb[0].mxu0
  %v3434 = vadd.f32 %v3241, %v3433
  %3435 = vmatprep.mubr.bf16.mxu0 0
  %3436 = vmatmul.mubr.bf16.gmra.mrb[0].mxu0 %v2770
  %v3437 = vpop.f32.mrb[0].mxu0
  %v3438 = vadd.f32 %v3245, %v3437
  %v3439 = vpop.f32.mrb[0].mxu0
  %v3440 = vadd.f32 %v3247, %v3439
  %v3441 = vpop.f32.mrb[0].mxu0
  %v3442 = vadd.f32 %v3249, %v3441
  %v3443 = vpop.f32.mrb[0].mxu0
  %v3444 = vadd.f32 %v3251, %v3443
  %3445 = vmatprep.mubr.bf16.mxu0 0
  %3446 = vmatmul.mubr.bf16.gmra.mrb[0].mxu0 %v2773
  %v3447 = vpop.f32.mrb[0].mxu0
  %v3448 = vadd.f32 %v3255, %v3447
  %v3449 = vpop.f32.mrb[0].mxu0
  %v3450 = vadd.f32 %v3257, %v3449
  %v3451 = vpop.f32.mrb[0].mxu0
  %v3452 = vadd.f32 %v3259, %v3451
  %v3453 = vpop.f32.mrb[0].mxu0
  %v3454 = vadd.f32 %v3261, %v3453
  %3455 = vmatprep.mubr.bf16.mxu0 0
  %3456 = vmatmul.mubr.bf16.gmra.mrb[0].mxu0 %v2776
  %v3457 = vpop.f32.mrb[0].mxu0
  %v3458 = vadd.f32 %v3265, %v3457
  %v3459 = vpop.f32.mrb[0].mxu0
  %v3460 = vadd.f32 %v3267, %v3459
  %v3461 = vpop.f32.mrb[0].mxu0
  %v3462 = vadd.f32 %v3269, %v3461
  %v3463 = vpop.f32.mrb[0].mxu0
  %v3464 = vadd.f32 %v3271, %v3463
  %3465 = vmatprep.mubr.bf16.mxu0 0
  %3466 = vmatmul.mubr.bf16.gmra.mrb[0].mxu0 %v2779
  %v3467 = vpop.f32.mrb[0].mxu0
  %v3468 = vadd.f32 %v3275, %v3467
  %v3469 = vpop.f32.mrb[0].mxu0
  %v3470 = vadd.f32 %v3277, %v3469
  %v3471 = vpop.f32.mrb[0].mxu0
  %v3472 = vadd.f32 %v3279, %v3471
  %v3473 = vpop.f32.mrb[0].mxu0
  %v3474 = vadd.f32 %v3281, %v3473
  %3475 = vmatprep.mubr.bf16.mxu0 0
  %3476 = vmatmul.mubr.bf16.gmra.mrb[0].mxu0 %v2782
  %v3477 = vpop.f32.mrb[0].mxu0
  %v3478 = vadd.f32 %v3285, %v3477
  %v3479 = vpop.f32.mrb[0].mxu0
  %v3480 = vadd.f32 %v3287, %v3479
  %v3481 = vpop.f32.mrb[0].mxu0
  %v3482 = vadd.f32 %v3289, %v3481
  %v3483 = vpop.f32.mrb[0].mxu0
  %v3484 = vadd.f32 %v3291, %v3483
  %3485 = vmatprep.mubr.bf16.mxu0 0
  %3486 = vmatmul.mubr.bf16.gmra.mrb[0].mxu0 %v2785
  %v3487 = vpop.f32.mrb[0].mxu0
  %v3488 = vadd.f32 %v3295, %v3487
  %v3489 = vpop.f32.mrb[0].mxu0
  %v3490 = vadd.f32 %v3297, %v3489
  %v3491 = vpop.f32.mrb[0].mxu0
  %v3492 = vadd.f32 %v3299, %v3491
  %v3493 = vpop.f32.mrb[0].mxu0
  %v3494 = vadd.f32 %v3301, %v3493
  %3495 = vmatprep.mubr.bf16.mxu0 0
  %3496 = vmatmul.mubr.bf16.gmra.mrb[0].mxu0 %v2788
  %v3497 = vpop.f32.mrb[0].mxu0
  %v3498 = vadd.f32 %v3305, %v3497
  %v3499 = vpop.f32.mrb[0].mxu0
  %v3500 = vadd.f32 %v3307, %v3499
  %v3501 = vpop.f32.mrb[0].mxu0
  %v3502 = vadd.f32 %v3309, %v3501
  %v3503 = vpop.f32.mrb[0].mxu0
  %v3504 = vadd.f32 %v3311, %v3503
  %3505 = vmatprep.mubr.bf16.mxu0 0
  %3506 = vmatmul.mubr.bf16.gmra.mrb[0].mxu0 %v2791
  %v3507 = vpop.f32.mrb[0].mxu0
  %v3508 = vadd.f32 %v3315, %v3507
  %v3509 = vpop.f32.mrb[0].mxu0
  %v3510 = vadd.f32 %v3317, %v3509
  %v3511 = vpop.f32.mrb[0].mxu0
  %v3512 = vadd.f32 %v3319, %v3511
  %v3513 = vpop.f32.mrb[0].mxu0
  %v3514 = vadd.f32 %v3321, %v3513
  %3515 = vmatprep.mubr.bf16.mxu0 0
  %3516 = vmatmul.mubr.bf16.gmra.mrb[0].mxu0 %v2794
  %v3517 = vpop.f32.mrb[0].mxu0
  %v3518 = vadd.f32 %v3325, %v3517
  %v3519 = vpop.f32.mrb[0].mxu0
  %v3520 = vadd.f32 %v3327, %v3519
  %v3521 = vpop.f32.mrb[0].mxu0
  %v3522 = vadd.f32 %v3329, %v3521
  %v3523 = vpop.f32.mrb[0].mxu0
  %v3524 = vadd.f32 %v3331, %v3523
  %3525 = vmatprep.mubr.bf16.mxu0 0
  %3526 = vmatmul.mubr.bf16.gmra.mrb[0].mxu0 %v2797
  %v3527 = vpop.f32.mrb[0].mxu0
  %v3528 = vadd.f32 %v3335, %v3527
  %v3529 = vpop.f32.mrb[0].mxu0
  %v3530 = vadd.f32 %v3337, %v3529
  %v3531 = vpop.f32.mrb[0].mxu0
  %v3532 = vadd.f32 %v3339, %v3531
  %v3533 = vpop.f32.mrb[0].mxu0
  %v3534 = vadd.f32 %v3341, %v3533
  %3535 = vmatprep.mubr.bf16.mxu0 0
  %3536 = vmatmul.mubr.bf16.gmra.mrb[0].mxu0 %v2800
  %v3537 = vpop.f32.mrb[0].mxu0
  %v3538 = vadd.f32 %v3345, %v3537
  %v3539 = vpop.f32.mrb[0].mxu0
  %v3540 = vadd.f32 %v3347, %v3539
  %v3541 = vpop.f32.mrb[0].mxu0
  %v3542 = vadd.f32 %v3349, %v3541
  %v3543 = vpop.f32.mrb[0].mxu0
  %v3544 = vadd.f32 %v3351, %v3543
  %3545 = vmatprep.mubr.bf16.mxu0 0
  %3546 = vmatmul.mubr.bf16.gmra.mrb[0].mxu0 %v2803
  %v3547 = vpop.f32.mrb[0].mxu0
  %v3548 = vadd.f32 %v3355, %v3547
  %v3549 = vpop.f32.mrb[0].mxu0
  %v3550 = vadd.f32 %v3357, %v3549
  %v3551 = vpop.f32.mrb[0].mxu0
  %v3552 = vadd.f32 %v3359, %v3551
  %v3553 = vpop.f32.mrb[0].mxu0
  %v3554 = vadd.f32 %v3361, %v3553
  %3555 = vmatprep.mubr.bf16.mxu0 0
  %3556 = vmatmul.mubr.bf16.gmra.mrb[0].mxu0 %v2806
  %v3557 = vpop.f32.mrb[0].mxu0
  %v3558 = vadd.f32 %v3365, %v3557
  %v3559 = vpop.f32.mrb[0].mxu0
  %v3560 = vadd.f32 %v3367, %v3559
  %v3561 = vpop.f32.mrb[0].mxu0
  %v3562 = vadd.f32 %v3369, %v3561
  %v3563 = vpop.f32.mrb[0].mxu0
  %v3564 = vadd.f32 %v3371, %v3563
  %3565 = vmatprep.mubr.bf16.mxu0 0
  %3566 = vmatmul.mubr.bf16.gmra.mrb[0].mxu0 %v2809
  %v3567 = vpop.f32.mrb[0].mxu0
  %v3568 = vadd.f32 %v3375, %v3567
  %v3569 = vpop.f32.mrb[0].mxu0
  %v3570 = vadd.f32 %v3377, %v3569
  %v3571 = vpop.f32.mrb[0].mxu0
  %v3572 = vadd.f32 %v3379, %v3571
  %v3573 = vpop.f32.mrb[0].mxu0
  %v3574 = vadd.f32 %v3381, %v3573
  %3575 = vmatprep.mubr.bf16.mxu0 0
  %3576 = vmatmul.mubr.bf16.gmra.mrb[0].mxu0 %v2812
  %v3577 = vpop.f32.mrb[0].mxu0
  %v3578 = vadd.f32 %v3385, %v3577
  %v3579 = vpop.f32.mrb[0].mxu0
  %v3580 = vadd.f32 %v3387, %v3579
  %v3581 = vpop.f32.mrb[0].mxu0
  %v3582 = vadd.f32 %v3389, %v3581
  %v3583 = vpop.f32.mrb[0].mxu0
  %v3584 = vadd.f32 %v3391, %v3583
  %3585 = vdwg.mxu0
  %3586 = vmatprep.subr.bf16.mxu0 %v1984
  %3587 = vmatpush1.bf16.msra.mxu0 %v1983
  %3588 = vmatprep.subr.bf16.mxu0 %v1992
  %3589 = vmatpush1.bf16.msra.mxu0 %v1991
  %3590 = vmatprep.subr.bf16.mxu0 %v2000
  %3591 = vmatpush1.bf16.msra.mxu0 %v1999
  %3592 = vmatprep.subr.bf16.mxu0 %v2008
  %3593 = vmatpush1.bf16.msra.mxu0 %v2007
  %3594 = vmatprep.subr.bf16.mxu0 %v2016
  %3595 = vmatpush1.bf16.msra.mxu0 %v2015
  %3596 = vmatprep.subr.bf16.mxu0 %v2024
  %3597 = vmatpush1.bf16.msra.mxu0 %v2023
  %3598 = vmatprep.subr.bf16.mxu0 %v2032
  %3599 = vmatpush1.bf16.msra.mxu0 %v2031
  %3600 = vmatprep.subr.bf16.mxu0 %v2040
  %3601 = vmatpush1.bf16.msra.mxu0 %v2039
  %3602 = vmatprep.subr.bf16.mxu0 %v2048
  %3603 = vmatpush1.bf16.msra.mxu0 %v2047
  %3604 = vmatprep.subr.bf16.mxu0 %v2056
  %3605 = vmatpush1.bf16.msra.mxu0 %v2055
  %3606 = vmatprep.subr.bf16.mxu0 %v2064
  %3607 = vmatpush1.bf16.msra.mxu0 %v2063
  %3608 = vmatprep.subr.bf16.mxu0 %v2072
  %3609 = vmatpush1.bf16.msra.mxu0 %v2071
  %3610 = vmatprep.subr.bf16.mxu0 %v2080
  %3611 = vmatpush1.bf16.msra.mxu0 %v2079
  %3612 = vmatprep.subr.bf16.mxu0 %v2088
  %3613 = vmatpush1.bf16.msra.mxu0 %v2087
  %3614 = vmatprep.subr.bf16.mxu0 %v2096
  %3615 = vmatpush1.bf16.msra.mxu0 %v2095
  %3616 = vmatprep.subr.bf16.mxu0 %v2104
  %3617 = vmatpush1.bf16.msra.mxu0 %v2103
  %3618 = vmatprep.mubr.bf16.mxu0 %v260
  %3619 = vmatmul.mubr.bf16.gmra.mrb[0].mxu0 %v259
  %v3620 = vpop.f32.mrb[0].mxu0
  %v3621 = vadd.f32 %v776, %v3620
  %v3622 = vpop.f32.mrb[0].mxu0
  %v3623 = vadd.f32 %v780, %v3622
  %v3624 = vpop.f32.mrb[0].mxu0
  %v3625 = vadd.f32 %v776, %v3624
  %v3626 = vpop.f32.mrb[0].mxu0
  %v3627 = vadd.f32 %v780, %v3626
  %3628 = vmatprep.mubr.bf16.mxu0 %v267
  %3629 = vmatmul.mubr.bf16.gmra.mrb[0].mxu0 %v266
  %v3630 = vpop.f32.mrb[0].mxu0
  %v3631 = vadd.f32 %v776, %v3630
  %v3632 = vpop.f32.mrb[0].mxu0
  %v3633 = vadd.f32 %v780, %v3632
  %v3634 = vpop.f32.mrb[0].mxu0
  %v3635 = vadd.f32 %v776, %v3634
  %v3636 = vpop.f32.mrb[0].mxu0
  %v3637 = vadd.f32 %v780, %v3636
  %3638 = vmatprep.mubr.bf16.mxu0 %v274
  %3639 = vmatmul.mubr.bf16.gmra.mrb[0].mxu0 %v273
  %v3640 = vpop.f32.mrb[0].mxu0
  %v3641 = vadd.f32 %v776, %v3640
  %v3642 = vpop.f32.mrb[0].mxu0
  %v3643 = vadd.f32 %v780, %v3642
  %v3644 = vpop.f32.mrb[0].mxu0
  %v3645 = vadd.f32 %v776, %v3644
  %v3646 = vpop.f32.mrb[0].mxu0
  %v3647 = vadd.f32 %v780, %v3646
  %3648 = vmatprep.mubr.bf16.mxu0 %v281
  %3649 = vmatmul.mubr.bf16.gmra.mrb[0].mxu0 %v280
  %v3650 = vpop.f32.mrb[0].mxu0
  %v3651 = vadd.f32 %v776, %v3650
  %v3652 = vpop.f32.mrb[0].mxu0
  %v3653 = vadd.f32 %v780, %v3652
  %v3654 = vpop.f32.mrb[0].mxu0
  %v3655 = vadd.f32 %v776, %v3654
  %v3656 = vpop.f32.mrb[0].mxu0
  %v3657 = vadd.f32 %v780, %v3656
  %3658 = vmatprep.mubr.bf16.mxu0 %v288
  %3659 = vmatmul.mubr.bf16.gmra.mrb[0].mxu0 %v287
  %v3660 = vpop.f32.mrb[0].mxu0
  %v3661 = vadd.f32 %v776, %v3660
  %v3662 = vpop.f32.mrb[0].mxu0
  %v3663 = vadd.f32 %v780, %v3662
  %v3664 = vpop.f32.mrb[0].mxu0
  %v3665 = vadd.f32 %v776, %v3664
  %v3666 = vpop.f32.mrb[0].mxu0
  %v3667 = vadd.f32 %v780, %v3666
  %3668 = vmatprep.mubr.bf16.mxu0 %v295
  %3669 = vmatmul.mubr.bf16.gmra.mrb[0].mxu0 %v294
  %v3670 = vpop.f32.mrb[0].mxu0
  %v3671 = vadd.f32 %v776, %v3670
  %v3672 = vpop.f32.mrb[0].mxu0
  %v3673 = vadd.f32 %v780, %v3672
  %v3674 = vpop.f32.mrb[0].mxu0
  %v3675 = vadd.f32 %v776, %v3674
  %v3676 = vpop.f32.mrb[0].mxu0
  %v3677 = vadd.f32 %v780, %v3676
  %3678 = vmatprep.mubr.bf16.mxu0 %v302
  %3679 = vmatmul.mubr.bf16.gmra.mrb[0].mxu0 %v301
  %v3680 = vpop.f32.mrb[0].mxu0
  %v3681 = vadd.f32 %v776, %v3680
  %v3682 = vpop.f32.mrb[0].mxu0
  %v3683 = vadd.f32 %v780, %v3682
  %v3684 = vpop.f32.mrb[0].mxu0
  %v3685 = vadd.f32 %v776, %v3684
  %v3686 = vpop.f32.mrb[0].mxu0
  %v3687 = vadd.f32 %v780, %v3686
  %3688 = vmatprep.mubr.bf16.mxu0 %v309
  %3689 = vmatmul.mubr.bf16.gmra.mrb[0].mxu0 %v308
  %v3690 = vpop.f32.mrb[0].mxu0
  %v3691 = vadd.f32 %v776, %v3690
  %v3692 = vpop.f32.mrb[0].mxu0
  %v3693 = vadd.f32 %v780, %v3692
  %v3694 = vpop.f32.mrb[0].mxu0
  %v3695 = vadd.f32 %v776, %v3694
  %v3696 = vpop.f32.mrb[0].mxu0
  %v3697 = vadd.f32 %v780, %v3696
  %3698 = vmatprep.mubr.bf16.mxu0 %v316
  %3699 = vmatmul.mubr.bf16.gmra.mrb[0].mxu0 %v315
  %v3700 = vpop.f32.mrb[0].mxu0
  %v3701 = vadd.f32 %v776, %v3700
  %v3702 = vpop.f32.mrb[0].mxu0
  %v3703 = vadd.f32 %v780, %v3702
  %v3704 = vpop.f32.mrb[0].mxu0
  %v3705 = vadd.f32 %v776, %v3704
  %v3706 = vpop.f32.mrb[0].mxu0
  %v3707 = vadd.f32 %v780, %v3706
  %3708 = vmatprep.mubr.bf16.mxu0 %v323
  %3709 = vmatmul.mubr.bf16.gmra.mrb[0].mxu0 %v322
  %v3710 = vpop.f32.mrb[0].mxu0
  %v3711 = vadd.f32 %v776, %v3710
  %v3712 = vpop.f32.mrb[0].mxu0
  %v3713 = vadd.f32 %v780, %v3712
  %v3714 = vpop.f32.mrb[0].mxu0
  %v3715 = vadd.f32 %v776, %v3714
  %v3716 = vpop.f32.mrb[0].mxu0
  %v3717 = vadd.f32 %v780, %v3716
  %3718 = vmatprep.mubr.bf16.mxu0 %v330
  %3719 = vmatmul.mubr.bf16.gmra.mrb[0].mxu0 %v329
  %v3720 = vpop.f32.mrb[0].mxu0
  %v3721 = vadd.f32 %v776, %v3720
  %v3722 = vpop.f32.mrb[0].mxu0
  %v3723 = vadd.f32 %v780, %v3722
  %v3724 = vpop.f32.mrb[0].mxu0
  %v3725 = vadd.f32 %v776, %v3724
  %v3726 = vpop.f32.mrb[0].mxu0
  %v3727 = vadd.f32 %v780, %v3726
  %3728 = vmatprep.mubr.bf16.mxu0 %v337
  %3729 = vmatmul.mubr.bf16.gmra.mrb[0].mxu0 %v336
  %v3730 = vpop.f32.mrb[0].mxu0
  %v3731 = vadd.f32 %v776, %v3730
  %v3732 = vpop.f32.mrb[0].mxu0
  %v3733 = vadd.f32 %v780, %v3732
  %v3734 = vpop.f32.mrb[0].mxu0
  %v3735 = vadd.f32 %v776, %v3734
  %v3736 = vpop.f32.mrb[0].mxu0
  %v3737 = vadd.f32 %v780, %v3736
  %3738 = vmatprep.mubr.bf16.mxu0 %v344
  %3739 = vmatmul.mubr.bf16.gmra.mrb[0].mxu0 %v343
  %v3740 = vpop.f32.mrb[0].mxu0
  %v3741 = vadd.f32 %v776, %v3740
  %v3742 = vpop.f32.mrb[0].mxu0
  %v3743 = vadd.f32 %v780, %v3742
  %v3744 = vpop.f32.mrb[0].mxu0
  %v3745 = vadd.f32 %v776, %v3744
  %v3746 = vpop.f32.mrb[0].mxu0
  %v3747 = vadd.f32 %v780, %v3746
  %3748 = vmatprep.mubr.bf16.mxu0 %v351
  %3749 = vmatmul.mubr.bf16.gmra.mrb[0].mxu0 %v350
  %v3750 = vpop.f32.mrb[0].mxu0
  %v3751 = vadd.f32 %v776, %v3750
  %v3752 = vpop.f32.mrb[0].mxu0
  %v3753 = vadd.f32 %v780, %v3752
  %v3754 = vpop.f32.mrb[0].mxu0
  %v3755 = vadd.f32 %v776, %v3754
  %v3756 = vpop.f32.mrb[0].mxu0
  %v3757 = vadd.f32 %v780, %v3756
  %3758 = vmatprep.mubr.bf16.mxu0 %v358
  %3759 = vmatmul.mubr.bf16.gmra.mrb[0].mxu0 %v357
  %v3760 = vpop.f32.mrb[0].mxu0
  %v3761 = vadd.f32 %v776, %v3760
  %v3762 = vpop.f32.mrb[0].mxu0
  %v3763 = vadd.f32 %v780, %v3762
  %v3764 = vpop.f32.mrb[0].mxu0
  %v3765 = vadd.f32 %v776, %v3764
  %v3766 = vpop.f32.mrb[0].mxu0
  %v3767 = vadd.f32 %v780, %v3766
  %3768 = vmatprep.mubr.bf16.mxu0 %v365
  %3769 = vmatmul.mubr.bf16.gmra.mrb[0].mxu0 %v364
  %v3770 = vpop.f32.mrb[0].mxu0
  %v3771 = vadd.f32 %v776, %v3770
  %v3772 = vpop.f32.mrb[0].mxu0
  %v3773 = vadd.f32 %v780, %v3772
  %v3774 = vpop.f32.mrb[0].mxu0
  %v3775 = vadd.f32 %v776, %v3774
  %v3776 = vpop.f32.mrb[0].mxu0
  %v3777 = vadd.f32 %v780, %v3776
  %3778 = vdwg.mxu0
  %3779 = vmatprep.subr.bf16.mxu0 %v2112
  %3780 = vmatpush1.bf16.msra.mxu0 %v2111
  %3781 = vmatprep.subr.bf16.mxu0 %v2120
  %3782 = vmatpush1.bf16.msra.mxu0 %v2119
  %3783 = vmatprep.subr.bf16.mxu0 %v2128
  %3784 = vmatpush1.bf16.msra.mxu0 %v2127
  %3785 = vmatprep.subr.bf16.mxu0 %v2136
  %3786 = vmatpush1.bf16.msra.mxu0 %v2135
  %3787 = vmatprep.subr.bf16.mxu0 %v2144
  %3788 = vmatpush1.bf16.msra.mxu0 %v2143
  %3789 = vmatprep.subr.bf16.mxu0 %v2152
  %3790 = vmatpush1.bf16.msra.mxu0 %v2151
  %3791 = vmatprep.subr.bf16.mxu0 %v2160
  %3792 = vmatpush1.bf16.msra.mxu0 %v2159
  %3793 = vmatprep.subr.bf16.mxu0 %v2168
  %3794 = vmatpush1.bf16.msra.mxu0 %v2167
  %3795 = vmatprep.subr.bf16.mxu0 %v2176
  %3796 = vmatpush1.bf16.msra.mxu0 %v2175
  %3797 = vmatprep.subr.bf16.mxu0 %v2184
  %3798 = vmatpush1.bf16.msra.mxu0 %v2183
  %3799 = vmatprep.subr.bf16.mxu0 %v2192
  %3800 = vmatpush1.bf16.msra.mxu0 %v2191
  %3801 = vmatprep.subr.bf16.mxu0 %v2200
  %3802 = vmatpush1.bf16.msra.mxu0 %v2199
  %3803 = vmatprep.subr.bf16.mxu0 %v2208
  %3804 = vmatpush1.bf16.msra.mxu0 %v2207
  %3805 = vmatprep.subr.bf16.mxu0 %v2216
  %3806 = vmatpush1.bf16.msra.mxu0 %v2215
  %3807 = vmatprep.subr.bf16.mxu0 %v2224
  %3808 = vmatpush1.bf16.msra.mxu0 %v2223
  %3809 = vmatprep.subr.bf16.mxu0 %v2232
  %3810 = vmatpush1.bf16.msra.mxu0 %v2231
  %3811 = vmatprep.mubr.bf16.mxu0 %v262
  %3812 = vmatmul.mubr.bf16.gmra.mrb[0].mxu0 %v261
  %v3813 = vpop.f32.mrb[0].mxu0
  %v3814 = vadd.f32 %v3621, %v3813
  %v3815 = vpop.f32.mrb[0].mxu0
  %v3816 = vadd.f32 %v3623, %v3815
  %v3817 = vpop.f32.mrb[0].mxu0
  %v3818 = vadd.f32 %v3625, %v3817
  %v3819 = vpop.f32.mrb[0].mxu0
  %v3820 = vadd.f32 %v3627, %v3819
  %3821 = vmatprep.mubr.bf16.mxu0 %v269
  %3822 = vmatmul.mubr.bf16.gmra.mrb[0].mxu0 %v268
  %v3823 = vpop.f32.mrb[0].mxu0
  %v3824 = vadd.f32 %v3631, %v3823
  %v3825 = vpop.f32.mrb[0].mxu0
  %v3826 = vadd.f32 %v3633, %v3825
  %v3827 = vpop.f32.mrb[0].mxu0
  %v3828 = vadd.f32 %v3635, %v3827
  %v3829 = vpop.f32.mrb[0].mxu0
  %v3830 = vadd.f32 %v3637, %v3829
  %3831 = vmatprep.mubr.bf16.mxu0 %v276
  %3832 = vmatmul.mubr.bf16.gmra.mrb[0].mxu0 %v275
  %v3833 = vpop.f32.mrb[0].mxu0
  %v3834 = vadd.f32 %v3641, %v3833
  %v3835 = vpop.f32.mrb[0].mxu0
  %v3836 = vadd.f32 %v3643, %v3835
  %v3837 = vpop.f32.mrb[0].mxu0
  %v3838 = vadd.f32 %v3645, %v3837
  %v3839 = vpop.f32.mrb[0].mxu0
  %v3840 = vadd.f32 %v3647, %v3839
  %3841 = vmatprep.mubr.bf16.mxu0 %v283
  %3842 = vmatmul.mubr.bf16.gmra.mrb[0].mxu0 %v282
  %v3843 = vpop.f32.mrb[0].mxu0
  %v3844 = vadd.f32 %v3651, %v3843
  %v3845 = vpop.f32.mrb[0].mxu0
  %v3846 = vadd.f32 %v3653, %v3845
  %v3847 = vpop.f32.mrb[0].mxu0
  %v3848 = vadd.f32 %v3655, %v3847
  %v3849 = vpop.f32.mrb[0].mxu0
  %v3850 = vadd.f32 %v3657, %v3849
  %3851 = vmatprep.mubr.bf16.mxu0 %v290
  %3852 = vmatmul.mubr.bf16.gmra.mrb[0].mxu0 %v289
  %v3853 = vpop.f32.mrb[0].mxu0
  %v3854 = vadd.f32 %v3661, %v3853
  %v3855 = vpop.f32.mrb[0].mxu0
  %v3856 = vadd.f32 %v3663, %v3855
  %v3857 = vpop.f32.mrb[0].mxu0
  %v3858 = vadd.f32 %v3665, %v3857
  %v3859 = vpop.f32.mrb[0].mxu0
  %v3860 = vadd.f32 %v3667, %v3859
  %3861 = vmatprep.mubr.bf16.mxu0 %v297
  %3862 = vmatmul.mubr.bf16.gmra.mrb[0].mxu0 %v296
  %v3863 = vpop.f32.mrb[0].mxu0
  %v3864 = vadd.f32 %v3671, %v3863
  %v3865 = vpop.f32.mrb[0].mxu0
  %v3866 = vadd.f32 %v3673, %v3865
  %v3867 = vpop.f32.mrb[0].mxu0
  %v3868 = vadd.f32 %v3675, %v3867
  %v3869 = vpop.f32.mrb[0].mxu0
  %v3870 = vadd.f32 %v3677, %v3869
  %3871 = vmatprep.mubr.bf16.mxu0 %v304
  %3872 = vmatmul.mubr.bf16.gmra.mrb[0].mxu0 %v303
  %v3873 = vpop.f32.mrb[0].mxu0
  %v3874 = vadd.f32 %v3681, %v3873
  %v3875 = vpop.f32.mrb[0].mxu0
  %v3876 = vadd.f32 %v3683, %v3875
  %v3877 = vpop.f32.mrb[0].mxu0
  %v3878 = vadd.f32 %v3685, %v3877
  %v3879 = vpop.f32.mrb[0].mxu0
  %v3880 = vadd.f32 %v3687, %v3879
  %3881 = vmatprep.mubr.bf16.mxu0 %v311
  %3882 = vmatmul.mubr.bf16.gmra.mrb[0].mxu0 %v310
  %v3883 = vpop.f32.mrb[0].mxu0
  %v3884 = vadd.f32 %v3691, %v3883
  %v3885 = vpop.f32.mrb[0].mxu0
  %v3886 = vadd.f32 %v3693, %v3885
  %v3887 = vpop.f32.mrb[0].mxu0
  %v3888 = vadd.f32 %v3695, %v3887
  %v3889 = vpop.f32.mrb[0].mxu0
  %v3890 = vadd.f32 %v3697, %v3889
  %3891 = vmatprep.mubr.bf16.mxu0 %v318
  %3892 = vmatmul.mubr.bf16.gmra.mrb[0].mxu0 %v317
  %v3893 = vpop.f32.mrb[0].mxu0
  %v3894 = vadd.f32 %v3701, %v3893
  %v3895 = vpop.f32.mrb[0].mxu0
  %v3896 = vadd.f32 %v3703, %v3895
  %v3897 = vpop.f32.mrb[0].mxu0
  %v3898 = vadd.f32 %v3705, %v3897
  %v3899 = vpop.f32.mrb[0].mxu0
  %v3900 = vadd.f32 %v3707, %v3899
  %3901 = vmatprep.mubr.bf16.mxu0 %v325
  %3902 = vmatmul.mubr.bf16.gmra.mrb[0].mxu0 %v324
  %v3903 = vpop.f32.mrb[0].mxu0
  %v3904 = vadd.f32 %v3711, %v3903
  %v3905 = vpop.f32.mrb[0].mxu0
  %v3906 = vadd.f32 %v3713, %v3905
  %v3907 = vpop.f32.mrb[0].mxu0
  %v3908 = vadd.f32 %v3715, %v3907
  %v3909 = vpop.f32.mrb[0].mxu0
  %v3910 = vadd.f32 %v3717, %v3909
  %3911 = vmatprep.mubr.bf16.mxu0 %v332
  %3912 = vmatmul.mubr.bf16.gmra.mrb[0].mxu0 %v331
  %v3913 = vpop.f32.mrb[0].mxu0
  %v3914 = vadd.f32 %v3721, %v3913
  %v3915 = vpop.f32.mrb[0].mxu0
  %v3916 = vadd.f32 %v3723, %v3915
  %v3917 = vpop.f32.mrb[0].mxu0
  %v3918 = vadd.f32 %v3725, %v3917
  %v3919 = vpop.f32.mrb[0].mxu0
  %v3920 = vadd.f32 %v3727, %v3919
  %3921 = vmatprep.mubr.bf16.mxu0 %v339
  %3922 = vmatmul.mubr.bf16.gmra.mrb[0].mxu0 %v338
  %v3923 = vpop.f32.mrb[0].mxu0
  %v3924 = vadd.f32 %v3731, %v3923
  %v3925 = vpop.f32.mrb[0].mxu0
  %v3926 = vadd.f32 %v3733, %v3925
  %v3927 = vpop.f32.mrb[0].mxu0
  %v3928 = vadd.f32 %v3735, %v3927
  %v3929 = vpop.f32.mrb[0].mxu0
  %v3930 = vadd.f32 %v3737, %v3929
  %3931 = vmatprep.mubr.bf16.mxu0 %v346
  %3932 = vmatmul.mubr.bf16.gmra.mrb[0].mxu0 %v345
  %v3933 = vpop.f32.mrb[0].mxu0
  %v3934 = vadd.f32 %v3741, %v3933
  %v3935 = vpop.f32.mrb[0].mxu0
  %v3936 = vadd.f32 %v3743, %v3935
  %v3937 = vpop.f32.mrb[0].mxu0
  %v3938 = vadd.f32 %v3745, %v3937
  %v3939 = vpop.f32.mrb[0].mxu0
  %v3940 = vadd.f32 %v3747, %v3939
  %3941 = vmatprep.mubr.bf16.mxu0 %v353
  %3942 = vmatmul.mubr.bf16.gmra.mrb[0].mxu0 %v352
  %v3943 = vpop.f32.mrb[0].mxu0
  %v3944 = vadd.f32 %v3751, %v3943
  %v3945 = vpop.f32.mrb[0].mxu0
  %v3946 = vadd.f32 %v3753, %v3945
  %v3947 = vpop.f32.mrb[0].mxu0
  %v3948 = vadd.f32 %v3755, %v3947
  %v3949 = vpop.f32.mrb[0].mxu0
  %v3950 = vadd.f32 %v3757, %v3949
  %3951 = vmatprep.mubr.bf16.mxu0 %v360
  %3952 = vmatmul.mubr.bf16.gmra.mrb[0].mxu0 %v359
  %v3953 = vpop.f32.mrb[0].mxu0
  %v3954 = vadd.f32 %v3761, %v3953
  %v3955 = vpop.f32.mrb[0].mxu0
  %v3956 = vadd.f32 %v3763, %v3955
  %v3957 = vpop.f32.mrb[0].mxu0
  %v3958 = vadd.f32 %v3765, %v3957
  %v3959 = vpop.f32.mrb[0].mxu0
  %v3960 = vadd.f32 %v3767, %v3959
  %3961 = vmatprep.mubr.bf16.mxu0 %v367
  %3962 = vmatmul.mubr.bf16.gmra.mrb[0].mxu0 %v366
  %v3963 = vpop.f32.mrb[0].mxu0
  %v3964 = vadd.f32 %v3771, %v3963
  %v3965 = vpop.f32.mrb[0].mxu0
  %v3966 = vadd.f32 %v3773, %v3965
  %v3967 = vpop.f32.mrb[0].mxu0
  %v3968 = vadd.f32 %v3775, %v3967
  %v3969 = vpop.f32.mrb[0].mxu0
  %v3970 = vadd.f32 %v3777, %v3969
  %3971 = vdwg.mxu0
  %3972 = vmatprep.subr.bf16.mxu0 %v2240
  %3973 = vmatpush1.bf16.msra.mxu0 %v2239
  %3974 = vmatprep.subr.bf16.mxu0 %v2248
  %3975 = vmatpush1.bf16.msra.mxu0 %v2247
  %3976 = vmatprep.subr.bf16.mxu0 %v2256
  %3977 = vmatpush1.bf16.msra.mxu0 %v2255
  %3978 = vmatprep.subr.bf16.mxu0 %v2264
  %3979 = vmatpush1.bf16.msra.mxu0 %v2263
  %3980 = vmatprep.subr.bf16.mxu0 %v2272
  %3981 = vmatpush1.bf16.msra.mxu0 %v2271
  %3982 = vmatprep.subr.bf16.mxu0 %v2280
  %3983 = vmatpush1.bf16.msra.mxu0 %v2279
  %3984 = vmatprep.subr.bf16.mxu0 %v2288
  %3985 = vmatpush1.bf16.msra.mxu0 %v2287
  %3986 = vmatprep.subr.bf16.mxu0 %v2296
  %3987 = vmatpush1.bf16.msra.mxu0 %v2295
  %3988 = vmatprep.subr.bf16.mxu0 %v2304
  %3989 = vmatpush1.bf16.msra.mxu0 %v2303
  %3990 = vmatprep.subr.bf16.mxu0 %v2312
  %3991 = vmatpush1.bf16.msra.mxu0 %v2311
  %3992 = vmatprep.subr.bf16.mxu0 %v2320
  %3993 = vmatpush1.bf16.msra.mxu0 %v2319
  %3994 = vmatprep.subr.bf16.mxu0 %v2328
  %3995 = vmatpush1.bf16.msra.mxu0 %v2327
  %3996 = vmatprep.subr.bf16.mxu0 %v2336
  %3997 = vmatpush1.bf16.msra.mxu0 %v2335
  %3998 = vmatprep.subr.bf16.mxu0 %v2344
  %3999 = vmatpush1.bf16.msra.mxu0 %v2343
  %4000 = vmatprep.subr.bf16.mxu0 %v2352
  %4001 = vmatpush1.bf16.msra.mxu0 %v2351
  %4002 = vmatprep.subr.bf16.mxu0 %v2360
  %4003 = vmatpush1.bf16.msra.mxu0 %v2359
  %4004 = vmatprep.mubr.bf16.mxu0 %v264
  %4005 = vmatmul.mubr.bf16.gmra.mrb[0].mxu0 %v263
  %v4006 = vpop.f32.mrb[0].mxu0
  %v4007 = vadd.f32 %v3814, %v4006
  %v4008 = vpop.f32.mrb[0].mxu0
  %v4009 = vadd.f32 %v3816, %v4008
  %v4010 = vpop.f32.mrb[0].mxu0
  %v4011 = vadd.f32 %v3818, %v4010
  %v4012 = vpop.f32.mrb[0].mxu0
  %v4013 = vadd.f32 %v3820, %v4012
  %4014 = vmatprep.mubr.bf16.mxu0 %v271
  %4015 = vmatmul.mubr.bf16.gmra.mrb[0].mxu0 %v270
  %v4016 = vpop.f32.mrb[0].mxu0
  %v4017 = vadd.f32 %v3824, %v4016
  %v4018 = vpop.f32.mrb[0].mxu0
  %v4019 = vadd.f32 %v3826, %v4018
  %v4020 = vpop.f32.mrb[0].mxu0
  %v4021 = vadd.f32 %v3828, %v4020
  %v4022 = vpop.f32.mrb[0].mxu0
  %v4023 = vadd.f32 %v3830, %v4022
  %4024 = vmatprep.mubr.bf16.mxu0 %v278
  %4025 = vmatmul.mubr.bf16.gmra.mrb[0].mxu0 %v277
  %v4026 = vpop.f32.mrb[0].mxu0
  %v4027 = vadd.f32 %v3834, %v4026
  %v4028 = vpop.f32.mrb[0].mxu0
  %v4029 = vadd.f32 %v3836, %v4028
  %v4030 = vpop.f32.mrb[0].mxu0
  %v4031 = vadd.f32 %v3838, %v4030
  %v4032 = vpop.f32.mrb[0].mxu0
  %v4033 = vadd.f32 %v3840, %v4032
  %4034 = vmatprep.mubr.bf16.mxu0 %v285
  %4035 = vmatmul.mubr.bf16.gmra.mrb[0].mxu0 %v284
  %v4036 = vpop.f32.mrb[0].mxu0
  %v4037 = vadd.f32 %v3844, %v4036
  %v4038 = vpop.f32.mrb[0].mxu0
  %v4039 = vadd.f32 %v3846, %v4038
  %v4040 = vpop.f32.mrb[0].mxu0
  %v4041 = vadd.f32 %v3848, %v4040
  %v4042 = vpop.f32.mrb[0].mxu0
  %v4043 = vadd.f32 %v3850, %v4042
  %4044 = vmatprep.mubr.bf16.mxu0 %v292
  %4045 = vmatmul.mubr.bf16.gmra.mrb[0].mxu0 %v291
  %v4046 = vpop.f32.mrb[0].mxu0
  %v4047 = vadd.f32 %v3854, %v4046
  %v4048 = vpop.f32.mrb[0].mxu0
  %v4049 = vadd.f32 %v3856, %v4048
  %v4050 = vpop.f32.mrb[0].mxu0
  %v4051 = vadd.f32 %v3858, %v4050
  %v4052 = vpop.f32.mrb[0].mxu0
  %v4053 = vadd.f32 %v3860, %v4052
  %4054 = vmatprep.mubr.bf16.mxu0 %v299
  %4055 = vmatmul.mubr.bf16.gmra.mrb[0].mxu0 %v298
  %v4056 = vpop.f32.mrb[0].mxu0
  %v4057 = vadd.f32 %v3864, %v4056
  %v4058 = vpop.f32.mrb[0].mxu0
  %v4059 = vadd.f32 %v3866, %v4058
  %v4060 = vpop.f32.mrb[0].mxu0
  %v4061 = vadd.f32 %v3868, %v4060
  %v4062 = vpop.f32.mrb[0].mxu0
  %v4063 = vadd.f32 %v3870, %v4062
  %4064 = vmatprep.mubr.bf16.mxu0 %v306
  %4065 = vmatmul.mubr.bf16.gmra.mrb[0].mxu0 %v305
  %v4066 = vpop.f32.mrb[0].mxu0
  %v4067 = vadd.f32 %v3874, %v4066
  %v4068 = vpop.f32.mrb[0].mxu0
  %v4069 = vadd.f32 %v3876, %v4068
  %v4070 = vpop.f32.mrb[0].mxu0
  %v4071 = vadd.f32 %v3878, %v4070
  %v4072 = vpop.f32.mrb[0].mxu0
  %v4073 = vadd.f32 %v3880, %v4072
  %4074 = vmatprep.mubr.bf16.mxu0 %v313
  %4075 = vmatmul.mubr.bf16.gmra.mrb[0].mxu0 %v312
  %v4076 = vpop.f32.mrb[0].mxu0
  %v4077 = vadd.f32 %v3884, %v4076
  %v4078 = vpop.f32.mrb[0].mxu0
  %v4079 = vadd.f32 %v3886, %v4078
  %v4080 = vpop.f32.mrb[0].mxu0
  %v4081 = vadd.f32 %v3888, %v4080
  %v4082 = vpop.f32.mrb[0].mxu0
  %v4083 = vadd.f32 %v3890, %v4082
  %4084 = vmatprep.mubr.bf16.mxu0 %v320
  %4085 = vmatmul.mubr.bf16.gmra.mrb[0].mxu0 %v319
  %v4086 = vpop.f32.mrb[0].mxu0
  %v4087 = vadd.f32 %v3894, %v4086
  %v4088 = vpop.f32.mrb[0].mxu0
  %v4089 = vadd.f32 %v3896, %v4088
  %v4090 = vpop.f32.mrb[0].mxu0
  %v4091 = vadd.f32 %v3898, %v4090
  %v4092 = vpop.f32.mrb[0].mxu0
  %v4093 = vadd.f32 %v3900, %v4092
  %4094 = vmatprep.mubr.bf16.mxu0 %v327
  %4095 = vmatmul.mubr.bf16.gmra.mrb[0].mxu0 %v326
  %v4096 = vpop.f32.mrb[0].mxu0
  %v4097 = vadd.f32 %v3904, %v4096
  %v4098 = vpop.f32.mrb[0].mxu0
  %v4099 = vadd.f32 %v3906, %v4098
  %v4100 = vpop.f32.mrb[0].mxu0
  %v4101 = vadd.f32 %v3908, %v4100
  %v4102 = vpop.f32.mrb[0].mxu0
  %v4103 = vadd.f32 %v3910, %v4102
  %4104 = vmatprep.mubr.bf16.mxu0 %v334
  %4105 = vmatmul.mubr.bf16.gmra.mrb[0].mxu0 %v333
  %v4106 = vpop.f32.mrb[0].mxu0
  %v4107 = vadd.f32 %v3914, %v4106
  %v4108 = vpop.f32.mrb[0].mxu0
  %v4109 = vadd.f32 %v3916, %v4108
  %v4110 = vpop.f32.mrb[0].mxu0
  %v4111 = vadd.f32 %v3918, %v4110
  %v4112 = vpop.f32.mrb[0].mxu0
  %v4113 = vadd.f32 %v3920, %v4112
  %4114 = vmatprep.mubr.bf16.mxu0 %v341
  %4115 = vmatmul.mubr.bf16.gmra.mrb[0].mxu0 %v340
  %v4116 = vpop.f32.mrb[0].mxu0
  %v4117 = vadd.f32 %v3924, %v4116
  %v4118 = vpop.f32.mrb[0].mxu0
  %v4119 = vadd.f32 %v3926, %v4118
  %v4120 = vpop.f32.mrb[0].mxu0
  %v4121 = vadd.f32 %v3928, %v4120
  %v4122 = vpop.f32.mrb[0].mxu0
  %v4123 = vadd.f32 %v3930, %v4122
  %4124 = vmatprep.mubr.bf16.mxu0 %v348
  %4125 = vmatmul.mubr.bf16.gmra.mrb[0].mxu0 %v347
  %v4126 = vpop.f32.mrb[0].mxu0
  %v4127 = vadd.f32 %v3934, %v4126
  %v4128 = vpop.f32.mrb[0].mxu0
  %v4129 = vadd.f32 %v3936, %v4128
  %v4130 = vpop.f32.mrb[0].mxu0
  %v4131 = vadd.f32 %v3938, %v4130
  %v4132 = vpop.f32.mrb[0].mxu0
  %v4133 = vadd.f32 %v3940, %v4132
  %4134 = vmatprep.mubr.bf16.mxu0 %v355
  %4135 = vmatmul.mubr.bf16.gmra.mrb[0].mxu0 %v354
  %v4136 = vpop.f32.mrb[0].mxu0
  %v4137 = vadd.f32 %v3944, %v4136
  %v4138 = vpop.f32.mrb[0].mxu0
  %v4139 = vadd.f32 %v3946, %v4138
  %v4140 = vpop.f32.mrb[0].mxu0
  %v4141 = vadd.f32 %v3948, %v4140
  %v4142 = vpop.f32.mrb[0].mxu0
  %v4143 = vadd.f32 %v3950, %v4142
  %4144 = vmatprep.mubr.bf16.mxu0 %v362
  %4145 = vmatmul.mubr.bf16.gmra.mrb[0].mxu0 %v361
  %v4146 = vpop.f32.mrb[0].mxu0
  %v4147 = vadd.f32 %v3954, %v4146
  %v4148 = vpop.f32.mrb[0].mxu0
  %v4149 = vadd.f32 %v3956, %v4148
  %v4150 = vpop.f32.mrb[0].mxu0
  %v4151 = vadd.f32 %v3958, %v4150
  %v4152 = vpop.f32.mrb[0].mxu0
  %v4153 = vadd.f32 %v3960, %v4152
  %4154 = vmatprep.mubr.bf16.mxu0 %v369
  %4155 = vmatmul.mubr.bf16.gmra.mrb[0].mxu0 %v368
  %v4156 = vpop.f32.mrb[0].mxu0
  %v4157 = vadd.f32 %v3964, %v4156
  %v4158 = vpop.f32.mrb[0].mxu0
  %v4159 = vadd.f32 %v3966, %v4158
  %v4160 = vpop.f32.mrb[0].mxu0
  %v4161 = vadd.f32 %v3968, %v4160
  %v4162 = vpop.f32.mrb[0].mxu0
  %v4163 = vadd.f32 %v3970, %v4162
  %4164 = vdwg.mxu0
  %4165 = vmatprep.subr.bf16.mxu0 %v2368
  %4166 = vmatpush1.bf16.msra.mxu0 %v2367
  %4167 = vmatprep.subr.bf16.mxu0 0
  %4168 = vmatpush1.bf16.msra.mxu0 0
  %4169 = vmatprep.subr.bf16.mxu0 0
  %4170 = vmatpush1.bf16.msra.mxu0 0
  %4171 = vmatprep.subr.bf16.mxu0 0
  %4172 = vmatpush1.bf16.msra.mxu0 0
  %4173 = vmatprep.subr.bf16.mxu0 0
  %4174 = vmatpush1.bf16.msra.mxu0 0
  %4175 = vmatprep.subr.bf16.mxu0 0
  %4176 = vmatpush1.bf16.msra.mxu0 0
  %4177 = vmatprep.subr.bf16.mxu0 0
  %4178 = vmatpush1.bf16.msra.mxu0 0
  %4179 = vmatprep.subr.bf16.mxu0 0
  %4180 = vmatpush1.bf16.msra.mxu0 0
  %4181 = vmatprep.subr.bf16.mxu0 0
  %4182 = vmatpush1.bf16.msra.mxu0 0
  %4183 = vmatprep.subr.bf16.mxu0 0
  %4184 = vmatpush1.bf16.msra.mxu0 0
  %4185 = vmatprep.subr.bf16.mxu0 0
  %4186 = vmatpush1.bf16.msra.mxu0 0
  %4187 = vmatprep.subr.bf16.mxu0 0
  %4188 = vmatpush1.bf16.msra.mxu0 0
  %4189 = vmatprep.subr.bf16.mxu0 0
  %4190 = vmatpush1.bf16.msra.mxu0 0
  %4191 = vmatprep.subr.bf16.mxu0 0
  %4192 = vmatpush1.bf16.msra.mxu0 0
  %4193 = vmatprep.subr.bf16.mxu0 0
  %4194 = vmatpush1.bf16.msra.mxu0 0
  %4195 = vmatprep.subr.bf16.mxu0 0
  %4196 = vmatpush1.bf16.msra.mxu0 0
  %4197 = vmatprep.mubr.bf16.mxu0 0
  %4198 = vmatmul.mubr.bf16.gmra.mrb[0].mxu0 %v2767
  %v4199 = vpop.f32.mrb[0].mxu0
  %v4200 = vadd.f32 %v4007, %v4199
  %v4201 = vpop.f32.mrb[0].mxu0
  %v4202 = vadd.f32 %v4009, %v4201
  %v4203 = vpop.f32.mrb[0].mxu0
  %v4204 = vadd.f32 %v4011, %v4203
  %v4205 = vpop.f32.mrb[0].mxu0
  %v4206 = vadd.f32 %v4013, %v4205
  %4207 = vmatprep.mubr.bf16.mxu0 0
  %4208 = vmatmul.mubr.bf16.gmra.mrb[0].mxu0 %v2770
  %v4209 = vpop.f32.mrb[0].mxu0
  %v4210 = vadd.f32 %v4017, %v4209
  %v4211 = vpop.f32.mrb[0].mxu0
  %v4212 = vadd.f32 %v4019, %v4211
  %v4213 = vpop.f32.mrb[0].mxu0
  %v4214 = vadd.f32 %v4021, %v4213
  %v4215 = vpop.f32.mrb[0].mxu0
  %v4216 = vadd.f32 %v4023, %v4215
  %4217 = vmatprep.mubr.bf16.mxu0 0
  %4218 = vmatmul.mubr.bf16.gmra.mrb[0].mxu0 %v2773
  %v4219 = vpop.f32.mrb[0].mxu0
  %v4220 = vadd.f32 %v4027, %v4219
  %v4221 = vpop.f32.mrb[0].mxu0
  %v4222 = vadd.f32 %v4029, %v4221
  %v4223 = vpop.f32.mrb[0].mxu0
  %v4224 = vadd.f32 %v4031, %v4223
  %v4225 = vpop.f32.mrb[0].mxu0
  %v4226 = vadd.f32 %v4033, %v4225
  %4227 = vmatprep.mubr.bf16.mxu0 0
  %4228 = vmatmul.mubr.bf16.gmra.mrb[0].mxu0 %v2776
  %v4229 = vpop.f32.mrb[0].mxu0
  %v4230 = vadd.f32 %v4037, %v4229
  %v4231 = vpop.f32.mrb[0].mxu0
  %v4232 = vadd.f32 %v4039, %v4231
  %v4233 = vpop.f32.mrb[0].mxu0
  %v4234 = vadd.f32 %v4041, %v4233
  %v4235 = vpop.f32.mrb[0].mxu0
  %v4236 = vadd.f32 %v4043, %v4235
  %4237 = vmatprep.mubr.bf16.mxu0 0
  %4238 = vmatmul.mubr.bf16.gmra.mrb[0].mxu0 %v2779
  %v4239 = vpop.f32.mrb[0].mxu0
  %v4240 = vadd.f32 %v4047, %v4239
  %v4241 = vpop.f32.mrb[0].mxu0
  %v4242 = vadd.f32 %v4049, %v4241
  %v4243 = vpop.f32.mrb[0].mxu0
  %v4244 = vadd.f32 %v4051, %v4243
  %v4245 = vpop.f32.mrb[0].mxu0
  %v4246 = vadd.f32 %v4053, %v4245
  %4247 = vmatprep.mubr.bf16.mxu0 0
  %4248 = vmatmul.mubr.bf16.gmra.mrb[0].mxu0 %v2782
  %v4249 = vpop.f32.mrb[0].mxu0
  %v4250 = vadd.f32 %v4057, %v4249
  %v4251 = vpop.f32.mrb[0].mxu0
  %v4252 = vadd.f32 %v4059, %v4251
  %v4253 = vpop.f32.mrb[0].mxu0
  %v4254 = vadd.f32 %v4061, %v4253
  %v4255 = vpop.f32.mrb[0].mxu0
  %v4256 = vadd.f32 %v4063, %v4255
  %4257 = vmatprep.mubr.bf16.mxu0 0
  %4258 = vmatmul.mubr.bf16.gmra.mrb[0].mxu0 %v2785
  %v4259 = vpop.f32.mrb[0].mxu0
  %v4260 = vadd.f32 %v4067, %v4259
  %v4261 = vpop.f32.mrb[0].mxu0
  %v4262 = vadd.f32 %v4069, %v4261
  %v4263 = vpop.f32.mrb[0].mxu0
  %v4264 = vadd.f32 %v4071, %v4263
  %v4265 = vpop.f32.mrb[0].mxu0
  %v4266 = vadd.f32 %v4073, %v4265
  %4267 = vmatprep.mubr.bf16.mxu0 0
  %4268 = vmatmul.mubr.bf16.gmra.mrb[0].mxu0 %v2788
  %v4269 = vpop.f32.mrb[0].mxu0
  %v4270 = vadd.f32 %v4077, %v4269
  %v4271 = vpop.f32.mrb[0].mxu0
  %v4272 = vadd.f32 %v4079, %v4271
  %v4273 = vpop.f32.mrb[0].mxu0
  %v4274 = vadd.f32 %v4081, %v4273
  %v4275 = vpop.f32.mrb[0].mxu0
  %v4276 = vadd.f32 %v4083, %v4275
  %4277 = vmatprep.mubr.bf16.mxu0 0
  %4278 = vmatmul.mubr.bf16.gmra.mrb[0].mxu0 %v2791
  %v4279 = vpop.f32.mrb[0].mxu0
  %v4280 = vadd.f32 %v4087, %v4279
  %v4281 = vpop.f32.mrb[0].mxu0
  %v4282 = vadd.f32 %v4089, %v4281
  %v4283 = vpop.f32.mrb[0].mxu0
  %v4284 = vadd.f32 %v4091, %v4283
  %v4285 = vpop.f32.mrb[0].mxu0
  %v4286 = vadd.f32 %v4093, %v4285
  %4287 = vmatprep.mubr.bf16.mxu0 0
  %4288 = vmatmul.mubr.bf16.gmra.mrb[0].mxu0 %v2794
  %v4289 = vpop.f32.mrb[0].mxu0
  %v4290 = vadd.f32 %v4097, %v4289
  %v4291 = vpop.f32.mrb[0].mxu0
  %v4292 = vadd.f32 %v4099, %v4291
  %v4293 = vpop.f32.mrb[0].mxu0
  %v4294 = vadd.f32 %v4101, %v4293
  %v4295 = vpop.f32.mrb[0].mxu0
  %v4296 = vadd.f32 %v4103, %v4295
  %4297 = vmatprep.mubr.bf16.mxu0 0
  %4298 = vmatmul.mubr.bf16.gmra.mrb[0].mxu0 %v2797
  %v4299 = vpop.f32.mrb[0].mxu0
  %v4300 = vadd.f32 %v4107, %v4299
  %v4301 = vpop.f32.mrb[0].mxu0
  %v4302 = vadd.f32 %v4109, %v4301
  %v4303 = vpop.f32.mrb[0].mxu0
  %v4304 = vadd.f32 %v4111, %v4303
  %v4305 = vpop.f32.mrb[0].mxu0
  %v4306 = vadd.f32 %v4113, %v4305
  %4307 = vmatprep.mubr.bf16.mxu0 0
  %4308 = vmatmul.mubr.bf16.gmra.mrb[0].mxu0 %v2800
  %v4309 = vpop.f32.mrb[0].mxu0
  %v4310 = vadd.f32 %v4117, %v4309
  %v4311 = vpop.f32.mrb[0].mxu0
  %v4312 = vadd.f32 %v4119, %v4311
  %v4313 = vpop.f32.mrb[0].mxu0
  %v4314 = vadd.f32 %v4121, %v4313
  %v4315 = vpop.f32.mrb[0].mxu0
  %v4316 = vadd.f32 %v4123, %v4315
  %4317 = vmatprep.mubr.bf16.mxu0 0
  %4318 = vmatmul.mubr.bf16.gmra.mrb[0].mxu0 %v2803
  %v4319 = vpop.f32.mrb[0].mxu0
  %v4320 = vadd.f32 %v4127, %v4319
  %v4321 = vpop.f32.mrb[0].mxu0
  %v4322 = vadd.f32 %v4129, %v4321
  %v4323 = vpop.f32.mrb[0].mxu0
  %v4324 = vadd.f32 %v4131, %v4323
  %v4325 = vpop.f32.mrb[0].mxu0
  %v4326 = vadd.f32 %v4133, %v4325
  %4327 = vmatprep.mubr.bf16.mxu0 0
  %4328 = vmatmul.mubr.bf16.gmra.mrb[0].mxu0 %v2806
  %v4329 = vpop.f32.mrb[0].mxu0
  %v4330 = vadd.f32 %v4137, %v4329
  %v4331 = vpop.f32.mrb[0].mxu0
  %v4332 = vadd.f32 %v4139, %v4331
  %v4333 = vpop.f32.mrb[0].mxu0
  %v4334 = vadd.f32 %v4141, %v4333
  %v4335 = vpop.f32.mrb[0].mxu0
  %v4336 = vadd.f32 %v4143, %v4335
  %4337 = vmatprep.mubr.bf16.mxu0 0
  %4338 = vmatmul.mubr.bf16.gmra.mrb[0].mxu0 %v2809
  %v4339 = vpop.f32.mrb[0].mxu0
  %v4340 = vadd.f32 %v4147, %v4339
  %v4341 = vpop.f32.mrb[0].mxu0
  %v4342 = vadd.f32 %v4149, %v4341
  %v4343 = vpop.f32.mrb[0].mxu0
  %v4344 = vadd.f32 %v4151, %v4343
  %v4345 = vpop.f32.mrb[0].mxu0
  %v4346 = vadd.f32 %v4153, %v4345
  %4347 = vmatprep.mubr.bf16.mxu0 0
  %4348 = vmatmul.mubr.bf16.gmra.mrb[0].mxu0 %v2812
  %v4349 = vpop.f32.mrb[0].mxu0
  %v4350 = vadd.f32 %v4157, %v4349
  %v4351 = vpop.f32.mrb[0].mxu0
  %v4352 = vadd.f32 %v4159, %v4351
  %v4353 = vpop.f32.mrb[0].mxu0
  %v4354 = vadd.f32 %v4161, %v4353
  %v4355 = vpop.f32.mrb[0].mxu0
  %v4356 = vadd.f32 %v4163, %v4355
  %4357 = vdwg.mxu0
  %4358 = vmatprep.subr.bf16.mxu0 %v1986
  %4359 = vmatpush1.bf16.msra.mxu0 %v1985
  %4360 = vmatprep.subr.bf16.mxu0 %v1994
  %4361 = vmatpush1.bf16.msra.mxu0 %v1993
  %4362 = vmatprep.subr.bf16.mxu0 %v2002
  %4363 = vmatpush1.bf16.msra.mxu0 %v2001
  %4364 = vmatprep.subr.bf16.mxu0 %v2010
  %4365 = vmatpush1.bf16.msra.mxu0 %v2009
  %4366 = vmatprep.subr.bf16.mxu0 %v2018
  %4367 = vmatpush1.bf16.msra.mxu0 %v2017
  %4368 = vmatprep.subr.bf16.mxu0 %v2026
  %4369 = vmatpush1.bf16.msra.mxu0 %v2025
  %4370 = vmatprep.subr.bf16.mxu0 %v2034
  %4371 = vmatpush1.bf16.msra.mxu0 %v2033
  %4372 = vmatprep.subr.bf16.mxu0 %v2042
  %4373 = vmatpush1.bf16.msra.mxu0 %v2041
  %4374 = vmatprep.subr.bf16.mxu0 %v2050
  %4375 = vmatpush1.bf16.msra.mxu0 %v2049
  %4376 = vmatprep.subr.bf16.mxu0 %v2058
  %4377 = vmatpush1.bf16.msra.mxu0 %v2057
  %4378 = vmatprep.subr.bf16.mxu0 %v2066
  %4379 = vmatpush1.bf16.msra.mxu0 %v2065
  %4380 = vmatprep.subr.bf16.mxu0 %v2074
  %4381 = vmatpush1.bf16.msra.mxu0 %v2073
  %4382 = vmatprep.subr.bf16.mxu0 %v2082
  %4383 = vmatpush1.bf16.msra.mxu0 %v2081
  %4384 = vmatprep.subr.bf16.mxu0 %v2090
  %4385 = vmatpush1.bf16.msra.mxu0 %v2089
  %4386 = vmatprep.subr.bf16.mxu0 %v2098
  %4387 = vmatpush1.bf16.msra.mxu0 %v2097
  %4388 = vmatprep.subr.bf16.mxu0 %v2106
  %4389 = vmatpush1.bf16.msra.mxu0 %v2105
  %4390 = vmatprep.mubr.bf16.mxu0 %v260
  %4391 = vmatmul.mubr.bf16.gmra.mrb[0].mxu0 %v259
  %v4392 = vpop.f32.mrb[0].mxu0
  %v4393 = vadd.f32 %v784, %v4392
  %v4394 = vpop.f32.mrb[0].mxu0
  %v4395 = vadd.f32 %v788, %v4394
  %v4396 = vpop.f32.mrb[0].mxu0
  %v4397 = vadd.f32 %v784, %v4396
  %v4398 = vpop.f32.mrb[0].mxu0
  %v4399 = vadd.f32 %v788, %v4398
  %4400 = vmatprep.mubr.bf16.mxu0 %v267
  %4401 = vmatmul.mubr.bf16.gmra.mrb[0].mxu0 %v266
  %v4402 = vpop.f32.mrb[0].mxu0
  %v4403 = vadd.f32 %v784, %v4402
  %v4404 = vpop.f32.mrb[0].mxu0
  %v4405 = vadd.f32 %v788, %v4404
  %v4406 = vpop.f32.mrb[0].mxu0
  %v4407 = vadd.f32 %v784, %v4406
  %v4408 = vpop.f32.mrb[0].mxu0
  %v4409 = vadd.f32 %v788, %v4408
  %4410 = vmatprep.mubr.bf16.mxu0 %v274
  %4411 = vmatmul.mubr.bf16.gmra.mrb[0].mxu0 %v273
  %v4412 = vpop.f32.mrb[0].mxu0
  %v4413 = vadd.f32 %v784, %v4412
  %v4414 = vpop.f32.mrb[0].mxu0
  %v4415 = vadd.f32 %v788, %v4414
  %v4416 = vpop.f32.mrb[0].mxu0
  %v4417 = vadd.f32 %v784, %v4416
  %v4418 = vpop.f32.mrb[0].mxu0
  %v4419 = vadd.f32 %v788, %v4418
  %4420 = vmatprep.mubr.bf16.mxu0 %v281
  %4421 = vmatmul.mubr.bf16.gmra.mrb[0].mxu0 %v280
  %v4422 = vpop.f32.mrb[0].mxu0
  %v4423 = vadd.f32 %v784, %v4422
  %v4424 = vpop.f32.mrb[0].mxu0
  %v4425 = vadd.f32 %v788, %v4424
  %v4426 = vpop.f32.mrb[0].mxu0
  %v4427 = vadd.f32 %v784, %v4426
  %v4428 = vpop.f32.mrb[0].mxu0
  %v4429 = vadd.f32 %v788, %v4428
  %4430 = vmatprep.mubr.bf16.mxu0 %v288
  %4431 = vmatmul.mubr.bf16.gmra.mrb[0].mxu0 %v287
  %v4432 = vpop.f32.mrb[0].mxu0
  %v4433 = vadd.f32 %v784, %v4432
  %v4434 = vpop.f32.mrb[0].mxu0
  %v4435 = vadd.f32 %v788, %v4434
  %v4436 = vpop.f32.mrb[0].mxu0
  %v4437 = vadd.f32 %v784, %v4436
  %v4438 = vpop.f32.mrb[0].mxu0
  %v4439 = vadd.f32 %v788, %v4438
  %4440 = vmatprep.mubr.bf16.mxu0 %v295
  %4441 = vmatmul.mubr.bf16.gmra.mrb[0].mxu0 %v294
  %v4442 = vpop.f32.mrb[0].mxu0
  %v4443 = vadd.f32 %v784, %v4442
  %v4444 = vpop.f32.mrb[0].mxu0
  %v4445 = vadd.f32 %v788, %v4444
  %v4446 = vpop.f32.mrb[0].mxu0
  %v4447 = vadd.f32 %v784, %v4446
  %v4448 = vpop.f32.mrb[0].mxu0
  %v4449 = vadd.f32 %v788, %v4448
  %4450 = vmatprep.mubr.bf16.mxu0 %v302
  %4451 = vmatmul.mubr.bf16.gmra.mrb[0].mxu0 %v301
  %v4452 = vpop.f32.mrb[0].mxu0
  %v4453 = vadd.f32 %v784, %v4452
  %v4454 = vpop.f32.mrb[0].mxu0
  %v4455 = vadd.f32 %v788, %v4454
  %v4456 = vpop.f32.mrb[0].mxu0
  %v4457 = vadd.f32 %v784, %v4456
  %v4458 = vpop.f32.mrb[0].mxu0
  %v4459 = vadd.f32 %v788, %v4458
  %4460 = vmatprep.mubr.bf16.mxu0 %v309
  %4461 = vmatmul.mubr.bf16.gmra.mrb[0].mxu0 %v308
  %v4462 = vpop.f32.mrb[0].mxu0
  %v4463 = vadd.f32 %v784, %v4462
  %v4464 = vpop.f32.mrb[0].mxu0
  %v4465 = vadd.f32 %v788, %v4464
  %v4466 = vpop.f32.mrb[0].mxu0
  %v4467 = vadd.f32 %v784, %v4466
  %v4468 = vpop.f32.mrb[0].mxu0
  %v4469 = vadd.f32 %v788, %v4468
  %4470 = vmatprep.mubr.bf16.mxu0 %v316
  %4471 = vmatmul.mubr.bf16.gmra.mrb[0].mxu0 %v315
  %v4472 = vpop.f32.mrb[0].mxu0
  %v4473 = vadd.f32 %v784, %v4472
  %v4474 = vpop.f32.mrb[0].mxu0
  %v4475 = vadd.f32 %v788, %v4474
  %v4476 = vpop.f32.mrb[0].mxu0
  %v4477 = vadd.f32 %v784, %v4476
  %v4478 = vpop.f32.mrb[0].mxu0
  %v4479 = vadd.f32 %v788, %v4478
  %4480 = vmatprep.mubr.bf16.mxu0 %v323
  %4481 = vmatmul.mubr.bf16.gmra.mrb[0].mxu0 %v322
  %v4482 = vpop.f32.mrb[0].mxu0
  %v4483 = vadd.f32 %v784, %v4482
  %v4484 = vpop.f32.mrb[0].mxu0
  %v4485 = vadd.f32 %v788, %v4484
  %v4486 = vpop.f32.mrb[0].mxu0
  %v4487 = vadd.f32 %v784, %v4486
  %v4488 = vpop.f32.mrb[0].mxu0
  %v4489 = vadd.f32 %v788, %v4488
  %4490 = vmatprep.mubr.bf16.mxu0 %v330
  %4491 = vmatmul.mubr.bf16.gmra.mrb[0].mxu0 %v329
  %v4492 = vpop.f32.mrb[0].mxu0
  %v4493 = vadd.f32 %v784, %v4492
  %v4494 = vpop.f32.mrb[0].mxu0
  %v4495 = vadd.f32 %v788, %v4494
  %v4496 = vpop.f32.mrb[0].mxu0
  %v4497 = vadd.f32 %v784, %v4496
  %v4498 = vpop.f32.mrb[0].mxu0
  %v4499 = vadd.f32 %v788, %v4498
  %4500 = vmatprep.mubr.bf16.mxu0 %v337
  %4501 = vmatmul.mubr.bf16.gmra.mrb[0].mxu0 %v336
  %v4502 = vpop.f32.mrb[0].mxu0
  %v4503 = vadd.f32 %v784, %v4502
  %v4504 = vpop.f32.mrb[0].mxu0
  %v4505 = vadd.f32 %v788, %v4504
  %v4506 = vpop.f32.mrb[0].mxu0
  %v4507 = vadd.f32 %v784, %v4506
  %v4508 = vpop.f32.mrb[0].mxu0
  %v4509 = vadd.f32 %v788, %v4508
  %4510 = vmatprep.mubr.bf16.mxu0 %v344
  %4511 = vmatmul.mubr.bf16.gmra.mrb[0].mxu0 %v343
  %v4512 = vpop.f32.mrb[0].mxu0
  %v4513 = vadd.f32 %v784, %v4512
  %v4514 = vpop.f32.mrb[0].mxu0
  %v4515 = vadd.f32 %v788, %v4514
  %v4516 = vpop.f32.mrb[0].mxu0
  %v4517 = vadd.f32 %v784, %v4516
  %v4518 = vpop.f32.mrb[0].mxu0
  %v4519 = vadd.f32 %v788, %v4518
  %4520 = vmatprep.mubr.bf16.mxu0 %v351
  %4521 = vmatmul.mubr.bf16.gmra.mrb[0].mxu0 %v350
  %v4522 = vpop.f32.mrb[0].mxu0
  %v4523 = vadd.f32 %v784, %v4522
  %v4524 = vpop.f32.mrb[0].mxu0
  %v4525 = vadd.f32 %v788, %v4524
  %v4526 = vpop.f32.mrb[0].mxu0
  %v4527 = vadd.f32 %v784, %v4526
  %v4528 = vpop.f32.mrb[0].mxu0
  %v4529 = vadd.f32 %v788, %v4528
  %4530 = vmatprep.mubr.bf16.mxu0 %v358
  %4531 = vmatmul.mubr.bf16.gmra.mrb[0].mxu0 %v357
  %v4532 = vpop.f32.mrb[0].mxu0
  %v4533 = vadd.f32 %v784, %v4532
  %v4534 = vpop.f32.mrb[0].mxu0
  %v4535 = vadd.f32 %v788, %v4534
  %v4536 = vpop.f32.mrb[0].mxu0
  %v4537 = vadd.f32 %v784, %v4536
  %v4538 = vpop.f32.mrb[0].mxu0
  %v4539 = vadd.f32 %v788, %v4538
  %4540 = vmatprep.mubr.bf16.mxu0 %v365
  %4541 = vmatmul.mubr.bf16.gmra.mrb[0].mxu0 %v364
  %v4542 = vpop.f32.mrb[0].mxu0
  %v4543 = vadd.f32 %v784, %v4542
  %v4544 = vpop.f32.mrb[0].mxu0
  %v4545 = vadd.f32 %v788, %v4544
  %v4546 = vpop.f32.mrb[0].mxu0
  %v4547 = vadd.f32 %v784, %v4546
  %v4548 = vpop.f32.mrb[0].mxu0
  %v4549 = vadd.f32 %v788, %v4548
  %4550 = vdwg.mxu0
  %4551 = vmatprep.subr.bf16.mxu0 %v2114
  %4552 = vmatpush1.bf16.msra.mxu0 %v2113
  %4553 = vmatprep.subr.bf16.mxu0 %v2122
  %4554 = vmatpush1.bf16.msra.mxu0 %v2121
  %4555 = vmatprep.subr.bf16.mxu0 %v2130
  %4556 = vmatpush1.bf16.msra.mxu0 %v2129
  %4557 = vmatprep.subr.bf16.mxu0 %v2138
  %4558 = vmatpush1.bf16.msra.mxu0 %v2137
  %4559 = vmatprep.subr.bf16.mxu0 %v2146
  %4560 = vmatpush1.bf16.msra.mxu0 %v2145
  %4561 = vmatprep.subr.bf16.mxu0 %v2154
  %4562 = vmatpush1.bf16.msra.mxu0 %v2153
  %4563 = vmatprep.subr.bf16.mxu0 %v2162
  %4564 = vmatpush1.bf16.msra.mxu0 %v2161
  %4565 = vmatprep.subr.bf16.mxu0 %v2170
  %4566 = vmatpush1.bf16.msra.mxu0 %v2169
  %4567 = vmatprep.subr.bf16.mxu0 %v2178
  %4568 = vmatpush1.bf16.msra.mxu0 %v2177
  %4569 = vmatprep.subr.bf16.mxu0 %v2186
  %4570 = vmatpush1.bf16.msra.mxu0 %v2185
  %4571 = vmatprep.subr.bf16.mxu0 %v2194
  %4572 = vmatpush1.bf16.msra.mxu0 %v2193
  %4573 = vmatprep.subr.bf16.mxu0 %v2202
  %4574 = vmatpush1.bf16.msra.mxu0 %v2201
  %4575 = vmatprep.subr.bf16.mxu0 %v2210
  %4576 = vmatpush1.bf16.msra.mxu0 %v2209
  %4577 = vmatprep.subr.bf16.mxu0 %v2218
  %4578 = vmatpush1.bf16.msra.mxu0 %v2217
  %4579 = vmatprep.subr.bf16.mxu0 %v2226
  %4580 = vmatpush1.bf16.msra.mxu0 %v2225
  %4581 = vmatprep.subr.bf16.mxu0 %v2234
  %4582 = vmatpush1.bf16.msra.mxu0 %v2233
  %4583 = vmatprep.mubr.bf16.mxu0 %v262
  %4584 = vmatmul.mubr.bf16.gmra.mrb[0].mxu0 %v261
  %v4585 = vpop.f32.mrb[0].mxu0
  %v4586 = vadd.f32 %v4393, %v4585
  %v4587 = vpop.f32.mrb[0].mxu0
  %v4588 = vadd.f32 %v4395, %v4587
  %v4589 = vpop.f32.mrb[0].mxu0
  %v4590 = vadd.f32 %v4397, %v4589
  %v4591 = vpop.f32.mrb[0].mxu0
  %v4592 = vadd.f32 %v4399, %v4591
  %4593 = vmatprep.mubr.bf16.mxu0 %v269
  %4594 = vmatmul.mubr.bf16.gmra.mrb[0].mxu0 %v268
  %v4595 = vpop.f32.mrb[0].mxu0
  %v4596 = vadd.f32 %v4403, %v4595
  %v4597 = vpop.f32.mrb[0].mxu0
  %v4598 = vadd.f32 %v4405, %v4597
  %v4599 = vpop.f32.mrb[0].mxu0
  %v4600 = vadd.f32 %v4407, %v4599
  %v4601 = vpop.f32.mrb[0].mxu0
  %v4602 = vadd.f32 %v4409, %v4601
  %4603 = vmatprep.mubr.bf16.mxu0 %v276
  %4604 = vmatmul.mubr.bf16.gmra.mrb[0].mxu0 %v275
  %v4605 = vpop.f32.mrb[0].mxu0
  %v4606 = vadd.f32 %v4413, %v4605
  %v4607 = vpop.f32.mrb[0].mxu0
  %v4608 = vadd.f32 %v4415, %v4607
  %v4609 = vpop.f32.mrb[0].mxu0
  %v4610 = vadd.f32 %v4417, %v4609
  %v4611 = vpop.f32.mrb[0].mxu0
  %v4612 = vadd.f32 %v4419, %v4611
  %4613 = vmatprep.mubr.bf16.mxu0 %v283
  %4614 = vmatmul.mubr.bf16.gmra.mrb[0].mxu0 %v282
  %v4615 = vpop.f32.mrb[0].mxu0
  %v4616 = vadd.f32 %v4423, %v4615
  %v4617 = vpop.f32.mrb[0].mxu0
  %v4618 = vadd.f32 %v4425, %v4617
  %v4619 = vpop.f32.mrb[0].mxu0
  %v4620 = vadd.f32 %v4427, %v4619
  %v4621 = vpop.f32.mrb[0].mxu0
  %v4622 = vadd.f32 %v4429, %v4621
  %4623 = vmatprep.mubr.bf16.mxu0 %v290
  %4624 = vmatmul.mubr.bf16.gmra.mrb[0].mxu0 %v289
  %v4625 = vpop.f32.mrb[0].mxu0
  %v4626 = vadd.f32 %v4433, %v4625
  %v4627 = vpop.f32.mrb[0].mxu0
  %v4628 = vadd.f32 %v4435, %v4627
  %v4629 = vpop.f32.mrb[0].mxu0
  %v4630 = vadd.f32 %v4437, %v4629
  %v4631 = vpop.f32.mrb[0].mxu0
  %v4632 = vadd.f32 %v4439, %v4631
  %4633 = vmatprep.mubr.bf16.mxu0 %v297
  %4634 = vmatmul.mubr.bf16.gmra.mrb[0].mxu0 %v296
  %v4635 = vpop.f32.mrb[0].mxu0
  %v4636 = vadd.f32 %v4443, %v4635
  %v4637 = vpop.f32.mrb[0].mxu0
  %v4638 = vadd.f32 %v4445, %v4637
  %v4639 = vpop.f32.mrb[0].mxu0
  %v4640 = vadd.f32 %v4447, %v4639
  %v4641 = vpop.f32.mrb[0].mxu0
  %v4642 = vadd.f32 %v4449, %v4641
  %4643 = vmatprep.mubr.bf16.mxu0 %v304
  %4644 = vmatmul.mubr.bf16.gmra.mrb[0].mxu0 %v303
  %v4645 = vpop.f32.mrb[0].mxu0
  %v4646 = vadd.f32 %v4453, %v4645
  %v4647 = vpop.f32.mrb[0].mxu0
  %v4648 = vadd.f32 %v4455, %v4647
  %v4649 = vpop.f32.mrb[0].mxu0
  %v4650 = vadd.f32 %v4457, %v4649
  %v4651 = vpop.f32.mrb[0].mxu0
  %v4652 = vadd.f32 %v4459, %v4651
  %4653 = vmatprep.mubr.bf16.mxu0 %v311
  %4654 = vmatmul.mubr.bf16.gmra.mrb[0].mxu0 %v310
  %v4655 = vpop.f32.mrb[0].mxu0
  %v4656 = vadd.f32 %v4463, %v4655
  %v4657 = vpop.f32.mrb[0].mxu0
  %v4658 = vadd.f32 %v4465, %v4657
  %v4659 = vpop.f32.mrb[0].mxu0
  %v4660 = vadd.f32 %v4467, %v4659
  %v4661 = vpop.f32.mrb[0].mxu0
  %v4662 = vadd.f32 %v4469, %v4661
  %4663 = vmatprep.mubr.bf16.mxu0 %v318
  %4664 = vmatmul.mubr.bf16.gmra.mrb[0].mxu0 %v317
  %v4665 = vpop.f32.mrb[0].mxu0
  %v4666 = vadd.f32 %v4473, %v4665
  %v4667 = vpop.f32.mrb[0].mxu0
  %v4668 = vadd.f32 %v4475, %v4667
  %v4669 = vpop.f32.mrb[0].mxu0
  %v4670 = vadd.f32 %v4477, %v4669
  %v4671 = vpop.f32.mrb[0].mxu0
  %v4672 = vadd.f32 %v4479, %v4671
  %4673 = vmatprep.mubr.bf16.mxu0 %v325
  %4674 = vmatmul.mubr.bf16.gmra.mrb[0].mxu0 %v324
  %v4675 = vpop.f32.mrb[0].mxu0
  %v4676 = vadd.f32 %v4483, %v4675
  %v4677 = vpop.f32.mrb[0].mxu0
  %v4678 = vadd.f32 %v4485, %v4677
  %v4679 = vpop.f32.mrb[0].mxu0
  %v4680 = vadd.f32 %v4487, %v4679
  %v4681 = vpop.f32.mrb[0].mxu0
  %v4682 = vadd.f32 %v4489, %v4681
  %4683 = vmatprep.mubr.bf16.mxu0 %v332
  %4684 = vmatmul.mubr.bf16.gmra.mrb[0].mxu0 %v331
  %v4685 = vpop.f32.mrb[0].mxu0
  %v4686 = vadd.f32 %v4493, %v4685
  %v4687 = vpop.f32.mrb[0].mxu0
  %v4688 = vadd.f32 %v4495, %v4687
  %v4689 = vpop.f32.mrb[0].mxu0
  %v4690 = vadd.f32 %v4497, %v4689
  %v4691 = vpop.f32.mrb[0].mxu0
  %v4692 = vadd.f32 %v4499, %v4691
  %4693 = vmatprep.mubr.bf16.mxu0 %v339
  %4694 = vmatmul.mubr.bf16.gmra.mrb[0].mxu0 %v338
  %v4695 = vpop.f32.mrb[0].mxu0
  %v4696 = vadd.f32 %v4503, %v4695
  %v4697 = vpop.f32.mrb[0].mxu0
  %v4698 = vadd.f32 %v4505, %v4697
  %v4699 = vpop.f32.mrb[0].mxu0
  %v4700 = vadd.f32 %v4507, %v4699
  %v4701 = vpop.f32.mrb[0].mxu0
  %v4702 = vadd.f32 %v4509, %v4701
  %4703 = vmatprep.mubr.bf16.mxu0 %v346
  %4704 = vmatmul.mubr.bf16.gmra.mrb[0].mxu0 %v345
  %v4705 = vpop.f32.mrb[0].mxu0
  %v4706 = vadd.f32 %v4513, %v4705
  %v4707 = vpop.f32.mrb[0].mxu0
  %v4708 = vadd.f32 %v4515, %v4707
  %v4709 = vpop.f32.mrb[0].mxu0
  %v4710 = vadd.f32 %v4517, %v4709
  %v4711 = vpop.f32.mrb[0].mxu0
  %v4712 = vadd.f32 %v4519, %v4711
  %4713 = vmatprep.mubr.bf16.mxu0 %v353
  %4714 = vmatmul.mubr.bf16.gmra.mrb[0].mxu0 %v352
  %v4715 = vpop.f32.mrb[0].mxu0
  %v4716 = vadd.f32 %v4523, %v4715
  %v4717 = vpop.f32.mrb[0].mxu0
  %v4718 = vadd.f32 %v4525, %v4717
  %v4719 = vpop.f32.mrb[0].mxu0
  %v4720 = vadd.f32 %v4527, %v4719
  %v4721 = vpop.f32.mrb[0].mxu0
  %v4722 = vadd.f32 %v4529, %v4721
  %4723 = vmatprep.mubr.bf16.mxu0 %v360
  %4724 = vmatmul.mubr.bf16.gmra.mrb[0].mxu0 %v359
  %v4725 = vpop.f32.mrb[0].mxu0
  %v4726 = vadd.f32 %v4533, %v4725
  %v4727 = vpop.f32.mrb[0].mxu0
  %v4728 = vadd.f32 %v4535, %v4727
  %v4729 = vpop.f32.mrb[0].mxu0
  %v4730 = vadd.f32 %v4537, %v4729
  %v4731 = vpop.f32.mrb[0].mxu0
  %v4732 = vadd.f32 %v4539, %v4731
  %4733 = vmatprep.mubr.bf16.mxu0 %v367
  %4734 = vmatmul.mubr.bf16.gmra.mrb[0].mxu0 %v366
  %v4735 = vpop.f32.mrb[0].mxu0
  %v4736 = vadd.f32 %v4543, %v4735
  %v4737 = vpop.f32.mrb[0].mxu0
  %v4738 = vadd.f32 %v4545, %v4737
  %v4739 = vpop.f32.mrb[0].mxu0
  %v4740 = vadd.f32 %v4547, %v4739
  %v4741 = vpop.f32.mrb[0].mxu0
  %v4742 = vadd.f32 %v4549, %v4741
  %4743 = vdwg.mxu0
  %4744 = vmatprep.subr.bf16.mxu0 %v2242
  %4745 = vmatpush1.bf16.msra.mxu0 %v2241
  %4746 = vmatprep.subr.bf16.mxu0 %v2250
  %4747 = vmatpush1.bf16.msra.mxu0 %v2249
  %4748 = vmatprep.subr.bf16.mxu0 %v2258
  %4749 = vmatpush1.bf16.msra.mxu0 %v2257
  %4750 = vmatprep.subr.bf16.mxu0 %v2266
  %4751 = vmatpush1.bf16.msra.mxu0 %v2265
  %4752 = vmatprep.subr.bf16.mxu0 %v2274
  %4753 = vmatpush1.bf16.msra.mxu0 %v2273
  %4754 = vmatprep.subr.bf16.mxu0 %v2282
  %4755 = vmatpush1.bf16.msra.mxu0 %v2281
  %4756 = vmatprep.subr.bf16.mxu0 %v2290
  %4757 = vmatpush1.bf16.msra.mxu0 %v2289
  %4758 = vmatprep.subr.bf16.mxu0 %v2298
  %4759 = vmatpush1.bf16.msra.mxu0 %v2297
  %4760 = vmatprep.subr.bf16.mxu0 %v2306
  %4761 = vmatpush1.bf16.msra.mxu0 %v2305
  %4762 = vmatprep.subr.bf16.mxu0 %v2314
  %4763 = vmatpush1.bf16.msra.mxu0 %v2313
  %4764 = vmatprep.subr.bf16.mxu0 %v2322
  %4765 = vmatpush1.bf16.msra.mxu0 %v2321
  %4766 = vmatprep.subr.bf16.mxu0 %v2330
  %4767 = vmatpush1.bf16.msra.mxu0 %v2329
  %4768 = vmatprep.subr.bf16.mxu0 %v2338
  %4769 = vmatpush1.bf16.msra.mxu0 %v2337
  %4770 = vmatprep.subr.bf16.mxu0 %v2346
  %4771 = vmatpush1.bf16.msra.mxu0 %v2345
  %4772 = vmatprep.subr.bf16.mxu0 %v2354
  %4773 = vmatpush1.bf16.msra.mxu0 %v2353
  %4774 = vmatprep.subr.bf16.mxu0 %v2362
  %4775 = vmatpush1.bf16.msra.mxu0 %v2361
  %4776 = vmatprep.mubr.bf16.mxu0 %v264
  %4777 = vmatmul.mubr.bf16.gmra.mrb[0].mxu0 %v263
  %v4778 = vpop.f32.mrb[0].mxu0
  %v4779 = vadd.f32 %v4586, %v4778
  %v4780 = vpop.f32.mrb[0].mxu0
  %v4781 = vadd.f32 %v4588, %v4780
  %v4782 = vpop.f32.mrb[0].mxu0
  %v4783 = vadd.f32 %v4590, %v4782
  %v4784 = vpop.f32.mrb[0].mxu0
  %v4785 = vadd.f32 %v4592, %v4784
  %4786 = vmatprep.mubr.bf16.mxu0 %v271
  %4787 = vmatmul.mubr.bf16.gmra.mrb[0].mxu0 %v270
  %v4788 = vpop.f32.mrb[0].mxu0
  %v4789 = vadd.f32 %v4596, %v4788
  %v4790 = vpop.f32.mrb[0].mxu0
  %v4791 = vadd.f32 %v4598, %v4790
  %v4792 = vpop.f32.mrb[0].mxu0
  %v4793 = vadd.f32 %v4600, %v4792
  %v4794 = vpop.f32.mrb[0].mxu0
  %v4795 = vadd.f32 %v4602, %v4794
  %4796 = vmatprep.mubr.bf16.mxu0 %v278
  %4797 = vmatmul.mubr.bf16.gmra.mrb[0].mxu0 %v277
  %v4798 = vpop.f32.mrb[0].mxu0
  %v4799 = vadd.f32 %v4606, %v4798
  %v4800 = vpop.f32.mrb[0].mxu0
  %v4801 = vadd.f32 %v4608, %v4800
  %v4802 = vpop.f32.mrb[0].mxu0
  %v4803 = vadd.f32 %v4610, %v4802
  %v4804 = vpop.f32.mrb[0].mxu0
  %v4805 = vadd.f32 %v4612, %v4804
  %4806 = vmatprep.mubr.bf16.mxu0 %v285
  %4807 = vmatmul.mubr.bf16.gmra.mrb[0].mxu0 %v284
  %v4808 = vpop.f32.mrb[0].mxu0
  %v4809 = vadd.f32 %v4616, %v4808
  %v4810 = vpop.f32.mrb[0].mxu0
  %v4811 = vadd.f32 %v4618, %v4810
  %v4812 = vpop.f32.mrb[0].mxu0
  %v4813 = vadd.f32 %v4620, %v4812
  %v4814 = vpop.f32.mrb[0].mxu0
  %v4815 = vadd.f32 %v4622, %v4814
  %4816 = vmatprep.mubr.bf16.mxu0 %v292
  %4817 = vmatmul.mubr.bf16.gmra.mrb[0].mxu0 %v291
  %v4818 = vpop.f32.mrb[0].mxu0
  %v4819 = vadd.f32 %v4626, %v4818
  %v4820 = vpop.f32.mrb[0].mxu0
  %v4821 = vadd.f32 %v4628, %v4820
  %v4822 = vpop.f32.mrb[0].mxu0
  %v4823 = vadd.f32 %v4630, %v4822
  %v4824 = vpop.f32.mrb[0].mxu0
  %v4825 = vadd.f32 %v4632, %v4824
  %4826 = vmatprep.mubr.bf16.mxu0 %v299
  %4827 = vmatmul.mubr.bf16.gmra.mrb[0].mxu0 %v298
  %v4828 = vpop.f32.mrb[0].mxu0
  %v4829 = vadd.f32 %v4636, %v4828
  %v4830 = vpop.f32.mrb[0].mxu0
  %v4831 = vadd.f32 %v4638, %v4830
  %v4832 = vpop.f32.mrb[0].mxu0
  %v4833 = vadd.f32 %v4640, %v4832
  %v4834 = vpop.f32.mrb[0].mxu0
  %v4835 = vadd.f32 %v4642, %v4834
  %4836 = vmatprep.mubr.bf16.mxu0 %v306
  %4837 = vmatmul.mubr.bf16.gmra.mrb[0].mxu0 %v305
  %v4838 = vpop.f32.mrb[0].mxu0
  %v4839 = vadd.f32 %v4646, %v4838
  %v4840 = vpop.f32.mrb[0].mxu0
  %v4841 = vadd.f32 %v4648, %v4840
  %v4842 = vpop.f32.mrb[0].mxu0
  %v4843 = vadd.f32 %v4650, %v4842
  %v4844 = vpop.f32.mrb[0].mxu0
  %v4845 = vadd.f32 %v4652, %v4844
  %4846 = vmatprep.mubr.bf16.mxu0 %v313
  %4847 = vmatmul.mubr.bf16.gmra.mrb[0].mxu0 %v312
  %v4848 = vpop.f32.mrb[0].mxu0
  %v4849 = vadd.f32 %v4656, %v4848
  %v4850 = vpop.f32.mrb[0].mxu0
  %v4851 = vadd.f32 %v4658, %v4850
  %v4852 = vpop.f32.mrb[0].mxu0
  %v4853 = vadd.f32 %v4660, %v4852
  %v4854 = vpop.f32.mrb[0].mxu0
  %v4855 = vadd.f32 %v4662, %v4854
  %4856 = vmatprep.mubr.bf16.mxu0 %v320
  %4857 = vmatmul.mubr.bf16.gmra.mrb[0].mxu0 %v319
  %v4858 = vpop.f32.mrb[0].mxu0
  %v4859 = vadd.f32 %v4666, %v4858
  %v4860 = vpop.f32.mrb[0].mxu0
  %v4861 = vadd.f32 %v4668, %v4860
  %v4862 = vpop.f32.mrb[0].mxu0
  %v4863 = vadd.f32 %v4670, %v4862
  %v4864 = vpop.f32.mrb[0].mxu0
  %v4865 = vadd.f32 %v4672, %v4864
  %4866 = vmatprep.mubr.bf16.mxu0 %v327
  %4867 = vmatmul.mubr.bf16.gmra.mrb[0].mxu0 %v326
  %v4868 = vpop.f32.mrb[0].mxu0
  %v4869 = vadd.f32 %v4676, %v4868
  %v4870 = vpop.f32.mrb[0].mxu0
  %v4871 = vadd.f32 %v4678, %v4870
  %v4872 = vpop.f32.mrb[0].mxu0
  %v4873 = vadd.f32 %v4680, %v4872
  %v4874 = vpop.f32.mrb[0].mxu0
  %v4875 = vadd.f32 %v4682, %v4874
  %4876 = vmatprep.mubr.bf16.mxu0 %v334
  %4877 = vmatmul.mubr.bf16.gmra.mrb[0].mxu0 %v333
  %v4878 = vpop.f32.mrb[0].mxu0
  %v4879 = vadd.f32 %v4686, %v4878
  %v4880 = vpop.f32.mrb[0].mxu0
  %v4881 = vadd.f32 %v4688, %v4880
  %v4882 = vpop.f32.mrb[0].mxu0
  %v4883 = vadd.f32 %v4690, %v4882
  %v4884 = vpop.f32.mrb[0].mxu0
  %v4885 = vadd.f32 %v4692, %v4884
  %4886 = vmatprep.mubr.bf16.mxu0 %v341
  %4887 = vmatmul.mubr.bf16.gmra.mrb[0].mxu0 %v340
  %v4888 = vpop.f32.mrb[0].mxu0
  %v4889 = vadd.f32 %v4696, %v4888
  %v4890 = vpop.f32.mrb[0].mxu0
  %v4891 = vadd.f32 %v4698, %v4890
  %v4892 = vpop.f32.mrb[0].mxu0
  %v4893 = vadd.f32 %v4700, %v4892
  %v4894 = vpop.f32.mrb[0].mxu0
  %v4895 = vadd.f32 %v4702, %v4894
  %4896 = vmatprep.mubr.bf16.mxu0 %v348
  %4897 = vmatmul.mubr.bf16.gmra.mrb[0].mxu0 %v347
  %v4898 = vpop.f32.mrb[0].mxu0
  %v4899 = vadd.f32 %v4706, %v4898
  %v4900 = vpop.f32.mrb[0].mxu0
  %v4901 = vadd.f32 %v4708, %v4900
  %v4902 = vpop.f32.mrb[0].mxu0
  %v4903 = vadd.f32 %v4710, %v4902
  %v4904 = vpop.f32.mrb[0].mxu0
  %v4905 = vadd.f32 %v4712, %v4904
  %4906 = vmatprep.mubr.bf16.mxu0 %v355
  %4907 = vmatmul.mubr.bf16.gmra.mrb[0].mxu0 %v354
  %v4908 = vpop.f32.mrb[0].mxu0
  %v4909 = vadd.f32 %v4716, %v4908
  %v4910 = vpop.f32.mrb[0].mxu0
  %v4911 = vadd.f32 %v4718, %v4910
  %v4912 = vpop.f32.mrb[0].mxu0
  %v4913 = vadd.f32 %v4720, %v4912
  %v4914 = vpop.f32.mrb[0].mxu0
  %v4915 = vadd.f32 %v4722, %v4914
  %4916 = vmatprep.mubr.bf16.mxu0 %v362
  %4917 = vmatmul.mubr.bf16.gmra.mrb[0].mxu0 %v361
  %v4918 = vpop.f32.mrb[0].mxu0
  %v4919 = vadd.f32 %v4726, %v4918
  %v4920 = vpop.f32.mrb[0].mxu0
  %v4921 = vadd.f32 %v4728, %v4920
  %v4922 = vpop.f32.mrb[0].mxu0
  %v4923 = vadd.f32 %v4730, %v4922
  %v4924 = vpop.f32.mrb[0].mxu0
  %v4925 = vadd.f32 %v4732, %v4924
  %4926 = vmatprep.mubr.bf16.mxu0 %v369
  %4927 = vmatmul.mubr.bf16.gmra.mrb[0].mxu0 %v368
  %v4928 = vpop.f32.mrb[0].mxu0
  %v4929 = vadd.f32 %v4736, %v4928
  %v4930 = vpop.f32.mrb[0].mxu0
  %v4931 = vadd.f32 %v4738, %v4930
  %v4932 = vpop.f32.mrb[0].mxu0
  %v4933 = vadd.f32 %v4740, %v4932
  %v4934 = vpop.f32.mrb[0].mxu0
  %v4935 = vadd.f32 %v4742, %v4934
  %4936 = vdwg.mxu0
  %4937 = vmatprep.subr.bf16.mxu0 %v2370
  %4938 = vmatpush1.bf16.msra.mxu0 %v2369
  %4939 = vmatprep.subr.bf16.mxu0 0
  %4940 = vmatpush1.bf16.msra.mxu0 0
  %4941 = vmatprep.subr.bf16.mxu0 0
  %4942 = vmatpush1.bf16.msra.mxu0 0
  %4943 = vmatprep.subr.bf16.mxu0 0
  %4944 = vmatpush1.bf16.msra.mxu0 0
  %4945 = vmatprep.subr.bf16.mxu0 0
  %4946 = vmatpush1.bf16.msra.mxu0 0
  %4947 = vmatprep.subr.bf16.mxu0 0
  %4948 = vmatpush1.bf16.msra.mxu0 0
  %4949 = vmatprep.subr.bf16.mxu0 0
  %4950 = vmatpush1.bf16.msra.mxu0 0
  %4951 = vmatprep.subr.bf16.mxu0 0
  %4952 = vmatpush1.bf16.msra.mxu0 0
  %4953 = vmatprep.subr.bf16.mxu0 0
  %4954 = vmatpush1.bf16.msra.mxu0 0
  %4955 = vmatprep.subr.bf16.mxu0 0
  %4956 = vmatpush1.bf16.msra.mxu0 0
  %4957 = vmatprep.subr.bf16.mxu0 0
  %4958 = vmatpush1.bf16.msra.mxu0 0
  %4959 = vmatprep.subr.bf16.mxu0 0
  %4960 = vmatpush1.bf16.msra.mxu0 0
  %4961 = vmatprep.subr.bf16.mxu0 0
  %4962 = vmatpush1.bf16.msra.mxu0 0
  %4963 = vmatprep.subr.bf16.mxu0 0
  %4964 = vmatpush1.bf16.msra.mxu0 0
  %4965 = vmatprep.subr.bf16.mxu0 0
  %4966 = vmatpush1.bf16.msra.mxu0 0
  %4967 = vmatprep.subr.bf16.mxu0 0
  %4968 = vmatpush1.bf16.msra.mxu0 0
  %4969 = vmatprep.mubr.bf16.mxu0 0
  %4970 = vmatmul.mubr.bf16.gmra.mrb[0].mxu0 %v2767
  %v4971 = vpop.f32.mrb[0].mxu0
  %v4972 = vadd.f32 %v4779, %v4971
  %v4973 = vpop.f32.mrb[0].mxu0
  %v4974 = vadd.f32 %v4781, %v4973
  %v4975 = vpop.f32.mrb[0].mxu0
  %v4976 = vadd.f32 %v4783, %v4975
  %v4977 = vpop.f32.mrb[0].mxu0
  %v4978 = vadd.f32 %v4785, %v4977
  %4979 = vmatprep.mubr.bf16.mxu0 0
  %4980 = vmatmul.mubr.bf16.gmra.mrb[0].mxu0 %v2770
  %v4981 = vpop.f32.mrb[0].mxu0
  %v4982 = vadd.f32 %v4789, %v4981
  %v4983 = vpop.f32.mrb[0].mxu0
  %v4984 = vadd.f32 %v4791, %v4983
  %v4985 = vpop.f32.mrb[0].mxu0
  %v4986 = vadd.f32 %v4793, %v4985
  %v4987 = vpop.f32.mrb[0].mxu0
  %v4988 = vadd.f32 %v4795, %v4987
  %4989 = vmatprep.mubr.bf16.mxu0 0
  %4990 = vmatmul.mubr.bf16.gmra.mrb[0].mxu0 %v2773
  %v4991 = vpop.f32.mrb[0].mxu0
  %v4992 = vadd.f32 %v4799, %v4991
  %v4993 = vpop.f32.mrb[0].mxu0
  %v4994 = vadd.f32 %v4801, %v4993
  %v4995 = vpop.f32.mrb[0].mxu0
  %v4996 = vadd.f32 %v4803, %v4995
  %v4997 = vpop.f32.mrb[0].mxu0
  %v4998 = vadd.f32 %v4805, %v4997
  %4999 = vmatprep.mubr.bf16.mxu0 0
  %5000 = vmatmul.mubr.bf16.gmra.mrb[0].mxu0 %v2776
  %v5001 = vpop.f32.mrb[0].mxu0
  %v5002 = vadd.f32 %v4809, %v5001
  %v5003 = vpop.f32.mrb[0].mxu0
  %v5004 = vadd.f32 %v4811, %v5003
  %v5005 = vpop.f32.mrb[0].mxu0
  %v5006 = vadd.f32 %v4813, %v5005
  %v5007 = vpop.f32.mrb[0].mxu0
  %v5008 = vadd.f32 %v4815, %v5007
  %5009 = vmatprep.mubr.bf16.mxu0 0
  %5010 = vmatmul.mubr.bf16.gmra.mrb[0].mxu0 %v2779
  %v5011 = vpop.f32.mrb[0].mxu0
  %v5012 = vadd.f32 %v4819, %v5011
  %v5013 = vpop.f32.mrb[0].mxu0
  %v5014 = vadd.f32 %v4821, %v5013
  %v5015 = vpop.f32.mrb[0].mxu0
  %v5016 = vadd.f32 %v4823, %v5015
  %v5017 = vpop.f32.mrb[0].mxu0
  %v5018 = vadd.f32 %v4825, %v5017
  %5019 = vmatprep.mubr.bf16.mxu0 0
  %5020 = vmatmul.mubr.bf16.gmra.mrb[0].mxu0 %v2782
  %v5021 = vpop.f32.mrb[0].mxu0
  %v5022 = vadd.f32 %v4829, %v5021
  %v5023 = vpop.f32.mrb[0].mxu0
  %v5024 = vadd.f32 %v4831, %v5023
  %v5025 = vpop.f32.mrb[0].mxu0
  %v5026 = vadd.f32 %v4833, %v5025
  %v5027 = vpop.f32.mrb[0].mxu0
  %v5028 = vadd.f32 %v4835, %v5027
  %5029 = vmatprep.mubr.bf16.mxu0 0
  %5030 = vmatmul.mubr.bf16.gmra.mrb[0].mxu0 %v2785
  %v5031 = vpop.f32.mrb[0].mxu0
  %v5032 = vadd.f32 %v4839, %v5031
  %v5033 = vpop.f32.mrb[0].mxu0
  %v5034 = vadd.f32 %v4841, %v5033
  %v5035 = vpop.f32.mrb[0].mxu0
  %v5036 = vadd.f32 %v4843, %v5035
  %v5037 = vpop.f32.mrb[0].mxu0
  %v5038 = vadd.f32 %v4845, %v5037
  %5039 = vmatprep.mubr.bf16.mxu0 0
  %5040 = vmatmul.mubr.bf16.gmra.mrb[0].mxu0 %v2788
  %v5041 = vpop.f32.mrb[0].mxu0
  %v5042 = vadd.f32 %v4849, %v5041
  %v5043 = vpop.f32.mrb[0].mxu0
  %v5044 = vadd.f32 %v4851, %v5043
  %v5045 = vpop.f32.mrb[0].mxu0
  %v5046 = vadd.f32 %v4853, %v5045
  %v5047 = vpop.f32.mrb[0].mxu0
  %v5048 = vadd.f32 %v4855, %v5047
  %5049 = vmatprep.mubr.bf16.mxu0 0
  %5050 = vmatmul.mubr.bf16.gmra.mrb[0].mxu0 %v2791
  %v5051 = vpop.f32.mrb[0].mxu0
  %v5052 = vadd.f32 %v4859, %v5051
  %v5053 = vpop.f32.mrb[0].mxu0
  %v5054 = vadd.f32 %v4861, %v5053
  %v5055 = vpop.f32.mrb[0].mxu0
  %v5056 = vadd.f32 %v4863, %v5055
  %v5057 = vpop.f32.mrb[0].mxu0
  %v5058 = vadd.f32 %v4865, %v5057
  %5059 = vmatprep.mubr.bf16.mxu0 0
  %5060 = vmatmul.mubr.bf16.gmra.mrb[0].mxu0 %v2794
  %v5061 = vpop.f32.mrb[0].mxu0
  %v5062 = vadd.f32 %v4869, %v5061
  %v5063 = vpop.f32.mrb[0].mxu0
  %v5064 = vadd.f32 %v4871, %v5063
  %v5065 = vpop.f32.mrb[0].mxu0
  %v5066 = vadd.f32 %v4873, %v5065
  %v5067 = vpop.f32.mrb[0].mxu0
  %v5068 = vadd.f32 %v4875, %v5067
  %5069 = vmatprep.mubr.bf16.mxu0 0
  %5070 = vmatmul.mubr.bf16.gmra.mrb[0].mxu0 %v2797
  %v5071 = vpop.f32.mrb[0].mxu0
  %v5072 = vadd.f32 %v4879, %v5071
  %v5073 = vpop.f32.mrb[0].mxu0
  %v5074 = vadd.f32 %v4881, %v5073
  %v5075 = vpop.f32.mrb[0].mxu0
  %v5076 = vadd.f32 %v4883, %v5075
  %v5077 = vpop.f32.mrb[0].mxu0
  %v5078 = vadd.f32 %v4885, %v5077
  %5079 = vmatprep.mubr.bf16.mxu0 0
  %5080 = vmatmul.mubr.bf16.gmra.mrb[0].mxu0 %v2800
  %v5081 = vpop.f32.mrb[0].mxu0
  %v5082 = vadd.f32 %v4889, %v5081
  %v5083 = vpop.f32.mrb[0].mxu0
  %v5084 = vadd.f32 %v4891, %v5083
  %v5085 = vpop.f32.mrb[0].mxu0
  %v5086 = vadd.f32 %v4893, %v5085
  %v5087 = vpop.f32.mrb[0].mxu0
  %v5088 = vadd.f32 %v4895, %v5087
  %5089 = vmatprep.mubr.bf16.mxu0 0
  %5090 = vmatmul.mubr.bf16.gmra.mrb[0].mxu0 %v2803
  %v5091 = vpop.f32.mrb[0].mxu0
  %v5092 = vadd.f32 %v4899, %v5091
  %v5093 = vpop.f32.mrb[0].mxu0
  %v5094 = vadd.f32 %v4901, %v5093
  %v5095 = vpop.f32.mrb[0].mxu0
  %v5096 = vadd.f32 %v4903, %v5095
  %v5097 = vpop.f32.mrb[0].mxu0
  %v5098 = vadd.f32 %v4905, %v5097
  %5099 = vmatprep.mubr.bf16.mxu0 0
  %5100 = vmatmul.mubr.bf16.gmra.mrb[0].mxu0 %v2806
  %v5101 = vpop.f32.mrb[0].mxu0
  %v5102 = vadd.f32 %v4909, %v5101
  %v5103 = vpop.f32.mrb[0].mxu0
  %v5104 = vadd.f32 %v4911, %v5103
  %v5105 = vpop.f32.mrb[0].mxu0
  %v5106 = vadd.f32 %v4913, %v5105
  %v5107 = vpop.f32.mrb[0].mxu0
  %v5108 = vadd.f32 %v4915, %v5107
  %5109 = vmatprep.mubr.bf16.mxu0 0
  %5110 = vmatmul.mubr.bf16.gmra.mrb[0].mxu0 %v2809
  %v5111 = vpop.f32.mrb[0].mxu0
  %v5112 = vadd.f32 %v4919, %v5111
  %v5113 = vpop.f32.mrb[0].mxu0
  %v5114 = vadd.f32 %v4921, %v5113
  %v5115 = vpop.f32.mrb[0].mxu0
  %v5116 = vadd.f32 %v4923, %v5115
  %v5117 = vpop.f32.mrb[0].mxu0
  %v5118 = vadd.f32 %v4925, %v5117
  %5119 = vmatprep.mubr.bf16.mxu0 0
  %5120 = vmatmul.mubr.bf16.gmra.mrb[0].mxu0 %v2812
  %v5121 = vpop.f32.mrb[0].mxu0
  %v5122 = vadd.f32 %v4929, %v5121
  %v5123 = vpop.f32.mrb[0].mxu0
  %v5124 = vadd.f32 %v4931, %v5123
  %v5125 = vpop.f32.mrb[0].mxu0
  %v5126 = vadd.f32 %v4933, %v5125
  %v5127 = vpop.f32.mrb[0].mxu0
  %v5128 = vadd.f32 %v4935, %v5127
  %5129 = vdwg.mxu0
  %5130 = vmatprep.subr.bf16.mxu0 %v1988
  %5131 = vmatpush1.bf16.msra.mxu0 %v1987
  %5132 = vmatprep.subr.bf16.mxu0 %v1996
  %5133 = vmatpush1.bf16.msra.mxu0 %v1995
  %5134 = vmatprep.subr.bf16.mxu0 %v2004
  %5135 = vmatpush1.bf16.msra.mxu0 %v2003
  %5136 = vmatprep.subr.bf16.mxu0 %v2012
  %5137 = vmatpush1.bf16.msra.mxu0 %v2011
  %5138 = vmatprep.subr.bf16.mxu0 %v2020
  %5139 = vmatpush1.bf16.msra.mxu0 %v2019
  %5140 = vmatprep.subr.bf16.mxu0 %v2028
  %5141 = vmatpush1.bf16.msra.mxu0 %v2027
  %5142 = vmatprep.subr.bf16.mxu0 %v2036
  %5143 = vmatpush1.bf16.msra.mxu0 %v2035
  %5144 = vmatprep.subr.bf16.mxu0 %v2044
  %5145 = vmatpush1.bf16.msra.mxu0 %v2043
  %5146 = vmatprep.subr.bf16.mxu0 %v2052
  %5147 = vmatpush1.bf16.msra.mxu0 %v2051
  %5148 = vmatprep.subr.bf16.mxu0 %v2060
  %5149 = vmatpush1.bf16.msra.mxu0 %v2059
  %5150 = vmatprep.subr.bf16.mxu0 %v2068
  %5151 = vmatpush1.bf16.msra.mxu0 %v2067
  %5152 = vmatprep.subr.bf16.mxu0 %v2076
  %5153 = vmatpush1.bf16.msra.mxu0 %v2075
  %5154 = vmatprep.subr.bf16.mxu0 %v2084
  %5155 = vmatpush1.bf16.msra.mxu0 %v2083
  %5156 = vmatprep.subr.bf16.mxu0 %v2092
  %5157 = vmatpush1.bf16.msra.mxu0 %v2091
  %5158 = vmatprep.subr.bf16.mxu0 %v2100
  %5159 = vmatpush1.bf16.msra.mxu0 %v2099
  %5160 = vmatprep.subr.bf16.mxu0 %v2108
  %5161 = vmatpush1.bf16.msra.mxu0 %v2107
  %5162 = vmatprep.mubr.bf16.mxu0 %v260
  %5163 = vmatmul.mubr.bf16.gmra.mrb[0].mxu0 %v259
  %v5164 = vpop.f32.mrb[0].mxu0
  %v5165 = vadd.f32 %v792, %v5164
  %v5166 = vpop.f32.mrb[0].mxu0
  %v5167 = vadd.f32 %v796, %v5166
  %v5168 = vpop.f32.mrb[0].mxu0
  %v5169 = vadd.f32 %v792, %v5168
  %v5170 = vpop.f32.mrb[0].mxu0
  %v5171 = vadd.f32 %v796, %v5170
  %5172 = vmatprep.mubr.bf16.mxu0 %v267
  %5173 = vmatmul.mubr.bf16.gmra.mrb[0].mxu0 %v266
  %v5174 = vpop.f32.mrb[0].mxu0
  %v5175 = vadd.f32 %v792, %v5174
  %v5176 = vpop.f32.mrb[0].mxu0
  %v5177 = vadd.f32 %v796, %v5176
  %v5178 = vpop.f32.mrb[0].mxu0
  %v5179 = vadd.f32 %v792, %v5178
  %v5180 = vpop.f32.mrb[0].mxu0
  %v5181 = vadd.f32 %v796, %v5180
  %5182 = vmatprep.mubr.bf16.mxu0 %v274
  %5183 = vmatmul.mubr.bf16.gmra.mrb[0].mxu0 %v273
  %v5184 = vpop.f32.mrb[0].mxu0
  %v5185 = vadd.f32 %v792, %v5184
  %v5186 = vpop.f32.mrb[0].mxu0
  %v5187 = vadd.f32 %v796, %v5186
  %v5188 = vpop.f32.mrb[0].mxu0
  %v5189 = vadd.f32 %v792, %v5188
  %v5190 = vpop.f32.mrb[0].mxu0
  %v5191 = vadd.f32 %v796, %v5190
  %5192 = vmatprep.mubr.bf16.mxu0 %v281
  %5193 = vmatmul.mubr.bf16.gmra.mrb[0].mxu0 %v280
  %v5194 = vpop.f32.mrb[0].mxu0
  %v5195 = vadd.f32 %v792, %v5194
  %v5196 = vpop.f32.mrb[0].mxu0
  %v5197 = vadd.f32 %v796, %v5196
  %v5198 = vpop.f32.mrb[0].mxu0
  %v5199 = vadd.f32 %v792, %v5198
  %v5200 = vpop.f32.mrb[0].mxu0
  %v5201 = vadd.f32 %v796, %v5200
  %5202 = vmatprep.mubr.bf16.mxu0 %v288
  %5203 = vmatmul.mubr.bf16.gmra.mrb[0].mxu0 %v287
  %v5204 = vpop.f32.mrb[0].mxu0
  %v5205 = vadd.f32 %v792, %v5204
  %v5206 = vpop.f32.mrb[0].mxu0
  %v5207 = vadd.f32 %v796, %v5206
  %v5208 = vpop.f32.mrb[0].mxu0
  %v5209 = vadd.f32 %v792, %v5208
  %v5210 = vpop.f32.mrb[0].mxu0
  %v5211 = vadd.f32 %v796, %v5210
  %5212 = vmatprep.mubr.bf16.mxu0 %v295
  %5213 = vmatmul.mubr.bf16.gmra.mrb[0].mxu0 %v294
  %v5214 = vpop.f32.mrb[0].mxu0
  %v5215 = vadd.f32 %v792, %v5214
  %v5216 = vpop.f32.mrb[0].mxu0
  %v5217 = vadd.f32 %v796, %v5216
  %v5218 = vpop.f32.mrb[0].mxu0
  %v5219 = vadd.f32 %v792, %v5218
  %v5220 = vpop.f32.mrb[0].mxu0
  %v5221 = vadd.f32 %v796, %v5220
  %5222 = vmatprep.mubr.bf16.mxu0 %v302
  %5223 = vmatmul.mubr.bf16.gmra.mrb[0].mxu0 %v301
  %v5224 = vpop.f32.mrb[0].mxu0
  %v5225 = vadd.f32 %v792, %v5224
  %v5226 = vpop.f32.mrb[0].mxu0
  %v5227 = vadd.f32 %v796, %v5226
  %v5228 = vpop.f32.mrb[0].mxu0
  %v5229 = vadd.f32 %v792, %v5228
  %v5230 = vpop.f32.mrb[0].mxu0
  %v5231 = vadd.f32 %v796, %v5230
  %5232 = vmatprep.mubr.bf16.mxu0 %v309
  %5233 = vmatmul.mubr.bf16.gmra.mrb[0].mxu0 %v308
  %v5234 = vpop.f32.mrb[0].mxu0
  %v5235 = vadd.f32 %v792, %v5234
  %v5236 = vpop.f32.mrb[0].mxu0
  %v5237 = vadd.f32 %v796, %v5236
  %v5238 = vpop.f32.mrb[0].mxu0
  %v5239 = vadd.f32 %v792, %v5238
  %v5240 = vpop.f32.mrb[0].mxu0
  %v5241 = vadd.f32 %v796, %v5240
  %5242 = vmatprep.mubr.bf16.mxu0 %v316
  %5243 = vmatmul.mubr.bf16.gmra.mrb[0].mxu0 %v315
  %v5244 = vpop.f32.mrb[0].mxu0
  %v5245 = vadd.f32 %v792, %v5244
  %v5246 = vpop.f32.mrb[0].mxu0
  %v5247 = vadd.f32 %v796, %v5246
  %v5248 = vpop.f32.mrb[0].mxu0
  %v5249 = vadd.f32 %v792, %v5248
  %v5250 = vpop.f32.mrb[0].mxu0
  %v5251 = vadd.f32 %v796, %v5250
  %5252 = vmatprep.mubr.bf16.mxu0 %v323
  %5253 = vmatmul.mubr.bf16.gmra.mrb[0].mxu0 %v322
  %v5254 = vpop.f32.mrb[0].mxu0
  %v5255 = vadd.f32 %v792, %v5254
  %v5256 = vpop.f32.mrb[0].mxu0
  %v5257 = vadd.f32 %v796, %v5256
  %v5258 = vpop.f32.mrb[0].mxu0
  %v5259 = vadd.f32 %v792, %v5258
  %v5260 = vpop.f32.mrb[0].mxu0
  %v5261 = vadd.f32 %v796, %v5260
  %5262 = vmatprep.mubr.bf16.mxu0 %v330
  %5263 = vmatmul.mubr.bf16.gmra.mrb[0].mxu0 %v329
  %v5264 = vpop.f32.mrb[0].mxu0
  %v5265 = vadd.f32 %v792, %v5264
  %v5266 = vpop.f32.mrb[0].mxu0
  %v5267 = vadd.f32 %v796, %v5266
  %v5268 = vpop.f32.mrb[0].mxu0
  %v5269 = vadd.f32 %v792, %v5268
  %v5270 = vpop.f32.mrb[0].mxu0
  %v5271 = vadd.f32 %v796, %v5270
  %5272 = vmatprep.mubr.bf16.mxu0 %v337
  %5273 = vmatmul.mubr.bf16.gmra.mrb[0].mxu0 %v336
  %v5274 = vpop.f32.mrb[0].mxu0
  %v5275 = vadd.f32 %v792, %v5274
  %v5276 = vpop.f32.mrb[0].mxu0
  %v5277 = vadd.f32 %v796, %v5276
  %v5278 = vpop.f32.mrb[0].mxu0
  %v5279 = vadd.f32 %v792, %v5278
  %v5280 = vpop.f32.mrb[0].mxu0
  %v5281 = vadd.f32 %v796, %v5280
  %5282 = vmatprep.mubr.bf16.mxu0 %v344
  %5283 = vmatmul.mubr.bf16.gmra.mrb[0].mxu0 %v343
  %v5284 = vpop.f32.mrb[0].mxu0
  %v5285 = vadd.f32 %v792, %v5284
  %v5286 = vpop.f32.mrb[0].mxu0
  %v5287 = vadd.f32 %v796, %v5286
  %v5288 = vpop.f32.mrb[0].mxu0
  %v5289 = vadd.f32 %v792, %v5288
  %v5290 = vpop.f32.mrb[0].mxu0
  %v5291 = vadd.f32 %v796, %v5290
  %5292 = vmatprep.mubr.bf16.mxu0 %v351
  %5293 = vmatmul.mubr.bf16.gmra.mrb[0].mxu0 %v350
  %v5294 = vpop.f32.mrb[0].mxu0
  %v5295 = vadd.f32 %v792, %v5294
  %v5296 = vpop.f32.mrb[0].mxu0
  %v5297 = vadd.f32 %v796, %v5296
  %v5298 = vpop.f32.mrb[0].mxu0
  %v5299 = vadd.f32 %v792, %v5298
  %v5300 = vpop.f32.mrb[0].mxu0
  %v5301 = vadd.f32 %v796, %v5300
  %5302 = vmatprep.mubr.bf16.mxu0 %v358
  %5303 = vmatmul.mubr.bf16.gmra.mrb[0].mxu0 %v357
  %v5304 = vpop.f32.mrb[0].mxu0
  %v5305 = vadd.f32 %v792, %v5304
  %v5306 = vpop.f32.mrb[0].mxu0
  %v5307 = vadd.f32 %v796, %v5306
  %v5308 = vpop.f32.mrb[0].mxu0
  %v5309 = vadd.f32 %v792, %v5308
  %v5310 = vpop.f32.mrb[0].mxu0
  %v5311 = vadd.f32 %v796, %v5310
  %5312 = vmatprep.mubr.bf16.mxu0 %v365
  %5313 = vmatmul.mubr.bf16.gmra.mrb[0].mxu0 %v364
  %v5314 = vpop.f32.mrb[0].mxu0
  %v5315 = vadd.f32 %v792, %v5314
  %v5316 = vpop.f32.mrb[0].mxu0
  %v5317 = vadd.f32 %v796, %v5316
  %v5318 = vpop.f32.mrb[0].mxu0
  %v5319 = vadd.f32 %v792, %v5318
  %v5320 = vpop.f32.mrb[0].mxu0
  %v5321 = vadd.f32 %v796, %v5320
  %5322 = vdwg.mxu0
  %5323 = vmatprep.subr.bf16.mxu0 %v2116
  %5324 = vmatpush1.bf16.msra.mxu0 %v2115
  %5325 = vmatprep.subr.bf16.mxu0 %v2124
  %5326 = vmatpush1.bf16.msra.mxu0 %v2123
  %5327 = vmatprep.subr.bf16.mxu0 %v2132
  %5328 = vmatpush1.bf16.msra.mxu0 %v2131
  %5329 = vmatprep.subr.bf16.mxu0 %v2140
  %5330 = vmatpush1.bf16.msra.mxu0 %v2139
  %5331 = vmatprep.subr.bf16.mxu0 %v2148
  %5332 = vmatpush1.bf16.msra.mxu0 %v2147
  %5333 = vmatprep.subr.bf16.mxu0 %v2156
  %5334 = vmatpush1.bf16.msra.mxu0 %v2155
  %5335 = vmatprep.subr.bf16.mxu0 %v2164
  %5336 = vmatpush1.bf16.msra.mxu0 %v2163
  %5337 = vmatprep.subr.bf16.mxu0 %v2172
  %5338 = vmatpush1.bf16.msra.mxu0 %v2171
  %5339 = vmatprep.subr.bf16.mxu0 %v2180
  %5340 = vmatpush1.bf16.msra.mxu0 %v2179
  %5341 = vmatprep.subr.bf16.mxu0 %v2188
  %5342 = vmatpush1.bf16.msra.mxu0 %v2187
  %5343 = vmatprep.subr.bf16.mxu0 %v2196
  %5344 = vmatpush1.bf16.msra.mxu0 %v2195
  %5345 = vmatprep.subr.bf16.mxu0 %v2204
  %5346 = vmatpush1.bf16.msra.mxu0 %v2203
  %5347 = vmatprep.subr.bf16.mxu0 %v2212
  %5348 = vmatpush1.bf16.msra.mxu0 %v2211
  %5349 = vmatprep.subr.bf16.mxu0 %v2220
  %5350 = vmatpush1.bf16.msra.mxu0 %v2219
  %5351 = vmatprep.subr.bf16.mxu0 %v2228
  %5352 = vmatpush1.bf16.msra.mxu0 %v2227
  %5353 = vmatprep.subr.bf16.mxu0 %v2236
  %5354 = vmatpush1.bf16.msra.mxu0 %v2235
  %5355 = vmatprep.mubr.bf16.mxu0 %v262
  %5356 = vmatmul.mubr.bf16.gmra.mrb[0].mxu0 %v261
  %v5357 = vpop.f32.mrb[0].mxu0
  %v5358 = vadd.f32 %v5165, %v5357
  %v5359 = vpop.f32.mrb[0].mxu0
  %v5360 = vadd.f32 %v5167, %v5359
  %v5361 = vpop.f32.mrb[0].mxu0
  %v5362 = vadd.f32 %v5169, %v5361
  %v5363 = vpop.f32.mrb[0].mxu0
  %v5364 = vadd.f32 %v5171, %v5363
  %5365 = vmatprep.mubr.bf16.mxu0 %v269
  %5366 = vmatmul.mubr.bf16.gmra.mrb[0].mxu0 %v268
  %v5367 = vpop.f32.mrb[0].mxu0
  %v5368 = vadd.f32 %v5175, %v5367
  %v5369 = vpop.f32.mrb[0].mxu0
  %v5370 = vadd.f32 %v5177, %v5369
  %v5371 = vpop.f32.mrb[0].mxu0
  %v5372 = vadd.f32 %v5179, %v5371
  %v5373 = vpop.f32.mrb[0].mxu0
  %v5374 = vadd.f32 %v5181, %v5373
  %5375 = vmatprep.mubr.bf16.mxu0 %v276
  %5376 = vmatmul.mubr.bf16.gmra.mrb[0].mxu0 %v275
  %v5377 = vpop.f32.mrb[0].mxu0
  %v5378 = vadd.f32 %v5185, %v5377
  %v5379 = vpop.f32.mrb[0].mxu0
  %v5380 = vadd.f32 %v5187, %v5379
  %v5381 = vpop.f32.mrb[0].mxu0
  %v5382 = vadd.f32 %v5189, %v5381
  %v5383 = vpop.f32.mrb[0].mxu0
  %v5384 = vadd.f32 %v5191, %v5383
  %5385 = vmatprep.mubr.bf16.mxu0 %v283
  %5386 = vmatmul.mubr.bf16.gmra.mrb[0].mxu0 %v282
  %v5387 = vpop.f32.mrb[0].mxu0
  %v5388 = vadd.f32 %v5195, %v5387
  %v5389 = vpop.f32.mrb[0].mxu0
  %v5390 = vadd.f32 %v5197, %v5389
  %v5391 = vpop.f32.mrb[0].mxu0
  %v5392 = vadd.f32 %v5199, %v5391
  %v5393 = vpop.f32.mrb[0].mxu0
  %v5394 = vadd.f32 %v5201, %v5393
  %5395 = vmatprep.mubr.bf16.mxu0 %v290
  %5396 = vmatmul.mubr.bf16.gmra.mrb[0].mxu0 %v289
  %v5397 = vpop.f32.mrb[0].mxu0
  %v5398 = vadd.f32 %v5205, %v5397
  %v5399 = vpop.f32.mrb[0].mxu0
  %v5400 = vadd.f32 %v5207, %v5399
  %v5401 = vpop.f32.mrb[0].mxu0
  %v5402 = vadd.f32 %v5209, %v5401
  %v5403 = vpop.f32.mrb[0].mxu0
  %v5404 = vadd.f32 %v5211, %v5403
  %5405 = vmatprep.mubr.bf16.mxu0 %v297
  %5406 = vmatmul.mubr.bf16.gmra.mrb[0].mxu0 %v296
  %v5407 = vpop.f32.mrb[0].mxu0
  %v5408 = vadd.f32 %v5215, %v5407
  %v5409 = vpop.f32.mrb[0].mxu0
  %v5410 = vadd.f32 %v5217, %v5409
  %v5411 = vpop.f32.mrb[0].mxu0
  %v5412 = vadd.f32 %v5219, %v5411
  %v5413 = vpop.f32.mrb[0].mxu0
  %v5414 = vadd.f32 %v5221, %v5413
  %5415 = vmatprep.mubr.bf16.mxu0 %v304
  %5416 = vmatmul.mubr.bf16.gmra.mrb[0].mxu0 %v303
  %v5417 = vpop.f32.mrb[0].mxu0
  %v5418 = vadd.f32 %v5225, %v5417
  %v5419 = vpop.f32.mrb[0].mxu0
  %v5420 = vadd.f32 %v5227, %v5419
  %v5421 = vpop.f32.mrb[0].mxu0
  %v5422 = vadd.f32 %v5229, %v5421
  %v5423 = vpop.f32.mrb[0].mxu0
  %v5424 = vadd.f32 %v5231, %v5423
  %5425 = vmatprep.mubr.bf16.mxu0 %v311
  %5426 = vmatmul.mubr.bf16.gmra.mrb[0].mxu0 %v310
  %v5427 = vpop.f32.mrb[0].mxu0
  %v5428 = vadd.f32 %v5235, %v5427
  %v5429 = vpop.f32.mrb[0].mxu0
  %v5430 = vadd.f32 %v5237, %v5429
  %v5431 = vpop.f32.mrb[0].mxu0
  %v5432 = vadd.f32 %v5239, %v5431
  %v5433 = vpop.f32.mrb[0].mxu0
  %v5434 = vadd.f32 %v5241, %v5433
  %5435 = vmatprep.mubr.bf16.mxu0 %v318
  %5436 = vmatmul.mubr.bf16.gmra.mrb[0].mxu0 %v317
  %v5437 = vpop.f32.mrb[0].mxu0
  %v5438 = vadd.f32 %v5245, %v5437
  %v5439 = vpop.f32.mrb[0].mxu0
  %v5440 = vadd.f32 %v5247, %v5439
  %v5441 = vpop.f32.mrb[0].mxu0
  %v5442 = vadd.f32 %v5249, %v5441
  %v5443 = vpop.f32.mrb[0].mxu0
  %v5444 = vadd.f32 %v5251, %v5443
  %5445 = vmatprep.mubr.bf16.mxu0 %v325
  %5446 = vmatmul.mubr.bf16.gmra.mrb[0].mxu0 %v324
  %v5447 = vpop.f32.mrb[0].mxu0
  %v5448 = vadd.f32 %v5255, %v5447
  %v5449 = vpop.f32.mrb[0].mxu0
  %v5450 = vadd.f32 %v5257, %v5449
  %v5451 = vpop.f32.mrb[0].mxu0
  %v5452 = vadd.f32 %v5259, %v5451
  %v5453 = vpop.f32.mrb[0].mxu0
  %v5454 = vadd.f32 %v5261, %v5453
  %5455 = vmatprep.mubr.bf16.mxu0 %v332
  %5456 = vmatmul.mubr.bf16.gmra.mrb[0].mxu0 %v331
  %v5457 = vpop.f32.mrb[0].mxu0
  %v5458 = vadd.f32 %v5265, %v5457
  %v5459 = vpop.f32.mrb[0].mxu0
  %v5460 = vadd.f32 %v5267, %v5459
  %v5461 = vpop.f32.mrb[0].mxu0
  %v5462 = vadd.f32 %v5269, %v5461
  %v5463 = vpop.f32.mrb[0].mxu0
  %v5464 = vadd.f32 %v5271, %v5463
  %5465 = vmatprep.mubr.bf16.mxu0 %v339
  %5466 = vmatmul.mubr.bf16.gmra.mrb[0].mxu0 %v338
  %v5467 = vpop.f32.mrb[0].mxu0
  %v5468 = vadd.f32 %v5275, %v5467
  %v5469 = vpop.f32.mrb[0].mxu0
  %v5470 = vadd.f32 %v5277, %v5469
  %v5471 = vpop.f32.mrb[0].mxu0
  %v5472 = vadd.f32 %v5279, %v5471
  %v5473 = vpop.f32.mrb[0].mxu0
  %v5474 = vadd.f32 %v5281, %v5473
  %5475 = vmatprep.mubr.bf16.mxu0 %v346
  %5476 = vmatmul.mubr.bf16.gmra.mrb[0].mxu0 %v345
  %v5477 = vpop.f32.mrb[0].mxu0
  %v5478 = vadd.f32 %v5285, %v5477
  %v5479 = vpop.f32.mrb[0].mxu0
  %v5480 = vadd.f32 %v5287, %v5479
  %v5481 = vpop.f32.mrb[0].mxu0
  %v5482 = vadd.f32 %v5289, %v5481
  %v5483 = vpop.f32.mrb[0].mxu0
  %v5484 = vadd.f32 %v5291, %v5483
  %5485 = vmatprep.mubr.bf16.mxu0 %v353
  %5486 = vmatmul.mubr.bf16.gmra.mrb[0].mxu0 %v352
  %v5487 = vpop.f32.mrb[0].mxu0
  %v5488 = vadd.f32 %v5295, %v5487
  %v5489 = vpop.f32.mrb[0].mxu0
  %v5490 = vadd.f32 %v5297, %v5489
  %v5491 = vpop.f32.mrb[0].mxu0
  %v5492 = vadd.f32 %v5299, %v5491
  %v5493 = vpop.f32.mrb[0].mxu0
  %v5494 = vadd.f32 %v5301, %v5493
  %5495 = vmatprep.mubr.bf16.mxu0 %v360
  %5496 = vmatmul.mubr.bf16.gmra.mrb[0].mxu0 %v359
  %v5497 = vpop.f32.mrb[0].mxu0
  %v5498 = vadd.f32 %v5305, %v5497
  %v5499 = vpop.f32.mrb[0].mxu0
  %v5500 = vadd.f32 %v5307, %v5499
  %v5501 = vpop.f32.mrb[0].mxu0
  %v5502 = vadd.f32 %v5309, %v5501
  %v5503 = vpop.f32.mrb[0].mxu0
  %v5504 = vadd.f32 %v5311, %v5503
  %5505 = vmatprep.mubr.bf16.mxu0 %v367
  %5506 = vmatmul.mubr.bf16.gmra.mrb[0].mxu0 %v366
  %v5507 = vpop.f32.mrb[0].mxu0
  %v5508 = vadd.f32 %v5315, %v5507
  %v5509 = vpop.f32.mrb[0].mxu0
  %v5510 = vadd.f32 %v5317, %v5509
  %v5511 = vpop.f32.mrb[0].mxu0
  %v5512 = vadd.f32 %v5319, %v5511
  %v5513 = vpop.f32.mrb[0].mxu0
  %v5514 = vadd.f32 %v5321, %v5513
  %5515 = vdwg.mxu0
  %5516 = vmatprep.subr.bf16.mxu0 %v2244
  %5517 = vmatpush1.bf16.msra.mxu0 %v2243
  %5518 = vmatprep.subr.bf16.mxu0 %v2252
  %5519 = vmatpush1.bf16.msra.mxu0 %v2251
  %5520 = vmatprep.subr.bf16.mxu0 %v2260
  %5521 = vmatpush1.bf16.msra.mxu0 %v2259
  %5522 = vmatprep.subr.bf16.mxu0 %v2268
  %5523 = vmatpush1.bf16.msra.mxu0 %v2267
  %5524 = vmatprep.subr.bf16.mxu0 %v2276
  %5525 = vmatpush1.bf16.msra.mxu0 %v2275
  %5526 = vmatprep.subr.bf16.mxu0 %v2284
  %5527 = vmatpush1.bf16.msra.mxu0 %v2283
  %5528 = vmatprep.subr.bf16.mxu0 %v2292
  %5529 = vmatpush1.bf16.msra.mxu0 %v2291
  %5530 = vmatprep.subr.bf16.mxu0 %v2300
  %5531 = vmatpush1.bf16.msra.mxu0 %v2299
  %5532 = vmatprep.subr.bf16.mxu0 %v2308
  %5533 = vmatpush1.bf16.msra.mxu0 %v2307
  %5534 = vmatprep.subr.bf16.mxu0 %v2316
  %5535 = vmatpush1.bf16.msra.mxu0 %v2315
  %5536 = vmatprep.subr.bf16.mxu0 %v2324
  %5537 = vmatpush1.bf16.msra.mxu0 %v2323
  %5538 = vmatprep.subr.bf16.mxu0 %v2332
  %5539 = vmatpush1.bf16.msra.mxu0 %v2331
  %5540 = vmatprep.subr.bf16.mxu0 %v2340
  %5541 = vmatpush1.bf16.msra.mxu0 %v2339
  %5542 = vmatprep.subr.bf16.mxu0 %v2348
  %5543 = vmatpush1.bf16.msra.mxu0 %v2347
  %5544 = vmatprep.subr.bf16.mxu0 %v2356
  %5545 = vmatpush1.bf16.msra.mxu0 %v2355
  %5546 = vmatprep.subr.bf16.mxu0 %v2364
  %5547 = vmatpush1.bf16.msra.mxu0 %v2363
  %5548 = vmatprep.mubr.bf16.mxu0 %v264
  %5549 = vmatmul.mubr.bf16.gmra.mrb[0].mxu0 %v263
  %v5550 = vpop.f32.mrb[0].mxu0
  %v5551 = vadd.f32 %v5358, %v5550
  %v5552 = vpop.f32.mrb[0].mxu0
  %v5553 = vadd.f32 %v5360, %v5552
  %v5554 = vpop.f32.mrb[0].mxu0
  %v5555 = vadd.f32 %v5362, %v5554
  %v5556 = vpop.f32.mrb[0].mxu0
  %v5557 = vadd.f32 %v5364, %v5556
  %5558 = vmatprep.mubr.bf16.mxu0 %v271
  %5559 = vmatmul.mubr.bf16.gmra.mrb[0].mxu0 %v270
  %v5560 = vpop.f32.mrb[0].mxu0
  %v5561 = vadd.f32 %v5368, %v5560
  %v5562 = vpop.f32.mrb[0].mxu0
  %v5563 = vadd.f32 %v5370, %v5562
  %v5564 = vpop.f32.mrb[0].mxu0
  %v5565 = vadd.f32 %v5372, %v5564
  %v5566 = vpop.f32.mrb[0].mxu0
  %v5567 = vadd.f32 %v5374, %v5566
  %5568 = vmatprep.mubr.bf16.mxu0 %v278
  %5569 = vmatmul.mubr.bf16.gmra.mrb[0].mxu0 %v277
  %v5570 = vpop.f32.mrb[0].mxu0
  %v5571 = vadd.f32 %v5378, %v5570
  %v5572 = vpop.f32.mrb[0].mxu0
  %v5573 = vadd.f32 %v5380, %v5572
  %v5574 = vpop.f32.mrb[0].mxu0
  %v5575 = vadd.f32 %v5382, %v5574
  %v5576 = vpop.f32.mrb[0].mxu0
  %v5577 = vadd.f32 %v5384, %v5576
  %5578 = vmatprep.mubr.bf16.mxu0 %v285
  %5579 = vmatmul.mubr.bf16.gmra.mrb[0].mxu0 %v284
  %v5580 = vpop.f32.mrb[0].mxu0
  %v5581 = vadd.f32 %v5388, %v5580
  %v5582 = vpop.f32.mrb[0].mxu0
  %v5583 = vadd.f32 %v5390, %v5582
  %v5584 = vpop.f32.mrb[0].mxu0
  %v5585 = vadd.f32 %v5392, %v5584
  %v5586 = vpop.f32.mrb[0].mxu0
  %v5587 = vadd.f32 %v5394, %v5586
  %5588 = vmatprep.mubr.bf16.mxu0 %v292
  %5589 = vmatmul.mubr.bf16.gmra.mrb[0].mxu0 %v291
  %v5590 = vpop.f32.mrb[0].mxu0
  %v5591 = vadd.f32 %v5398, %v5590
  %v5592 = vpop.f32.mrb[0].mxu0
  %v5593 = vadd.f32 %v5400, %v5592
  %v5594 = vpop.f32.mrb[0].mxu0
  %v5595 = vadd.f32 %v5402, %v5594
  %v5596 = vpop.f32.mrb[0].mxu0
  %v5597 = vadd.f32 %v5404, %v5596
  %5598 = vmatprep.mubr.bf16.mxu0 %v299
  %5599 = vmatmul.mubr.bf16.gmra.mrb[0].mxu0 %v298
  %v5600 = vpop.f32.mrb[0].mxu0
  %v5601 = vadd.f32 %v5408, %v5600
  %v5602 = vpop.f32.mrb[0].mxu0
  %v5603 = vadd.f32 %v5410, %v5602
  %v5604 = vpop.f32.mrb[0].mxu0
  %v5605 = vadd.f32 %v5412, %v5604
  %v5606 = vpop.f32.mrb[0].mxu0
  %v5607 = vadd.f32 %v5414, %v5606
  %5608 = vmatprep.mubr.bf16.mxu0 %v306
  %5609 = vmatmul.mubr.bf16.gmra.mrb[0].mxu0 %v305
  %v5610 = vpop.f32.mrb[0].mxu0
  %v5611 = vadd.f32 %v5418, %v5610
  %v5612 = vpop.f32.mrb[0].mxu0
  %v5613 = vadd.f32 %v5420, %v5612
  %v5614 = vpop.f32.mrb[0].mxu0
  %v5615 = vadd.f32 %v5422, %v5614
  %v5616 = vpop.f32.mrb[0].mxu0
  %v5617 = vadd.f32 %v5424, %v5616
  %5618 = vmatprep.mubr.bf16.mxu0 %v313
  %5619 = vmatmul.mubr.bf16.gmra.mrb[0].mxu0 %v312
  %v5620 = vpop.f32.mrb[0].mxu0
  %v5621 = vadd.f32 %v5428, %v5620
  %v5622 = vpop.f32.mrb[0].mxu0
  %v5623 = vadd.f32 %v5430, %v5622
  %v5624 = vpop.f32.mrb[0].mxu0
  %v5625 = vadd.f32 %v5432, %v5624
  %v5626 = vpop.f32.mrb[0].mxu0
  %v5627 = vadd.f32 %v5434, %v5626
  %5628 = vmatprep.mubr.bf16.mxu0 %v320
  %5629 = vmatmul.mubr.bf16.gmra.mrb[0].mxu0 %v319
  %v5630 = vpop.f32.mrb[0].mxu0
  %v5631 = vadd.f32 %v5438, %v5630
  %v5632 = vpop.f32.mrb[0].mxu0
  %v5633 = vadd.f32 %v5440, %v5632
  %v5634 = vpop.f32.mrb[0].mxu0
  %v5635 = vadd.f32 %v5442, %v5634
  %v5636 = vpop.f32.mrb[0].mxu0
  %v5637 = vadd.f32 %v5444, %v5636
  %5638 = vmatprep.mubr.bf16.mxu0 %v327
  %5639 = vmatmul.mubr.bf16.gmra.mrb[0].mxu0 %v326
  %v5640 = vpop.f32.mrb[0].mxu0
  %v5641 = vadd.f32 %v5448, %v5640
  %v5642 = vpop.f32.mrb[0].mxu0
  %v5643 = vadd.f32 %v5450, %v5642
  %v5644 = vpop.f32.mrb[0].mxu0
  %v5645 = vadd.f32 %v5452, %v5644
  %v5646 = vpop.f32.mrb[0].mxu0
  %v5647 = vadd.f32 %v5454, %v5646
  %5648 = vmatprep.mubr.bf16.mxu0 %v334
  %5649 = vmatmul.mubr.bf16.gmra.mrb[0].mxu0 %v333
  %v5650 = vpop.f32.mrb[0].mxu0
  %v5651 = vadd.f32 %v5458, %v5650
  %v5652 = vpop.f32.mrb[0].mxu0
  %v5653 = vadd.f32 %v5460, %v5652
  %v5654 = vpop.f32.mrb[0].mxu0
  %v5655 = vadd.f32 %v5462, %v5654
  %v5656 = vpop.f32.mrb[0].mxu0
  %v5657 = vadd.f32 %v5464, %v5656
  %5658 = vmatprep.mubr.bf16.mxu0 %v341
  %5659 = vmatmul.mubr.bf16.gmra.mrb[0].mxu0 %v340
  %v5660 = vpop.f32.mrb[0].mxu0
  %v5661 = vadd.f32 %v5468, %v5660
  %v5662 = vpop.f32.mrb[0].mxu0
  %v5663 = vadd.f32 %v5470, %v5662
  %v5664 = vpop.f32.mrb[0].mxu0
  %v5665 = vadd.f32 %v5472, %v5664
  %v5666 = vpop.f32.mrb[0].mxu0
  %v5667 = vadd.f32 %v5474, %v5666
  %5668 = vmatprep.mubr.bf16.mxu0 %v348
  %5669 = vmatmul.mubr.bf16.gmra.mrb[0].mxu0 %v347
  %v5670 = vpop.f32.mrb[0].mxu0
  %v5671 = vadd.f32 %v5478, %v5670
  %v5672 = vpop.f32.mrb[0].mxu0
  %v5673 = vadd.f32 %v5480, %v5672
  %v5674 = vpop.f32.mrb[0].mxu0
  %v5675 = vadd.f32 %v5482, %v5674
  %v5676 = vpop.f32.mrb[0].mxu0
  %v5677 = vadd.f32 %v5484, %v5676
  %5678 = vmatprep.mubr.bf16.mxu0 %v355
  %5679 = vmatmul.mubr.bf16.gmra.mrb[0].mxu0 %v354
  %v5680 = vpop.f32.mrb[0].mxu0
  %v5681 = vadd.f32 %v5488, %v5680
  %v5682 = vpop.f32.mrb[0].mxu0
  %v5683 = vadd.f32 %v5490, %v5682
  %v5684 = vpop.f32.mrb[0].mxu0
  %v5685 = vadd.f32 %v5492, %v5684
  %v5686 = vpop.f32.mrb[0].mxu0
  %v5687 = vadd.f32 %v5494, %v5686
  %5688 = vmatprep.mubr.bf16.mxu0 %v362
  %5689 = vmatmul.mubr.bf16.gmra.mrb[0].mxu0 %v361
  %v5690 = vpop.f32.mrb[0].mxu0
  %v5691 = vadd.f32 %v5498, %v5690
  %v5692 = vpop.f32.mrb[0].mxu0
  %v5693 = vadd.f32 %v5500, %v5692
  %v5694 = vpop.f32.mrb[0].mxu0
  %v5695 = vadd.f32 %v5502, %v5694
  %v5696 = vpop.f32.mrb[0].mxu0
  %v5697 = vadd.f32 %v5504, %v5696
  %5698 = vmatprep.mubr.bf16.mxu0 %v369
  %5699 = vmatmul.mubr.bf16.gmra.mrb[0].mxu0 %v368
  %v5700 = vpop.f32.mrb[0].mxu0
  %v5701 = vadd.f32 %v5508, %v5700
  %v5702 = vpop.f32.mrb[0].mxu0
  %v5703 = vadd.f32 %v5510, %v5702
  %v5704 = vpop.f32.mrb[0].mxu0
  %v5705 = vadd.f32 %v5512, %v5704
  %v5706 = vpop.f32.mrb[0].mxu0
  %v5707 = vadd.f32 %v5514, %v5706
  %5708 = vdwg.mxu0
  %5709 = vmatprep.subr.bf16.mxu0 %v2372
  %5710 = vmatpush1.bf16.msra.mxu0 %v2371
  %5711 = vmatprep.subr.bf16.mxu0 0
  %5712 = vmatpush1.bf16.msra.mxu0 0
  %5713 = vmatprep.subr.bf16.mxu0 0
  %5714 = vmatpush1.bf16.msra.mxu0 0
  %5715 = vmatprep.subr.bf16.mxu0 0
  %5716 = vmatpush1.bf16.msra.mxu0 0
  %5717 = vmatprep.subr.bf16.mxu0 0
  %5718 = vmatpush1.bf16.msra.mxu0 0
  %5719 = vmatprep.subr.bf16.mxu0 0
  %5720 = vmatpush1.bf16.msra.mxu0 0
  %5721 = vmatprep.subr.bf16.mxu0 0
  %5722 = vmatpush1.bf16.msra.mxu0 0
  %5723 = vmatprep.subr.bf16.mxu0 0
  %5724 = vmatpush1.bf16.msra.mxu0 0
  %5725 = vmatprep.subr.bf16.mxu0 0
  %5726 = vmatpush1.bf16.msra.mxu0 0
  %5727 = vmatprep.subr.bf16.mxu0 0
  %5728 = vmatpush1.bf16.msra.mxu0 0
  %5729 = vmatprep.subr.bf16.mxu0 0
  %5730 = vmatpush1.bf16.msra.mxu0 0
  %5731 = vmatprep.subr.bf16.mxu0 0
  %5732 = vmatpush1.bf16.msra.mxu0 0
  %5733 = vmatprep.subr.bf16.mxu0 0
  %5734 = vmatpush1.bf16.msra.mxu0 0
  %5735 = vmatprep.subr.bf16.mxu0 0
  %5736 = vmatpush1.bf16.msra.mxu0 0
  %5737 = vmatprep.subr.bf16.mxu0 0
  %5738 = vmatpush1.bf16.msra.mxu0 0
  %5739 = vmatprep.subr.bf16.mxu0 0
  %5740 = vmatpush1.bf16.msra.mxu0 0
  %5741 = vmatprep.mubr.bf16.mxu0 0
  %5742 = vmatmul.mubr.bf16.gmra.mrb[0].mxu0 %v2767
  %v5743 = vpop.f32.mrb[0].mxu0
  %v5744 = vadd.f32 %v5551, %v5743
  %v5745 = vpop.f32.mrb[0].mxu0
  %v5746 = vadd.f32 %v5553, %v5745
  %v5747 = vpop.f32.mrb[0].mxu0
  %v5748 = vadd.f32 %v5555, %v5747
  %v5749 = vpop.f32.mrb[0].mxu0
  %v5750 = vadd.f32 %v5557, %v5749
  %5751 = vmatprep.mubr.bf16.mxu0 0
  %5752 = vmatmul.mubr.bf16.gmra.mrb[0].mxu0 %v2770
  %v5753 = vpop.f32.mrb[0].mxu0
  %v5754 = vadd.f32 %v5561, %v5753
  %v5755 = vpop.f32.mrb[0].mxu0
  %v5756 = vadd.f32 %v5563, %v5755
  %v5757 = vpop.f32.mrb[0].mxu0
  %v5758 = vadd.f32 %v5565, %v5757
  %v5759 = vpop.f32.mrb[0].mxu0
  %v5760 = vadd.f32 %v5567, %v5759
  %5761 = vmatprep.mubr.bf16.mxu0 0
  %5762 = vmatmul.mubr.bf16.gmra.mrb[0].mxu0 %v2773
  %v5763 = vpop.f32.mrb[0].mxu0
  %v5764 = vadd.f32 %v5571, %v5763
  %v5765 = vpop.f32.mrb[0].mxu0
  %v5766 = vadd.f32 %v5573, %v5765
  %v5767 = vpop.f32.mrb[0].mxu0
  %v5768 = vadd.f32 %v5575, %v5767
  %v5769 = vpop.f32.mrb[0].mxu0
  %v5770 = vadd.f32 %v5577, %v5769
  %5771 = vmatprep.mubr.bf16.mxu0 0
  %5772 = vmatmul.mubr.bf16.gmra.mrb[0].mxu0 %v2776
  %v5773 = vpop.f32.mrb[0].mxu0
  %v5774 = vadd.f32 %v5581, %v5773
  %v5775 = vpop.f32.mrb[0].mxu0
  %v5776 = vadd.f32 %v5583, %v5775
  %v5777 = vpop.f32.mrb[0].mxu0
  %v5778 = vadd.f32 %v5585, %v5777
  %v5779 = vpop.f32.mrb[0].mxu0
  %v5780 = vadd.f32 %v5587, %v5779
  %5781 = vmatprep.mubr.bf16.mxu0 0
  %5782 = vmatmul.mubr.bf16.gmra.mrb[0].mxu0 %v2779
  %v5783 = vpop.f32.mrb[0].mxu0
  %v5784 = vadd.f32 %v5591, %v5783
  %v5785 = vpop.f32.mrb[0].mxu0
  %v5786 = vadd.f32 %v5593, %v5785
  %v5787 = vpop.f32.mrb[0].mxu0
  %v5788 = vadd.f32 %v5595, %v5787
  %v5789 = vpop.f32.mrb[0].mxu0
  %v5790 = vadd.f32 %v5597, %v5789
  %5791 = vmatprep.mubr.bf16.mxu0 0
  %5792 = vmatmul.mubr.bf16.gmra.mrb[0].mxu0 %v2782
  %v5793 = vpop.f32.mrb[0].mxu0
  %v5794 = vadd.f32 %v5601, %v5793
  %v5795 = vpop.f32.mrb[0].mxu0
  %v5796 = vadd.f32 %v5603, %v5795
  %v5797 = vpop.f32.mrb[0].mxu0
  %v5798 = vadd.f32 %v5605, %v5797
  %v5799 = vpop.f32.mrb[0].mxu0
  %v5800 = vadd.f32 %v5607, %v5799
  %5801 = vmatprep.mubr.bf16.mxu0 0
  %5802 = vmatmul.mubr.bf16.gmra.mrb[0].mxu0 %v2785
  %v5803 = vpop.f32.mrb[0].mxu0
  %v5804 = vadd.f32 %v5611, %v5803
  %v5805 = vpop.f32.mrb[0].mxu0
  %v5806 = vadd.f32 %v5613, %v5805
  %v5807 = vpop.f32.mrb[0].mxu0
  %v5808 = vadd.f32 %v5615, %v5807
  %v5809 = vpop.f32.mrb[0].mxu0
  %v5810 = vadd.f32 %v5617, %v5809
  %5811 = vmatprep.mubr.bf16.mxu0 0
  %5812 = vmatmul.mubr.bf16.gmra.mrb[0].mxu0 %v2788
  %v5813 = vpop.f32.mrb[0].mxu0
  %v5814 = vadd.f32 %v5621, %v5813
  %v5815 = vpop.f32.mrb[0].mxu0
  %v5816 = vadd.f32 %v5623, %v5815
  %v5817 = vpop.f32.mrb[0].mxu0
  %v5818 = vadd.f32 %v5625, %v5817
  %v5819 = vpop.f32.mrb[0].mxu0
  %v5820 = vadd.f32 %v5627, %v5819
  %5821 = vmatprep.mubr.bf16.mxu0 0
  %5822 = vmatmul.mubr.bf16.gmra.mrb[0].mxu0 %v2791
  %v5823 = vpop.f32.mrb[0].mxu0
  %v5824 = vadd.f32 %v5631, %v5823
  %v5825 = vpop.f32.mrb[0].mxu0
  %v5826 = vadd.f32 %v5633, %v5825
  %v5827 = vpop.f32.mrb[0].mxu0
  %v5828 = vadd.f32 %v5635, %v5827
  %v5829 = vpop.f32.mrb[0].mxu0
  %v5830 = vadd.f32 %v5637, %v5829
  %5831 = vmatprep.mubr.bf16.mxu0 0
  %5832 = vmatmul.mubr.bf16.gmra.mrb[0].mxu0 %v2794
  %v5833 = vpop.f32.mrb[0].mxu0
  %v5834 = vadd.f32 %v5641, %v5833
  %v5835 = vpop.f32.mrb[0].mxu0
  %v5836 = vadd.f32 %v5643, %v5835
  %v5837 = vpop.f32.mrb[0].mxu0
  %v5838 = vadd.f32 %v5645, %v5837
  %v5839 = vpop.f32.mrb[0].mxu0
  %v5840 = vadd.f32 %v5647, %v5839
  %5841 = vmatprep.mubr.bf16.mxu0 0
  %5842 = vmatmul.mubr.bf16.gmra.mrb[0].mxu0 %v2797
  %v5843 = vpop.f32.mrb[0].mxu0
  %v5844 = vadd.f32 %v5651, %v5843
  %v5845 = vpop.f32.mrb[0].mxu0
  %v5846 = vadd.f32 %v5653, %v5845
  %v5847 = vpop.f32.mrb[0].mxu0
  %v5848 = vadd.f32 %v5655, %v5847
  %v5849 = vpop.f32.mrb[0].mxu0
  %v5850 = vadd.f32 %v5657, %v5849
  %5851 = vmatprep.mubr.bf16.mxu0 0
  %5852 = vmatmul.mubr.bf16.gmra.mrb[0].mxu0 %v2800
  %v5853 = vpop.f32.mrb[0].mxu0
  %v5854 = vadd.f32 %v5661, %v5853
  %v5855 = vpop.f32.mrb[0].mxu0
  %v5856 = vadd.f32 %v5663, %v5855
  %v5857 = vpop.f32.mrb[0].mxu0
  %v5858 = vadd.f32 %v5665, %v5857
  %v5859 = vpop.f32.mrb[0].mxu0
  %v5860 = vadd.f32 %v5667, %v5859
  %5861 = vmatprep.mubr.bf16.mxu0 0
  %5862 = vmatmul.mubr.bf16.gmra.mrb[0].mxu0 %v2803
  %v5863 = vpop.f32.mrb[0].mxu0
  %v5864 = vadd.f32 %v5671, %v5863
  %v5865 = vpop.f32.mrb[0].mxu0
  %v5866 = vadd.f32 %v5673, %v5865
  %v5867 = vpop.f32.mrb[0].mxu0
  %v5868 = vadd.f32 %v5675, %v5867
  %v5869 = vpop.f32.mrb[0].mxu0
  %v5870 = vadd.f32 %v5677, %v5869
  %5871 = vmatprep.mubr.bf16.mxu0 0
  %5872 = vmatmul.mubr.bf16.gmra.mrb[0].mxu0 %v2806
  %v5873 = vpop.f32.mrb[0].mxu0
  %v5874 = vadd.f32 %v5681, %v5873
  %v5875 = vpop.f32.mrb[0].mxu0
  %v5876 = vadd.f32 %v5683, %v5875
  %v5877 = vpop.f32.mrb[0].mxu0
  %v5878 = vadd.f32 %v5685, %v5877
  %v5879 = vpop.f32.mrb[0].mxu0
  %v5880 = vadd.f32 %v5687, %v5879
  %5881 = vmatprep.mubr.bf16.mxu0 0
  %5882 = vmatmul.mubr.bf16.gmra.mrb[0].mxu0 %v2809
  %v5883 = vpop.f32.mrb[0].mxu0
  %v5884 = vadd.f32 %v5691, %v5883
  %v5885 = vpop.f32.mrb[0].mxu0
  %v5886 = vadd.f32 %v5693, %v5885
  %v5887 = vpop.f32.mrb[0].mxu0
  %v5888 = vadd.f32 %v5695, %v5887
  %v5889 = vpop.f32.mrb[0].mxu0
  %v5890 = vadd.f32 %v5697, %v5889
  %5891 = vmatprep.mubr.bf16.mxu0 0
  %5892 = vmatmul.mubr.bf16.gmra.mrb[0].mxu0 %v2812
  %v5893 = vpop.f32.mrb[0].mxu0
  %v5894 = vadd.f32 %v5701, %v5893
  %v5895 = vpop.f32.mrb[0].mxu0
  %v5896 = vadd.f32 %v5703, %v5895
  %v5897 = vpop.f32.mrb[0].mxu0
  %v5898 = vadd.f32 %v5705, %v5897
  %v5899 = vpop.f32.mrb[0].mxu0
  %v5900 = vadd.f32 %v5707, %v5899
  %5901 = vdwg.mxu0
  %v5902 = vmul.f32 %v3428, 0.2
  %v5903 = vmul.f32 %v3430, 0.2
  %v5904 = vmul.f32 %v4200, 0.2
  %v5905 = vmul.f32 %v4202, 0.2
  %v5906 = vmul.f32 %v4972, 0.2
  %v5907 = vmul.f32 %v4974, 0.2
  %v5908 = vmul.f32 %v5744, 0.2
  %v5909 = vmul.f32 %v5746, 0.2
  %v5910 = vmul.f32 %v3432, 0.2
  %v5911 = vmul.f32 %v3434, 0.2
  %v5912 = vmul.f32 %v4204, 0.2
  %v5913 = vmul.f32 %v4206, 0.2
  %v5914 = vmul.f32 %v4976, 0.2
  %v5915 = vmul.f32 %v4978, 0.2
  %v5916 = vmul.f32 %v5748, 0.2
  %v5917 = vmul.f32 %v5750, 0.2
  %v5918 = vmul.f32 %v3438, 0.2
  %v5919 = vmul.f32 %v3440, 0.2
  %v5920 = vmul.f32 %v4210, 0.2
  %v5921 = vmul.f32 %v4212, 0.2
  %v5922 = vmul.f32 %v4982, 0.2
  %v5923 = vmul.f32 %v4984, 0.2
  %v5924 = vmul.f32 %v5754, 0.2
  %v5925 = vmul.f32 %v5756, 0.2
  %v5926 = vmul.f32 %v3442, 0.2
  %v5927 = vmul.f32 %v3444, 0.2
  %v5928 = vmul.f32 %v4214, 0.2
  %v5929 = vmul.f32 %v4216, 0.2
  %v5930 = vmul.f32 %v4986, 0.2
  %v5931 = vmul.f32 %v4988, 0.2
  %v5932 = vmul.f32 %v5758, 0.2
  %v5933 = vmul.f32 %v5760, 0.2
  %v5934 = vmul.f32 %v3448, 0.2
  %v5935 = vmul.f32 %v3450, 0.2
  %v5936 = vmul.f32 %v4220, 0.2
  %v5937 = vmul.f32 %v4222, 0.2
  %v5938 = vmul.f32 %v4992, 0.2
  %v5939 = vmul.f32 %v4994, 0.2
  %v5940 = vmul.f32 %v5764, 0.2
  %v5941 = vmul.f32 %v5766, 0.2
  %v5942 = vmul.f32 %v3452, 0.2
  %v5943 = vmul.f32 %v3454, 0.2
  %v5944 = vmul.f32 %v4224, 0.2
  %v5945 = vmul.f32 %v4226, 0.2
  %v5946 = vmul.f32 %v4996, 0.2
  %v5947 = vmul.f32 %v4998, 0.2
  %v5948 = vmul.f32 %v5768, 0.2
  %v5949 = vmul.f32 %v5770, 0.2
  %v5950 = vmul.f32 %v3458, 0.2
  %v5951 = vmul.f32 %v3460, 0.2
  %v5952 = vmul.f32 %v4230, 0.2
  %v5953 = vmul.f32 %v4232, 0.2
  %v5954 = vmul.f32 %v5002, 0.2
  %v5955 = vmul.f32 %v5004, 0.2
  %v5956 = vmul.f32 %v5774, 0.2
  %v5957 = vmul.f32 %v5776, 0.2
  %v5958 = vmul.f32 %v3462, 0.2
  %v5959 = vmul.f32 %v3464, 0.2
  %v5960 = vmul.f32 %v4234, 0.2
  %v5961 = vmul.f32 %v4236, 0.2
  %v5962 = vmul.f32 %v5006, 0.2
  %v5963 = vmul.f32 %v5008, 0.2
  %v5964 = vmul.f32 %v5778, 0.2
  %v5965 = vmul.f32 %v5780, 0.2
  %v5966 = vmul.f32 %v3468, 0.2
  %v5967 = vmul.f32 %v3470, 0.2
  %v5968 = vmul.f32 %v4240, 0.2
  %v5969 = vmul.f32 %v4242, 0.2
  %v5970 = vmul.f32 %v5012, 0.2
  %v5971 = vmul.f32 %v5014, 0.2
  %v5972 = vmul.f32 %v5784, 0.2
  %v5973 = vmul.f32 %v5786, 0.2
  %v5974 = vmul.f32 %v3472, 0.2
  %v5975 = vmul.f32 %v3474, 0.2
  %v5976 = vmul.f32 %v4244, 0.2
  %v5977 = vmul.f32 %v4246, 0.2
  %v5978 = vmul.f32 %v5016, 0.2
  %v5979 = vmul.f32 %v5018, 0.2
  %v5980 = vmul.f32 %v5788, 0.2
  %v5981 = vmul.f32 %v5790, 0.2
  %v5982 = vmul.f32 %v3478, 0.2
  %v5983 = vmul.f32 %v3480, 0.2
  %v5984 = vmul.f32 %v4250, 0.2
  %v5985 = vmul.f32 %v4252, 0.2
  %v5986 = vmul.f32 %v5022, 0.2
  %v5987 = vmul.f32 %v5024, 0.2
  %v5988 = vmul.f32 %v5794, 0.2
  %v5989 = vmul.f32 %v5796, 0.2
  %v5990 = vmul.f32 %v3482, 0.2
  %v5991 = vmul.f32 %v3484, 0.2
  %v5992 = vmul.f32 %v4254, 0.2
  %v5993 = vmul.f32 %v4256, 0.2
  %v5994 = vmul.f32 %v5026, 0.2
  %v5995 = vmul.f32 %v5028, 0.2
  %v5996 = vmul.f32 %v5798, 0.2
  %v5997 = vmul.f32 %v5800, 0.2
  %v5998 = vmul.f32 %v3488, 0.2
  %v5999 = vmul.f32 %v3490, 0.2
  %v6000 = vmul.f32 %v4260, 0.2
  %v6001 = vmul.f32 %v4262, 0.2
  %v6002 = vmul.f32 %v5032, 0.2
  %v6003 = vmul.f32 %v5034, 0.2
  %v6004 = vmul.f32 %v5804, 0.2
  %v6005 = vmul.f32 %v5806, 0.2
  %v6006 = vmul.f32 %v3492, 0.2
  %v6007 = vmul.f32 %v3494, 0.2
  %v6008 = vmul.f32 %v4264, 0.2
  %v6009 = vmul.f32 %v4266, 0.2
  %v6010 = vmul.f32 %v5036, 0.2
  %v6011 = vmul.f32 %v5038, 0.2
  %v6012 = vmul.f32 %v5808, 0.2
  %v6013 = vmul.f32 %v5810, 0.2
  %v6014 = vmul.f32 %v3498, 0.2
  %v6015 = vmul.f32 %v3500, 0.2
  %v6016 = vmul.f32 %v4270, 0.2
  %v6017 = vmul.f32 %v4272, 0.2
  %v6018 = vmul.f32 %v5042, 0.2
  %v6019 = vmul.f32 %v5044, 0.2
  %v6020 = vmul.f32 %v5814, 0.2
  %v6021 = vmul.f32 %v5816, 0.2
  %v6022 = vmul.f32 %v3502, 0.2
  %v6023 = vmul.f32 %v3504, 0.2
  %v6024 = vmul.f32 %v4274, 0.2
  %v6025 = vmul.f32 %v4276, 0.2
  %v6026 = vmul.f32 %v5046, 0.2
  %v6027 = vmul.f32 %v5048, 0.2
  %v6028 = vmul.f32 %v5818, 0.2
  %v6029 = vmul.f32 %v5820, 0.2
  %v6030 = vmul.f32 %v3508, 0.2
  %v6031 = vmul.f32 %v3510, 0.2
  %v6032 = vmul.f32 %v4280, 0.2
  %v6033 = vmul.f32 %v4282, 0.2
  %v6034 = vmul.f32 %v5052, 0.2
  %v6035 = vmul.f32 %v5054, 0.2
  %v6036 = vmul.f32 %v5824, 0.2
  %v6037 = vmul.f32 %v5826, 0.2
  %v6038 = vmul.f32 %v3512, 0.2
  %v6039 = vmul.f32 %v3514, 0.2
  %v6040 = vmul.f32 %v4284, 0.2
  %v6041 = vmul.f32 %v4286, 0.2
  %v6042 = vmul.f32 %v5056, 0.2
  %v6043 = vmul.f32 %v5058, 0.2
  %v6044 = vmul.f32 %v5828, 0.2
  %v6045 = vmul.f32 %v5830, 0.2
  %v6046 = vmul.f32 %v3518, 0.2
  %v6047 = vmul.f32 %v3520, 0.2
  %v6048 = vmul.f32 %v4290, 0.2
  %v6049 = vmul.f32 %v4292, 0.2
  %v6050 = vmul.f32 %v5062, 0.2
  %v6051 = vmul.f32 %v5064, 0.2
  %v6052 = vmul.f32 %v5834, 0.2
  %v6053 = vmul.f32 %v5836, 0.2
  %v6054 = vmul.f32 %v3522, 0.2
  %v6055 = vmul.f32 %v3524, 0.2
  %v6056 = vmul.f32 %v4294, 0.2
  %v6057 = vmul.f32 %v4296, 0.2
  %v6058 = vmul.f32 %v5066, 0.2
  %v6059 = vmul.f32 %v5068, 0.2
  %v6060 = vmul.f32 %v5838, 0.2
  %v6061 = vmul.f32 %v5840, 0.2
  %v6062 = vmul.f32 %v3528, 0.2
  %v6063 = vmul.f32 %v3530, 0.2
  %v6064 = vmul.f32 %v4300, 0.2
  %v6065 = vmul.f32 %v4302, 0.2
  %v6066 = vmul.f32 %v5072, 0.2
  %v6067 = vmul.f32 %v5074, 0.2
  %v6068 = vmul.f32 %v5844, 0.2
  %v6069 = vmul.f32 %v5846, 0.2
  %v6070 = vmul.f32 %v3532, 0.2
  %v6071 = vmul.f32 %v3534, 0.2
  %v6072 = vmul.f32 %v4304, 0.2
  %v6073 = vmul.f32 %v4306, 0.2
  %v6074 = vmul.f32 %v5076, 0.2
  %v6075 = vmul.f32 %v5078, 0.2
  %v6076 = vmul.f32 %v5848, 0.2
  %v6077 = vmul.f32 %v5850, 0.2
  %v6078 = vmul.f32 %v3538, 0.2
  %v6079 = vmul.f32 %v3540, 0.2
  %v6080 = vmul.f32 %v4310, 0.2
  %v6081 = vmul.f32 %v4312, 0.2
  %v6082 = vmul.f32 %v5082, 0.2
  %v6083 = vmul.f32 %v5084, 0.2
  %v6084 = vmul.f32 %v5854, 0.2
  %v6085 = vmul.f32 %v5856, 0.2
  %v6086 = vmul.f32 %v3542, 0.2
  %v6087 = vmul.f32 %v3544, 0.2
  %v6088 = vmul.f32 %v4314, 0.2
  %v6089 = vmul.f32 %v4316, 0.2
  %v6090 = vmul.f32 %v5086, 0.2
  %v6091 = vmul.f32 %v5088, 0.2
  %v6092 = vmul.f32 %v5858, 0.2
  %v6093 = vmul.f32 %v5860, 0.2
  %v6094 = vmul.f32 %v3548, 0.2
  %v6095 = vmul.f32 %v3550, 0.2
  %v6096 = vmul.f32 %v4320, 0.2
  %v6097 = vmul.f32 %v4322, 0.2
  %v6098 = vmul.f32 %v5092, 0.2
  %v6099 = vmul.f32 %v5094, 0.2
  %v6100 = vmul.f32 %v5864, 0.2
  %v6101 = vmul.f32 %v5866, 0.2
  %v6102 = vmul.f32 %v3552, 0.2
  %v6103 = vmul.f32 %v3554, 0.2
  %v6104 = vmul.f32 %v4324, 0.2
  %v6105 = vmul.f32 %v4326, 0.2
  %v6106 = vmul.f32 %v5096, 0.2
  %v6107 = vmul.f32 %v5098, 0.2
  %v6108 = vmul.f32 %v5868, 0.2
  %v6109 = vmul.f32 %v5870, 0.2
  %v6110 = vmul.f32 %v3558, 0.2
  %v6111 = vmul.f32 %v3560, 0.2
  %v6112 = vmul.f32 %v4330, 0.2
  %v6113 = vmul.f32 %v4332, 0.2
  %v6114 = vmul.f32 %v5102, 0.2
  %v6115 = vmul.f32 %v5104, 0.2
  %v6116 = vmul.f32 %v5874, 0.2
  %v6117 = vmul.f32 %v5876, 0.2
  %v6118 = vmul.f32 %v3562, 0.2
  %v6119 = vmul.f32 %v3564, 0.2
  %v6120 = vmul.f32 %v4334, 0.2
  %v6121 = vmul.f32 %v4336, 0.2
  %v6122 = vmul.f32 %v5106, 0.2
  %v6123 = vmul.f32 %v5108, 0.2
  %v6124 = vmul.f32 %v5878, 0.2
  %v6125 = vmul.f32 %v5880, 0.2
  %v6126 = vmul.f32 %v3568, 0.2
  %v6127 = vmul.f32 %v3570, 0.2
  %v6128 = vmul.f32 %v4340, 0.2
  %v6129 = vmul.f32 %v4342, 0.2
  %v6130 = vmul.f32 %v5112, 0.2
  %v6131 = vmul.f32 %v5114, 0.2
  %v6132 = vmul.f32 %v5884, 0.2
  %v6133 = vmul.f32 %v5886, 0.2
  %v6134 = vmul.f32 %v3572, 0.2
  %v6135 = vmul.f32 %v3574, 0.2
  %v6136 = vmul.f32 %v4344, 0.2
  %v6137 = vmul.f32 %v4346, 0.2
  %v6138 = vmul.f32 %v5116, 0.2
  %v6139 = vmul.f32 %v5118, 0.2
  %v6140 = vmul.f32 %v5888, 0.2
  %v6141 = vmul.f32 %v5890, 0.2
  %v6142 = vmul.f32 %v3578, 0.2
  %v6143 = vmul.f32 %v3580, 0.2
  %v6144 = vmul.f32 %v4350, 0.2
  %v6145 = vmul.f32 %v4352, 0.2
  %v6146 = vmul.f32 %v5122, 0.2
  %v6147 = vmul.f32 %v5124, 0.2
  %v6148 = vmul.f32 %v5894, 0.2
  %v6149 = vmul.f32 %v5896, 0.2
  %v6150 = vmul.f32 %v3582, 0.2
  %v6151 = vmul.f32 %v3584, 0.2
  %v6152 = vmul.f32 %v4354, 0.2
  %v6153 = vmul.f32 %v4356, 0.2
  %v6154 = vmul.f32 %v5126, 0.2
  %v6155 = vmul.f32 %v5128, 0.2
  %v6156 = vmul.f32 %v5898, 0.2
  %v6157 = vmul.f32 %v5900, 0.2
  %v6158 = vmax.f32 %v3428, %v5902
  %v6159 = vmax.f32 %v3430, %v5903
  %v6160 = vmax.f32 %v4200, %v5904
  %v6161 = vmax.f32 %v4202, %v5905
  %v6162 = vmax.f32 %v4972, %v5906
  %v6163 = vmax.f32 %v4974, %v5907
  %v6164 = vmax.f32 %v5744, %v5908
  %v6165 = vmax.f32 %v5746, %v5909
  %v6166 = vmax.f32 %v3432, %v5910
  %v6167 = vmax.f32 %v3434, %v5911
  %v6168 = vmax.f32 %v4204, %v5912
  %v6169 = vmax.f32 %v4206, %v5913
  %v6170 = vmax.f32 %v4976, %v5914
  %v6171 = vmax.f32 %v4978, %v5915
  %v6172 = vmax.f32 %v5748, %v5916
  %v6173 = vmax.f32 %v5750, %v5917
  %v6174 = vmax.f32 %v3438, %v5918
  %v6175 = vmax.f32 %v3440, %v5919
  %v6176 = vmax.f32 %v4210, %v5920
  %v6177 = vmax.f32 %v4212, %v5921
  %v6178 = vmax.f32 %v4982, %v5922
  %v6179 = vmax.f32 %v4984, %v5923
  %v6180 = vmax.f32 %v5754, %v5924
  %v6181 = vmax.f32 %v5756, %v5925
  %v6182 = vmax.f32 %v3442, %v5926
  %v6183 = vmax.f32 %v3444, %v5927
  %v6184 = vmax.f32 %v4214, %v5928
  %v6185 = vmax.f32 %v4216, %v5929
  %v6186 = vmax.f32 %v4986, %v5930
  %v6187 = vmax.f32 %v4988, %v5931
  %v6188 = vmax.f32 %v5758, %v5932
  %v6189 = vmax.f32 %v5760, %v5933
  %v6190 = vmax.f32 %v3448, %v5934
  %v6191 = vmax.f32 %v3450, %v5935
  %v6192 = vmax.f32 %v4220, %v5936
  %v6193 = vmax.f32 %v4222, %v5937
  %v6194 = vmax.f32 %v4992, %v5938
  %v6195 = vmax.f32 %v4994, %v5939
  %v6196 = vmax.f32 %v5764, %v5940
  %v6197 = vmax.f32 %v5766, %v5941
  %v6198 = vmax.f32 %v3452, %v5942
  %v6199 = vmax.f32 %v3454, %v5943
  %v6200 = vmax.f32 %v4224, %v5944
  %v6201 = vmax.f32 %v4226, %v5945
  %v6202 = vmax.f32 %v4996, %v5946
  %v6203 = vmax.f32 %v4998, %v5947
  %v6204 = vmax.f32 %v5768, %v5948
  %v6205 = vmax.f32 %v5770, %v5949
  %v6206 = vmax.f32 %v3458, %v5950
  %v6207 = vmax.f32 %v3460, %v5951
  %v6208 = vmax.f32 %v4230, %v5952
  %v6209 = vmax.f32 %v4232, %v5953
  %v6210 = vmax.f32 %v5002, %v5954
  %v6211 = vmax.f32 %v5004, %v5955
  %v6212 = vmax.f32 %v5774, %v5956
  %v6213 = vmax.f32 %v5776, %v5957
  %v6214 = vmax.f32 %v3462, %v5958
  %v6215 = vmax.f32 %v3464, %v5959
  %v6216 = vmax.f32 %v4234, %v5960
  %v6217 = vmax.f32 %v4236, %v5961
  %v6218 = vmax.f32 %v5006, %v5962
  %v6219 = vmax.f32 %v5008, %v5963
  %v6220 = vmax.f32 %v5778, %v5964
  %v6221 = vmax.f32 %v5780, %v5965
  %v6222 = vmax.f32 %v3468, %v5966
  %v6223 = vmax.f32 %v3470, %v5967
  %v6224 = vmax.f32 %v4240, %v5968
  %v6225 = vmax.f32 %v4242, %v5969
  %v6226 = vmax.f32 %v5012, %v5970
  %v6227 = vmax.f32 %v5014, %v5971
  %v6228 = vmax.f32 %v5784, %v5972
  %v6229 = vmax.f32 %v5786, %v5973
  %v6230 = vmax.f32 %v3472, %v5974
  %v6231 = vmax.f32 %v3474, %v5975
  %v6232 = vmax.f32 %v4244, %v5976
  %v6233 = vmax.f32 %v4246, %v5977
  %v6234 = vmax.f32 %v5016, %v5978
  %v6235 = vmax.f32 %v5018, %v5979
  %v6236 = vmax.f32 %v5788, %v5980
  %v6237 = vmax.f32 %v5790, %v5981
  %v6238 = vmax.f32 %v3478, %v5982
  %v6239 = vmax.f32 %v3480, %v5983
  %v6240 = vmax.f32 %v4250, %v5984
  %v6241 = vmax.f32 %v4252, %v5985
  %v6242 = vmax.f32 %v5022, %v5986
  %v6243 = vmax.f32 %v5024, %v5987
  %v6244 = vmax.f32 %v5794, %v5988
  %v6245 = vmax.f32 %v5796, %v5989
  %v6246 = vmax.f32 %v3482, %v5990
  %v6247 = vmax.f32 %v3484, %v5991
  %v6248 = vmax.f32 %v4254, %v5992
  %v6249 = vmax.f32 %v4256, %v5993
  %v6250 = vmax.f32 %v5026, %v5994
  %v6251 = vmax.f32 %v5028, %v5995
  %v6252 = vmax.f32 %v5798, %v5996
  %v6253 = vmax.f32 %v5800, %v5997
  %v6254 = vmax.f32 %v3488, %v5998
  %v6255 = vmax.f32 %v3490, %v5999
  %v6256 = vmax.f32 %v4260, %v6000
  %v6257 = vmax.f32 %v4262, %v6001
  %v6258 = vmax.f32 %v5032, %v6002
  %v6259 = vmax.f32 %v5034, %v6003
  %v6260 = vmax.f32 %v5804, %v6004
  %v6261 = vmax.f32 %v5806, %v6005
  %v6262 = vmax.f32 %v3492, %v6006
  %v6263 = vmax.f32 %v3494, %v6007
  %v6264 = vmax.f32 %v4264, %v6008
  %v6265 = vmax.f32 %v4266, %v6009
  %v6266 = vmax.f32 %v5036, %v6010
  %v6267 = vmax.f32 %v5038, %v6011
  %v6268 = vmax.f32 %v5808, %v6012
  %v6269 = vmax.f32 %v5810, %v6013
  %v6270 = vmax.f32 %v3498, %v6014
  %v6271 = vmax.f32 %v3500, %v6015
  %v6272 = vmax.f32 %v4270, %v6016
  %v6273 = vmax.f32 %v4272, %v6017
  %v6274 = vmax.f32 %v5042, %v6018
  %v6275 = vmax.f32 %v5044, %v6019
  %v6276 = vmax.f32 %v5814, %v6020
  %v6277 = vmax.f32 %v5816, %v6021
  %v6278 = vmax.f32 %v3502, %v6022
  %v6279 = vmax.f32 %v3504, %v6023
  %v6280 = vmax.f32 %v4274, %v6024
  %v6281 = vmax.f32 %v4276, %v6025
  %v6282 = vmax.f32 %v5046, %v6026
  %v6283 = vmax.f32 %v5048, %v6027
  %v6284 = vmax.f32 %v5818, %v6028
  %v6285 = vmax.f32 %v5820, %v6029
  %v6286 = vmax.f32 %v3508, %v6030
  %v6287 = vmax.f32 %v3510, %v6031
  %v6288 = vmax.f32 %v4280, %v6032
  %v6289 = vmax.f32 %v4282, %v6033
  %v6290 = vmax.f32 %v5052, %v6034
  %v6291 = vmax.f32 %v5054, %v6035
  %v6292 = vmax.f32 %v5824, %v6036
  %v6293 = vmax.f32 %v5826, %v6037
  %v6294 = vmax.f32 %v3512, %v6038
  %v6295 = vmax.f32 %v3514, %v6039
  %v6296 = vmax.f32 %v4284, %v6040
  %v6297 = vmax.f32 %v4286, %v6041
  %v6298 = vmax.f32 %v5056, %v6042
  %v6299 = vmax.f32 %v5058, %v6043
  %v6300 = vmax.f32 %v5828, %v6044
  %v6301 = vmax.f32 %v5830, %v6045
  %v6302 = vmax.f32 %v3518, %v6046
  %v6303 = vmax.f32 %v3520, %v6047
  %v6304 = vmax.f32 %v4290, %v6048
  %v6305 = vmax.f32 %v4292, %v6049
  %v6306 = vmax.f32 %v5062, %v6050
  %v6307 = vmax.f32 %v5064, %v6051
  %v6308 = vmax.f32 %v5834, %v6052
  %v6309 = vmax.f32 %v5836, %v6053
  %v6310 = vmax.f32 %v3522, %v6054
  %v6311 = vmax.f32 %v3524, %v6055
  %v6312 = vmax.f32 %v4294, %v6056
  %v6313 = vmax.f32 %v4296, %v6057
  %v6314 = vmax.f32 %v5066, %v6058
  %v6315 = vmax.f32 %v5068, %v6059
  %v6316 = vmax.f32 %v5838, %v6060
  %v6317 = vmax.f32 %v5840, %v6061
  %v6318 = vmax.f32 %v3528, %v6062
  %v6319 = vmax.f32 %v3530, %v6063
  %v6320 = vmax.f32 %v4300, %v6064
  %v6321 = vmax.f32 %v4302, %v6065
  %v6322 = vmax.f32 %v5072, %v6066
  %v6323 = vmax.f32 %v5074, %v6067
  %v6324 = vmax.f32 %v5844, %v6068
  %v6325 = vmax.f32 %v5846, %v6069
  %v6326 = vmax.f32 %v3532, %v6070
  %v6327 = vmax.f32 %v3534, %v6071
  %v6328 = vmax.f32 %v4304, %v6072
  %v6329 = vmax.f32 %v4306, %v6073
  %v6330 = vmax.f32 %v5076, %v6074
  %v6331 = vmax.f32 %v5078, %v6075
  %v6332 = vmax.f32 %v5848, %v6076
  %v6333 = vmax.f32 %v5850, %v6077
  %v6334 = vmax.f32 %v3538, %v6078
  %v6335 = vmax.f32 %v3540, %v6079
  %v6336 = vmax.f32 %v4310, %v6080
  %v6337 = vmax.f32 %v4312, %v6081
  %v6338 = vmax.f32 %v5082, %v6082
  %v6339 = vmax.f32 %v5084, %v6083
  %v6340 = vmax.f32 %v5854, %v6084
  %v6341 = vmax.f32 %v5856, %v6085
  %v6342 = vmax.f32 %v3542, %v6086
  %v6343 = vmax.f32 %v3544, %v6087
  %v6344 = vmax.f32 %v4314, %v6088
  %v6345 = vmax.f32 %v4316, %v6089
  %v6346 = vmax.f32 %v5086, %v6090
  %v6347 = vmax.f32 %v5088, %v6091
  %v6348 = vmax.f32 %v5858, %v6092
  %v6349 = vmax.f32 %v5860, %v6093
  %v6350 = vmax.f32 %v3548, %v6094
  %v6351 = vmax.f32 %v3550, %v6095
  %v6352 = vmax.f32 %v4320, %v6096
  %v6353 = vmax.f32 %v4322, %v6097
  %v6354 = vmax.f32 %v5092, %v6098
  %v6355 = vmax.f32 %v5094, %v6099
  %v6356 = vmax.f32 %v5864, %v6100
  %v6357 = vmax.f32 %v5866, %v6101
  %v6358 = vmax.f32 %v3552, %v6102
  %v6359 = vmax.f32 %v3554, %v6103
  %v6360 = vmax.f32 %v4324, %v6104
  %v6361 = vmax.f32 %v4326, %v6105
  %v6362 = vmax.f32 %v5096, %v6106
  %v6363 = vmax.f32 %v5098, %v6107
  %v6364 = vmax.f32 %v5868, %v6108
  %v6365 = vmax.f32 %v5870, %v6109
  %v6366 = vmax.f32 %v3558, %v6110
  %v6367 = vmax.f32 %v3560, %v6111
  %v6368 = vmax.f32 %v4330, %v6112
  %v6369 = vmax.f32 %v4332, %v6113
  %v6370 = vmax.f32 %v5102, %v6114
  %v6371 = vmax.f32 %v5104, %v6115
  %v6372 = vmax.f32 %v5874, %v6116
  %v6373 = vmax.f32 %v5876, %v6117
  %v6374 = vmax.f32 %v3562, %v6118
  %v6375 = vmax.f32 %v3564, %v6119
  %v6376 = vmax.f32 %v4334, %v6120
  %v6377 = vmax.f32 %v4336, %v6121
  %v6378 = vmax.f32 %v5106, %v6122
  %v6379 = vmax.f32 %v5108, %v6123
  %v6380 = vmax.f32 %v5878, %v6124
  %v6381 = vmax.f32 %v5880, %v6125
  %v6382 = vmax.f32 %v3568, %v6126
  %v6383 = vmax.f32 %v3570, %v6127
  %v6384 = vmax.f32 %v4340, %v6128
  %v6385 = vmax.f32 %v4342, %v6129
  %v6386 = vmax.f32 %v5112, %v6130
  %v6387 = vmax.f32 %v5114, %v6131
  %v6388 = vmax.f32 %v5884, %v6132
  %v6389 = vmax.f32 %v5886, %v6133
  %v6390 = vmax.f32 %v3572, %v6134
  %v6391 = vmax.f32 %v3574, %v6135
  %v6392 = vmax.f32 %v4344, %v6136
  %v6393 = vmax.f32 %v4346, %v6137
  %v6394 = vmax.f32 %v5116, %v6138
  %v6395 = vmax.f32 %v5118, %v6139
  %v6396 = vmax.f32 %v5888, %v6140
  %v6397 = vmax.f32 %v5890, %v6141
  %v6398 = vmax.f32 %v3578, %v6142
  %v6399 = vmax.f32 %v3580, %v6143
  %v6400 = vmax.f32 %v4350, %v6144
  %v6401 = vmax.f32 %v4352, %v6145
  %v6402 = vmax.f32 %v5122, %v6146
  %v6403 = vmax.f32 %v5124, %v6147
  %v6404 = vmax.f32 %v5894, %v6148
  %v6405 = vmax.f32 %v5896, %v6149
  %v6406 = vmax.f32 %v3582, %v6150
  %v6407 = vmax.f32 %v3584, %v6151
  %v6408 = vmax.f32 %v4354, %v6152
  %v6409 = vmax.f32 %v4356, %v6153
  %v6410 = vmax.f32 %v5126, %v6154
  %v6411 = vmax.f32 %v5128, %v6155
  %v6412 = vmax.f32 %v5898, %v6156
  %v6413 = vmax.f32 %v5900, %v6157
  %v6414 = vpack.c.bf16 %v6166, %v6158
  %v6415 = vpack.c.bf16 %v6167, %v6159
  %v6416 = vpack.c.bf16 %v6168, %v6160
  %v6417 = vpack.c.bf16 %v6169, %v6161
  %v6418 = vpack.c.bf16 %v6170, %v6162
  %v6419 = vpack.c.bf16 %v6171, %v6163
  %v6420 = vpack.c.bf16 %v6172, %v6164
  %v6421 = vpack.c.bf16 %v6173, %v6165
  %v6422 = vpack.c.bf16 %v6182, %v6174
  %v6423 = vpack.c.bf16 %v6183, %v6175
  %v6424 = vpack.c.bf16 %v6184, %v6176
  %v6425 = vpack.c.bf16 %v6185, %v6177
  %v6426 = vpack.c.bf16 %v6186, %v6178
  %v6427 = vpack.c.bf16 %v6187, %v6179
  %v6428 = vpack.c.bf16 %v6188, %v6180
  %v6429 = vpack.c.bf16 %v6189, %v6181
  %v6430 = vpack.c.bf16 %v6198, %v6190
  %v6431 = vpack.c.bf16 %v6199, %v6191
  %v6432 = vpack.c.bf16 %v6200, %v6192
  %v6433 = vpack.c.bf16 %v6201, %v6193
  %v6434 = vpack.c.bf16 %v6202, %v6194
  %v6435 = vpack.c.bf16 %v6203, %v6195
  %v6436 = vpack.c.bf16 %v6204, %v6196
  %v6437 = vpack.c.bf16 %v6205, %v6197
  %v6438 = vpack.c.bf16 %v6214, %v6206
  %v6439 = vpack.c.bf16 %v6215, %v6207
  %v6440 = vpack.c.bf16 %v6216, %v6208
  %v6441 = vpack.c.bf16 %v6217, %v6209
  %v6442 = vpack.c.bf16 %v6218, %v6210
  %v6443 = vpack.c.bf16 %v6219, %v6211
  %v6444 = vpack.c.bf16 %v6220, %v6212
  %v6445 = vpack.c.bf16 %v6221, %v6213
  %v6446 = vpack.c.bf16 %v6230, %v6222
  %v6447 = vpack.c.bf16 %v6231, %v6223
  %v6448 = vpack.c.bf16 %v6232, %v6224
  %v6449 = vpack.c.bf16 %v6233, %v6225
  %v6450 = vpack.c.bf16 %v6234, %v6226
  %v6451 = vpack.c.bf16 %v6235, %v6227
  %v6452 = vpack.c.bf16 %v6236, %v6228
  %v6453 = vpack.c.bf16 %v6237, %v6229
  %v6454 = vpack.c.bf16 %v6246, %v6238
  %v6455 = vpack.c.bf16 %v6247, %v6239
  %v6456 = vpack.c.bf16 %v6248, %v6240
  %v6457 = vpack.c.bf16 %v6249, %v6241
  %v6458 = vpack.c.bf16 %v6250, %v6242
  %v6459 = vpack.c.bf16 %v6251, %v6243
  %v6460 = vpack.c.bf16 %v6252, %v6244
  %v6461 = vpack.c.bf16 %v6253, %v6245
  %v6462 = vpack.c.bf16 %v6262, %v6254
  %v6463 = vpack.c.bf16 %v6263, %v6255
  %v6464 = vpack.c.bf16 %v6264, %v6256
  %v6465 = vpack.c.bf16 %v6265, %v6257
  %v6466 = vpack.c.bf16 %v6266, %v6258
  %v6467 = vpack.c.bf16 %v6267, %v6259
  %v6468 = vpack.c.bf16 %v6268, %v6260
  %v6469 = vpack.c.bf16 %v6269, %v6261
  %v6470 = vpack.c.bf16 %v6278, %v6270
  %v6471 = vpack.c.bf16 %v6279, %v6271
  %v6472 = vpack.c.bf16 %v6280, %v6272
  %v6473 = vpack.c.bf16 %v6281, %v6273
  %v6474 = vpack.c.bf16 %v6282, %v6274
  %v6475 = vpack.c.bf16 %v6283, %v6275
  %v6476 = vpack.c.bf16 %v6284, %v6276
  %v6477 = vpack.c.bf16 %v6285, %v6277
  %v6478 = vpack.c.bf16 %v6294, %v6286
  %v6479 = vpack.c.bf16 %v6295, %v6287
  %v6480 = vpack.c.bf16 %v6296, %v6288
  %v6481 = vpack.c.bf16 %v6297, %v6289
  %v6482 = vpack.c.bf16 %v6298, %v6290
  %v6483 = vpack.c.bf16 %v6299, %v6291
  %v6484 = vpack.c.bf16 %v6300, %v6292
  %v6485 = vpack.c.bf16 %v6301, %v6293
  %v6486 = vpack.c.bf16 %v6310, %v6302
  %v6487 = vpack.c.bf16 %v6311, %v6303
  %v6488 = vpack.c.bf16 %v6312, %v6304
  %v6489 = vpack.c.bf16 %v6313, %v6305
  %v6490 = vpack.c.bf16 %v6314, %v6306
  %v6491 = vpack.c.bf16 %v6315, %v6307
  %v6492 = vpack.c.bf16 %v6316, %v6308
  %v6493 = vpack.c.bf16 %v6317, %v6309
  %v6494 = vpack.c.bf16 %v6326, %v6318
  %v6495 = vpack.c.bf16 %v6327, %v6319
  %v6496 = vpack.c.bf16 %v6328, %v6320
  %v6497 = vpack.c.bf16 %v6329, %v6321
  %v6498 = vpack.c.bf16 %v6330, %v6322
  %v6499 = vpack.c.bf16 %v6331, %v6323
  %v6500 = vpack.c.bf16 %v6332, %v6324
  %v6501 = vpack.c.bf16 %v6333, %v6325
  %v6502 = vpack.c.bf16 %v6342, %v6334
  %v6503 = vpack.c.bf16 %v6343, %v6335
  %v6504 = vpack.c.bf16 %v6344, %v6336
  %v6505 = vpack.c.bf16 %v6345, %v6337
  %v6506 = vpack.c.bf16 %v6346, %v6338
  %v6507 = vpack.c.bf16 %v6347, %v6339
  %v6508 = vpack.c.bf16 %v6348, %v6340
  %v6509 = vpack.c.bf16 %v6349, %v6341
  %v6510 = vpack.c.bf16 %v6358, %v6350
  %v6511 = vpack.c.bf16 %v6359, %v6351
  %v6512 = vpack.c.bf16 %v6360, %v6352
  %v6513 = vpack.c.bf16 %v6361, %v6353
  %v6514 = vpack.c.bf16 %v6362, %v6354
  %v6515 = vpack.c.bf16 %v6363, %v6355
  %v6516 = vpack.c.bf16 %v6364, %v6356
  %v6517 = vpack.c.bf16 %v6365, %v6357
  %v6518 = vpack.c.bf16 %v6374, %v6366
  %v6519 = vpack.c.bf16 %v6375, %v6367
  %v6520 = vpack.c.bf16 %v6376, %v6368
  %v6521 = vpack.c.bf16 %v6377, %v6369
  %v6522 = vpack.c.bf16 %v6378, %v6370
  %v6523 = vpack.c.bf16 %v6379, %v6371
  %v6524 = vpack.c.bf16 %v6380, %v6372
  %v6525 = vpack.c.bf16 %v6381, %v6373
  %v6526 = vpack.c.bf16 %v6390, %v6382
  %v6527 = vpack.c.bf16 %v6391, %v6383
  %v6528 = vpack.c.bf16 %v6392, %v6384
  %v6529 = vpack.c.bf16 %v6393, %v6385
  %v6530 = vpack.c.bf16 %v6394, %v6386
  %v6531 = vpack.c.bf16 %v6395, %v6387
  %v6532 = vpack.c.bf16 %v6396, %v6388
  %v6533 = vpack.c.bf16 %v6397, %v6389
  %v6534 = vpack.c.bf16 %v6406, %v6398
  %v6535 = vpack.c.bf16 %v6407, %v6399
  %v6536 = vpack.c.bf16 %v6408, %v6400
  %v6537 = vpack.c.bf16 %v6409, %v6401
  %v6538 = vpack.c.bf16 %v6410, %v6402
  %v6539 = vpack.c.bf16 %v6411, %v6403
  %v6540 = vpack.c.bf16 %v6412, %v6404
  %v6541 = vpack.c.bf16 %v6413, %v6405
  %v6542 = vld [vmem:[%s3] sm:$0xff]
  %v6543 = vld [vmem:[%s3 + $0x8] sm:$0xff]
  %v6544 = vld [vmem:[%s3 + $0x10] sm:$0xff]
  %v6545 = vld [vmem:[%s3 + $0x18] sm:$0xff]
  %v6546 = vld [vmem:[%s3 + $0x20] sm:$0xff]
  %v6547 = vld [vmem:[%s3 + $0x28] sm:$0xff]
  %v6548 = vld [vmem:[%s3 + $0x30] sm:$0xff]
  %v6549 = vld [vmem:[%s3 + $0x38] sm:$0xff]
  %v6550 = vld [vmem:[%s3 + $0x40] sm:$0xff]
  %v6551 = vld [vmem:[%s3 + $0x48] sm:$0xff]
  %v6552 = vld [vmem:[%s3 + $0x50] sm:$0xff]
  %v6553 = vld [vmem:[%s3 + $0x58] sm:$0xff]
  %v6554 = vld [vmem:[%s3 + $0x60] sm:$0xff]
  %v6555 = vld [vmem:[%s3 + $0x68] sm:$0xff]
  %v6556 = vld [vmem:[%s3 + $0x70] sm:$0xff]
  %v6557 = vld [vmem:[%s3 + $0x78] sm:$0xff]
  %v6558 = vld [vmem:[%s3 + $0x80] sm:$0xff]
  %v6559 = vld [vmem:[%s3 + $0x88] sm:$0xff]
  %v6560 = vld [vmem:[%s3 + $0x90] sm:$0xff]
  %v6561 = vld [vmem:[%s3 + $0x98] sm:$0xff]
  %v6562 = vld [vmem:[%s3 + $0xa0] sm:$0xff]
  %v6563 = vld [vmem:[%s3 + $0xa8] sm:$0xff]
  %v6564 = vld [vmem:[%s3 + $0xb0] sm:$0xff]
  %v6565 = vld [vmem:[%s3 + $0xb8] sm:$0xff]
  %v6566 = vld [vmem:[%s3 + $0xc0] sm:$0xff]
  %v6567 = vld [vmem:[%s3 + $0xc8] sm:$0xff]
  %v6568 = vld [vmem:[%s3 + $0xd0] sm:$0xff]
  %v6569 = vld [vmem:[%s3 + $0xd8] sm:$0xff]
  %v6570 = vld [vmem:[%s3 + $0xe0] sm:$0xff]
  %v6571 = vld [vmem:[%s3 + $0xe8] sm:$0xff]
  %v6572 = vld [vmem:[%s3 + $0xf0] sm:$0xff]
  %v6573 = vld [vmem:[%s3 + $0xf8] sm:$0xff]
  %v6574 = vld [vmem:[%s3 + $0x100] sm:$0xff]
  %v6575 = vld [vmem:[%s3 + $0x108] sm:$0xff]
  %v6576 = vld [vmem:[%s3 + $0x110] sm:$0xff]
  %v6577 = vld [vmem:[%s3 + $0x118] sm:$0xff]
  %v6578 = vld [vmem:[%s3 + $0x120] sm:$0xff]
  %v6579 = vld [vmem:[%s3 + $0x128] sm:$0xff]
  %v6580 = vld [vmem:[%s3 + $0x130] sm:$0xff]
  %v6581 = vld [vmem:[%s3 + $0x138] sm:$0xff]
  %v6582 = vld [vmem:[%s3 + $0x140] sm:$0xff]
  %v6583 = vld [vmem:[%s3 + $0x148] sm:$0xff]
  %v6584 = vld [vmem:[%s3 + $0x150] sm:$0xff]
  %v6585 = vld [vmem:[%s3 + $0x158] sm:$0xff]
  %v6586 = vld [vmem:[%s3 + $0x160] sm:$0xff]
  %v6587 = vld [vmem:[%s3 + $0x168] sm:$0xff]
  %v6588 = vld [vmem:[%s3 + $0x170] sm:$0xff]
  %v6589 = vld [vmem:[%s3 + $0x178] sm:$0xff]
  %v6590 = vld [vmem:[%s3 + $0x180] sm:$0xff]
  %v6591 = vld [vmem:[%s3 + $0x188] sm:$0xff]
  %v6592 = vld [vmem:[%s3 + $0x190] sm:$0xff]
  %v6593 = vld [vmem:[%s3 + $0x198] sm:$0xff]
  %v6594 = vld [vmem:[%s3 + $0x1a0] sm:$0xff]
  %v6595 = vld [vmem:[%s3 + $0x1a8] sm:$0xff]
  %v6596 = vld [vmem:[%s3 + $0x1b0] sm:$0xff]
  %v6597 = vld [vmem:[%s3 + $0x1b8] sm:$0xff]
  %v6598 = vld [vmem:[%s3 + $0x1c0] sm:$0xff]
  %v6599 = vld [vmem:[%s3 + $0x1c8] sm:$0xff]
  %v6600 = vld [vmem:[%s3 + $0x1d0] sm:$0xff]
  %v6601 = vld [vmem:[%s3 + $0x1d8] sm:$0xff]
  %v6602 = vld [vmem:[%s3 + $0x1e0] sm:$0xff]
  %v6603 = vld [vmem:[%s3 + $0x1e8] sm:$0xff]
  %v6604 = vld [vmem:[%s3 + $0x1f0] sm:$0xff]
  %v6605 = vld [vmem:[%s3 + $0x1f8] sm:$0xff]
  %v6606 = vld [vmem:[%s3 + $0x200] sm:$0xff]
  %v6607 = vld [vmem:[%s3 + $0x208] sm:$0xff]
  %v6608 = vld [vmem:[%s3 + $0x210] sm:$0xff]
  %v6609 = vld [vmem:[%s3 + $0x218] sm:$0xff]
  %v6610 = vld [vmem:[%s3 + $0x220] sm:$0xff]
  %v6611 = vld [vmem:[%s3 + $0x228] sm:$0xff]
  %v6612 = vld [vmem:[%s3 + $0x230] sm:$0xff]
  %v6613 = vld [vmem:[%s3 + $0x238] sm:$0xff]
  %v6614 = vld [vmem:[%s3 + $0x240] sm:$0xff]
  %v6615 = vld [vmem:[%s3 + $0x248] sm:$0xff]
  %v6616 = vld [vmem:[%s3 + $0x250] sm:$0xff]
  %v6617 = vld [vmem:[%s3 + $0x258] sm:$0xff]
  %v6618 = vld [vmem:[%s3 + $0x260] sm:$0xff]
  %v6619 = vld [vmem:[%s3 + $0x268] sm:$0xff]
  %v6620 = vld [vmem:[%s3 + $0x270] sm:$0xff]
  %v6621 = vld [vmem:[%s3 + $0x278] sm:$0xff]
  %v6622 = vld [vmem:[%s3 + $0x280] sm:$0xff]
  %v6623 = vld [vmem:[%s3 + $0x288] sm:$0xff]
  %v6624 = vld [vmem:[%s3 + $0x290] sm:$0xff]
  %v6625 = vld [vmem:[%s3 + $0x298] sm:$0xff]
  %v6626 = vld [vmem:[%s3 + $0x2a0] sm:$0xff]
  %v6627 = vld [vmem:[%s3 + $0x2a8] sm:$0xff]
  %v6628 = vld [vmem:[%s3 + $0x2b0] sm:$0xff]
  %v6629 = vld [vmem:[%s3 + $0x2b8] sm:$0xff]
  %v6630 = vld [vmem:[%s3 + $0x2c0] sm:$0xff]
  %v6631 = vld [vmem:[%s3 + $0x2c8] sm:$0xff]
  %v6632 = vld [vmem:[%s3 + $0x2d0] sm:$0xff]
  %v6633 = vld [vmem:[%s3 + $0x2d8] sm:$0xff]
  %v6634 = vld [vmem:[%s3 + $0x2e0] sm:$0xff]
  %v6635 = vld [vmem:[%s3 + $0x2e8] sm:$0xff]
  %v6636 = vld [vmem:[%s3 + $0x2f0] sm:$0xff]
  %v6637 = vld [vmem:[%s3 + $0x2f8] sm:$0xff]
  %v6638 = vld [vmem:[%s3 + $0x300] sm:$0xff]
  %v6639 = vld [vmem:[%s3 + $0x308] sm:$0xff]
  %v6640 = vld [vmem:[%s3 + $0x310] sm:$0xff]
  %v6641 = vld [vmem:[%s3 + $0x318] sm:$0xff]
  %v6642 = vld [vmem:[%s3 + $0x320] sm:$0xff]
  %v6643 = vld [vmem:[%s3 + $0x328] sm:$0xff]
  %v6644 = vld [vmem:[%s3 + $0x330] sm:$0xff]
  %v6645 = vld [vmem:[%s3 + $0x338] sm:$0xff]
  %v6646 = vld [vmem:[%s3 + $0x340] sm:$0xff]
  %v6647 = vld [vmem:[%s3 + $0x348] sm:$0xff]
  %v6648 = vld [vmem:[%s3 + $0x350] sm:$0xff]
  %v6649 = vld [vmem:[%s3 + $0x358] sm:$0xff]
  %v6650 = vld [vmem:[%s3 + $0x360] sm:$0xff]
  %v6651 = vld [vmem:[%s3 + $0x368] sm:$0xff]
  %v6652 = vld [vmem:[%s3 + $0x370] sm:$0xff]
  %v6653 = vld [vmem:[%s3 + $0x378] sm:$0xff]
  %v6654 = vld [vmem:[%s3 + $0x380] sm:$0xff]
  %v6655 = vld [vmem:[%s3 + $0x388] sm:$0xff]
  %v6656 = vld [vmem:[%s3 + $0x390] sm:$0xff]
  %v6657 = vld [vmem:[%s3 + $0x398] sm:$0xff]
  %v6658 = vld [vmem:[%s3 + $0x3a0] sm:$0xff]
  %v6659 = vld [vmem:[%s3 + $0x3a8] sm:$0xff]
  %v6660 = vld [vmem:[%s3 + $0x3b0] sm:$0xff]
  %v6661 = vld [vmem:[%s3 + $0x3b8] sm:$0xff]
  %v6662 = vld [vmem:[%s3 + $0x3c0] sm:$0xff]
  %v6663 = vld [vmem:[%s3 + $0x3c8] sm:$0xff]
  %v6664 = vld [vmem:[%s3 + $0x3d0] sm:$0xff]
  %v6665 = vld [vmem:[%s3 + $0x3d8] sm:$0xff]
  %v6666 = vld [vmem:[%s3 + $0x3e0] sm:$0xff]
  %v6667 = vld [vmem:[%s3 + $0x3e8] sm:$0xff]
  %v6668 = vld [vmem:[%s3 + $0x3f0] sm:$0xff]
  %v6669 = vld [vmem:[%s3 + $0x3f8] sm:$0xff]
  %v6670 = vld [vmem:[%s3 + $0x400] sm:$0xff]
  %v6671 = vld [vmem:[%s3 + $0x408] sm:$0xff]
  %v6672 = vld [vmem:[%s3 + $0x410] sm:$0xff]
  %v6673 = vld [vmem:[%s3 + $0x418] sm:$0xff]
  %v6674 = vld [vmem:[%s3 + $0x420] sm:$0xff]
  %v6675 = vld [vmem:[%s3 + $0x428] sm:$0xff]
  %v6676 = vld [vmem:[%s3 + $0x430] sm:$0xff]
  %v6677 = vld [vmem:[%s3 + $0x438] sm:$0xff]
  %v6678 = vld [vmem:[%s3 + $0x440] sm:$0xff]
  %v6679 = vld [vmem:[%s3 + $0x448] sm:$0xff]
  %v6680 = vld [vmem:[%s3 + $0x450] sm:$0xff]
  %v6681 = vld [vmem:[%s3 + $0x458] sm:$0xff]
  %v6682 = vld [vmem:[%s3 + $0x460] sm:$0xff]
  %v6683 = vld [vmem:[%s3 + $0x468] sm:$0xff]
  %v6684 = vld [vmem:[%s3 + $0x470] sm:$0xff]
  %v6685 = vld [vmem:[%s3 + $0x478] sm:$0xff]
  %v6686 = vld [vmem:[%s3 + $0x480] sm:$0xff]
  %v6687 = vld [vmem:[%s3 + $0x488] sm:$0xff]
  %v6688 = vld [vmem:[%s3 + $0x490] sm:$0xff]
  %v6689 = vld [vmem:[%s3 + $0x498] sm:$0xff]
  %v6690 = vld [vmem:[%s3 + $0x4a0] sm:$0xff]
  %v6691 = vld [vmem:[%s3 + $0x4a8] sm:$0xff]
  %v6692 = vld [vmem:[%s3 + $0x4b0] sm:$0xff]
  %v6693 = vld [vmem:[%s3 + $0x4b8] sm:$0xff]
  %v6694 = vld [vmem:[%s3 + $0x4c0] sm:$0xff]
  %v6695 = vld [vmem:[%s3 + $0x4c8] sm:$0xff]
  %v6696 = vld [vmem:[%s3 + $0x4d0] sm:$0xff]
  %v6697 = vld [vmem:[%s3 + $0x4d8] sm:$0xff]
  %v6698 = vld [vmem:[%s3 + $0x4e0] sm:$0xff]
  %v6699 = vld [vmem:[%s3 + $0x4e8] sm:$0xff]
  %v6700 = vld [vmem:[%s3 + $0x4f0] sm:$0xff]
  %v6701 = vld [vmem:[%s3 + $0x4f8] sm:$0xff]
  %v6702 = vld [vmem:[%s3 + $0x500] sm:$0xff]
  %v6703 = vld [vmem:[%s3 + $0x508] sm:$0xff]
  %v6704 = vld [vmem:[%s3 + $0x510] sm:$0xff]
  %v6705 = vld [vmem:[%s3 + $0x518] sm:$0xff]
  %v6706 = vld [vmem:[%s3 + $0x520] sm:$0xff]
  %v6707 = vld [vmem:[%s3 + $0x528] sm:$0xff]
  %v6708 = vld [vmem:[%s3 + $0x530] sm:$0xff]
  %v6709 = vld [vmem:[%s3 + $0x538] sm:$0xff]
  %v6710 = vld [vmem:[%s3 + $0x540] sm:$0xff]
  %v6711 = vld [vmem:[%s3 + $0x548] sm:$0xff]
  %v6712 = vld [vmem:[%s3 + $0x550] sm:$0xff]
  %v6713 = vld [vmem:[%s3 + $0x558] sm:$0xff]
  %v6714 = vld [vmem:[%s3 + $0x560] sm:$0xff]
  %v6715 = vld [vmem:[%s3 + $0x568] sm:$0xff]
  %v6716 = vld [vmem:[%s3 + $0x570] sm:$0xff]
  %v6717 = vld [vmem:[%s3 + $0x578] sm:$0xff]
  %v6718 = vld [vmem:[%s3 + $0x580] sm:$0xff]
  %v6719 = vld [vmem:[%s3 + $0x588] sm:$0xff]
  %v6720 = vld [vmem:[%s3 + $0x590] sm:$0xff]
  %v6721 = vld [vmem:[%s3 + $0x598] sm:$0xff]
  %v6722 = vld [vmem:[%s3 + $0x5a0] sm:$0xff]
  %v6723 = vld [vmem:[%s3 + $0x5a8] sm:$0xff]
  %v6724 = vld [vmem:[%s3 + $0x5b0] sm:$0xff]
  %v6725 = vld [vmem:[%s3 + $0x5b8] sm:$0xff]
  %v6726 = vld [vmem:[%s3 + $0x5c0] sm:$0xff]
  %v6727 = vld [vmem:[%s3 + $0x5c8] sm:$0xff]
  %v6728 = vld [vmem:[%s3 + $0x5d0] sm:$0xff]
  %v6729 = vld [vmem:[%s3 + $0x5d8] sm:$0xff]
  %v6730 = vld [vmem:[%s3 + $0x5e0] sm:$0xff]
  %v6731 = vld [vmem:[%s3 + $0x5e8] sm:$0xff]
  %v6732 = vld [vmem:[%s3 + $0x5f0] sm:$0xff]
  %v6733 = vld [vmem:[%s3 + $0x5f8] sm:$0xff]
  %v6734 = vld [vmem:[%s3 + $0x600] sm:$0xff]
  %v6735 = vld [vmem:[%s3 + $0x608] sm:$0xff]
  %v6736 = vld [vmem:[%s3 + $0x610] sm:$0xff]
  %v6737 = vld [vmem:[%s3 + $0x618] sm:$0xff]
  %v6738 = vld [vmem:[%s3 + $0x620] sm:$0xff]
  %v6739 = vld [vmem:[%s3 + $0x628] sm:$0xff]
  %v6740 = vld [vmem:[%s3 + $0x630] sm:$0xff]
  %v6741 = vld [vmem:[%s3 + $0x638] sm:$0xff]
  %v6742 = vld [vmem:[%s3 + $0x640] sm:$0xff]
  %v6743 = vld [vmem:[%s3 + $0x648] sm:$0xff]
  %v6744 = vld [vmem:[%s3 + $0x650] sm:$0xff]
  %v6745 = vld [vmem:[%s3 + $0x658] sm:$0xff]
  %v6746 = vld [vmem:[%s3 + $0x660] sm:$0xff]
  %v6747 = vld [vmem:[%s3 + $0x668] sm:$0xff]
  %v6748 = vld [vmem:[%s3 + $0x670] sm:$0xff]
  %v6749 = vld [vmem:[%s3 + $0x678] sm:$0xff]
  %v6750 = vld [vmem:[%s3 + $0x680] sm:$0xff]
  %v6751 = vld [vmem:[%s3 + $0x688] sm:$0xff]
  %v6752 = vld [vmem:[%s3 + $0x690] sm:$0xff]
  %v6753 = vld [vmem:[%s3 + $0x698] sm:$0xff]
  %v6754 = vld [vmem:[%s3 + $0x6a0] sm:$0xff]
  %v6755 = vld [vmem:[%s3 + $0x6a8] sm:$0xff]
  %v6756 = vld [vmem:[%s3 + $0x6b0] sm:$0xff]
  %v6757 = vld [vmem:[%s3 + $0x6b8] sm:$0xff]
  %v6758 = vld [vmem:[%s3 + $0x6c0] sm:$0xff]
  %v6759 = vld [vmem:[%s3 + $0x6c8] sm:$0xff]
  %v6760 = vld [vmem:[%s3 + $0x6d0] sm:$0xff]
  %v6761 = vld [vmem:[%s3 + $0x6d8] sm:$0xff]
  %v6762 = vld [vmem:[%s3 + $0x6e0] sm:$0xff]
  %v6763 = vld [vmem:[%s3 + $0x6e8] sm:$0xff]
  %v6764 = vld [vmem:[%s3 + $0x6f0] sm:$0xff]
  %v6765 = vld [vmem:[%s3 + $0x6f8] sm:$0xff]
  %v6766 = vld [vmem:[%s3 + $0x700] sm:$0xff]
  %v6767 = vld [vmem:[%s3 + $0x708] sm:$0xff]
  %v6768 = vld [vmem:[%s3 + $0x710] sm:$0xff]
  %v6769 = vld [vmem:[%s3 + $0x718] sm:$0xff]
  %v6770 = vld [vmem:[%s3 + $0x720] sm:$0xff]
  %v6771 = vld [vmem:[%s3 + $0x728] sm:$0xff]
  %v6772 = vld [vmem:[%s3 + $0x730] sm:$0xff]
  %v6773 = vld [vmem:[%s3 + $0x738] sm:$0xff]
  %v6774 = vld [vmem:[%s3 + $0x740] sm:$0xff]
  %v6775 = vld [vmem:[%s3 + $0x748] sm:$0xff]
  %v6776 = vld [vmem:[%s3 + $0x750] sm:$0xff]
  %v6777 = vld [vmem:[%s3 + $0x758] sm:$0xff]
  %v6778 = vld [vmem:[%s3 + $0x760] sm:$0xff]
  %v6779 = vld [vmem:[%s3 + $0x768] sm:$0xff]
  %v6780 = vld [vmem:[%s3 + $0x770] sm:$0xff]
  %v6781 = vld [vmem:[%s3 + $0x778] sm:$0xff]
  %v6782 = vld [vmem:[%s3 + $0x780] sm:$0xff]
  %v6783 = vld [vmem:[%s3 + $0x788] sm:$0xff]
  %v6784 = vld [vmem:[%s3 + $0x790] sm:$0xff]
  %v6785 = vld [vmem:[%s3 + $0x798] sm:$0xff]
  %v6786 = vld [vmem:[%s3 + $0x7a0] sm:$0xff]
  %v6787 = vld [vmem:[%s3 + $0x7a8] sm:$0xff]
  %v6788 = vld [vmem:[%s3 + $0x7b0] sm:$0xff]
  %v6789 = vld [vmem:[%s3 + $0x7b8] sm:$0xff]
  %v6790 = vld [vmem:[%s3 + $0x7c0] sm:$0xff]
  %v6791 = vld [vmem:[%s3 + $0x7c8] sm:$0xff]
  %v6792 = vld [vmem:[%s3 + $0x7d0] sm:$0xff]
  %v6793 = vld [vmem:[%s3 + $0x7d8] sm:$0xff]
  %v6794 = vld [vmem:[%s3 + $0x7e0] sm:$0xff]
  %v6795 = vld [vmem:[%s3 + $0x7e8] sm:$0xff]
  %v6796 = vld [vmem:[%s3 + $0x7f0] sm:$0xff]
  %v6797 = vld [vmem:[%s3 + $0x7f8] sm:$0xff]
  %v6798 = vld [vmem:[%s4] sm:$0xf]
  %v6800 = vlaneseq
  %v6801 = vshrl.u32 %v6800, 7
  %v6802 = vsub.s32 0, %v6801
  %v6803 = vrot.slane %v6798, %v6802
  %v6804 = vlaneseq
  %v6805 = vshrl.u32 %v6804, 7
  %v6806 = vsub.s32 1, %v6805
  %v6807 = vrot.slane %v6798, %v6806
  %v6808 = vlaneseq
  %v6809 = vshrl.u32 %v6808, 7
  %v6810 = vsub.s32 2, %v6809
  %v6811 = vrot.slane %v6798, %v6810
  %v6812 = vlaneseq
  %v6813 = vshrl.u32 %v6812, 7
  %v6814 = vsub.s32 3, %v6813
  %v6815 = vrot.slane %v6798, %v6814
  %v7076 = vunpack.c.l.b16 %v6542
  %v7077 = vunpack.c.h.b16 %v6542
  %v7078 = vunpack.c.l.b16 %v6543
  %v7079 = vunpack.c.h.b16 %v6543
  %v7080 = vunpack.c.l.b16 %v6544
  %v7081 = vunpack.c.h.b16 %v6544
  %v7082 = vunpack.c.l.b16 %v6545
  %v7083 = vunpack.c.h.b16 %v6545
  %v7084 = vunpack.c.l.b16 %v6546
  %v7085 = vunpack.c.h.b16 %v6546
  %v7086 = vunpack.c.l.b16 %v6547
  %v7087 = vunpack.c.h.b16 %v6547
  %v7088 = vunpack.c.l.b16 %v6548
  %v7089 = vunpack.c.h.b16 %v6548
  %v7090 = vunpack.c.l.b16 %v6549
  %v7091 = vunpack.c.h.b16 %v6549
  %v7092 = vunpack.c.l.b16 %v6550
  %v7093 = vunpack.c.h.b16 %v6550
  %v7094 = vunpack.c.l.b16 %v6551
  %v7095 = vunpack.c.h.b16 %v6551
  %v7096 = vunpack.c.l.b16 %v6552
  %v7097 = vunpack.c.h.b16 %v6552
  %v7098 = vunpack.c.l.b16 %v6553
  %v7099 = vunpack.c.h.b16 %v6553
  %v7100 = vunpack.c.l.b16 %v6554
  %v7101 = vunpack.c.h.b16 %v6554
  %v7102 = vunpack.c.l.b16 %v6555
  %v7103 = vunpack.c.h.b16 %v6555
  %v7104 = vunpack.c.l.b16 %v6556
  %v7105 = vunpack.c.h.b16 %v6556
  %v7106 = vunpack.c.l.b16 %v6557
  %v7107 = vunpack.c.h.b16 %v6557
  %v7108 = vunpack.c.l.b16 %v6558
  %v7109 = vunpack.c.h.b16 %v6558
  %v7110 = vunpack.c.l.b16 %v6559
  %v7111 = vunpack.c.h.b16 %v6559
  %v7112 = vunpack.c.l.b16 %v6560
  %v7113 = vunpack.c.h.b16 %v6560
  %v7114 = vunpack.c.l.b16 %v6561
  %v7115 = vunpack.c.h.b16 %v6561
  %v7116 = vunpack.c.l.b16 %v6562
  %v7117 = vunpack.c.h.b16 %v6562
  %v7118 = vunpack.c.l.b16 %v6563
  %v7119 = vunpack.c.h.b16 %v6563
  %v7120 = vunpack.c.l.b16 %v6564
  %v7121 = vunpack.c.h.b16 %v6564
  %v7122 = vunpack.c.l.b16 %v6565
  %v7123 = vunpack.c.h.b16 %v6565
  %v7124 = vunpack.c.l.b16 %v6566
  %v7125 = vunpack.c.h.b16 %v6566
  %v7126 = vunpack.c.l.b16 %v6567
  %v7127 = vunpack.c.h.b16 %v6567
  %v7128 = vunpack.c.l.b16 %v6568
  %v7129 = vunpack.c.h.b16 %v6568
  %v7130 = vunpack.c.l.b16 %v6569
  %v7131 = vunpack.c.h.b16 %v6569
  %v7132 = vunpack.c.l.b16 %v6570
  %v7133 = vunpack.c.h.b16 %v6570
  %v7134 = vunpack.c.l.b16 %v6571
  %v7135 = vunpack.c.h.b16 %v6571
  %v7136 = vunpack.c.l.b16 %v6572
  %v7137 = vunpack.c.h.b16 %v6572
  %v7138 = vunpack.c.l.b16 %v6573
  %v7139 = vunpack.c.h.b16 %v6573
  %v7140 = vunpack.c.l.b16 %v6574
  %v7141 = vunpack.c.h.b16 %v6574
  %v7142 = vunpack.c.l.b16 %v6575
  %v7143 = vunpack.c.h.b16 %v6575
  %v7144 = vunpack.c.l.b16 %v6576
  %v7145 = vunpack.c.h.b16 %v6576
  %v7146 = vunpack.c.l.b16 %v6577
  %v7147 = vunpack.c.h.b16 %v6577
  %v7148 = vunpack.c.l.b16 %v6578
  %v7149 = vunpack.c.h.b16 %v6578
  %v7150 = vunpack.c.l.b16 %v6579
  %v7151 = vunpack.c.h.b16 %v6579
  %v7152 = vunpack.c.l.b16 %v6580
  %v7153 = vunpack.c.h.b16 %v6580
  %v7154 = vunpack.c.l.b16 %v6581
  %v7155 = vunpack.c.h.b16 %v6581
  %v7156 = vunpack.c.l.b16 %v6582
  %v7157 = vunpack.c.h.b16 %v6582
  %v7158 = vunpack.c.l.b16 %v6583
  %v7159 = vunpack.c.h.b16 %v6583
  %v7160 = vunpack.c.l.b16 %v6584
  %v7161 = vunpack.c.h.b16 %v6584
  %v7162 = vunpack.c.l.b16 %v6585
  %v7163 = vunpack.c.h.b16 %v6585
  %v7164 = vunpack.c.l.b16 %v6586
  %v7165 = vunpack.c.h.b16 %v6586
  %v7166 = vunpack.c.l.b16 %v6587
  %v7167 = vunpack.c.h.b16 %v6587
  %v7168 = vunpack.c.l.b16 %v6588
  %v7169 = vunpack.c.h.b16 %v6588
  %v7170 = vunpack.c.l.b16 %v6589
  %v7171 = vunpack.c.h.b16 %v6589
  %v7172 = vunpack.c.l.b16 %v6590
  %v7173 = vunpack.c.h.b16 %v6590
  %v7174 = vunpack.c.l.b16 %v6591
  %v7175 = vunpack.c.h.b16 %v6591
  %v7176 = vunpack.c.l.b16 %v6592
  %v7177 = vunpack.c.h.b16 %v6592
  %v7178 = vunpack.c.l.b16 %v6593
  %v7179 = vunpack.c.h.b16 %v6593
  %v7180 = vunpack.c.l.b16 %v6594
  %v7181 = vunpack.c.h.b16 %v6594
  %v7182 = vunpack.c.l.b16 %v6595
  %v7183 = vunpack.c.h.b16 %v6595
  %v7184 = vunpack.c.l.b16 %v6596
  %v7185 = vunpack.c.h.b16 %v6596
  %v7186 = vunpack.c.l.b16 %v6597
  %v7187 = vunpack.c.h.b16 %v6597
  %v7188 = vunpack.c.l.b16 %v6598
  %v7189 = vunpack.c.h.b16 %v6598
  %v7190 = vunpack.c.l.b16 %v6599
  %v7191 = vunpack.c.h.b16 %v6599
  %v7192 = vunpack.c.l.b16 %v6600
  %v7193 = vunpack.c.h.b16 %v6600
  %v7194 = vunpack.c.l.b16 %v6601
  %v7195 = vunpack.c.h.b16 %v6601
  %v7196 = vunpack.c.l.b16 %v6602
  %v7197 = vunpack.c.h.b16 %v6602
  %v7198 = vunpack.c.l.b16 %v6603
  %v7199 = vunpack.c.h.b16 %v6603
  %v7200 = vunpack.c.l.b16 %v6604
  %v7201 = vunpack.c.h.b16 %v6604
  %v7202 = vunpack.c.l.b16 %v6605
  %v7203 = vunpack.c.h.b16 %v6605
  %v7204 = vunpack.c.l.b16 %v6606
  %v7205 = vunpack.c.h.b16 %v6606
  %v7206 = vunpack.c.l.b16 %v6607
  %v7207 = vunpack.c.h.b16 %v6607
  %v7208 = vunpack.c.l.b16 %v6608
  %v7209 = vunpack.c.h.b16 %v6608
  %v7210 = vunpack.c.l.b16 %v6609
  %v7211 = vunpack.c.h.b16 %v6609
  %v7212 = vunpack.c.l.b16 %v6610
  %v7213 = vunpack.c.h.b16 %v6610
  %v7214 = vunpack.c.l.b16 %v6611
  %v7215 = vunpack.c.h.b16 %v6611
  %v7216 = vunpack.c.l.b16 %v6612
  %v7217 = vunpack.c.h.b16 %v6612
  %v7218 = vunpack.c.l.b16 %v6613
  %v7219 = vunpack.c.h.b16 %v6613
  %v7220 = vunpack.c.l.b16 %v6614
  %v7221 = vunpack.c.h.b16 %v6614
  %v7222 = vunpack.c.l.b16 %v6615
  %v7223 = vunpack.c.h.b16 %v6615
  %v7224 = vunpack.c.l.b16 %v6616
  %v7225 = vunpack.c.h.b16 %v6616
  %v7226 = vunpack.c.l.b16 %v6617
  %v7227 = vunpack.c.h.b16 %v6617
  %v7228 = vunpack.c.l.b16 %v6618
  %v7229 = vunpack.c.h.b16 %v6618
  %v7230 = vunpack.c.l.b16 %v6619
  %v7231 = vunpack.c.h.b16 %v6619
  %v7232 = vunpack.c.l.b16 %v6620
  %v7233 = vunpack.c.h.b16 %v6620
  %v7234 = vunpack.c.l.b16 %v6621
  %v7235 = vunpack.c.h.b16 %v6621
  %v7236 = vunpack.c.l.b16 %v6622
  %v7237 = vunpack.c.h.b16 %v6622
  %v7238 = vunpack.c.l.b16 %v6623
  %v7239 = vunpack.c.h.b16 %v6623
  %v7240 = vunpack.c.l.b16 %v6624
  %v7241 = vunpack.c.h.b16 %v6624
  %v7242 = vunpack.c.l.b16 %v6625
  %v7243 = vunpack.c.h.b16 %v6625
  %v7244 = vunpack.c.l.b16 %v6626
  %v7245 = vunpack.c.h.b16 %v6626
  %v7246 = vunpack.c.l.b16 %v6627
  %v7247 = vunpack.c.h.b16 %v6627
  %v7248 = vunpack.c.l.b16 %v6628
  %v7249 = vunpack.c.h.b16 %v6628
  %v7250 = vunpack.c.l.b16 %v6629
  %v7251 = vunpack.c.h.b16 %v6629
  %v7252 = vunpack.c.l.b16 %v6630
  %v7253 = vunpack.c.h.b16 %v6630
  %v7254 = vunpack.c.l.b16 %v6631
  %v7255 = vunpack.c.h.b16 %v6631
  %v7256 = vunpack.c.l.b16 %v6632
  %v7257 = vunpack.c.h.b16 %v6632
  %v7258 = vunpack.c.l.b16 %v6633
  %v7259 = vunpack.c.h.b16 %v6633
  %v7260 = vunpack.c.l.b16 %v6634
  %v7261 = vunpack.c.h.b16 %v6634
  %v7262 = vunpack.c.l.b16 %v6635
  %v7263 = vunpack.c.h.b16 %v6635
  %v7264 = vunpack.c.l.b16 %v6636
  %v7265 = vunpack.c.h.b16 %v6636
  %v7266 = vunpack.c.l.b16 %v6637
  %v7267 = vunpack.c.h.b16 %v6637
  %v7268 = vunpack.c.l.b16 %v6638
  %v7269 = vunpack.c.h.b16 %v6638
  %v7270 = vunpack.c.l.b16 %v6639
  %v7271 = vunpack.c.h.b16 %v6639
  %v7272 = vunpack.c.l.b16 %v6640
  %v7273 = vunpack.c.h.b16 %v6640
  %v7274 = vunpack.c.l.b16 %v6641
  %v7275 = vunpack.c.h.b16 %v6641
  %v7276 = vunpack.c.l.b16 %v6642
  %v7277 = vunpack.c.h.b16 %v6642
  %v7278 = vunpack.c.l.b16 %v6643
  %v7279 = vunpack.c.h.b16 %v6643
  %v7280 = vunpack.c.l.b16 %v6644
  %v7281 = vunpack.c.h.b16 %v6644
  %v7282 = vunpack.c.l.b16 %v6645
  %v7283 = vunpack.c.h.b16 %v6645
  %v7284 = vunpack.c.l.b16 %v6646
  %v7285 = vunpack.c.h.b16 %v6646
  %v7286 = vunpack.c.l.b16 %v6647
  %v7287 = vunpack.c.h.b16 %v6647
  %v7288 = vunpack.c.l.b16 %v6648
  %v7289 = vunpack.c.h.b16 %v6648
  %v7290 = vunpack.c.l.b16 %v6649
  %v7291 = vunpack.c.h.b16 %v6649
  %v7292 = vunpack.c.l.b16 %v6650
  %v7293 = vunpack.c.h.b16 %v6650
  %v7294 = vunpack.c.l.b16 %v6651
  %v7295 = vunpack.c.h.b16 %v6651
  %v7296 = vunpack.c.l.b16 %v6652
  %v7297 = vunpack.c.h.b16 %v6652
  %v7298 = vunpack.c.l.b16 %v6653
  %v7299 = vunpack.c.h.b16 %v6653
  %v7300 = vunpack.c.l.b16 %v6654
  %v7301 = vunpack.c.h.b16 %v6654
  %v7302 = vunpack.c.l.b16 %v6655
  %v7303 = vunpack.c.h.b16 %v6655
  %v7304 = vunpack.c.l.b16 %v6656
  %v7305 = vunpack.c.h.b16 %v6656
  %v7306 = vunpack.c.l.b16 %v6657
  %v7307 = vunpack.c.h.b16 %v6657
  %v7308 = vunpack.c.l.b16 %v6658
  %v7309 = vunpack.c.h.b16 %v6658
  %v7310 = vunpack.c.l.b16 %v6659
  %v7311 = vunpack.c.h.b16 %v6659
  %v7312 = vunpack.c.l.b16 %v6660
  %v7313 = vunpack.c.h.b16 %v6660
  %v7314 = vunpack.c.l.b16 %v6661
  %v7315 = vunpack.c.h.b16 %v6661
  %v7316 = vunpack.c.l.b16 %v6662
  %v7317 = vunpack.c.h.b16 %v6662
  %v7318 = vunpack.c.l.b16 %v6663
  %v7319 = vunpack.c.h.b16 %v6663
  %v7320 = vunpack.c.l.b16 %v6664
  %v7321 = vunpack.c.h.b16 %v6664
  %v7322 = vunpack.c.l.b16 %v6665
  %v7323 = vunpack.c.h.b16 %v6665
  %v7324 = vunpack.c.l.b16 %v6666
  %v7325 = vunpack.c.h.b16 %v6666
  %v7326 = vunpack.c.l.b16 %v6667
  %v7327 = vunpack.c.h.b16 %v6667
  %v7328 = vunpack.c.l.b16 %v6668
  %v7329 = vunpack.c.h.b16 %v6668
  %v7330 = vunpack.c.l.b16 %v6669
  %v7331 = vunpack.c.h.b16 %v6669
  %v7332 = vunpack.c.l.b16 %v6670
  %v7333 = vunpack.c.h.b16 %v6670
  %v7334 = vunpack.c.l.b16 %v6671
  %v7335 = vunpack.c.h.b16 %v6671
  %v7336 = vunpack.c.l.b16 %v6672
  %v7337 = vunpack.c.h.b16 %v6672
  %v7338 = vunpack.c.l.b16 %v6673
  %v7339 = vunpack.c.h.b16 %v6673
  %v7340 = vunpack.c.l.b16 %v6674
  %v7341 = vunpack.c.h.b16 %v6674
  %v7342 = vunpack.c.l.b16 %v6675
  %v7343 = vunpack.c.h.b16 %v6675
  %v7344 = vunpack.c.l.b16 %v6676
  %v7345 = vunpack.c.h.b16 %v6676
  %v7346 = vunpack.c.l.b16 %v6677
  %v7347 = vunpack.c.h.b16 %v6677
  %v7348 = vunpack.c.l.b16 %v6678
  %v7349 = vunpack.c.h.b16 %v6678
  %v7350 = vunpack.c.l.b16 %v6679
  %v7351 = vunpack.c.h.b16 %v6679
  %v7352 = vunpack.c.l.b16 %v6680
  %v7353 = vunpack.c.h.b16 %v6680
  %v7354 = vunpack.c.l.b16 %v6681
  %v7355 = vunpack.c.h.b16 %v6681
  %v7356 = vunpack.c.l.b16 %v6682
  %v7357 = vunpack.c.h.b16 %v6682
  %v7358 = vunpack.c.l.b16 %v6683
  %v7359 = vunpack.c.h.b16 %v6683
  %v7360 = vunpack.c.l.b16 %v6684
  %v7361 = vunpack.c.h.b16 %v6684
  %v7362 = vunpack.c.l.b16 %v6685
  %v7363 = vunpack.c.h.b16 %v6685
  %v7364 = vunpack.c.l.b16 %v6686
  %v7365 = vunpack.c.h.b16 %v6686
  %v7366 = vunpack.c.l.b16 %v6687
  %v7367 = vunpack.c.h.b16 %v6687
  %v7368 = vunpack.c.l.b16 %v6688
  %v7369 = vunpack.c.h.b16 %v6688
  %v7370 = vunpack.c.l.b16 %v6689
  %v7371 = vunpack.c.h.b16 %v6689
  %v7372 = vunpack.c.l.b16 %v6690
  %v7373 = vunpack.c.h.b16 %v6690
  %v7374 = vunpack.c.l.b16 %v6691
  %v7375 = vunpack.c.h.b16 %v6691
  %v7376 = vunpack.c.l.b16 %v6692
  %v7377 = vunpack.c.h.b16 %v6692
  %v7378 = vunpack.c.l.b16 %v6693
  %v7379 = vunpack.c.h.b16 %v6693
  %v7380 = vunpack.c.l.b16 %v6694
  %v7381 = vunpack.c.h.b16 %v6694
  %v7382 = vunpack.c.l.b16 %v6695
  %v7383 = vunpack.c.h.b16 %v6695
  %v7384 = vunpack.c.l.b16 %v6696
  %v7385 = vunpack.c.h.b16 %v6696
  %v7386 = vunpack.c.l.b16 %v6697
  %v7387 = vunpack.c.h.b16 %v6697
  %v7388 = vunpack.c.l.b16 %v6698
  %v7389 = vunpack.c.h.b16 %v6698
  %v7390 = vunpack.c.l.b16 %v6699
  %v7391 = vunpack.c.h.b16 %v6699
  %v7392 = vunpack.c.l.b16 %v6700
  %v7393 = vunpack.c.h.b16 %v6700
  %v7394 = vunpack.c.l.b16 %v6701
  %v7395 = vunpack.c.h.b16 %v6701
  %v7396 = vunpack.c.l.b16 %v6702
  %v7397 = vunpack.c.h.b16 %v6702
  %v7398 = vunpack.c.l.b16 %v6703
  %v7399 = vunpack.c.h.b16 %v6703
  %v7400 = vunpack.c.l.b16 %v6704
  %v7401 = vunpack.c.h.b16 %v6704
  %v7402 = vunpack.c.l.b16 %v6705
  %v7403 = vunpack.c.h.b16 %v6705
  %v7404 = vunpack.c.l.b16 %v6706
  %v7405 = vunpack.c.h.b16 %v6706
  %v7406 = vunpack.c.l.b16 %v6707
  %v7407 = vunpack.c.h.b16 %v6707
  %v7408 = vunpack.c.l.b16 %v6708
  %v7409 = vunpack.c.h.b16 %v6708
  %v7410 = vunpack.c.l.b16 %v6709
  %v7411 = vunpack.c.h.b16 %v6709
  %v7412 = vunpack.c.l.b16 %v6710
  %v7413 = vunpack.c.h.b16 %v6710
  %v7414 = vunpack.c.l.b16 %v6711
  %v7415 = vunpack.c.h.b16 %v6711
  %v7416 = vunpack.c.l.b16 %v6712
  %v7417 = vunpack.c.h.b16 %v6712
  %v7418 = vunpack.c.l.b16 %v6713
  %v7419 = vunpack.c.h.b16 %v6713
  %v7420 = vunpack.c.l.b16 %v6714
  %v7421 = vunpack.c.h.b16 %v6714
  %v7422 = vunpack.c.l.b16 %v6715
  %v7423 = vunpack.c.h.b16 %v6715
  %v7424 = vunpack.c.l.b16 %v6716
  %v7425 = vunpack.c.h.b16 %v6716
  %v7426 = vunpack.c.l.b16 %v6717
  %v7427 = vunpack.c.h.b16 %v6717
  %v7428 = vunpack.c.l.b16 %v6718
  %v7429 = vunpack.c.h.b16 %v6718
  %v7430 = vunpack.c.l.b16 %v6719
  %v7431 = vunpack.c.h.b16 %v6719
  %v7432 = vunpack.c.l.b16 %v6720
  %v7433 = vunpack.c.h.b16 %v6720
  %v7434 = vunpack.c.l.b16 %v6721
  %v7435 = vunpack.c.h.b16 %v6721
  %v7436 = vunpack.c.l.b16 %v6722
  %v7437 = vunpack.c.h.b16 %v6722
  %v7438 = vunpack.c.l.b16 %v6723
  %v7439 = vunpack.c.h.b16 %v6723
  %v7440 = vunpack.c.l.b16 %v6724
  %v7441 = vunpack.c.h.b16 %v6724
  %v7442 = vunpack.c.l.b16 %v6725
  %v7443 = vunpack.c.h.b16 %v6725
  %v7444 = vunpack.c.l.b16 %v6726
  %v7445 = vunpack.c.h.b16 %v6726
  %v7446 = vunpack.c.l.b16 %v6727
  %v7447 = vunpack.c.h.b16 %v6727
  %v7448 = vunpack.c.l.b16 %v6728
  %v7449 = vunpack.c.h.b16 %v6728
  %v7450 = vunpack.c.l.b16 %v6729
  %v7451 = vunpack.c.h.b16 %v6729
  %v7452 = vunpack.c.l.b16 %v6730
  %v7453 = vunpack.c.h.b16 %v6730
  %v7454 = vunpack.c.l.b16 %v6731
  %v7455 = vunpack.c.h.b16 %v6731
  %v7456 = vunpack.c.l.b16 %v6732
  %v7457 = vunpack.c.h.b16 %v6732
  %v7458 = vunpack.c.l.b16 %v6733
  %v7459 = vunpack.c.h.b16 %v6733
  %v7460 = vunpack.c.l.b16 %v6734
  %v7461 = vunpack.c.h.b16 %v6734
  %v7462 = vunpack.c.l.b16 %v6735
  %v7463 = vunpack.c.h.b16 %v6735
  %v7464 = vunpack.c.l.b16 %v6736
  %v7465 = vunpack.c.h.b16 %v6736
  %v7466 = vunpack.c.l.b16 %v6737
  %v7467 = vunpack.c.h.b16 %v6737
  %v7468 = vunpack.c.l.b16 %v6738
  %v7469 = vunpack.c.h.b16 %v6738
  %v7470 = vunpack.c.l.b16 %v6739
  %v7471 = vunpack.c.h.b16 %v6739
  %v7472 = vunpack.c.l.b16 %v6740
  %v7473 = vunpack.c.h.b16 %v6740
  %v7474 = vunpack.c.l.b16 %v6741
  %v7475 = vunpack.c.h.b16 %v6741
  %v7476 = vunpack.c.l.b16 %v6742
  %v7477 = vunpack.c.h.b16 %v6742
  %v7478 = vunpack.c.l.b16 %v6743
  %v7479 = vunpack.c.h.b16 %v6743
  %v7480 = vunpack.c.l.b16 %v6744
  %v7481 = vunpack.c.h.b16 %v6744
  %v7482 = vunpack.c.l.b16 %v6745
  %v7483 = vunpack.c.h.b16 %v6745
  %v7484 = vunpack.c.l.b16 %v6746
  %v7485 = vunpack.c.h.b16 %v6746
  %v7486 = vunpack.c.l.b16 %v6747
  %v7487 = vunpack.c.h.b16 %v6747
  %v7488 = vunpack.c.l.b16 %v6748
  %v7489 = vunpack.c.h.b16 %v6748
  %v7490 = vunpack.c.l.b16 %v6749
  %v7491 = vunpack.c.h.b16 %v6749
  %v7492 = vunpack.c.l.b16 %v6750
  %v7493 = vunpack.c.h.b16 %v6750
  %v7494 = vunpack.c.l.b16 %v6751
  %v7495 = vunpack.c.h.b16 %v6751
  %v7496 = vunpack.c.l.b16 %v6752
  %v7497 = vunpack.c.h.b16 %v6752
  %v7498 = vunpack.c.l.b16 %v6753
  %v7499 = vunpack.c.h.b16 %v6753
  %v7500 = vunpack.c.l.b16 %v6754
  %v7501 = vunpack.c.h.b16 %v6754
  %v7502 = vunpack.c.l.b16 %v6755
  %v7503 = vunpack.c.h.b16 %v6755
  %v7504 = vunpack.c.l.b16 %v6756
  %v7505 = vunpack.c.h.b16 %v6756
  %v7506 = vunpack.c.l.b16 %v6757
  %v7507 = vunpack.c.h.b16 %v6757
  %v7508 = vunpack.c.l.b16 %v6758
  %v7509 = vunpack.c.h.b16 %v6758
  %v7510 = vunpack.c.l.b16 %v6759
  %v7511 = vunpack.c.h.b16 %v6759
  %v7512 = vunpack.c.l.b16 %v6760
  %v7513 = vunpack.c.h.b16 %v6760
  %v7514 = vunpack.c.l.b16 %v6761
  %v7515 = vunpack.c.h.b16 %v6761
  %v7516 = vunpack.c.l.b16 %v6762
  %v7517 = vunpack.c.h.b16 %v6762
  %v7518 = vunpack.c.l.b16 %v6763
  %v7519 = vunpack.c.h.b16 %v6763
  %v7520 = vunpack.c.l.b16 %v6764
  %v7521 = vunpack.c.h.b16 %v6764
  %v7522 = vunpack.c.l.b16 %v6765
  %v7523 = vunpack.c.h.b16 %v6765
  %v7524 = vunpack.c.l.b16 %v6766
  %v7525 = vunpack.c.h.b16 %v6766
  %v7526 = vunpack.c.l.b16 %v6767
  %v7527 = vunpack.c.h.b16 %v6767
  %v7528 = vunpack.c.l.b16 %v6768
  %v7529 = vunpack.c.h.b16 %v6768
  %v7530 = vunpack.c.l.b16 %v6769
  %v7531 = vunpack.c.h.b16 %v6769
  %v7532 = vunpack.c.l.b16 %v6770
  %v7533 = vunpack.c.h.b16 %v6770
  %v7534 = vunpack.c.l.b16 %v6771
  %v7535 = vunpack.c.h.b16 %v6771
  %v7536 = vunpack.c.l.b16 %v6772
  %v7537 = vunpack.c.h.b16 %v6772
  %v7538 = vunpack.c.l.b16 %v6773
  %v7539 = vunpack.c.h.b16 %v6773
  %v7540 = vunpack.c.l.b16 %v6774
  %v7541 = vunpack.c.h.b16 %v6774
  %v7542 = vunpack.c.l.b16 %v6775
  %v7543 = vunpack.c.h.b16 %v6775
  %v7544 = vunpack.c.l.b16 %v6776
  %v7545 = vunpack.c.h.b16 %v6776
  %v7546 = vunpack.c.l.b16 %v6777
  %v7547 = vunpack.c.h.b16 %v6777
  %v7548 = vunpack.c.l.b16 %v6778
  %v7549 = vunpack.c.h.b16 %v6778
  %v7550 = vunpack.c.l.b16 %v6779
  %v7551 = vunpack.c.h.b16 %v6779
  %v7552 = vunpack.c.l.b16 %v6780
  %v7553 = vunpack.c.h.b16 %v6780
  %v7554 = vunpack.c.l.b16 %v6781
  %v7555 = vunpack.c.h.b16 %v6781
  %v7556 = vunpack.c.l.b16 %v6782
  %v7557 = vunpack.c.h.b16 %v6782
  %v7558 = vunpack.c.l.b16 %v6783
  %v7559 = vunpack.c.h.b16 %v6783
  %v7560 = vunpack.c.l.b16 %v6784
  %v7561 = vunpack.c.h.b16 %v6784
  %v7562 = vunpack.c.l.b16 %v6785
  %v7563 = vunpack.c.h.b16 %v6785
  %v7564 = vunpack.c.l.b16 %v6786
  %v7565 = vunpack.c.h.b16 %v6786
  %v7566 = vunpack.c.l.b16 %v6787
  %v7567 = vunpack.c.h.b16 %v6787
  %v7568 = vunpack.c.l.b16 %v6788
  %v7569 = vunpack.c.h.b16 %v6788
  %v7570 = vunpack.c.l.b16 %v6789
  %v7571 = vunpack.c.h.b16 %v6789
  %v7572 = vunpack.c.l.b16 %v6790
  %v7573 = vunpack.c.h.b16 %v6790
  %v7574 = vunpack.c.l.b16 %v6791
  %v7575 = vunpack.c.h.b16 %v6791
  %v7576 = vunpack.c.l.b16 %v6792
  %v7577 = vunpack.c.h.b16 %v6792
  %v7578 = vunpack.c.l.b16 %v6793
  %v7579 = vunpack.c.h.b16 %v6793
  %v7580 = vunpack.c.l.b16 %v6794
  %v7581 = vunpack.c.h.b16 %v6794
  %v7582 = vunpack.c.l.b16 %v6795
  %v7583 = vunpack.c.h.b16 %v6795
  %v7584 = vunpack.c.l.b16 %v6796
  %v7585 = vunpack.c.h.b16 %v6796
  %v7586 = vunpack.c.l.b16 %v6797
  %v7587 = vunpack.c.h.b16 %v6797
  %v7588 = vpack.c.b16 %v7080, %v7076
  %v7589 = vpack.c.b16 %v7081, %v7077
  %v7590 = vpack.c.b16 %v7082, %v7078
  %v7591 = vpack.c.b16 %v7083, %v7079
  %v7592 = vpack.c.b16 %v7088, %v7084
  %v7593 = vpack.c.b16 %v7089, %v7085
  %v7594 = vpack.c.b16 %v7090, %v7086
  %v7595 = vpack.c.b16 %v7091, %v7087
  %v7596 = vpack.c.b16 %v7096, %v7092
  %v7597 = vpack.c.b16 %v7097, %v7093
  %v7598 = vpack.c.b16 %v7098, %v7094
  %v7599 = vpack.c.b16 %v7099, %v7095
  %v7600 = vpack.c.b16 %v7104, %v7100
  %v7601 = vpack.c.b16 %v7105, %v7101
  %v7602 = vpack.c.b16 %v7106, %v7102
  %v7603 = vpack.c.b16 %v7107, %v7103
  %v7604 = vpack.c.b16 %v7112, %v7108
  %v7605 = vpack.c.b16 %v7113, %v7109
  %v7606 = vpack.c.b16 %v7114, %v7110
  %v7607 = vpack.c.b16 %v7115, %v7111
  %v7608 = vpack.c.b16 %v7120, %v7116
  %v7609 = vpack.c.b16 %v7121, %v7117
  %v7610 = vpack.c.b16 %v7122, %v7118
  %v7611 = vpack.c.b16 %v7123, %v7119
  %v7612 = vpack.c.b16 %v7128, %v7124
  %v7613 = vpack.c.b16 %v7129, %v7125
  %v7614 = vpack.c.b16 %v7130, %v7126
  %v7615 = vpack.c.b16 %v7131, %v7127
  %v7616 = vpack.c.b16 %v7136, %v7132
  %v7617 = vpack.c.b16 %v7137, %v7133
  %v7618 = vpack.c.b16 %v7138, %v7134
  %v7619 = vpack.c.b16 %v7139, %v7135
  %v7620 = vpack.c.b16 %v7144, %v7140
  %v7621 = vpack.c.b16 %v7145, %v7141
  %v7622 = vpack.c.b16 %v7146, %v7142
  %v7623 = vpack.c.b16 %v7147, %v7143
  %v7624 = vpack.c.b16 %v7152, %v7148
  %v7625 = vpack.c.b16 %v7153, %v7149
  %v7626 = vpack.c.b16 %v7154, %v7150
  %v7627 = vpack.c.b16 %v7155, %v7151
  %v7628 = vpack.c.b16 %v7160, %v7156
  %v7629 = vpack.c.b16 %v7161, %v7157
  %v7630 = vpack.c.b16 %v7162, %v7158
  %v7631 = vpack.c.b16 %v7163, %v7159
  %v7632 = vpack.c.b16 %v7168, %v7164
  %v7633 = vpack.c.b16 %v7169, %v7165
  %v7634 = vpack.c.b16 %v7170, %v7166
  %v7635 = vpack.c.b16 %v7171, %v7167
  %v7636 = vpack.c.b16 %v7176, %v7172
  %v7637 = vpack.c.b16 %v7177, %v7173
  %v7638 = vpack.c.b16 %v7178, %v7174
  %v7639 = vpack.c.b16 %v7179, %v7175
  %v7640 = vpack.c.b16 %v7184, %v7180
  %v7641 = vpack.c.b16 %v7185, %v7181
  %v7642 = vpack.c.b16 %v7186, %v7182
  %v7643 = vpack.c.b16 %v7187, %v7183
  %v7644 = vpack.c.b16 %v7192, %v7188
  %v7645 = vpack.c.b16 %v7193, %v7189
  %v7646 = vpack.c.b16 %v7194, %v7190
  %v7647 = vpack.c.b16 %v7195, %v7191
  %v7648 = vpack.c.b16 %v7200, %v7196
  %v7649 = vpack.c.b16 %v7201, %v7197
  %v7650 = vpack.c.b16 %v7202, %v7198
  %v7651 = vpack.c.b16 %v7203, %v7199
  %v7652 = vpack.c.b16 %v7208, %v7204
  %v7653 = vpack.c.b16 %v7209, %v7205
  %v7654 = vpack.c.b16 %v7210, %v7206
  %v7655 = vpack.c.b16 %v7211, %v7207
  %v7656 = vpack.c.b16 %v7216, %v7212
  %v7657 = vpack.c.b16 %v7217, %v7213
  %v7658 = vpack.c.b16 %v7218, %v7214
  %v7659 = vpack.c.b16 %v7219, %v7215
  %v7660 = vpack.c.b16 %v7224, %v7220
  %v7661 = vpack.c.b16 %v7225, %v7221
  %v7662 = vpack.c.b16 %v7226, %v7222
  %v7663 = vpack.c.b16 %v7227, %v7223
  %v7664 = vpack.c.b16 %v7232, %v7228
  %v7665 = vpack.c.b16 %v7233, %v7229
  %v7666 = vpack.c.b16 %v7234, %v7230
  %v7667 = vpack.c.b16 %v7235, %v7231
  %v7668 = vpack.c.b16 %v7240, %v7236
  %v7669 = vpack.c.b16 %v7241, %v7237
  %v7670 = vpack.c.b16 %v7242, %v7238
  %v7671 = vpack.c.b16 %v7243, %v7239
  %v7672 = vpack.c.b16 %v7248, %v7244
  %v7673 = vpack.c.b16 %v7249, %v7245
  %v7674 = vpack.c.b16 %v7250, %v7246
  %v7675 = vpack.c.b16 %v7251, %v7247
  %v7676 = vpack.c.b16 %v7256, %v7252
  %v7677 = vpack.c.b16 %v7257, %v7253
  %v7678 = vpack.c.b16 %v7258, %v7254
  %v7679 = vpack.c.b16 %v7259, %v7255
  %v7680 = vpack.c.b16 %v7264, %v7260
  %v7681 = vpack.c.b16 %v7265, %v7261
  %v7682 = vpack.c.b16 %v7266, %v7262
  %v7683 = vpack.c.b16 %v7267, %v7263
  %v7684 = vpack.c.b16 %v7272, %v7268
  %v7685 = vpack.c.b16 %v7273, %v7269
  %v7686 = vpack.c.b16 %v7274, %v7270
  %v7687 = vpack.c.b16 %v7275, %v7271
  %v7688 = vpack.c.b16 %v7280, %v7276
  %v7689 = vpack.c.b16 %v7281, %v7277
  %v7690 = vpack.c.b16 %v7282, %v7278
  %v7691 = vpack.c.b16 %v7283, %v7279
  %v7692 = vpack.c.b16 %v7288, %v7284
  %v7693 = vpack.c.b16 %v7289, %v7285
  %v7694 = vpack.c.b16 %v7290, %v7286
  %v7695 = vpack.c.b16 %v7291, %v7287
  %v7696 = vpack.c.b16 %v7296, %v7292
  %v7697 = vpack.c.b16 %v7297, %v7293
  %v7698 = vpack.c.b16 %v7298, %v7294
  %v7699 = vpack.c.b16 %v7299, %v7295
  %v7700 = vpack.c.b16 %v7304, %v7300
  %v7701 = vpack.c.b16 %v7305, %v7301
  %v7702 = vpack.c.b16 %v7306, %v7302
  %v7703 = vpack.c.b16 %v7307, %v7303
  %v7704 = vpack.c.b16 %v7312, %v7308
  %v7705 = vpack.c.b16 %v7313, %v7309
  %v7706 = vpack.c.b16 %v7314, %v7310
  %v7707 = vpack.c.b16 %v7315, %v7311
  %v7708 = vpack.c.b16 %v7320, %v7316
  %v7709 = vpack.c.b16 %v7321, %v7317
  %v7710 = vpack.c.b16 %v7322, %v7318
  %v7711 = vpack.c.b16 %v7323, %v7319
  %v7712 = vpack.c.b16 %v7328, %v7324
  %v7713 = vpack.c.b16 %v7329, %v7325
  %v7714 = vpack.c.b16 %v7330, %v7326
  %v7715 = vpack.c.b16 %v7331, %v7327
  %v7716 = vpack.c.b16 %v7336, %v7332
  %v7717 = vpack.c.b16 %v7337, %v7333
  %v7718 = vpack.c.b16 %v7338, %v7334
  %v7719 = vpack.c.b16 %v7339, %v7335
  %v7720 = vpack.c.b16 %v7344, %v7340
  %v7721 = vpack.c.b16 %v7345, %v7341
  %v7722 = vpack.c.b16 %v7346, %v7342
  %v7723 = vpack.c.b16 %v7347, %v7343
  %v7724 = vpack.c.b16 %v7352, %v7348
  %v7725 = vpack.c.b16 %v7353, %v7349
  %v7726 = vpack.c.b16 %v7354, %v7350
  %v7727 = vpack.c.b16 %v7355, %v7351
  %v7728 = vpack.c.b16 %v7360, %v7356
  %v7729 = vpack.c.b16 %v7361, %v7357
  %v7730 = vpack.c.b16 %v7362, %v7358
  %v7731 = vpack.c.b16 %v7363, %v7359
  %v7732 = vpack.c.b16 %v7368, %v7364
  %v7733 = vpack.c.b16 %v7369, %v7365
  %v7734 = vpack.c.b16 %v7370, %v7366
  %v7735 = vpack.c.b16 %v7371, %v7367
  %v7736 = vpack.c.b16 %v7376, %v7372
  %v7737 = vpack.c.b16 %v7377, %v7373
  %v7738 = vpack.c.b16 %v7378, %v7374
  %v7739 = vpack.c.b16 %v7379, %v7375
  %v7740 = vpack.c.b16 %v7384, %v7380
  %v7741 = vpack.c.b16 %v7385, %v7381
  %v7742 = vpack.c.b16 %v7386, %v7382
  %v7743 = vpack.c.b16 %v7387, %v7383
  %v7744 = vpack.c.b16 %v7392, %v7388
  %v7745 = vpack.c.b16 %v7393, %v7389
  %v7746 = vpack.c.b16 %v7394, %v7390
  %v7747 = vpack.c.b16 %v7395, %v7391
  %v7748 = vpack.c.b16 %v7400, %v7396
  %v7749 = vpack.c.b16 %v7401, %v7397
  %v7750 = vpack.c.b16 %v7402, %v7398
  %v7751 = vpack.c.b16 %v7403, %v7399
  %v7752 = vpack.c.b16 %v7408, %v7404
  %v7753 = vpack.c.b16 %v7409, %v7405
  %v7754 = vpack.c.b16 %v7410, %v7406
  %v7755 = vpack.c.b16 %v7411, %v7407
  %v7756 = vpack.c.b16 %v7416, %v7412
  %v7757 = vpack.c.b16 %v7417, %v7413
  %v7758 = vpack.c.b16 %v7418, %v7414
  %v7759 = vpack.c.b16 %v7419, %v7415
  %v7760 = vpack.c.b16 %v7424, %v7420
  %v7761 = vpack.c.b16 %v7425, %v7421
  %v7762 = vpack.c.b16 %v7426, %v7422
  %v7763 = vpack.c.b16 %v7427, %v7423
  %v7764 = vpack.c.b16 %v7432, %v7428
  %v7765 = vpack.c.b16 %v7433, %v7429
  %v7766 = vpack.c.b16 %v7434, %v7430
  %v7767 = vpack.c.b16 %v7435, %v7431
  %v7768 = vpack.c.b16 %v7440, %v7436
  %v7769 = vpack.c.b16 %v7441, %v7437
  %v7770 = vpack.c.b16 %v7442, %v7438
  %v7771 = vpack.c.b16 %v7443, %v7439
  %v7772 = vpack.c.b16 %v7448, %v7444
  %v7773 = vpack.c.b16 %v7449, %v7445
  %v7774 = vpack.c.b16 %v7450, %v7446
  %v7775 = vpack.c.b16 %v7451, %v7447
  %v7776 = vpack.c.b16 %v7456, %v7452
  %v7777 = vpack.c.b16 %v7457, %v7453
  %v7778 = vpack.c.b16 %v7458, %v7454
  %v7779 = vpack.c.b16 %v7459, %v7455
  %v7780 = vpack.c.b16 %v7464, %v7460
  %v7781 = vpack.c.b16 %v7465, %v7461
  %v7782 = vpack.c.b16 %v7466, %v7462
  %v7783 = vpack.c.b16 %v7467, %v7463
  %v7784 = vpack.c.b16 %v7472, %v7468
  %v7785 = vpack.c.b16 %v7473, %v7469
  %v7786 = vpack.c.b16 %v7474, %v7470
  %v7787 = vpack.c.b16 %v7475, %v7471
  %v7788 = vpack.c.b16 %v7480, %v7476
  %v7789 = vpack.c.b16 %v7481, %v7477
  %v7790 = vpack.c.b16 %v7482, %v7478
  %v7791 = vpack.c.b16 %v7483, %v7479
  %v7792 = vpack.c.b16 %v7488, %v7484
  %v7793 = vpack.c.b16 %v7489, %v7485
  %v7794 = vpack.c.b16 %v7490, %v7486
  %v7795 = vpack.c.b16 %v7491, %v7487
  %v7796 = vpack.c.b16 %v7496, %v7492
  %v7797 = vpack.c.b16 %v7497, %v7493
  %v7798 = vpack.c.b16 %v7498, %v7494
  %v7799 = vpack.c.b16 %v7499, %v7495
  %v7800 = vpack.c.b16 %v7504, %v7500
  %v7801 = vpack.c.b16 %v7505, %v7501
  %v7802 = vpack.c.b16 %v7506, %v7502
  %v7803 = vpack.c.b16 %v7507, %v7503
  %v7804 = vpack.c.b16 %v7512, %v7508
  %v7805 = vpack.c.b16 %v7513, %v7509
  %v7806 = vpack.c.b16 %v7514, %v7510
  %v7807 = vpack.c.b16 %v7515, %v7511
  %v7808 = vpack.c.b16 %v7520, %v7516
  %v7809 = vpack.c.b16 %v7521, %v7517
  %v7810 = vpack.c.b16 %v7522, %v7518
  %v7811 = vpack.c.b16 %v7523, %v7519
  %v7812 = vpack.c.b16 %v7528, %v7524
  %v7813 = vpack.c.b16 %v7529, %v7525
  %v7814 = vpack.c.b16 %v7530, %v7526
  %v7815 = vpack.c.b16 %v7531, %v7527
  %v7816 = vpack.c.b16 %v7536, %v7532
  %v7817 = vpack.c.b16 %v7537, %v7533
  %v7818 = vpack.c.b16 %v7538, %v7534
  %v7819 = vpack.c.b16 %v7539, %v7535
  %v7820 = vpack.c.b16 %v7544, %v7540
  %v7821 = vpack.c.b16 %v7545, %v7541
  %v7822 = vpack.c.b16 %v7546, %v7542
  %v7823 = vpack.c.b16 %v7547, %v7543
  %v7824 = vpack.c.b16 %v7552, %v7548
  %v7825 = vpack.c.b16 %v7553, %v7549
  %v7826 = vpack.c.b16 %v7554, %v7550
  %v7827 = vpack.c.b16 %v7555, %v7551
  %v7828 = vpack.c.b16 %v7560, %v7556
  %v7829 = vpack.c.b16 %v7561, %v7557
  %v7830 = vpack.c.b16 %v7562, %v7558
  %v7831 = vpack.c.b16 %v7563, %v7559
  %v7832 = vpack.c.b16 %v7568, %v7564
  %v7833 = vpack.c.b16 %v7569, %v7565
  %v7834 = vpack.c.b16 %v7570, %v7566
  %v7835 = vpack.c.b16 %v7571, %v7567
  %v7836 = vpack.c.b16 %v7576, %v7572
  %v7837 = vpack.c.b16 %v7577, %v7573
  %v7838 = vpack.c.b16 %v7578, %v7574
  %v7839 = vpack.c.b16 %v7579, %v7575
  %v7840 = vpack.c.b16 %v7584, %v7580
  %v7841 = vpack.c.b16 %v7585, %v7581
  %v7842 = vpack.c.b16 %v7586, %v7582
  %v7843 = vpack.c.b16 %v7587, %v7583
  %8100 = vmatprep.subr.bf16.mxu0 %v7589
  %8101 = vmatpush1.bf16.msra.mxu0 %v7588
  %8102 = vmatprep.subr.bf16.mxu0 %v7593
  %8103 = vmatpush1.bf16.msra.mxu0 %v7592
  %8104 = vmatprep.subr.bf16.mxu0 %v7597
  %8105 = vmatpush1.bf16.msra.mxu0 %v7596
  %8106 = vmatprep.subr.bf16.mxu0 %v7601
  %8107 = vmatpush1.bf16.msra.mxu0 %v7600
  %8108 = vmatprep.subr.bf16.mxu0 %v7605
  %8109 = vmatpush1.bf16.msra.mxu0 %v7604
  %8110 = vmatprep.subr.bf16.mxu0 %v7609
  %8111 = vmatpush1.bf16.msra.mxu0 %v7608
  %8112 = vmatprep.subr.bf16.mxu0 %v7613
  %8113 = vmatpush1.bf16.msra.mxu0 %v7612
  %8114 = vmatprep.subr.bf16.mxu0 %v7617
  %8115 = vmatpush1.bf16.msra.mxu0 %v7616
  %8116 = vmatprep.subr.bf16.mxu0 %v7621
  %8117 = vmatpush1.bf16.msra.mxu0 %v7620
  %8118 = vmatprep.subr.bf16.mxu0 %v7625
  %8119 = vmatpush1.bf16.msra.mxu0 %v7624
  %8120 = vmatprep.subr.bf16.mxu0 %v7629
  %8121 = vmatpush1.bf16.msra.mxu0 %v7628
  %8122 = vmatprep.subr.bf16.mxu0 %v7633
  %8123 = vmatpush1.bf16.msra.mxu0 %v7632
  %8124 = vmatprep.subr.bf16.mxu0 %v7637
  %8125 = vmatpush1.bf16.msra.mxu0 %v7636
  %8126 = vmatprep.subr.bf16.mxu0 %v7641
  %8127 = vmatpush1.bf16.msra.mxu0 %v7640
  %8128 = vmatprep.subr.bf16.mxu0 %v7645
  %8129 = vmatpush1.bf16.msra.mxu0 %v7644
  %8130 = vmatprep.subr.bf16.mxu0 %v7649
  %8131 = vmatpush1.bf16.msra.mxu0 %v7648
  %8132 = vmatprep.mubr.bf16.mxu0 %v6415
  %8133 = vmatmul.mubr.bf16.gmra.mrb[0].mxu0 %v6414
  %v8134 = vpop.f32.mrb[0].mxu0
  %v8135 = vadd.f32 %v6803, %v8134
  %v8136 = vpop.f32.mrb[0].mxu0
  %v8137 = vadd.f32 %v6807, %v8136
  %v8138 = vpop.f32.mrb[0].mxu0
  %v8139 = vadd.f32 %v6803, %v8138
  %v8140 = vpop.f32.mrb[0].mxu0
  %v8141 = vadd.f32 %v6807, %v8140
  %8142 = vmatprep.mubr.bf16.mxu0 %v6423
  %8143 = vmatmul.mubr.bf16.gmra.mrb[0].mxu0 %v6422
  %v8144 = vpop.f32.mrb[0].mxu0
  %v8145 = vadd.f32 %v6803, %v8144
  %v8146 = vpop.f32.mrb[0].mxu0
  %v8147 = vadd.f32 %v6807, %v8146
  %v8148 = vpop.f32.mrb[0].mxu0
  %v8149 = vadd.f32 %v6803, %v8148
  %v8150 = vpop.f32.mrb[0].mxu0
  %v8151 = vadd.f32 %v6807, %v8150
  %8152 = vmatprep.mubr.bf16.mxu0 %v6431
  %8153 = vmatmul.mubr.bf16.gmra.mrb[0].mxu0 %v6430
  %v8154 = vpop.f32.mrb[0].mxu0
  %v8155 = vadd.f32 %v6803, %v8154
  %v8156 = vpop.f32.mrb[0].mxu0
  %v8157 = vadd.f32 %v6807, %v8156
  %v8158 = vpop.f32.mrb[0].mxu0
  %v8159 = vadd.f32 %v6803, %v8158
  %v8160 = vpop.f32.mrb[0].mxu0
  %v8161 = vadd.f32 %v6807, %v8160
  %8162 = vmatprep.mubr.bf16.mxu0 %v6439
  %8163 = vmatmul.mubr.bf16.gmra.mrb[0].mxu0 %v6438
  %v8164 = vpop.f32.mrb[0].mxu0
  %v8165 = vadd.f32 %v6803, %v8164
  %v8166 = vpop.f32.mrb[0].mxu0
  %v8167 = vadd.f32 %v6807, %v8166
  %v8168 = vpop.f32.mrb[0].mxu0
  %v8169 = vadd.f32 %v6803, %v8168
  %v8170 = vpop.f32.mrb[0].mxu0
  %v8171 = vadd.f32 %v6807, %v8170
  %8172 = vmatprep.mubr.bf16.mxu0 %v6447
  %8173 = vmatmul.mubr.bf16.gmra.mrb[0].mxu0 %v6446
  %v8174 = vpop.f32.mrb[0].mxu0
  %v8175 = vadd.f32 %v6803, %v8174
  %v8176 = vpop.f32.mrb[0].mxu0
  %v8177 = vadd.f32 %v6807, %v8176
  %v8178 = vpop.f32.mrb[0].mxu0
  %v8179 = vadd.f32 %v6803, %v8178
  %v8180 = vpop.f32.mrb[0].mxu0
  %v8181 = vadd.f32 %v6807, %v8180
  %8182 = vmatprep.mubr.bf16.mxu0 %v6455
  %8183 = vmatmul.mubr.bf16.gmra.mrb[0].mxu0 %v6454
  %v8184 = vpop.f32.mrb[0].mxu0
  %v8185 = vadd.f32 %v6803, %v8184
  %v8186 = vpop.f32.mrb[0].mxu0
  %v8187 = vadd.f32 %v6807, %v8186
  %v8188 = vpop.f32.mrb[0].mxu0
  %v8189 = vadd.f32 %v6803, %v8188
  %v8190 = vpop.f32.mrb[0].mxu0
  %v8191 = vadd.f32 %v6807, %v8190
  %8192 = vmatprep.mubr.bf16.mxu0 %v6463
  %8193 = vmatmul.mubr.bf16.gmra.mrb[0].mxu0 %v6462
  %v8194 = vpop.f32.mrb[0].mxu0
  %v8195 = vadd.f32 %v6803, %v8194
  %v8196 = vpop.f32.mrb[0].mxu0
  %v8197 = vadd.f32 %v6807, %v8196
  %v8198 = vpop.f32.mrb[0].mxu0
  %v8199 = vadd.f32 %v6803, %v8198
  %v8200 = vpop.f32.mrb[0].mxu0
  %v8201 = vadd.f32 %v6807, %v8200
  %8202 = vmatprep.mubr.bf16.mxu0 %v6471
  %8203 = vmatmul.mubr.bf16.gmra.mrb[0].mxu0 %v6470
  %v8204 = vpop.f32.mrb[0].mxu0
  %v8205 = vadd.f32 %v6803, %v8204
  %v8206 = vpop.f32.mrb[0].mxu0
  %v8207 = vadd.f32 %v6807, %v8206
  %v8208 = vpop.f32.mrb[0].mxu0
  %v8209 = vadd.f32 %v6803, %v8208
  %v8210 = vpop.f32.mrb[0].mxu0
  %v8211 = vadd.f32 %v6807, %v8210
  %8212 = vmatprep.mubr.bf16.mxu0 %v6479
  %8213 = vmatmul.mubr.bf16.gmra.mrb[0].mxu0 %v6478
  %v8214 = vpop.f32.mrb[0].mxu0
  %v8215 = vadd.f32 %v6803, %v8214
  %v8216 = vpop.f32.mrb[0].mxu0
  %v8217 = vadd.f32 %v6807, %v8216
  %v8218 = vpop.f32.mrb[0].mxu0
  %v8219 = vadd.f32 %v6803, %v8218
  %v8220 = vpop.f32.mrb[0].mxu0
  %v8221 = vadd.f32 %v6807, %v8220
  %8222 = vmatprep.mubr.bf16.mxu0 %v6487
  %8223 = vmatmul.mubr.bf16.gmra.mrb[0].mxu0 %v6486
  %v8224 = vpop.f32.mrb[0].mxu0
  %v8225 = vadd.f32 %v6803, %v8224
  %v8226 = vpop.f32.mrb[0].mxu0
  %v8227 = vadd.f32 %v6807, %v8226
  %v8228 = vpop.f32.mrb[0].mxu0
  %v8229 = vadd.f32 %v6803, %v8228
  %v8230 = vpop.f32.mrb[0].mxu0
  %v8231 = vadd.f32 %v6807, %v8230
  %8232 = vmatprep.mubr.bf16.mxu0 %v6495
  %8233 = vmatmul.mubr.bf16.gmra.mrb[0].mxu0 %v6494
  %v8234 = vpop.f32.mrb[0].mxu0
  %v8235 = vadd.f32 %v6803, %v8234
  %v8236 = vpop.f32.mrb[0].mxu0
  %v8237 = vadd.f32 %v6807, %v8236
  %v8238 = vpop.f32.mrb[0].mxu0
  %v8239 = vadd.f32 %v6803, %v8238
  %v8240 = vpop.f32.mrb[0].mxu0
  %v8241 = vadd.f32 %v6807, %v8240
  %8242 = vmatprep.mubr.bf16.mxu0 %v6503
  %8243 = vmatmul.mubr.bf16.gmra.mrb[0].mxu0 %v6502
  %v8244 = vpop.f32.mrb[0].mxu0
  %v8245 = vadd.f32 %v6803, %v8244
  %v8246 = vpop.f32.mrb[0].mxu0
  %v8247 = vadd.f32 %v6807, %v8246
  %v8248 = vpop.f32.mrb[0].mxu0
  %v8249 = vadd.f32 %v6803, %v8248
  %v8250 = vpop.f32.mrb[0].mxu0
  %v8251 = vadd.f32 %v6807, %v8250
  %8252 = vmatprep.mubr.bf16.mxu0 %v6511
  %8253 = vmatmul.mubr.bf16.gmra.mrb[0].mxu0 %v6510
  %v8254 = vpop.f32.mrb[0].mxu0
  %v8255 = vadd.f32 %v6803, %v8254
  %v8256 = vpop.f32.mrb[0].mxu0
  %v8257 = vadd.f32 %v6807, %v8256
  %v8258 = vpop.f32.mrb[0].mxu0
  %v8259 = vadd.f32 %v6803, %v8258
  %v8260 = vpop.f32.mrb[0].mxu0
  %v8261 = vadd.f32 %v6807, %v8260
  %8262 = vmatprep.mubr.bf16.mxu0 %v6519
  %8263 = vmatmul.mubr.bf16.gmra.mrb[0].mxu0 %v6518
  %v8264 = vpop.f32.mrb[0].mxu0
  %v8265 = vadd.f32 %v6803, %v8264
  %v8266 = vpop.f32.mrb[0].mxu0
  %v8267 = vadd.f32 %v6807, %v8266
  %v8268 = vpop.f32.mrb[0].mxu0
  %v8269 = vadd.f32 %v6803, %v8268
  %v8270 = vpop.f32.mrb[0].mxu0
  %v8271 = vadd.f32 %v6807, %v8270
  %8272 = vmatprep.mubr.bf16.mxu0 %v6527
  %8273 = vmatmul.mubr.bf16.gmra.mrb[0].mxu0 %v6526
  %v8274 = vpop.f32.mrb[0].mxu0
  %v8275 = vadd.f32 %v6803, %v8274
  %v8276 = vpop.f32.mrb[0].mxu0
  %v8277 = vadd.f32 %v6807, %v8276
  %v8278 = vpop.f32.mrb[0].mxu0
  %v8279 = vadd.f32 %v6803, %v8278
  %v8280 = vpop.f32.mrb[0].mxu0
  %v8281 = vadd.f32 %v6807, %v8280
  %8282 = vmatprep.mubr.bf16.mxu0 %v6535
  %8283 = vmatmul.mubr.bf16.gmra.mrb[0].mxu0 %v6534
  %v8284 = vpop.f32.mrb[0].mxu0
  %v8285 = vadd.f32 %v6803, %v8284
  %v8286 = vpop.f32.mrb[0].mxu0
  %v8287 = vadd.f32 %v6807, %v8286
  %v8288 = vpop.f32.mrb[0].mxu0
  %v8289 = vadd.f32 %v6803, %v8288
  %v8290 = vpop.f32.mrb[0].mxu0
  %v8291 = vadd.f32 %v6807, %v8290
  %8292 = vdwg.mxu0
  %8293 = vmatprep.subr.bf16.mxu0 %v7653
  %8294 = vmatpush1.bf16.msra.mxu0 %v7652
  %8295 = vmatprep.subr.bf16.mxu0 %v7657
  %8296 = vmatpush1.bf16.msra.mxu0 %v7656
  %8297 = vmatprep.subr.bf16.mxu0 %v7661
  %8298 = vmatpush1.bf16.msra.mxu0 %v7660
  %8299 = vmatprep.subr.bf16.mxu0 %v7665
  %8300 = vmatpush1.bf16.msra.mxu0 %v7664
  %8301 = vmatprep.subr.bf16.mxu0 %v7669
  %8302 = vmatpush1.bf16.msra.mxu0 %v7668
  %8303 = vmatprep.subr.bf16.mxu0 %v7673
  %8304 = vmatpush1.bf16.msra.mxu0 %v7672
  %8305 = vmatprep.subr.bf16.mxu0 %v7677
  %8306 = vmatpush1.bf16.msra.mxu0 %v7676
  %8307 = vmatprep.subr.bf16.mxu0 %v7681
  %8308 = vmatpush1.bf16.msra.mxu0 %v7680
  %8309 = vmatprep.subr.bf16.mxu0 %v7685
  %8310 = vmatpush1.bf16.msra.mxu0 %v7684
  %8311 = vmatprep.subr.bf16.mxu0 %v7689
  %8312 = vmatpush1.bf16.msra.mxu0 %v7688
  %8313 = vmatprep.subr.bf16.mxu0 %v7693
  %8314 = vmatpush1.bf16.msra.mxu0 %v7692
  %8315 = vmatprep.subr.bf16.mxu0 %v7697
  %8316 = vmatpush1.bf16.msra.mxu0 %v7696
  %8317 = vmatprep.subr.bf16.mxu0 %v7701
  %8318 = vmatpush1.bf16.msra.mxu0 %v7700
  %8319 = vmatprep.subr.bf16.mxu0 %v7705
  %8320 = vmatpush1.bf16.msra.mxu0 %v7704
  %8321 = vmatprep.subr.bf16.mxu0 %v7709
  %8322 = vmatpush1.bf16.msra.mxu0 %v7708
  %8323 = vmatprep.subr.bf16.mxu0 %v7713
  %8324 = vmatpush1.bf16.msra.mxu0 %v7712
  %8325 = vmatprep.mubr.bf16.mxu0 %v6417
  %8326 = vmatmul.mubr.bf16.gmra.mrb[0].mxu0 %v6416
  %v8327 = vpop.f32.mrb[0].mxu0
  %v8328 = vadd.f32 %v8135, %v8327
  %v8329 = vpop.f32.mrb[0].mxu0
  %v8330 = vadd.f32 %v8137, %v8329
  %v8331 = vpop.f32.mrb[0].mxu0
  %v8332 = vadd.f32 %v8139, %v8331
  %v8333 = vpop.f32.mrb[0].mxu0
  %v8334 = vadd.f32 %v8141, %v8333
  %8335 = vmatprep.mubr.bf16.mxu0 %v6425
  %8336 = vmatmul.mubr.bf16.gmra.mrb[0].mxu0 %v6424
  %v8337 = vpop.f32.mrb[0].mxu0
  %v8338 = vadd.f32 %v8145, %v8337
  %v8339 = vpop.f32.mrb[0].mxu0
  %v8340 = vadd.f32 %v8147, %v8339
  %v8341 = vpop.f32.mrb[0].mxu0
  %v8342 = vadd.f32 %v8149, %v8341
  %v8343 = vpop.f32.mrb[0].mxu0
  %v8344 = vadd.f32 %v8151, %v8343
  %8345 = vmatprep.mubr.bf16.mxu0 %v6433
  %8346 = vmatmul.mubr.bf16.gmra.mrb[0].mxu0 %v6432
  %v8347 = vpop.f32.mrb[0].mxu0
  %v8348 = vadd.f32 %v8155, %v8347
  %v8349 = vpop.f32.mrb[0].mxu0
  %v8350 = vadd.f32 %v8157, %v8349
  %v8351 = vpop.f32.mrb[0].mxu0
  %v8352 = vadd.f32 %v8159, %v8351
  %v8353 = vpop.f32.mrb[0].mxu0
  %v8354 = vadd.f32 %v8161, %v8353
  %8355 = vmatprep.mubr.bf16.mxu0 %v6441
  %8356 = vmatmul.mubr.bf16.gmra.mrb[0].mxu0 %v6440
  %v8357 = vpop.f32.mrb[0].mxu0
  %v8358 = vadd.f32 %v8165, %v8357
  %v8359 = vpop.f32.mrb[0].mxu0
  %v8360 = vadd.f32 %v8167, %v8359
  %v8361 = vpop.f32.mrb[0].mxu0
  %v8362 = vadd.f32 %v8169, %v8361
  %v8363 = vpop.f32.mrb[0].mxu0
  %v8364 = vadd.f32 %v8171, %v8363
  %8365 = vmatprep.mubr.bf16.mxu0 %v6449
  %8366 = vmatmul.mubr.bf16.gmra.mrb[0].mxu0 %v6448
  %v8367 = vpop.f32.mrb[0].mxu0
  %v8368 = vadd.f32 %v8175, %v8367
  %v8369 = vpop.f32.mrb[0].mxu0
  %v8370 = vadd.f32 %v8177, %v8369
  %v8371 = vpop.f32.mrb[0].mxu0
  %v8372 = vadd.f32 %v8179, %v8371
  %v8373 = vpop.f32.mrb[0].mxu0
  %v8374 = vadd.f32 %v8181, %v8373
  %8375 = vmatprep.mubr.bf16.mxu0 %v6457
  %8376 = vmatmul.mubr.bf16.gmra.mrb[0].mxu0 %v6456
  %v8377 = vpop.f32.mrb[0].mxu0
  %v8378 = vadd.f32 %v8185, %v8377
  %v8379 = vpop.f32.mrb[0].mxu0
  %v8380 = vadd.f32 %v8187, %v8379
  %v8381 = vpop.f32.mrb[0].mxu0
  %v8382 = vadd.f32 %v8189, %v8381
  %v8383 = vpop.f32.mrb[0].mxu0
  %v8384 = vadd.f32 %v8191, %v8383
  %8385 = vmatprep.mubr.bf16.mxu0 %v6465
  %8386 = vmatmul.mubr.bf16.gmra.mrb[0].mxu0 %v6464
  %v8387 = vpop.f32.mrb[0].mxu0
  %v8388 = vadd.f32 %v8195, %v8387
  %v8389 = vpop.f32.mrb[0].mxu0
  %v8390 = vadd.f32 %v8197, %v8389
  %v8391 = vpop.f32.mrb[0].mxu0
  %v8392 = vadd.f32 %v8199, %v8391
  %v8393 = vpop.f32.mrb[0].mxu0
  %v8394 = vadd.f32 %v8201, %v8393
  %8395 = vmatprep.mubr.bf16.mxu0 %v6473
  %8396 = vmatmul.mubr.bf16.gmra.mrb[0].mxu0 %v6472
  %v8397 = vpop.f32.mrb[0].mxu0
  %v8398 = vadd.f32 %v8205, %v8397
  %v8399 = vpop.f32.mrb[0].mxu0
  %v8400 = vadd.f32 %v8207, %v8399
  %v8401 = vpop.f32.mrb[0].mxu0
  %v8402 = vadd.f32 %v8209, %v8401
  %v8403 = vpop.f32.mrb[0].mxu0
  %v8404 = vadd.f32 %v8211, %v8403
  %8405 = vmatprep.mubr.bf16.mxu0 %v6481
  %8406 = vmatmul.mubr.bf16.gmra.mrb[0].mxu0 %v6480
  %v8407 = vpop.f32.mrb[0].mxu0
  %v8408 = vadd.f32 %v8215, %v8407
  %v8409 = vpop.f32.mrb[0].mxu0
  %v8410 = vadd.f32 %v8217, %v8409
  %v8411 = vpop.f32.mrb[0].mxu0
  %v8412 = vadd.f32 %v8219, %v8411
  %v8413 = vpop.f32.mrb[0].mxu0
  %v8414 = vadd.f32 %v8221, %v8413
  %8415 = vmatprep.mubr.bf16.mxu0 %v6489
  %8416 = vmatmul.mubr.bf16.gmra.mrb[0].mxu0 %v6488
  %v8417 = vpop.f32.mrb[0].mxu0
  %v8418 = vadd.f32 %v8225, %v8417
  %v8419 = vpop.f32.mrb[0].mxu0
  %v8420 = vadd.f32 %v8227, %v8419
  %v8421 = vpop.f32.mrb[0].mxu0
  %v8422 = vadd.f32 %v8229, %v8421
  %v8423 = vpop.f32.mrb[0].mxu0
  %v8424 = vadd.f32 %v8231, %v8423
  %8425 = vmatprep.mubr.bf16.mxu0 %v6497
  %8426 = vmatmul.mubr.bf16.gmra.mrb[0].mxu0 %v6496
  %v8427 = vpop.f32.mrb[0].mxu0
  %v8428 = vadd.f32 %v8235, %v8427
  %v8429 = vpop.f32.mrb[0].mxu0
  %v8430 = vadd.f32 %v8237, %v8429
  %v8431 = vpop.f32.mrb[0].mxu0
  %v8432 = vadd.f32 %v8239, %v8431
  %v8433 = vpop.f32.mrb[0].mxu0
  %v8434 = vadd.f32 %v8241, %v8433
  %8435 = vmatprep.mubr.bf16.mxu0 %v6505
  %8436 = vmatmul.mubr.bf16.gmra.mrb[0].mxu0 %v6504
  %v8437 = vpop.f32.mrb[0].mxu0
  %v8438 = vadd.f32 %v8245, %v8437
  %v8439 = vpop.f32.mrb[0].mxu0
  %v8440 = vadd.f32 %v8247, %v8439
  %v8441 = vpop.f32.mrb[0].mxu0
  %v8442 = vadd.f32 %v8249, %v8441
  %v8443 = vpop.f32.mrb[0].mxu0
  %v8444 = vadd.f32 %v8251, %v8443
  %8445 = vmatprep.mubr.bf16.mxu0 %v6513
  %8446 = vmatmul.mubr.bf16.gmra.mrb[0].mxu0 %v6512
  %v8447 = vpop.f32.mrb[0].mxu0
  %v8448 = vadd.f32 %v8255, %v8447
  %v8449 = vpop.f32.mrb[0].mxu0
  %v8450 = vadd.f32 %v8257, %v8449
  %v8451 = vpop.f32.mrb[0].mxu0
  %v8452 = vadd.f32 %v8259, %v8451
  %v8453 = vpop.f32.mrb[0].mxu0
  %v8454 = vadd.f32 %v8261, %v8453
  %8455 = vmatprep.mubr.bf16.mxu0 %v6521
  %8456 = vmatmul.mubr.bf16.gmra.mrb[0].mxu0 %v6520
  %v8457 = vpop.f32.mrb[0].mxu0
  %v8458 = vadd.f32 %v8265, %v8457
  %v8459 = vpop.f32.mrb[0].mxu0
  %v8460 = vadd.f32 %v8267, %v8459
  %v8461 = vpop.f32.mrb[0].mxu0
  %v8462 = vadd.f32 %v8269, %v8461
  %v8463 = vpop.f32.mrb[0].mxu0
  %v8464 = vadd.f32 %v8271, %v8463
  %8465 = vmatprep.mubr.bf16.mxu0 %v6529
  %8466 = vmatmul.mubr.bf16.gmra.mrb[0].mxu0 %v6528
  %v8467 = vpop.f32.mrb[0].mxu0
  %v8468 = vadd.f32 %v8275, %v8467
  %v8469 = vpop.f32.mrb[0].mxu0
  %v8470 = vadd.f32 %v8277, %v8469
  %v8471 = vpop.f32.mrb[0].mxu0
  %v8472 = vadd.f32 %v8279, %v8471
  %v8473 = vpop.f32.mrb[0].mxu0
  %v8474 = vadd.f32 %v8281, %v8473
  %8475 = vmatprep.mubr.bf16.mxu0 %v6537
  %8476 = vmatmul.mubr.bf16.gmra.mrb[0].mxu0 %v6536
  %v8477 = vpop.f32.mrb[0].mxu0
  %v8478 = vadd.f32 %v8285, %v8477
  %v8479 = vpop.f32.mrb[0].mxu0
  %v8480 = vadd.f32 %v8287, %v8479
  %v8481 = vpop.f32.mrb[0].mxu0
  %v8482 = vadd.f32 %v8289, %v8481
  %v8483 = vpop.f32.mrb[0].mxu0
  %v8484 = vadd.f32 %v8291, %v8483
  %8485 = vdwg.mxu0
  %8486 = vmatprep.subr.bf16.mxu0 %v7717
  %8487 = vmatpush1.bf16.msra.mxu0 %v7716
  %8488 = vmatprep.subr.bf16.mxu0 %v7721
  %8489 = vmatpush1.bf16.msra.mxu0 %v7720
  %8490 = vmatprep.subr.bf16.mxu0 %v7725
  %8491 = vmatpush1.bf16.msra.mxu0 %v7724
  %8492 = vmatprep.subr.bf16.mxu0 %v7729
  %8493 = vmatpush1.bf16.msra.mxu0 %v7728
  %8494 = vmatprep.subr.bf16.mxu0 %v7733
  %8495 = vmatpush1.bf16.msra.mxu0 %v7732
  %8496 = vmatprep.subr.bf16.mxu0 %v7737
  %8497 = vmatpush1.bf16.msra.mxu0 %v7736
  %8498 = vmatprep.subr.bf16.mxu0 %v7741
  %8499 = vmatpush1.bf16.msra.mxu0 %v7740
  %8500 = vmatprep.subr.bf16.mxu0 %v7745
  %8501 = vmatpush1.bf16.msra.mxu0 %v7744
  %8502 = vmatprep.subr.bf16.mxu0 %v7749
  %8503 = vmatpush1.bf16.msra.mxu0 %v7748
  %8504 = vmatprep.subr.bf16.mxu0 %v7753
  %8505 = vmatpush1.bf16.msra.mxu0 %v7752
  %8506 = vmatprep.subr.bf16.mxu0 %v7757
  %8507 = vmatpush1.bf16.msra.mxu0 %v7756
  %8508 = vmatprep.subr.bf16.mxu0 %v7761
  %8509 = vmatpush1.bf16.msra.mxu0 %v7760
  %8510 = vmatprep.subr.bf16.mxu0 %v7765
  %8511 = vmatpush1.bf16.msra.mxu0 %v7764
  %8512 = vmatprep.subr.bf16.mxu0 %v7769
  %8513 = vmatpush1.bf16.msra.mxu0 %v7768
  %8514 = vmatprep.subr.bf16.mxu0 %v7773
  %8515 = vmatpush1.bf16.msra.mxu0 %v7772
  %8516 = vmatprep.subr.bf16.mxu0 %v7777
  %8517 = vmatpush1.bf16.msra.mxu0 %v7776
  %8518 = vmatprep.mubr.bf16.mxu0 %v6419
  %8519 = vmatmul.mubr.bf16.gmra.mrb[0].mxu0 %v6418
  %v8520 = vpop.f32.mrb[0].mxu0
  %v8521 = vadd.f32 %v8328, %v8520
  %v8522 = vpop.f32.mrb[0].mxu0
  %v8523 = vadd.f32 %v8330, %v8522
  %v8524 = vpop.f32.mrb[0].mxu0
  %v8525 = vadd.f32 %v8332, %v8524
  %v8526 = vpop.f32.mrb[0].mxu0
  %v8527 = vadd.f32 %v8334, %v8526
  %8528 = vmatprep.mubr.bf16.mxu0 %v6427
  %8529 = vmatmul.mubr.bf16.gmra.mrb[0].mxu0 %v6426
  %v8530 = vpop.f32.mrb[0].mxu0
  %v8531 = vadd.f32 %v8338, %v8530
  %v8532 = vpop.f32.mrb[0].mxu0
  %v8533 = vadd.f32 %v8340, %v8532
  %v8534 = vpop.f32.mrb[0].mxu0
  %v8535 = vadd.f32 %v8342, %v8534
  %v8536 = vpop.f32.mrb[0].mxu0
  %v8537 = vadd.f32 %v8344, %v8536
  %8538 = vmatprep.mubr.bf16.mxu0 %v6435
  %8539 = vmatmul.mubr.bf16.gmra.mrb[0].mxu0 %v6434
  %v8540 = vpop.f32.mrb[0].mxu0
  %v8541 = vadd.f32 %v8348, %v8540
  %v8542 = vpop.f32.mrb[0].mxu0
  %v8543 = vadd.f32 %v8350, %v8542
  %v8544 = vpop.f32.mrb[0].mxu0
  %v8545 = vadd.f32 %v8352, %v8544
  %v8546 = vpop.f32.mrb[0].mxu0
  %v8547 = vadd.f32 %v8354, %v8546
  %8548 = vmatprep.mubr.bf16.mxu0 %v6443
  %8549 = vmatmul.mubr.bf16.gmra.mrb[0].mxu0 %v6442
  %v8550 = vpop.f32.mrb[0].mxu0
  %v8551 = vadd.f32 %v8358, %v8550
  %v8552 = vpop.f32.mrb[0].mxu0
  %v8553 = vadd.f32 %v8360, %v8552
  %v8554 = vpop.f32.mrb[0].mxu0
  %v8555 = vadd.f32 %v8362, %v8554
  %v8556 = vpop.f32.mrb[0].mxu0
  %v8557 = vadd.f32 %v8364, %v8556
  %8558 = vmatprep.mubr.bf16.mxu0 %v6451
  %8559 = vmatmul.mubr.bf16.gmra.mrb[0].mxu0 %v6450
  %v8560 = vpop.f32.mrb[0].mxu0
  %v8561 = vadd.f32 %v8368, %v8560
  %v8562 = vpop.f32.mrb[0].mxu0
  %v8563 = vadd.f32 %v8370, %v8562
  %v8564 = vpop.f32.mrb[0].mxu0
  %v8565 = vadd.f32 %v8372, %v8564
  %v8566 = vpop.f32.mrb[0].mxu0
  %v8567 = vadd.f32 %v8374, %v8566
  %8568 = vmatprep.mubr.bf16.mxu0 %v6459
  %8569 = vmatmul.mubr.bf16.gmra.mrb[0].mxu0 %v6458
  %v8570 = vpop.f32.mrb[0].mxu0
  %v8571 = vadd.f32 %v8378, %v8570
  %v8572 = vpop.f32.mrb[0].mxu0
  %v8573 = vadd.f32 %v8380, %v8572
  %v8574 = vpop.f32.mrb[0].mxu0
  %v8575 = vadd.f32 %v8382, %v8574
  %v8576 = vpop.f32.mrb[0].mxu0
  %v8577 = vadd.f32 %v8384, %v8576
  %8578 = vmatprep.mubr.bf16.mxu0 %v6467
  %8579 = vmatmul.mubr.bf16.gmra.mrb[0].mxu0 %v6466
  %v8580 = vpop.f32.mrb[0].mxu0
  %v8581 = vadd.f32 %v8388, %v8580
  %v8582 = vpop.f32.mrb[0].mxu0
  %v8583 = vadd.f32 %v8390, %v8582
  %v8584 = vpop.f32.mrb[0].mxu0
  %v8585 = vadd.f32 %v8392, %v8584
  %v8586 = vpop.f32.mrb[0].mxu0
  %v8587 = vadd.f32 %v8394, %v8586
  %8588 = vmatprep.mubr.bf16.mxu0 %v6475
  %8589 = vmatmul.mubr.bf16.gmra.mrb[0].mxu0 %v6474
  %v8590 = vpop.f32.mrb[0].mxu0
  %v8591 = vadd.f32 %v8398, %v8590
  %v8592 = vpop.f32.mrb[0].mxu0
  %v8593 = vadd.f32 %v8400, %v8592
  %v8594 = vpop.f32.mrb[0].mxu0
  %v8595 = vadd.f32 %v8402, %v8594
  %v8596 = vpop.f32.mrb[0].mxu0
  %v8597 = vadd.f32 %v8404, %v8596
  %8598 = vmatprep.mubr.bf16.mxu0 %v6483
  %8599 = vmatmul.mubr.bf16.gmra.mrb[0].mxu0 %v6482
  %v8600 = vpop.f32.mrb[0].mxu0
  %v8601 = vadd.f32 %v8408, %v8600
  %v8602 = vpop.f32.mrb[0].mxu0
  %v8603 = vadd.f32 %v8410, %v8602
  %v8604 = vpop.f32.mrb[0].mxu0
  %v8605 = vadd.f32 %v8412, %v8604
  %v8606 = vpop.f32.mrb[0].mxu0
  %v8607 = vadd.f32 %v8414, %v8606
  %8608 = vmatprep.mubr.bf16.mxu0 %v6491
  %8609 = vmatmul.mubr.bf16.gmra.mrb[0].mxu0 %v6490
  %v8610 = vpop.f32.mrb[0].mxu0
  %v8611 = vadd.f32 %v8418, %v8610
  %v8612 = vpop.f32.mrb[0].mxu0
  %v8613 = vadd.f32 %v8420, %v8612
  %v8614 = vpop.f32.mrb[0].mxu0
  %v8615 = vadd.f32 %v8422, %v8614
  %v8616 = vpop.f32.mrb[0].mxu0
  %v8617 = vadd.f32 %v8424, %v8616
  %8618 = vmatprep.mubr.bf16.mxu0 %v6499
  %8619 = vmatmul.mubr.bf16.gmra.mrb[0].mxu0 %v6498
  %v8620 = vpop.f32.mrb[0].mxu0
  %v8621 = vadd.f32 %v8428, %v8620
  %v8622 = vpop.f32.mrb[0].mxu0
  %v8623 = vadd.f32 %v8430, %v8622
  %v8624 = vpop.f32.mrb[0].mxu0
  %v8625 = vadd.f32 %v8432, %v8624
  %v8626 = vpop.f32.mrb[0].mxu0
  %v8627 = vadd.f32 %v8434, %v8626
  %8628 = vmatprep.mubr.bf16.mxu0 %v6507
  %8629 = vmatmul.mubr.bf16.gmra.mrb[0].mxu0 %v6506
  %v8630 = vpop.f32.mrb[0].mxu0
  %v8631 = vadd.f32 %v8438, %v8630
  %v8632 = vpop.f32.mrb[0].mxu0
  %v8633 = vadd.f32 %v8440, %v8632
  %v8634 = vpop.f32.mrb[0].mxu0
  %v8635 = vadd.f32 %v8442, %v8634
  %v8636 = vpop.f32.mrb[0].mxu0
  %v8637 = vadd.f32 %v8444, %v8636
  %8638 = vmatprep.mubr.bf16.mxu0 %v6515
  %8639 = vmatmul.mubr.bf16.gmra.mrb[0].mxu0 %v6514
  %v8640 = vpop.f32.mrb[0].mxu0
  %v8641 = vadd.f32 %v8448, %v8640
  %v8642 = vpop.f32.mrb[0].mxu0
  %v8643 = vadd.f32 %v8450, %v8642
  %v8644 = vpop.f32.mrb[0].mxu0
  %v8645 = vadd.f32 %v8452, %v8644
  %v8646 = vpop.f32.mrb[0].mxu0
  %v8647 = vadd.f32 %v8454, %v8646
  %8648 = vmatprep.mubr.bf16.mxu0 %v6523
  %8649 = vmatmul.mubr.bf16.gmra.mrb[0].mxu0 %v6522
  %v8650 = vpop.f32.mrb[0].mxu0
  %v8651 = vadd.f32 %v8458, %v8650
  %v8652 = vpop.f32.mrb[0].mxu0
  %v8653 = vadd.f32 %v8460, %v8652
  %v8654 = vpop.f32.mrb[0].mxu0
  %v8655 = vadd.f32 %v8462, %v8654
  %v8656 = vpop.f32.mrb[0].mxu0
  %v8657 = vadd.f32 %v8464, %v8656
  %8658 = vmatprep.mubr.bf16.mxu0 %v6531
  %8659 = vmatmul.mubr.bf16.gmra.mrb[0].mxu0 %v6530
  %v8660 = vpop.f32.mrb[0].mxu0
  %v8661 = vadd.f32 %v8468, %v8660
  %v8662 = vpop.f32.mrb[0].mxu0
  %v8663 = vadd.f32 %v8470, %v8662
  %v8664 = vpop.f32.mrb[0].mxu0
  %v8665 = vadd.f32 %v8472, %v8664
  %v8666 = vpop.f32.mrb[0].mxu0
  %v8667 = vadd.f32 %v8474, %v8666
  %8668 = vmatprep.mubr.bf16.mxu0 %v6539
  %8669 = vmatmul.mubr.bf16.gmra.mrb[0].mxu0 %v6538
  %v8670 = vpop.f32.mrb[0].mxu0
  %v8671 = vadd.f32 %v8478, %v8670
  %v8672 = vpop.f32.mrb[0].mxu0
  %v8673 = vadd.f32 %v8480, %v8672
  %v8674 = vpop.f32.mrb[0].mxu0
  %v8675 = vadd.f32 %v8482, %v8674
  %v8676 = vpop.f32.mrb[0].mxu0
  %v8677 = vadd.f32 %v8484, %v8676
  %8678 = vdwg.mxu0
  %8679 = vmatprep.subr.bf16.mxu0 %v7781
  %8680 = vmatpush1.bf16.msra.mxu0 %v7780
  %8681 = vmatprep.subr.bf16.mxu0 %v7785
  %8682 = vmatpush1.bf16.msra.mxu0 %v7784
  %8683 = vmatprep.subr.bf16.mxu0 %v7789
  %8684 = vmatpush1.bf16.msra.mxu0 %v7788
  %8685 = vmatprep.subr.bf16.mxu0 %v7793
  %8686 = vmatpush1.bf16.msra.mxu0 %v7792
  %8687 = vmatprep.subr.bf16.mxu0 %v7797
  %8688 = vmatpush1.bf16.msra.mxu0 %v7796
  %8689 = vmatprep.subr.bf16.mxu0 %v7801
  %8690 = vmatpush1.bf16.msra.mxu0 %v7800
  %8691 = vmatprep.subr.bf16.mxu0 %v7805
  %8692 = vmatpush1.bf16.msra.mxu0 %v7804
  %8693 = vmatprep.subr.bf16.mxu0 %v7809
  %8694 = vmatpush1.bf16.msra.mxu0 %v7808
  %8695 = vmatprep.subr.bf16.mxu0 %v7813
  %8696 = vmatpush1.bf16.msra.mxu0 %v7812
  %8697 = vmatprep.subr.bf16.mxu0 %v7817
  %8698 = vmatpush1.bf16.msra.mxu0 %v7816
  %8699 = vmatprep.subr.bf16.mxu0 %v7821
  %8700 = vmatpush1.bf16.msra.mxu0 %v7820
  %8701 = vmatprep.subr.bf16.mxu0 %v7825
  %8702 = vmatpush1.bf16.msra.mxu0 %v7824
  %8703 = vmatprep.subr.bf16.mxu0 %v7829
  %8704 = vmatpush1.bf16.msra.mxu0 %v7828
  %8705 = vmatprep.subr.bf16.mxu0 %v7833
  %8706 = vmatpush1.bf16.msra.mxu0 %v7832
  %8707 = vmatprep.subr.bf16.mxu0 %v7837
  %8708 = vmatpush1.bf16.msra.mxu0 %v7836
  %8709 = vmatprep.subr.bf16.mxu0 %v7841
  %8710 = vmatpush1.bf16.msra.mxu0 %v7840
  %8711 = vmatprep.mubr.bf16.mxu0 %v6421
  %8712 = vmatmul.mubr.bf16.gmra.mrb[0].mxu0 %v6420
  %v8713 = vpop.f32.mrb[0].mxu0
  %v8714 = vadd.f32 %v8521, %v8713
  %v8715 = vpop.f32.mrb[0].mxu0
  %v8716 = vadd.f32 %v8523, %v8715
  %v8717 = vpop.f32.mrb[0].mxu0
  %v8718 = vadd.f32 %v8525, %v8717
  %v8719 = vpop.f32.mrb[0].mxu0
  %v8720 = vadd.f32 %v8527, %v8719
  %8721 = vmatprep.mubr.bf16.mxu0 %v6429
  %8722 = vmatmul.mubr.bf16.gmra.mrb[0].mxu0 %v6428
  %v8723 = vpop.f32.mrb[0].mxu0
  %v8724 = vadd.f32 %v8531, %v8723
  %v8725 = vpop.f32.mrb[0].mxu0
  %v8726 = vadd.f32 %v8533, %v8725
  %v8727 = vpop.f32.mrb[0].mxu0
  %v8728 = vadd.f32 %v8535, %v8727
  %v8729 = vpop.f32.mrb[0].mxu0
  %v8730 = vadd.f32 %v8537, %v8729
  %8731 = vmatprep.mubr.bf16.mxu0 %v6437
  %8732 = vmatmul.mubr.bf16.gmra.mrb[0].mxu0 %v6436
  %v8733 = vpop.f32.mrb[0].mxu0
  %v8734 = vadd.f32 %v8541, %v8733
  %v8735 = vpop.f32.mrb[0].mxu0
  %v8736 = vadd.f32 %v8543, %v8735
  %v8737 = vpop.f32.mrb[0].mxu0
  %v8738 = vadd.f32 %v8545, %v8737
  %v8739 = vpop.f32.mrb[0].mxu0
  %v8740 = vadd.f32 %v8547, %v8739
  %8741 = vmatprep.mubr.bf16.mxu0 %v6445
  %8742 = vmatmul.mubr.bf16.gmra.mrb[0].mxu0 %v6444
  %v8743 = vpop.f32.mrb[0].mxu0
  %v8744 = vadd.f32 %v8551, %v8743
  %v8745 = vpop.f32.mrb[0].mxu0
  %v8746 = vadd.f32 %v8553, %v8745
  %v8747 = vpop.f32.mrb[0].mxu0
  %v8748 = vadd.f32 %v8555, %v8747
  %v8749 = vpop.f32.mrb[0].mxu0
  %v8750 = vadd.f32 %v8557, %v8749
  %8751 = vmatprep.mubr.bf16.mxu0 %v6453
  %8752 = vmatmul.mubr.bf16.gmra.mrb[0].mxu0 %v6452
  %v8753 = vpop.f32.mrb[0].mxu0
  %v8754 = vadd.f32 %v8561, %v8753
  %v8755 = vpop.f32.mrb[0].mxu0
  %v8756 = vadd.f32 %v8563, %v8755
  %v8757 = vpop.f32.mrb[0].mxu0
  %v8758 = vadd.f32 %v8565, %v8757
  %v8759 = vpop.f32.mrb[0].mxu0
  %v8760 = vadd.f32 %v8567, %v8759
  %8761 = vmatprep.mubr.bf16.mxu0 %v6461
  %8762 = vmatmul.mubr.bf16.gmra.mrb[0].mxu0 %v6460
  %v8763 = vpop.f32.mrb[0].mxu0
  %v8764 = vadd.f32 %v8571, %v8763
  %v8765 = vpop.f32.mrb[0].mxu0
  %v8766 = vadd.f32 %v8573, %v8765
  %v8767 = vpop.f32.mrb[0].mxu0
  %v8768 = vadd.f32 %v8575, %v8767
  %v8769 = vpop.f32.mrb[0].mxu0
  %v8770 = vadd.f32 %v8577, %v8769
  %8771 = vmatprep.mubr.bf16.mxu0 %v6469
  %8772 = vmatmul.mubr.bf16.gmra.mrb[0].mxu0 %v6468
  %v8773 = vpop.f32.mrb[0].mxu0
  %v8774 = vadd.f32 %v8581, %v8773
  %v8775 = vpop.f32.mrb[0].mxu0
  %v8776 = vadd.f32 %v8583, %v8775
  %v8777 = vpop.f32.mrb[0].mxu0
  %v8778 = vadd.f32 %v8585, %v8777
  %v8779 = vpop.f32.mrb[0].mxu0
  %v8780 = vadd.f32 %v8587, %v8779
  %8781 = vmatprep.mubr.bf16.mxu0 %v6477
  %8782 = vmatmul.mubr.bf16.gmra.mrb[0].mxu0 %v6476
  %v8783 = vpop.f32.mrb[0].mxu0
  %v8784 = vadd.f32 %v8591, %v8783
  %v8785 = vpop.f32.mrb[0].mxu0
  %v8786 = vadd.f32 %v8593, %v8785
  %v8787 = vpop.f32.mrb[0].mxu0
  %v8788 = vadd.f32 %v8595, %v8787
  %v8789 = vpop.f32.mrb[0].mxu0
  %v8790 = vadd.f32 %v8597, %v8789
  %8791 = vmatprep.mubr.bf16.mxu0 %v6485
  %8792 = vmatmul.mubr.bf16.gmra.mrb[0].mxu0 %v6484
  %v8793 = vpop.f32.mrb[0].mxu0
  %v8794 = vadd.f32 %v8601, %v8793
  %v8795 = vpop.f32.mrb[0].mxu0
  %v8796 = vadd.f32 %v8603, %v8795
  %v8797 = vpop.f32.mrb[0].mxu0
  %v8798 = vadd.f32 %v8605, %v8797
  %v8799 = vpop.f32.mrb[0].mxu0
  %v8800 = vadd.f32 %v8607, %v8799
  %8801 = vmatprep.mubr.bf16.mxu0 %v6493
  %8802 = vmatmul.mubr.bf16.gmra.mrb[0].mxu0 %v6492
  %v8803 = vpop.f32.mrb[0].mxu0
  %v8804 = vadd.f32 %v8611, %v8803
  %v8805 = vpop.f32.mrb[0].mxu0
  %v8806 = vadd.f32 %v8613, %v8805
  %v8807 = vpop.f32.mrb[0].mxu0
  %v8808 = vadd.f32 %v8615, %v8807
  %v8809 = vpop.f32.mrb[0].mxu0
  %v8810 = vadd.f32 %v8617, %v8809
  %8811 = vmatprep.mubr.bf16.mxu0 %v6501
  %8812 = vmatmul.mubr.bf16.gmra.mrb[0].mxu0 %v6500
  %v8813 = vpop.f32.mrb[0].mxu0
  %v8814 = vadd.f32 %v8621, %v8813
  %v8815 = vpop.f32.mrb[0].mxu0
  %v8816 = vadd.f32 %v8623, %v8815
  %v8817 = vpop.f32.mrb[0].mxu0
  %v8818 = vadd.f32 %v8625, %v8817
  %v8819 = vpop.f32.mrb[0].mxu0
  %v8820 = vadd.f32 %v8627, %v8819
  %8821 = vmatprep.mubr.bf16.mxu0 %v6509
  %8822 = vmatmul.mubr.bf16.gmra.mrb[0].mxu0 %v6508
  %v8823 = vpop.f32.mrb[0].mxu0
  %v8824 = vadd.f32 %v8631, %v8823
  %v8825 = vpop.f32.mrb[0].mxu0
  %v8826 = vadd.f32 %v8633, %v8825
  %v8827 = vpop.f32.mrb[0].mxu0
  %v8828 = vadd.f32 %v8635, %v8827
  %v8829 = vpop.f32.mrb[0].mxu0
  %v8830 = vadd.f32 %v8637, %v8829
  %8831 = vmatprep.mubr.bf16.mxu0 %v6517
  %8832 = vmatmul.mubr.bf16.gmra.mrb[0].mxu0 %v6516
  %v8833 = vpop.f32.mrb[0].mxu0
  %v8834 = vadd.f32 %v8641, %v8833
  %v8835 = vpop.f32.mrb[0].mxu0
  %v8836 = vadd.f32 %v8643, %v8835
  %v8837 = vpop.f32.mrb[0].mxu0
  %v8838 = vadd.f32 %v8645, %v8837
  %v8839 = vpop.f32.mrb[0].mxu0
  %v8840 = vadd.f32 %v8647, %v8839
  %8841 = vmatprep.mubr.bf16.mxu0 %v6525
  %8842 = vmatmul.mubr.bf16.gmra.mrb[0].mxu0 %v6524
  %v8843 = vpop.f32.mrb[0].mxu0
  %v8844 = vadd.f32 %v8651, %v8843
  %v8845 = vpop.f32.mrb[0].mxu0
  %v8846 = vadd.f32 %v8653, %v8845
  %v8847 = vpop.f32.mrb[0].mxu0
  %v8848 = vadd.f32 %v8655, %v8847
  %v8849 = vpop.f32.mrb[0].mxu0
  %v8850 = vadd.f32 %v8657, %v8849
  %8851 = vmatprep.mubr.bf16.mxu0 %v6533
  %8852 = vmatmul.mubr.bf16.gmra.mrb[0].mxu0 %v6532
  %v8853 = vpop.f32.mrb[0].mxu0
  %v8854 = vadd.f32 %v8661, %v8853
  %v8855 = vpop.f32.mrb[0].mxu0
  %v8856 = vadd.f32 %v8663, %v8855
  %v8857 = vpop.f32.mrb[0].mxu0
  %v8858 = vadd.f32 %v8665, %v8857
  %v8859 = vpop.f32.mrb[0].mxu0
  %v8860 = vadd.f32 %v8667, %v8859
  %8861 = vmatprep.mubr.bf16.mxu0 %v6541
  %8862 = vmatmul.mubr.bf16.gmra.mrb[0].mxu0 %v6540
  %v8863 = vpop.f32.mrb[0].mxu0
  %v8864 = vadd.f32 %v8671, %v8863
  %v8865 = vpop.f32.mrb[0].mxu0
  %v8866 = vadd.f32 %v8673, %v8865
  %v8867 = vpop.f32.mrb[0].mxu0
  %v8868 = vadd.f32 %v8675, %v8867
  %v8869 = vpop.f32.mrb[0].mxu0
  %v8870 = vadd.f32 %v8677, %v8869
  %8871 = vdwg.mxu0
  %8872 = vmatprep.subr.bf16.mxu0 %v7591
  %8873 = vmatpush1.bf16.msra.mxu0 %v7590
  %8874 = vmatprep.subr.bf16.mxu0 %v7595
  %8875 = vmatpush1.bf16.msra.mxu0 %v7594
  %8876 = vmatprep.subr.bf16.mxu0 %v7599
  %8877 = vmatpush1.bf16.msra.mxu0 %v7598
  %8878 = vmatprep.subr.bf16.mxu0 %v7603
  %8879 = vmatpush1.bf16.msra.mxu0 %v7602
  %8880 = vmatprep.subr.bf16.mxu0 %v7607
  %8881 = vmatpush1.bf16.msra.mxu0 %v7606
  %8882 = vmatprep.subr.bf16.mxu0 %v7611
  %8883 = vmatpush1.bf16.msra.mxu0 %v7610
  %8884 = vmatprep.subr.bf16.mxu0 %v7615
  %8885 = vmatpush1.bf16.msra.mxu0 %v7614
  %8886 = vmatprep.subr.bf16.mxu0 %v7619
  %8887 = vmatpush1.bf16.msra.mxu0 %v7618
  %8888 = vmatprep.subr.bf16.mxu0 %v7623
  %8889 = vmatpush1.bf16.msra.mxu0 %v7622
  %8890 = vmatprep.subr.bf16.mxu0 %v7627
  %8891 = vmatpush1.bf16.msra.mxu0 %v7626
  %8892 = vmatprep.subr.bf16.mxu0 %v7631
  %8893 = vmatpush1.bf16.msra.mxu0 %v7630
  %8894 = vmatprep.subr.bf16.mxu0 %v7635
  %8895 = vmatpush1.bf16.msra.mxu0 %v7634
  %8896 = vmatprep.subr.bf16.mxu0 %v7639
  %8897 = vmatpush1.bf16.msra.mxu0 %v7638
  %8898 = vmatprep.subr.bf16.mxu0 %v7643
  %8899 = vmatpush1.bf16.msra.mxu0 %v7642
  %8900 = vmatprep.subr.bf16.mxu0 %v7647
  %8901 = vmatpush1.bf16.msra.mxu0 %v7646
  %8902 = vmatprep.subr.bf16.mxu0 %v7651
  %8903 = vmatpush1.bf16.msra.mxu0 %v7650
  %8904 = vmatprep.mubr.bf16.mxu0 %v6415
  %8905 = vmatmul.mubr.bf16.gmra.mrb[0].mxu0 %v6414
  %v8906 = vpop.f32.mrb[0].mxu0
  %v8907 = vadd.f32 %v6811, %v8906
  %v8908 = vpop.f32.mrb[0].mxu0
  %v8909 = vadd.f32 %v6815, %v8908
  %v8910 = vpop.f32.mrb[0].mxu0
  %v8911 = vadd.f32 %v6811, %v8910
  %v8912 = vpop.f32.mrb[0].mxu0
  %v8913 = vadd.f32 %v6815, %v8912
  %8914 = vmatprep.mubr.bf16.mxu0 %v6423
  %8915 = vmatmul.mubr.bf16.gmra.mrb[0].mxu0 %v6422
  %v8916 = vpop.f32.mrb[0].mxu0
  %v8917 = vadd.f32 %v6811, %v8916
  %v8918 = vpop.f32.mrb[0].mxu0
  %v8919 = vadd.f32 %v6815, %v8918
  %v8920 = vpop.f32.mrb[0].mxu0
  %v8921 = vadd.f32 %v6811, %v8920
  %v8922 = vpop.f32.mrb[0].mxu0
  %v8923 = vadd.f32 %v6815, %v8922
  %8924 = vmatprep.mubr.bf16.mxu0 %v6431
  %8925 = vmatmul.mubr.bf16.gmra.mrb[0].mxu0 %v6430
  %v8926 = vpop.f32.mrb[0].mxu0
  %v8927 = vadd.f32 %v6811, %v8926
  %v8928 = vpop.f32.mrb[0].mxu0
  %v8929 = vadd.f32 %v6815, %v8928
  %v8930 = vpop.f32.mrb[0].mxu0
  %v8931 = vadd.f32 %v6811, %v8930
  %v8932 = vpop.f32.mrb[0].mxu0
  %v8933 = vadd.f32 %v6815, %v8932
  %8934 = vmatprep.mubr.bf16.mxu0 %v6439
  %8935 = vmatmul.mubr.bf16.gmra.mrb[0].mxu0 %v6438
  %v8936 = vpop.f32.mrb[0].mxu0
  %v8937 = vadd.f32 %v6811, %v8936
  %v8938 = vpop.f32.mrb[0].mxu0
  %v8939 = vadd.f32 %v6815, %v8938
  %v8940 = vpop.f32.mrb[0].mxu0
  %v8941 = vadd.f32 %v6811, %v8940
  %v8942 = vpop.f32.mrb[0].mxu0
  %v8943 = vadd.f32 %v6815, %v8942
  %8944 = vmatprep.mubr.bf16.mxu0 %v6447
  %8945 = vmatmul.mubr.bf16.gmra.mrb[0].mxu0 %v6446
  %v8946 = vpop.f32.mrb[0].mxu0
  %v8947 = vadd.f32 %v6811, %v8946
  %v8948 = vpop.f32.mrb[0].mxu0
  %v8949 = vadd.f32 %v6815, %v8948
  %v8950 = vpop.f32.mrb[0].mxu0
  %v8951 = vadd.f32 %v6811, %v8950
  %v8952 = vpop.f32.mrb[0].mxu0
  %v8953 = vadd.f32 %v6815, %v8952
  %8954 = vmatprep.mubr.bf16.mxu0 %v6455
  %8955 = vmatmul.mubr.bf16.gmra.mrb[0].mxu0 %v6454
  %v8956 = vpop.f32.mrb[0].mxu0
  %v8957 = vadd.f32 %v6811, %v8956
  %v8958 = vpop.f32.mrb[0].mxu0
  %v8959 = vadd.f32 %v6815, %v8958
  %v8960 = vpop.f32.mrb[0].mxu0
  %v8961 = vadd.f32 %v6811, %v8960
  %v8962 = vpop.f32.mrb[0].mxu0
  %v8963 = vadd.f32 %v6815, %v8962
  %8964 = vmatprep.mubr.bf16.mxu0 %v6463
  %8965 = vmatmul.mubr.bf16.gmra.mrb[0].mxu0 %v6462
  %v8966 = vpop.f32.mrb[0].mxu0
  %v8967 = vadd.f32 %v6811, %v8966
  %v8968 = vpop.f32.mrb[0].mxu0
  %v8969 = vadd.f32 %v6815, %v8968
  %v8970 = vpop.f32.mrb[0].mxu0
  %v8971 = vadd.f32 %v6811, %v8970
  %v8972 = vpop.f32.mrb[0].mxu0
  %v8973 = vadd.f32 %v6815, %v8972
  %8974 = vmatprep.mubr.bf16.mxu0 %v6471
  %8975 = vmatmul.mubr.bf16.gmra.mrb[0].mxu0 %v6470
  %v8976 = vpop.f32.mrb[0].mxu0
  %v8977 = vadd.f32 %v6811, %v8976
  %v8978 = vpop.f32.mrb[0].mxu0
  %v8979 = vadd.f32 %v6815, %v8978
  %v8980 = vpop.f32.mrb[0].mxu0
  %v8981 = vadd.f32 %v6811, %v8980
  %v8982 = vpop.f32.mrb[0].mxu0
  %v8983 = vadd.f32 %v6815, %v8982
  %8984 = vmatprep.mubr.bf16.mxu0 %v6479
  %8985 = vmatmul.mubr.bf16.gmra.mrb[0].mxu0 %v6478
  %v8986 = vpop.f32.mrb[0].mxu0
  %v8987 = vadd.f32 %v6811, %v8986
  %v8988 = vpop.f32.mrb[0].mxu0
  %v8989 = vadd.f32 %v6815, %v8988
  %v8990 = vpop.f32.mrb[0].mxu0
  %v8991 = vadd.f32 %v6811, %v8990
  %v8992 = vpop.f32.mrb[0].mxu0
  %v8993 = vadd.f32 %v6815, %v8992
  %8994 = vmatprep.mubr.bf16.mxu0 %v6487
  %8995 = vmatmul.mubr.bf16.gmra.mrb[0].mxu0 %v6486
  %v8996 = vpop.f32.mrb[0].mxu0
  %v8997 = vadd.f32 %v6811, %v8996
  %v8998 = vpop.f32.mrb[0].mxu0
  %v8999 = vadd.f32 %v6815, %v8998
  %v9000 = vpop.f32.mrb[0].mxu0
  %v9001 = vadd.f32 %v6811, %v9000
  %v9002 = vpop.f32.mrb[0].mxu0
  %v9003 = vadd.f32 %v6815, %v9002
  %9004 = vmatprep.mubr.bf16.mxu0 %v6495
  %9005 = vmatmul.mubr.bf16.gmra.mrb[0].mxu0 %v6494
  %v9006 = vpop.f32.mrb[0].mxu0
  %v9007 = vadd.f32 %v6811, %v9006
  %v9008 = vpop.f32.mrb[0].mxu0
  %v9009 = vadd.f32 %v6815, %v9008
  %v9010 = vpop.f32.mrb[0].mxu0
  %v9011 = vadd.f32 %v6811, %v9010
  %v9012 = vpop.f32.mrb[0].mxu0
  %v9013 = vadd.f32 %v6815, %v9012
  %9014 = vmatprep.mubr.bf16.mxu0 %v6503
  %9015 = vmatmul.mubr.bf16.gmra.mrb[0].mxu0 %v6502
  %v9016 = vpop.f32.mrb[0].mxu0
  %v9017 = vadd.f32 %v6811, %v9016
  %v9018 = vpop.f32.mrb[0].mxu0
  %v9019 = vadd.f32 %v6815, %v9018
  %v9020 = vpop.f32.mrb[0].mxu0
  %v9021 = vadd.f32 %v6811, %v9020
  %v9022 = vpop.f32.mrb[0].mxu0
  %v9023 = vadd.f32 %v6815, %v9022
  %9024 = vmatprep.mubr.bf16.mxu0 %v6511
  %9025 = vmatmul.mubr.bf16.gmra.mrb[0].mxu0 %v6510
  %v9026 = vpop.f32.mrb[0].mxu0
  %v9027 = vadd.f32 %v6811, %v9026
  %v9028 = vpop.f32.mrb[0].mxu0
  %v9029 = vadd.f32 %v6815, %v9028
  %v9030 = vpop.f32.mrb[0].mxu0
  %v9031 = vadd.f32 %v6811, %v9030
  %v9032 = vpop.f32.mrb[0].mxu0
  %v9033 = vadd.f32 %v6815, %v9032
  %9034 = vmatprep.mubr.bf16.mxu0 %v6519
  %9035 = vmatmul.mubr.bf16.gmra.mrb[0].mxu0 %v6518
  %v9036 = vpop.f32.mrb[0].mxu0
  %v9037 = vadd.f32 %v6811, %v9036
  %v9038 = vpop.f32.mrb[0].mxu0
  %v9039 = vadd.f32 %v6815, %v9038
  %v9040 = vpop.f32.mrb[0].mxu0
  %v9041 = vadd.f32 %v6811, %v9040
  %v9042 = vpop.f32.mrb[0].mxu0
  %v9043 = vadd.f32 %v6815, %v9042
  %9044 = vmatprep.mubr.bf16.mxu0 %v6527
  %9045 = vmatmul.mubr.bf16.gmra.mrb[0].mxu0 %v6526
  %v9046 = vpop.f32.mrb[0].mxu0
  %v9047 = vadd.f32 %v6811, %v9046
  %v9048 = vpop.f32.mrb[0].mxu0
  %v9049 = vadd.f32 %v6815, %v9048
  %v9050 = vpop.f32.mrb[0].mxu0
  %v9051 = vadd.f32 %v6811, %v9050
  %v9052 = vpop.f32.mrb[0].mxu0
  %v9053 = vadd.f32 %v6815, %v9052
  %9054 = vmatprep.mubr.bf16.mxu0 %v6535
  %9055 = vmatmul.mubr.bf16.gmra.mrb[0].mxu0 %v6534
  %v9056 = vpop.f32.mrb[0].mxu0
  %v9057 = vadd.f32 %v6811, %v9056
  %v9058 = vpop.f32.mrb[0].mxu0
  %v9059 = vadd.f32 %v6815, %v9058
  %v9060 = vpop.f32.mrb[0].mxu0
  %v9061 = vadd.f32 %v6811, %v9060
  %v9062 = vpop.f32.mrb[0].mxu0
  %v9063 = vadd.f32 %v6815, %v9062
  %9064 = vdwg.mxu0
  %9065 = vmatprep.subr.bf16.mxu0 %v7655
  %9066 = vmatpush1.bf16.msra.mxu0 %v7654
  %9067 = vmatprep.subr.bf16.mxu0 %v7659
  %9068 = vmatpush1.bf16.msra.mxu0 %v7658
  %9069 = vmatprep.subr.bf16.mxu0 %v7663
  %9070 = vmatpush1.bf16.msra.mxu0 %v7662
  %9071 = vmatprep.subr.bf16.mxu0 %v7667
  %9072 = vmatpush1.bf16.msra.mxu0 %v7666
  %9073 = vmatprep.subr.bf16.mxu0 %v7671
  %9074 = vmatpush1.bf16.msra.mxu0 %v7670
  %9075 = vmatprep.subr.bf16.mxu0 %v7675
  %9076 = vmatpush1.bf16.msra.mxu0 %v7674
  %9077 = vmatprep.subr.bf16.mxu0 %v7679
  %9078 = vmatpush1.bf16.msra.mxu0 %v7678
  %9079 = vmatprep.subr.bf16.mxu0 %v7683
  %9080 = vmatpush1.bf16.msra.mxu0 %v7682
  %9081 = vmatprep.subr.bf16.mxu0 %v7687
  %9082 = vmatpush1.bf16.msra.mxu0 %v7686
  %9083 = vmatprep.subr.bf16.mxu0 %v7691
  %9084 = vmatpush1.bf16.msra.mxu0 %v7690
  %9085 = vmatprep.subr.bf16.mxu0 %v7695
  %9086 = vmatpush1.bf16.msra.mxu0 %v7694
  %9087 = vmatprep.subr.bf16.mxu0 %v7699
  %9088 = vmatpush1.bf16.msra.mxu0 %v7698
  %9089 = vmatprep.subr.bf16.mxu0 %v7703
  %9090 = vmatpush1.bf16.msra.mxu0 %v7702
  %9091 = vmatprep.subr.bf16.mxu0 %v7707
  %9092 = vmatpush1.bf16.msra.mxu0 %v7706
  %9093 = vmatprep.subr.bf16.mxu0 %v7711
  %9094 = vmatpush1.bf16.msra.mxu0 %v7710
  %9095 = vmatprep.subr.bf16.mxu0 %v7715
  %9096 = vmatpush1.bf16.msra.mxu0 %v7714
  %9097 = vmatprep.mubr.bf16.mxu0 %v6417
  %9098 = vmatmul.mubr.bf16.gmra.mrb[0].mxu0 %v6416
  %v9099 = vpop.f32.mrb[0].mxu0
  %v9100 = vadd.f32 %v8907, %v9099
  %v9101 = vpop.f32.mrb[0].mxu0
  %v9102 = vadd.f32 %v8909, %v9101
  %v9103 = vpop.f32.mrb[0].mxu0
  %v9104 = vadd.f32 %v8911, %v9103
  %v9105 = vpop.f32.mrb[0].mxu0
  %v9106 = vadd.f32 %v8913, %v9105
  %9107 = vmatprep.mubr.bf16.mxu0 %v6425
  %9108 = vmatmul.mubr.bf16.gmra.mrb[0].mxu0 %v6424
  %v9109 = vpop.f32.mrb[0].mxu0
  %v9110 = vadd.f32 %v8917, %v9109
  %v9111 = vpop.f32.mrb[0].mxu0
  %v9112 = vadd.f32 %v8919, %v9111
  %v9113 = vpop.f32.mrb[0].mxu0
  %v9114 = vadd.f32 %v8921, %v9113
  %v9115 = vpop.f32.mrb[0].mxu0
  %v9116 = vadd.f32 %v8923, %v9115
  %9117 = vmatprep.mubr.bf16.mxu0 %v6433
  %9118 = vmatmul.mubr.bf16.gmra.mrb[0].mxu0 %v6432
  %v9119 = vpop.f32.mrb[0].mxu0
  %v9120 = vadd.f32 %v8927, %v9119
  %v9121 = vpop.f32.mrb[0].mxu0
  %v9122 = vadd.f32 %v8929, %v9121
  %v9123 = vpop.f32.mrb[0].mxu0
  %v9124 = vadd.f32 %v8931, %v9123
  %v9125 = vpop.f32.mrb[0].mxu0
  %v9126 = vadd.f32 %v8933, %v9125
  %9127 = vmatprep.mubr.bf16.mxu0 %v6441
  %9128 = vmatmul.mubr.bf16.gmra.mrb[0].mxu0 %v6440
  %v9129 = vpop.f32.mrb[0].mxu0
  %v9130 = vadd.f32 %v8937, %v9129
  %v9131 = vpop.f32.mrb[0].mxu0
  %v9132 = vadd.f32 %v8939, %v9131
  %v9133 = vpop.f32.mrb[0].mxu0
  %v9134 = vadd.f32 %v8941, %v9133
  %v9135 = vpop.f32.mrb[0].mxu0
  %v9136 = vadd.f32 %v8943, %v9135
  %9137 = vmatprep.mubr.bf16.mxu0 %v6449
  %9138 = vmatmul.mubr.bf16.gmra.mrb[0].mxu0 %v6448
  %v9139 = vpop.f32.mrb[0].mxu0
  %v9140 = vadd.f32 %v8947, %v9139
  %v9141 = vpop.f32.mrb[0].mxu0
  %v9142 = vadd.f32 %v8949, %v9141
  %v9143 = vpop.f32.mrb[0].mxu0
  %v9144 = vadd.f32 %v8951, %v9143
  %v9145 = vpop.f32.mrb[0].mxu0
  %v9146 = vadd.f32 %v8953, %v9145
  %9147 = vmatprep.mubr.bf16.mxu0 %v6457
  %9148 = vmatmul.mubr.bf16.gmra.mrb[0].mxu0 %v6456
  %v9149 = vpop.f32.mrb[0].mxu0
  %v9150 = vadd.f32 %v8957, %v9149
  %v9151 = vpop.f32.mrb[0].mxu0
  %v9152 = vadd.f32 %v8959, %v9151
  %v9153 = vpop.f32.mrb[0].mxu0
  %v9154 = vadd.f32 %v8961, %v9153
  %v9155 = vpop.f32.mrb[0].mxu0
  %v9156 = vadd.f32 %v8963, %v9155
  %9157 = vmatprep.mubr.bf16.mxu0 %v6465
  %9158 = vmatmul.mubr.bf16.gmra.mrb[0].mxu0 %v6464
  %v9159 = vpop.f32.mrb[0].mxu0
  %v9160 = vadd.f32 %v8967, %v9159
  %v9161 = vpop.f32.mrb[0].mxu0
  %v9162 = vadd.f32 %v8969, %v9161
  %v9163 = vpop.f32.mrb[0].mxu0
  %v9164 = vadd.f32 %v8971, %v9163
  %v9165 = vpop.f32.mrb[0].mxu0
  %v9166 = vadd.f32 %v8973, %v9165
  %9167 = vmatprep.mubr.bf16.mxu0 %v6473
  %9168 = vmatmul.mubr.bf16.gmra.mrb[0].mxu0 %v6472
  %v9169 = vpop.f32.mrb[0].mxu0
  %v9170 = vadd.f32 %v8977, %v9169
  %v9171 = vpop.f32.mrb[0].mxu0
  %v9172 = vadd.f32 %v8979, %v9171
  %v9173 = vpop.f32.mrb[0].mxu0
  %v9174 = vadd.f32 %v8981, %v9173
  %v9175 = vpop.f32.mrb[0].mxu0
  %v9176 = vadd.f32 %v8983, %v9175
  %9177 = vmatprep.mubr.bf16.mxu0 %v6481
  %9178 = vmatmul.mubr.bf16.gmra.mrb[0].mxu0 %v6480
  %v9179 = vpop.f32.mrb[0].mxu0
  %v9180 = vadd.f32 %v8987, %v9179
  %v9181 = vpop.f32.mrb[0].mxu0
  %v9182 = vadd.f32 %v8989, %v9181
  %v9183 = vpop.f32.mrb[0].mxu0
  %v9184 = vadd.f32 %v8991, %v9183
  %v9185 = vpop.f32.mrb[0].mxu0
  %v9186 = vadd.f32 %v8993, %v9185
  %9187 = vmatprep.mubr.bf16.mxu0 %v6489
  %9188 = vmatmul.mubr.bf16.gmra.mrb[0].mxu0 %v6488
  %v9189 = vpop.f32.mrb[0].mxu0
  %v9190 = vadd.f32 %v8997, %v9189
  %v9191 = vpop.f32.mrb[0].mxu0
  %v9192 = vadd.f32 %v8999, %v9191
  %v9193 = vpop.f32.mrb[0].mxu0
  %v9194 = vadd.f32 %v9001, %v9193
  %v9195 = vpop.f32.mrb[0].mxu0
  %v9196 = vadd.f32 %v9003, %v9195
  %9197 = vmatprep.mubr.bf16.mxu0 %v6497
  %9198 = vmatmul.mubr.bf16.gmra.mrb[0].mxu0 %v6496
  %v9199 = vpop.f32.mrb[0].mxu0
  %v9200 = vadd.f32 %v9007, %v9199
  %v9201 = vpop.f32.mrb[0].mxu0
  %v9202 = vadd.f32 %v9009, %v9201
  %v9203 = vpop.f32.mrb[0].mxu0
  %v9204 = vadd.f32 %v9011, %v9203
  %v9205 = vpop.f32.mrb[0].mxu0
  %v9206 = vadd.f32 %v9013, %v9205
  %9207 = vmatprep.mubr.bf16.mxu0 %v6505
  %9208 = vmatmul.mubr.bf16.gmra.mrb[0].mxu0 %v6504
  %v9209 = vpop.f32.mrb[0].mxu0
  %v9210 = vadd.f32 %v9017, %v9209
  %v9211 = vpop.f32.mrb[0].mxu0
  %v9212 = vadd.f32 %v9019, %v9211
  %v9213 = vpop.f32.mrb[0].mxu0
  %v9214 = vadd.f32 %v9021, %v9213
  %v9215 = vpop.f32.mrb[0].mxu0
  %v9216 = vadd.f32 %v9023, %v9215
  %9217 = vmatprep.mubr.bf16.mxu0 %v6513
  %9218 = vmatmul.mubr.bf16.gmra.mrb[0].mxu0 %v6512
  %v9219 = vpop.f32.mrb[0].mxu0
  %v9220 = vadd.f32 %v9027, %v9219
  %v9221 = vpop.f32.mrb[0].mxu0
  %v9222 = vadd.f32 %v9029, %v9221
  %v9223 = vpop.f32.mrb[0].mxu0
  %v9224 = vadd.f32 %v9031, %v9223
  %v9225 = vpop.f32.mrb[0].mxu0
  %v9226 = vadd.f32 %v9033, %v9225
  %9227 = vmatprep.mubr.bf16.mxu0 %v6521
  %9228 = vmatmul.mubr.bf16.gmra.mrb[0].mxu0 %v6520
  %v9229 = vpop.f32.mrb[0].mxu0
  %v9230 = vadd.f32 %v9037, %v9229
  %v9231 = vpop.f32.mrb[0].mxu0
  %v9232 = vadd.f32 %v9039, %v9231
  %v9233 = vpop.f32.mrb[0].mxu0
  %v9234 = vadd.f32 %v9041, %v9233
  %v9235 = vpop.f32.mrb[0].mxu0
  %v9236 = vadd.f32 %v9043, %v9235
  %9237 = vmatprep.mubr.bf16.mxu0 %v6529
  %9238 = vmatmul.mubr.bf16.gmra.mrb[0].mxu0 %v6528
  %v9239 = vpop.f32.mrb[0].mxu0
  %v9240 = vadd.f32 %v9047, %v9239
  %v9241 = vpop.f32.mrb[0].mxu0
  %v9242 = vadd.f32 %v9049, %v9241
  %v9243 = vpop.f32.mrb[0].mxu0
  %v9244 = vadd.f32 %v9051, %v9243
  %v9245 = vpop.f32.mrb[0].mxu0
  %v9246 = vadd.f32 %v9053, %v9245
  %9247 = vmatprep.mubr.bf16.mxu0 %v6537
  %9248 = vmatmul.mubr.bf16.gmra.mrb[0].mxu0 %v6536
  %v9249 = vpop.f32.mrb[0].mxu0
  %v9250 = vadd.f32 %v9057, %v9249
  %v9251 = vpop.f32.mrb[0].mxu0
  %v9252 = vadd.f32 %v9059, %v9251
  %v9253 = vpop.f32.mrb[0].mxu0
  %v9254 = vadd.f32 %v9061, %v9253
  %v9255 = vpop.f32.mrb[0].mxu0
  %v9256 = vadd.f32 %v9063, %v9255
  %9257 = vdwg.mxu0
  %9258 = vmatprep.subr.bf16.mxu0 %v7719
  %9259 = vmatpush1.bf16.msra.mxu0 %v7718
  %9260 = vmatprep.subr.bf16.mxu0 %v7723
  %9261 = vmatpush1.bf16.msra.mxu0 %v7722
  %9262 = vmatprep.subr.bf16.mxu0 %v7727
  %9263 = vmatpush1.bf16.msra.mxu0 %v7726
  %9264 = vmatprep.subr.bf16.mxu0 %v7731
  %9265 = vmatpush1.bf16.msra.mxu0 %v7730
  %9266 = vmatprep.subr.bf16.mxu0 %v7735
  %9267 = vmatpush1.bf16.msra.mxu0 %v7734
  %9268 = vmatprep.subr.bf16.mxu0 %v7739
  %9269 = vmatpush1.bf16.msra.mxu0 %v7738
  %9270 = vmatprep.subr.bf16.mxu0 %v7743
  %9271 = vmatpush1.bf16.msra.mxu0 %v7742
  %9272 = vmatprep.subr.bf16.mxu0 %v7747
  %9273 = vmatpush1.bf16.msra.mxu0 %v7746
  %9274 = vmatprep.subr.bf16.mxu0 %v7751
  %9275 = vmatpush1.bf16.msra.mxu0 %v7750
  %9276 = vmatprep.subr.bf16.mxu0 %v7755
  %9277 = vmatpush1.bf16.msra.mxu0 %v7754
  %9278 = vmatprep.subr.bf16.mxu0 %v7759
  %9279 = vmatpush1.bf16.msra.mxu0 %v7758
  %9280 = vmatprep.subr.bf16.mxu0 %v7763
  %9281 = vmatpush1.bf16.msra.mxu0 %v7762
  %9282 = vmatprep.subr.bf16.mxu0 %v7767
  %9283 = vmatpush1.bf16.msra.mxu0 %v7766
  %9284 = vmatprep.subr.bf16.mxu0 %v7771
  %9285 = vmatpush1.bf16.msra.mxu0 %v7770
  %9286 = vmatprep.subr.bf16.mxu0 %v7775
  %9287 = vmatpush1.bf16.msra.mxu0 %v7774
  %9288 = vmatprep.subr.bf16.mxu0 %v7779
  %9289 = vmatpush1.bf16.msra.mxu0 %v7778
  %9290 = vmatprep.mubr.bf16.mxu0 %v6419
  %9291 = vmatmul.mubr.bf16.gmra.mrb[0].mxu0 %v6418
  %v9292 = vpop.f32.mrb[0].mxu0
  %v9293 = vadd.f32 %v9100, %v9292
  %v9294 = vpop.f32.mrb[0].mxu0
  %v9295 = vadd.f32 %v9102, %v9294
  %v9296 = vpop.f32.mrb[0].mxu0
  %v9297 = vadd.f32 %v9104, %v9296
  %v9298 = vpop.f32.mrb[0].mxu0
  %v9299 = vadd.f32 %v9106, %v9298
  %9300 = vmatprep.mubr.bf16.mxu0 %v6427
  %9301 = vmatmul.mubr.bf16.gmra.mrb[0].mxu0 %v6426
  %v9302 = vpop.f32.mrb[0].mxu0
  %v9303 = vadd.f32 %v9110, %v9302
  %v9304 = vpop.f32.mrb[0].mxu0
  %v9305 = vadd.f32 %v9112, %v9304
  %v9306 = vpop.f32.mrb[0].mxu0
  %v9307 = vadd.f32 %v9114, %v9306
  %v9308 = vpop.f32.mrb[0].mxu0
  %v9309 = vadd.f32 %v9116, %v9308
  %9310 = vmatprep.mubr.bf16.mxu0 %v6435
  %9311 = vmatmul.mubr.bf16.gmra.mrb[0].mxu0 %v6434
  %v9312 = vpop.f32.mrb[0].mxu0
  %v9313 = vadd.f32 %v9120, %v9312
  %v9314 = vpop.f32.mrb[0].mxu0
  %v9315 = vadd.f32 %v9122, %v9314
  %v9316 = vpop.f32.mrb[0].mxu0
  %v9317 = vadd.f32 %v9124, %v9316
  %v9318 = vpop.f32.mrb[0].mxu0
  %v9319 = vadd.f32 %v9126, %v9318
  %9320 = vmatprep.mubr.bf16.mxu0 %v6443
  %9321 = vmatmul.mubr.bf16.gmra.mrb[0].mxu0 %v6442
  %v9322 = vpop.f32.mrb[0].mxu0
  %v9323 = vadd.f32 %v9130, %v9322
  %v9324 = vpop.f32.mrb[0].mxu0
  %v9325 = vadd.f32 %v9132, %v9324
  %v9326 = vpop.f32.mrb[0].mxu0
  %v9327 = vadd.f32 %v9134, %v9326
  %v9328 = vpop.f32.mrb[0].mxu0
  %v9329 = vadd.f32 %v9136, %v9328
  %9330 = vmatprep.mubr.bf16.mxu0 %v6451
  %9331 = vmatmul.mubr.bf16.gmra.mrb[0].mxu0 %v6450
  %v9332 = vpop.f32.mrb[0].mxu0
  %v9333 = vadd.f32 %v9140, %v9332
  %v9334 = vpop.f32.mrb[0].mxu0
  %v9335 = vadd.f32 %v9142, %v9334
  %v9336 = vpop.f32.mrb[0].mxu0
  %v9337 = vadd.f32 %v9144, %v9336
  %v9338 = vpop.f32.mrb[0].mxu0
  %v9339 = vadd.f32 %v9146, %v9338
  %9340 = vmatprep.mubr.bf16.mxu0 %v6459
  %9341 = vmatmul.mubr.bf16.gmra.mrb[0].mxu0 %v6458
  %v9342 = vpop.f32.mrb[0].mxu0
  %v9343 = vadd.f32 %v9150, %v9342
  %v9344 = vpop.f32.mrb[0].mxu0
  %v9345 = vadd.f32 %v9152, %v9344
  %v9346 = vpop.f32.mrb[0].mxu0
  %v9347 = vadd.f32 %v9154, %v9346
  %v9348 = vpop.f32.mrb[0].mxu0
  %v9349 = vadd.f32 %v9156, %v9348
  %9350 = vmatprep.mubr.bf16.mxu0 %v6467
  %9351 = vmatmul.mubr.bf16.gmra.mrb[0].mxu0 %v6466
  %v9352 = vpop.f32.mrb[0].mxu0
  %v9353 = vadd.f32 %v9160, %v9352
  %v9354 = vpop.f32.mrb[0].mxu0
  %v9355 = vadd.f32 %v9162, %v9354
  %v9356 = vpop.f32.mrb[0].mxu0
  %v9357 = vadd.f32 %v9164, %v9356
  %v9358 = vpop.f32.mrb[0].mxu0
  %v9359 = vadd.f32 %v9166, %v9358
  %9360 = vmatprep.mubr.bf16.mxu0 %v6475
  %9361 = vmatmul.mubr.bf16.gmra.mrb[0].mxu0 %v6474
  %v9362 = vpop.f32.mrb[0].mxu0
  %v9363 = vadd.f32 %v9170, %v9362
  %v9364 = vpop.f32.mrb[0].mxu0
  %v9365 = vadd.f32 %v9172, %v9364
  %v9366 = vpop.f32.mrb[0].mxu0
  %v9367 = vadd.f32 %v9174, %v9366
  %v9368 = vpop.f32.mrb[0].mxu0
  %v9369 = vadd.f32 %v9176, %v9368
  %9370 = vmatprep.mubr.bf16.mxu0 %v6483
  %9371 = vmatmul.mubr.bf16.gmra.mrb[0].mxu0 %v6482
  %v9372 = vpop.f32.mrb[0].mxu0
  %v9373 = vadd.f32 %v9180, %v9372
  %v9374 = vpop.f32.mrb[0].mxu0
  %v9375 = vadd.f32 %v9182, %v9374
  %v9376 = vpop.f32.mrb[0].mxu0
  %v9377 = vadd.f32 %v9184, %v9376
  %v9378 = vpop.f32.mrb[0].mxu0
  %v9379 = vadd.f32 %v9186, %v9378
  %9380 = vmatprep.mubr.bf16.mxu0 %v6491
  %9381 = vmatmul.mubr.bf16.gmra.mrb[0].mxu0 %v6490
  %v9382 = vpop.f32.mrb[0].mxu0
  %v9383 = vadd.f32 %v9190, %v9382
  %v9384 = vpop.f32.mrb[0].mxu0
  %v9385 = vadd.f32 %v9192, %v9384
  %v9386 = vpop.f32.mrb[0].mxu0
  %v9387 = vadd.f32 %v9194, %v9386
  %v9388 = vpop.f32.mrb[0].mxu0
  %v9389 = vadd.f32 %v9196, %v9388
  %9390 = vmatprep.mubr.bf16.mxu0 %v6499
  %9391 = vmatmul.mubr.bf16.gmra.mrb[0].mxu0 %v6498
  %v9392 = vpop.f32.mrb[0].mxu0
  %v9393 = vadd.f32 %v9200, %v9392
  %v9394 = vpop.f32.mrb[0].mxu0
  %v9395 = vadd.f32 %v9202, %v9394
  %v9396 = vpop.f32.mrb[0].mxu0
  %v9397 = vadd.f32 %v9204, %v9396
  %v9398 = vpop.f32.mrb[0].mxu0
  %v9399 = vadd.f32 %v9206, %v9398
  %9400 = vmatprep.mubr.bf16.mxu0 %v6507
  %9401 = vmatmul.mubr.bf16.gmra.mrb[0].mxu0 %v6506
  %v9402 = vpop.f32.mrb[0].mxu0
  %v9403 = vadd.f32 %v9210, %v9402
  %v9404 = vpop.f32.mrb[0].mxu0
  %v9405 = vadd.f32 %v9212, %v9404
  %v9406 = vpop.f32.mrb[0].mxu0
  %v9407 = vadd.f32 %v9214, %v9406
  %v9408 = vpop.f32.mrb[0].mxu0
  %v9409 = vadd.f32 %v9216, %v9408
  %9410 = vmatprep.mubr.bf16.mxu0 %v6515
  %9411 = vmatmul.mubr.bf16.gmra.mrb[0].mxu0 %v6514
  %v9412 = vpop.f32.mrb[0].mxu0
  %v9413 = vadd.f32 %v9220, %v9412
  %v9414 = vpop.f32.mrb[0].mxu0
  %v9415 = vadd.f32 %v9222, %v9414
  %v9416 = vpop.f32.mrb[0].mxu0
  %v9417 = vadd.f32 %v9224, %v9416
  %v9418 = vpop.f32.mrb[0].mxu0
  %v9419 = vadd.f32 %v9226, %v9418
  %9420 = vmatprep.mubr.bf16.mxu0 %v6523
  %9421 = vmatmul.mubr.bf16.gmra.mrb[0].mxu0 %v6522
  %v9422 = vpop.f32.mrb[0].mxu0
  %v9423 = vadd.f32 %v9230, %v9422
  %v9424 = vpop.f32.mrb[0].mxu0
  %v9425 = vadd.f32 %v9232, %v9424
  %v9426 = vpop.f32.mrb[0].mxu0
  %v9427 = vadd.f32 %v9234, %v9426
  %v9428 = vpop.f32.mrb[0].mxu0
  %v9429 = vadd.f32 %v9236, %v9428
  %9430 = vmatprep.mubr.bf16.mxu0 %v6531
  %9431 = vmatmul.mubr.bf16.gmra.mrb[0].mxu0 %v6530
  %v9432 = vpop.f32.mrb[0].mxu0
  %v9433 = vadd.f32 %v9240, %v9432
  %v9434 = vpop.f32.mrb[0].mxu0
  %v9435 = vadd.f32 %v9242, %v9434
  %v9436 = vpop.f32.mrb[0].mxu0
  %v9437 = vadd.f32 %v9244, %v9436
  %v9438 = vpop.f32.mrb[0].mxu0
  %v9439 = vadd.f32 %v9246, %v9438
  %9440 = vmatprep.mubr.bf16.mxu0 %v6539
  %9441 = vmatmul.mubr.bf16.gmra.mrb[0].mxu0 %v6538
  %v9442 = vpop.f32.mrb[0].mxu0
  %v9443 = vadd.f32 %v9250, %v9442
  %v9444 = vpop.f32.mrb[0].mxu0
  %v9445 = vadd.f32 %v9252, %v9444
  %v9446 = vpop.f32.mrb[0].mxu0
  %v9447 = vadd.f32 %v9254, %v9446
  %v9448 = vpop.f32.mrb[0].mxu0
  %v9449 = vadd.f32 %v9256, %v9448
  %9450 = vdwg.mxu0
  %9451 = vmatprep.subr.bf16.mxu0 %v7783
  %9452 = vmatpush1.bf16.msra.mxu0 %v7782
  %9453 = vmatprep.subr.bf16.mxu0 %v7787
  %9454 = vmatpush1.bf16.msra.mxu0 %v7786
  %9455 = vmatprep.subr.bf16.mxu0 %v7791
  %9456 = vmatpush1.bf16.msra.mxu0 %v7790
  %9457 = vmatprep.subr.bf16.mxu0 %v7795
  %9458 = vmatpush1.bf16.msra.mxu0 %v7794
  %9459 = vmatprep.subr.bf16.mxu0 %v7799
  %9460 = vmatpush1.bf16.msra.mxu0 %v7798
  %9461 = vmatprep.subr.bf16.mxu0 %v7803
  %9462 = vmatpush1.bf16.msra.mxu0 %v7802
  %9463 = vmatprep.subr.bf16.mxu0 %v7807
  %9464 = vmatpush1.bf16.msra.mxu0 %v7806
  %9465 = vmatprep.subr.bf16.mxu0 %v7811
  %9466 = vmatpush1.bf16.msra.mxu0 %v7810
  %9467 = vmatprep.subr.bf16.mxu0 %v7815
  %9468 = vmatpush1.bf16.msra.mxu0 %v7814
  %9469 = vmatprep.subr.bf16.mxu0 %v7819
  %9470 = vmatpush1.bf16.msra.mxu0 %v7818
  %9471 = vmatprep.subr.bf16.mxu0 %v7823
  %9472 = vmatpush1.bf16.msra.mxu0 %v7822
  %9473 = vmatprep.subr.bf16.mxu0 %v7827
  %9474 = vmatpush1.bf16.msra.mxu0 %v7826
  %9475 = vmatprep.subr.bf16.mxu0 %v7831
  %9476 = vmatpush1.bf16.msra.mxu0 %v7830
  %9477 = vmatprep.subr.bf16.mxu0 %v7835
  %9478 = vmatpush1.bf16.msra.mxu0 %v7834
  %9479 = vmatprep.subr.bf16.mxu0 %v7839
  %9480 = vmatpush1.bf16.msra.mxu0 %v7838
  %9481 = vmatprep.subr.bf16.mxu0 %v7843
  %9482 = vmatpush1.bf16.msra.mxu0 %v7842
  %9483 = vmatprep.mubr.bf16.mxu0 %v6421
  %9484 = vmatmul.mubr.bf16.gmra.mrb[0].mxu0 %v6420
  %v9485 = vpop.f32.mrb[0].mxu0
  %v9486 = vadd.f32 %v9293, %v9485
  %v9487 = vpop.f32.mrb[0].mxu0
  %v9488 = vadd.f32 %v9295, %v9487
  %v9489 = vpop.f32.mrb[0].mxu0
  %v9490 = vadd.f32 %v9297, %v9489
  %v9491 = vpop.f32.mrb[0].mxu0
  %v9492 = vadd.f32 %v9299, %v9491
  %9493 = vmatprep.mubr.bf16.mxu0 %v6429
  %9494 = vmatmul.mubr.bf16.gmra.mrb[0].mxu0 %v6428
  %v9495 = vpop.f32.mrb[0].mxu0
  %v9496 = vadd.f32 %v9303, %v9495
  %v9497 = vpop.f32.mrb[0].mxu0
  %v9498 = vadd.f32 %v9305, %v9497
  %v9499 = vpop.f32.mrb[0].mxu0
  %v9500 = vadd.f32 %v9307, %v9499
  %v9501 = vpop.f32.mrb[0].mxu0
  %v9502 = vadd.f32 %v9309, %v9501
  %9503 = vmatprep.mubr.bf16.mxu0 %v6437
  %9504 = vmatmul.mubr.bf16.gmra.mrb[0].mxu0 %v6436
  %v9505 = vpop.f32.mrb[0].mxu0
  %v9506 = vadd.f32 %v9313, %v9505
  %v9507 = vpop.f32.mrb[0].mxu0
  %v9508 = vadd.f32 %v9315, %v9507
  %v9509 = vpop.f32.mrb[0].mxu0
  %v9510 = vadd.f32 %v9317, %v9509
  %v9511 = vpop.f32.mrb[0].mxu0
  %v9512 = vadd.f32 %v9319, %v9511
  %9513 = vmatprep.mubr.bf16.mxu0 %v6445
  %9514 = vmatmul.mubr.bf16.gmra.mrb[0].mxu0 %v6444
  %v9515 = vpop.f32.mrb[0].mxu0
  %v9516 = vadd.f32 %v9323, %v9515
  %v9517 = vpop.f32.mrb[0].mxu0
  %v9518 = vadd.f32 %v9325, %v9517
  %v9519 = vpop.f32.mrb[0].mxu0
  %v9520 = vadd.f32 %v9327, %v9519
  %v9521 = vpop.f32.mrb[0].mxu0
  %v9522 = vadd.f32 %v9329, %v9521
  %9523 = vmatprep.mubr.bf16.mxu0 %v6453
  %9524 = vmatmul.mubr.bf16.gmra.mrb[0].mxu0 %v6452
  %v9525 = vpop.f32.mrb[0].mxu0
  %v9526 = vadd.f32 %v9333, %v9525
  %v9527 = vpop.f32.mrb[0].mxu0
  %v9528 = vadd.f32 %v9335, %v9527
  %v9529 = vpop.f32.mrb[0].mxu0
  %v9530 = vadd.f32 %v9337, %v9529
  %v9531 = vpop.f32.mrb[0].mxu0
  %v9532 = vadd.f32 %v9339, %v9531
  %9533 = vmatprep.mubr.bf16.mxu0 %v6461
  %9534 = vmatmul.mubr.bf16.gmra.mrb[0].mxu0 %v6460
  %v9535 = vpop.f32.mrb[0].mxu0
  %v9536 = vadd.f32 %v9343, %v9535
  %v9537 = vpop.f32.mrb[0].mxu0
  %v9538 = vadd.f32 %v9345, %v9537
  %v9539 = vpop.f32.mrb[0].mxu0
  %v9540 = vadd.f32 %v9347, %v9539
  %v9541 = vpop.f32.mrb[0].mxu0
  %v9542 = vadd.f32 %v9349, %v9541
  %9543 = vmatprep.mubr.bf16.mxu0 %v6469
  %9544 = vmatmul.mubr.bf16.gmra.mrb[0].mxu0 %v6468
  %v9545 = vpop.f32.mrb[0].mxu0
  %v9546 = vadd.f32 %v9353, %v9545
  %v9547 = vpop.f32.mrb[0].mxu0
  %v9548 = vadd.f32 %v9355, %v9547
  %v9549 = vpop.f32.mrb[0].mxu0
  %v9550 = vadd.f32 %v9357, %v9549
  %v9551 = vpop.f32.mrb[0].mxu0
  %v9552 = vadd.f32 %v9359, %v9551
  %9553 = vmatprep.mubr.bf16.mxu0 %v6477
  %9554 = vmatmul.mubr.bf16.gmra.mrb[0].mxu0 %v6476
  %v9555 = vpop.f32.mrb[0].mxu0
  %v9556 = vadd.f32 %v9363, %v9555
  %v9557 = vpop.f32.mrb[0].mxu0
  %v9558 = vadd.f32 %v9365, %v9557
  %v9559 = vpop.f32.mrb[0].mxu0
  %v9560 = vadd.f32 %v9367, %v9559
  %v9561 = vpop.f32.mrb[0].mxu0
  %v9562 = vadd.f32 %v9369, %v9561
  %9563 = vmatprep.mubr.bf16.mxu0 %v6485
  %9564 = vmatmul.mubr.bf16.gmra.mrb[0].mxu0 %v6484
  %v9565 = vpop.f32.mrb[0].mxu0
  %v9566 = vadd.f32 %v9373, %v9565
  %v9567 = vpop.f32.mrb[0].mxu0
  %v9568 = vadd.f32 %v9375, %v9567
  %v9569 = vpop.f32.mrb[0].mxu0
  %v9570 = vadd.f32 %v9377, %v9569
  %v9571 = vpop.f32.mrb[0].mxu0
  %v9572 = vadd.f32 %v9379, %v9571
  %9573 = vmatprep.mubr.bf16.mxu0 %v6493
  %9574 = vmatmul.mubr.bf16.gmra.mrb[0].mxu0 %v6492
  %v9575 = vpop.f32.mrb[0].mxu0
  %v9576 = vadd.f32 %v9383, %v9575
  %v9577 = vpop.f32.mrb[0].mxu0
  %v9578 = vadd.f32 %v9385, %v9577
  %v9579 = vpop.f32.mrb[0].mxu0
  %v9580 = vadd.f32 %v9387, %v9579
  %v9581 = vpop.f32.mrb[0].mxu0
  %v9582 = vadd.f32 %v9389, %v9581
  %9583 = vmatprep.mubr.bf16.mxu0 %v6501
  %9584 = vmatmul.mubr.bf16.gmra.mrb[0].mxu0 %v6500
  %v9585 = vpop.f32.mrb[0].mxu0
  %v9586 = vadd.f32 %v9393, %v9585
  %v9587 = vpop.f32.mrb[0].mxu0
  %v9588 = vadd.f32 %v9395, %v9587
  %v9589 = vpop.f32.mrb[0].mxu0
  %v9590 = vadd.f32 %v9397, %v9589
  %v9591 = vpop.f32.mrb[0].mxu0
  %v9592 = vadd.f32 %v9399, %v9591
  %9593 = vmatprep.mubr.bf16.mxu0 %v6509
  %9594 = vmatmul.mubr.bf16.gmra.mrb[0].mxu0 %v6508
  %v9595 = vpop.f32.mrb[0].mxu0
  %v9596 = vadd.f32 %v9403, %v9595
  %v9597 = vpop.f32.mrb[0].mxu0
  %v9598 = vadd.f32 %v9405, %v9597
  %v9599 = vpop.f32.mrb[0].mxu0
  %v9600 = vadd.f32 %v9407, %v9599
  %v9601 = vpop.f32.mrb[0].mxu0
  %v9602 = vadd.f32 %v9409, %v9601
  %9603 = vmatprep.mubr.bf16.mxu0 %v6517
  %9604 = vmatmul.mubr.bf16.gmra.mrb[0].mxu0 %v6516
  %v9605 = vpop.f32.mrb[0].mxu0
  %v9606 = vadd.f32 %v9413, %v9605
  %v9607 = vpop.f32.mrb[0].mxu0
  %v9608 = vadd.f32 %v9415, %v9607
  %v9609 = vpop.f32.mrb[0].mxu0
  %v9610 = vadd.f32 %v9417, %v9609
  %v9611 = vpop.f32.mrb[0].mxu0
  %v9612 = vadd.f32 %v9419, %v9611
  %9613 = vmatprep.mubr.bf16.mxu0 %v6525
  %9614 = vmatmul.mubr.bf16.gmra.mrb[0].mxu0 %v6524
  %v9615 = vpop.f32.mrb[0].mxu0
  %v9616 = vadd.f32 %v9423, %v9615
  %v9617 = vpop.f32.mrb[0].mxu0
  %v9618 = vadd.f32 %v9425, %v9617
  %v9619 = vpop.f32.mrb[0].mxu0
  %v9620 = vadd.f32 %v9427, %v9619
  %v9621 = vpop.f32.mrb[0].mxu0
  %v9622 = vadd.f32 %v9429, %v9621
  %9623 = vmatprep.mubr.bf16.mxu0 %v6533
  %9624 = vmatmul.mubr.bf16.gmra.mrb[0].mxu0 %v6532
  %v9625 = vpop.f32.mrb[0].mxu0
  %v9626 = vadd.f32 %v9433, %v9625
  %v9627 = vpop.f32.mrb[0].mxu0
  %v9628 = vadd.f32 %v9435, %v9627
  %v9629 = vpop.f32.mrb[0].mxu0
  %v9630 = vadd.f32 %v9437, %v9629
  %v9631 = vpop.f32.mrb[0].mxu0
  %v9632 = vadd.f32 %v9439, %v9631
  %9633 = vmatprep.mubr.bf16.mxu0 %v6541
  %9634 = vmatmul.mubr.bf16.gmra.mrb[0].mxu0 %v6540
  %v9635 = vpop.f32.mrb[0].mxu0
  %v9636 = vadd.f32 %v9443, %v9635
  %v9637 = vpop.f32.mrb[0].mxu0
  %v9638 = vadd.f32 %v9445, %v9637
  %v9639 = vpop.f32.mrb[0].mxu0
  %v9640 = vadd.f32 %v9447, %v9639
  %v9641 = vpop.f32.mrb[0].mxu0
  %v9642 = vadd.f32 %v9449, %v9641
  %9643 = vdwg.mxu0
  %v9644 = vmul.f32 %v8714, 0.2
  %v9645 = vmul.f32 %v8716, 0.2
  %v9646 = vmul.f32 %v9486, 0.2
  %v9647 = vmul.f32 %v9488, 0.2
  %v9648 = vmul.f32 %v8718, 0.2
  %v9649 = vmul.f32 %v8720, 0.2
  %v9650 = vmul.f32 %v9490, 0.2
  %v9651 = vmul.f32 %v9492, 0.2
  %v9652 = vmul.f32 %v8724, 0.2
  %v9653 = vmul.f32 %v8726, 0.2
  %v9654 = vmul.f32 %v9496, 0.2
  %v9655 = vmul.f32 %v9498, 0.2
  %v9656 = vmul.f32 %v8728, 0.2
  %v9657 = vmul.f32 %v8730, 0.2
  %v9658 = vmul.f32 %v9500, 0.2
  %v9659 = vmul.f32 %v9502, 0.2
  %v9660 = vmul.f32 %v8734, 0.2
  %v9661 = vmul.f32 %v8736, 0.2
  %v9662 = vmul.f32 %v9506, 0.2
  %v9663 = vmul.f32 %v9508, 0.2
  %v9664 = vmul.f32 %v8738, 0.2
  %v9665 = vmul.f32 %v8740, 0.2
  %v9666 = vmul.f32 %v9510, 0.2
  %v9667 = vmul.f32 %v9512, 0.2
  %v9668 = vmul.f32 %v8744, 0.2
  %v9669 = vmul.f32 %v8746, 0.2
  %v9670 = vmul.f32 %v9516, 0.2
  %v9671 = vmul.f32 %v9518, 0.2
  %v9672 = vmul.f32 %v8748, 0.2
  %v9673 = vmul.f32 %v8750, 0.2
  %v9674 = vmul.f32 %v9520, 0.2
  %v9675 = vmul.f32 %v9522, 0.2
  %v9676 = vmul.f32 %v8754, 0.2
  %v9677 = vmul.f32 %v8756, 0.2
  %v9678 = vmul.f32 %v9526, 0.2
  %v9679 = vmul.f32 %v9528, 0.2
  %v9680 = vmul.f32 %v8758, 0.2
  %v9681 = vmul.f32 %v8760, 0.2
  %v9682 = vmul.f32 %v9530, 0.2
  %v9683 = vmul.f32 %v9532, 0.2
  %v9684 = vmul.f32 %v8764, 0.2
  %v9685 = vmul.f32 %v8766, 0.2
  %v9686 = vmul.f32 %v9536, 0.2
  %v9687 = vmul.f32 %v9538, 0.2
  %v9688 = vmul.f32 %v8768, 0.2
  %v9689 = vmul.f32 %v8770, 0.2
  %v9690 = vmul.f32 %v9540, 0.2
  %v9691 = vmul.f32 %v9542, 0.2
  %v9692 = vmul.f32 %v8774, 0.2
  %v9693 = vmul.f32 %v8776, 0.2
  %v9694 = vmul.f32 %v9546, 0.2
  %v9695 = vmul.f32 %v9548, 0.2
  %v9696 = vmul.f32 %v8778, 0.2
  %v9697 = vmul.f32 %v8780, 0.2
  %v9698 = vmul.f32 %v9550, 0.2
  %v9699 = vmul.f32 %v9552, 0.2
  %v9700 = vmul.f32 %v8784, 0.2
  %v9701 = vmul.f32 %v8786, 0.2
  %v9702 = vmul.f32 %v9556, 0.2
  %v9703 = vmul.f32 %v9558, 0.2
  %v9704 = vmul.f32 %v8788, 0.2
  %v9705 = vmul.f32 %v8790, 0.2
  %v9706 = vmul.f32 %v9560, 0.2
  %v9707 = vmul.f32 %v9562, 0.2
  %v9708 = vmul.f32 %v8794, 0.2
  %v9709 = vmul.f32 %v8796, 0.2
  %v9710 = vmul.f32 %v9566, 0.2
  %v9711 = vmul.f32 %v9568, 0.2
  %v9712 = vmul.f32 %v8798, 0.2
  %v9713 = vmul.f32 %v8800, 0.2
  %v9714 = vmul.f32 %v9570, 0.2
  %v9715 = vmul.f32 %v9572, 0.2
  %v9716 = vmul.f32 %v8804, 0.2
  %v9717 = vmul.f32 %v8806, 0.2
  %v9718 = vmul.f32 %v9576, 0.2
  %v9719 = vmul.f32 %v9578, 0.2
  %v9720 = vmul.f32 %v8808, 0.2
  %v9721 = vmul.f32 %v8810, 0.2
  %v9722 = vmul.f32 %v9580, 0.2
  %v9723 = vmul.f32 %v9582, 0.2
  %v9724 = vmul.f32 %v8814, 0.2
  %v9725 = vmul.f32 %v8816, 0.2
  %v9726 = vmul.f32 %v9586, 0.2
  %v9727 = vmul.f32 %v9588, 0.2
  %v9728 = vmul.f32 %v8818, 0.2
  %v9729 = vmul.f32 %v8820, 0.2
  %v9730 = vmul.f32 %v9590, 0.2
  %v9731 = vmul.f32 %v9592, 0.2
  %v9732 = vmul.f32 %v8824, 0.2
  %v9733 = vmul.f32 %v8826, 0.2
  %v9734 = vmul.f32 %v9596, 0.2
  %v9735 = vmul.f32 %v9598, 0.2
  %v9736 = vmul.f32 %v8828, 0.2
  %v9737 = vmul.f32 %v8830, 0.2
  %v9738 = vmul.f32 %v9600, 0.2
  %v9739 = vmul.f32 %v9602, 0.2
  %v9740 = vmul.f32 %v8834, 0.2
  %v9741 = vmul.f32 %v8836, 0.2
  %v9742 = vmul.f32 %v9606, 0.2
  %v9743 = vmul.f32 %v9608, 0.2
  %v9744 = vmul.f32 %v8838, 0.2
  %v9745 = vmul.f32 %v8840, 0.2
  %v9746 = vmul.f32 %v9610, 0.2
  %v9747 = vmul.f32 %v9612, 0.2
  %v9748 = vmul.f32 %v8844, 0.2
  %v9749 = vmul.f32 %v8846, 0.2
  %v9750 = vmul.f32 %v9616, 0.2
  %v9751 = vmul.f32 %v9618, 0.2
  %v9752 = vmul.f32 %v8848, 0.2
  %v9753 = vmul.f32 %v8850, 0.2
  %v9754 = vmul.f32 %v9620, 0.2
  %v9755 = vmul.f32 %v9622, 0.2
  %v9756 = vmul.f32 %v8854, 0.2
  %v9757 = vmul.f32 %v8856, 0.2
  %v9758 = vmul.f32 %v9626, 0.2
  %v9759 = vmul.f32 %v9628, 0.2
  %v9760 = vmul.f32 %v8858, 0.2
  %v9761 = vmul.f32 %v8860, 0.2
  %v9762 = vmul.f32 %v9630, 0.2
  %v9763 = vmul.f32 %v9632, 0.2
  %v9764 = vmul.f32 %v8864, 0.2
  %v9765 = vmul.f32 %v8866, 0.2
  %v9766 = vmul.f32 %v9636, 0.2
  %v9767 = vmul.f32 %v9638, 0.2
  %v9768 = vmul.f32 %v8868, 0.2
  %v9769 = vmul.f32 %v8870, 0.2
  %v9770 = vmul.f32 %v9640, 0.2
  %v9771 = vmul.f32 %v9642, 0.2
  %v9772 = vmax.f32 %v8714, %v9644
  %v9773 = vmax.f32 %v8716, %v9645
  %v9774 = vmax.f32 %v9486, %v9646
  %v9775 = vmax.f32 %v9488, %v9647
  %v9776 = vmax.f32 %v8718, %v9648
  %v9777 = vmax.f32 %v8720, %v9649
  %v9778 = vmax.f32 %v9490, %v9650
  %v9779 = vmax.f32 %v9492, %v9651
  %v9780 = vmax.f32 %v8724, %v9652
  %v9781 = vmax.f32 %v8726, %v9653
  %v9782 = vmax.f32 %v9496, %v9654
  %v9783 = vmax.f32 %v9498, %v9655
  %v9784 = vmax.f32 %v8728, %v9656
  %v9785 = vmax.f32 %v8730, %v9657
  %v9786 = vmax.f32 %v9500, %v9658
  %v9787 = vmax.f32 %v9502, %v9659
  %v9788 = vmax.f32 %v8734, %v9660
  %v9789 = vmax.f32 %v8736, %v9661
  %v9790 = vmax.f32 %v9506, %v9662
  %v9791 = vmax.f32 %v9508, %v9663
  %v9792 = vmax.f32 %v8738, %v9664
  %v9793 = vmax.f32 %v8740, %v9665
  %v9794 = vmax.f32 %v9510, %v9666
  %v9795 = vmax.f32 %v9512, %v9667
  %v9796 = vmax.f32 %v8744, %v9668
  %v9797 = vmax.f32 %v8746, %v9669
  %v9798 = vmax.f32 %v9516, %v9670
  %v9799 = vmax.f32 %v9518, %v9671
  %v9800 = vmax.f32 %v8748, %v9672
  %v9801 = vmax.f32 %v8750, %v9673
  %v9802 = vmax.f32 %v9520, %v9674
  %v9803 = vmax.f32 %v9522, %v9675
  %v9804 = vmax.f32 %v8754, %v9676
  %v9805 = vmax.f32 %v8756, %v9677
  %v9806 = vmax.f32 %v9526, %v9678
  %v9807 = vmax.f32 %v9528, %v9679
  %v9808 = vmax.f32 %v8758, %v9680
  %v9809 = vmax.f32 %v8760, %v9681
  %v9810 = vmax.f32 %v9530, %v9682
  %v9811 = vmax.f32 %v9532, %v9683
  %v9812 = vmax.f32 %v8764, %v9684
  %v9813 = vmax.f32 %v8766, %v9685
  %v9814 = vmax.f32 %v9536, %v9686
  %v9815 = vmax.f32 %v9538, %v9687
  %v9816 = vmax.f32 %v8768, %v9688
  %v9817 = vmax.f32 %v8770, %v9689
  %v9818 = vmax.f32 %v9540, %v9690
  %v9819 = vmax.f32 %v9542, %v9691
  %v9820 = vmax.f32 %v8774, %v9692
  %v9821 = vmax.f32 %v8776, %v9693
  %v9822 = vmax.f32 %v9546, %v9694
  %v9823 = vmax.f32 %v9548, %v9695
  %v9824 = vmax.f32 %v8778, %v9696
  %v9825 = vmax.f32 %v8780, %v9697
  %v9826 = vmax.f32 %v9550, %v9698
  %v9827 = vmax.f32 %v9552, %v9699
  %v9828 = vmax.f32 %v8784, %v9700
  %v9829 = vmax.f32 %v8786, %v9701
  %v9830 = vmax.f32 %v9556, %v9702
  %v9831 = vmax.f32 %v9558, %v9703
  %v9832 = vmax.f32 %v8788, %v9704
  %v9833 = vmax.f32 %v8790, %v9705
  %v9834 = vmax.f32 %v9560, %v9706
  %v9835 = vmax.f32 %v9562, %v9707
  %v9836 = vmax.f32 %v8794, %v9708
  %v9837 = vmax.f32 %v8796, %v9709
  %v9838 = vmax.f32 %v9566, %v9710
  %v9839 = vmax.f32 %v9568, %v9711
  %v9840 = vmax.f32 %v8798, %v9712
  %v9841 = vmax.f32 %v8800, %v9713
  %v9842 = vmax.f32 %v9570, %v9714
  %v9843 = vmax.f32 %v9572, %v9715
  %v9844 = vmax.f32 %v8804, %v9716
  %v9845 = vmax.f32 %v8806, %v9717
  %v9846 = vmax.f32 %v9576, %v9718
  %v9847 = vmax.f32 %v9578, %v9719
  %v9848 = vmax.f32 %v8808, %v9720
  %v9849 = vmax.f32 %v8810, %v9721
  %v9850 = vmax.f32 %v9580, %v9722
  %v9851 = vmax.f32 %v9582, %v9723
  %v9852 = vmax.f32 %v8814, %v9724
  %v9853 = vmax.f32 %v8816, %v9725
  %v9854 = vmax.f32 %v9586, %v9726
  %v9855 = vmax.f32 %v9588, %v9727
  %v9856 = vmax.f32 %v8818, %v9728
  %v9857 = vmax.f32 %v8820, %v9729
  %v9858 = vmax.f32 %v9590, %v9730
  %v9859 = vmax.f32 %v9592, %v9731
  %v9860 = vmax.f32 %v8824, %v9732
  %v9861 = vmax.f32 %v8826, %v9733
  %v9862 = vmax.f32 %v9596, %v9734
  %v9863 = vmax.f32 %v9598, %v9735
  %v9864 = vmax.f32 %v8828, %v9736
  %v9865 = vmax.f32 %v8830, %v9737
  %v9866 = vmax.f32 %v9600, %v9738
  %v9867 = vmax.f32 %v9602, %v9739
  %v9868 = vmax.f32 %v8834, %v9740
  %v9869 = vmax.f32 %v8836, %v9741
  %v9870 = vmax.f32 %v9606, %v9742
  %v9871 = vmax.f32 %v9608, %v9743
  %v9872 = vmax.f32 %v8838, %v9744
  %v9873 = vmax.f32 %v8840, %v9745
  %v9874 = vmax.f32 %v9610, %v9746
  %v9875 = vmax.f32 %v9612, %v9747
  %v9876 = vmax.f32 %v8844, %v9748
  %v9877 = vmax.f32 %v8846, %v9749
  %v9878 = vmax.f32 %v9616, %v9750
  %v9879 = vmax.f32 %v9618, %v9751
  %v9880 = vmax.f32 %v8848, %v9752
  %v9881 = vmax.f32 %v8850, %v9753
  %v9882 = vmax.f32 %v9620, %v9754
  %v9883 = vmax.f32 %v9622, %v9755
  %v9884 = vmax.f32 %v8854, %v9756
  %v9885 = vmax.f32 %v8856, %v9757
  %v9886 = vmax.f32 %v9626, %v9758
  %v9887 = vmax.f32 %v9628, %v9759
  %v9888 = vmax.f32 %v8858, %v9760
  %v9889 = vmax.f32 %v8860, %v9761
  %v9890 = vmax.f32 %v9630, %v9762
  %v9891 = vmax.f32 %v9632, %v9763
  %v9892 = vmax.f32 %v8864, %v9764
  %v9893 = vmax.f32 %v8866, %v9765
  %v9894 = vmax.f32 %v9636, %v9766
  %v9895 = vmax.f32 %v9638, %v9767
  %v9896 = vmax.f32 %v8868, %v9768
  %v9897 = vmax.f32 %v8870, %v9769
  %v9898 = vmax.f32 %v9640, %v9770
  %v9899 = vmax.f32 %v9642, %v9771
  %v9900 = vpack.c.bf16 %v9776, %v9772
  %v9901 = vpack.c.bf16 %v9777, %v9773
  %v9902 = vpack.c.bf16 %v9778, %v9774
  %v9903 = vpack.c.bf16 %v9779, %v9775
  %v9904 = vpack.c.bf16 %v9784, %v9780
  %v9905 = vpack.c.bf16 %v9785, %v9781
  %v9906 = vpack.c.bf16 %v9786, %v9782
  %v9907 = vpack.c.bf16 %v9787, %v9783
  %v9908 = vpack.c.bf16 %v9792, %v9788
  %v9909 = vpack.c.bf16 %v9793, %v9789
  %v9910 = vpack.c.bf16 %v9794, %v9790
  %v9911 = vpack.c.bf16 %v9795, %v9791
  %v9912 = vpack.c.bf16 %v9800, %v9796
  %v9913 = vpack.c.bf16 %v9801, %v9797
  %v9914 = vpack.c.bf16 %v9802, %v9798
  %v9915 = vpack.c.bf16 %v9803, %v9799
  %v9916 = vpack.c.bf16 %v9808, %v9804
  %v9917 = vpack.c.bf16 %v9809, %v9805
  %v9918 = vpack.c.bf16 %v9810, %v9806
  %v9919 = vpack.c.bf16 %v9811, %v9807
  %v9920 = vpack.c.bf16 %v9816, %v9812
  %v9921 = vpack.c.bf16 %v9817, %v9813
  %v9922 = vpack.c.bf16 %v9818, %v9814
  %v9923 = vpack.c.bf16 %v9819, %v9815
  %v9924 = vpack.c.bf16 %v9824, %v9820
  %v9925 = vpack.c.bf16 %v9825, %v9821
  %v9926 = vpack.c.bf16 %v9826, %v9822
  %v9927 = vpack.c.bf16 %v9827, %v9823
  %v9928 = vpack.c.bf16 %v9832, %v9828
  %v9929 = vpack.c.bf16 %v9833, %v9829
  %v9930 = vpack.c.bf16 %v9834, %v9830
  %v9931 = vpack.c.bf16 %v9835, %v9831
  %v9932 = vpack.c.bf16 %v9840, %v9836
  %v9933 = vpack.c.bf16 %v9841, %v9837
  %v9934 = vpack.c.bf16 %v9842, %v9838
  %v9935 = vpack.c.bf16 %v9843, %v9839
  %v9936 = vpack.c.bf16 %v9848, %v9844
  %v9937 = vpack.c.bf16 %v9849, %v9845
  %v9938 = vpack.c.bf16 %v9850, %v9846
  %v9939 = vpack.c.bf16 %v9851, %v9847
  %v9940 = vpack.c.bf16 %v9856, %v9852
  %v9941 = vpack.c.bf16 %v9857, %v9853
  %v9942 = vpack.c.bf16 %v9858, %v9854
  %v9943 = vpack.c.bf16 %v9859, %v9855
  %v9944 = vpack.c.bf16 %v9864, %v9860
  %v9945 = vpack.c.bf16 %v9865, %v9861
  %v9946 = vpack.c.bf16 %v9866, %v9862
  %v9947 = vpack.c.bf16 %v9867, %v9863
  %v9948 = vpack.c.bf16 %v9872, %v9868
  %v9949 = vpack.c.bf16 %v9873, %v9869
  %v9950 = vpack.c.bf16 %v9874, %v9870
  %v9951 = vpack.c.bf16 %v9875, %v9871
  %v9952 = vpack.c.bf16 %v9880, %v9876
  %v9953 = vpack.c.bf16 %v9881, %v9877
  %v9954 = vpack.c.bf16 %v9882, %v9878
  %v9955 = vpack.c.bf16 %v9883, %v9879
  %v9956 = vpack.c.bf16 %v9888, %v9884
  %v9957 = vpack.c.bf16 %v9889, %v9885
  %v9958 = vpack.c.bf16 %v9890, %v9886
  %v9959 = vpack.c.bf16 %v9891, %v9887
  %v9960 = vpack.c.bf16 %v9896, %v9892
  %v9961 = vpack.c.bf16 %v9897, %v9893
  %v9962 = vpack.c.bf16 %v9898, %v9894
  %v9963 = vpack.c.bf16 %v9899, %v9895
  %v9964 = vld [vmem:[%s5] sm:$0xff]
  %v9965 = vld [vmem:[%s5 + $0x8] sm:$0xff]
  %v9966 = vld [vmem:[%s5 + $0x10] sm:$0xff]
  %v9967 = vld [vmem:[%s5 + $0x18] sm:$0xff]
  %v9968 = vld [vmem:[%s5 + $0x20] sm:$0xff]
  %v9969 = vld [vmem:[%s5 + $0x28] sm:$0xff]
  %v9970 = vld [vmem:[%s5 + $0x30] sm:$0xff]
  %v9971 = vld [vmem:[%s5 + $0x38] sm:$0xff]
  %v9972 = vld [vmem:[%s5 + $0x40] sm:$0xff]
  %v9973 = vld [vmem:[%s5 + $0x48] sm:$0xff]
  %v9974 = vld [vmem:[%s5 + $0x50] sm:$0xff]
  %v9975 = vld [vmem:[%s5 + $0x58] sm:$0xff]
  %v9976 = vld [vmem:[%s5 + $0x60] sm:$0xff]
  %v9977 = vld [vmem:[%s5 + $0x68] sm:$0xff]
  %v9978 = vld [vmem:[%s5 + $0x70] sm:$0xff]
  %v9979 = vld [vmem:[%s5 + $0x78] sm:$0xff]
  %v9980 = vld [vmem:[%s5 + $0x80] sm:$0xff]
  %v9981 = vld [vmem:[%s5 + $0x88] sm:$0xff]
  %v9982 = vld [vmem:[%s5 + $0x90] sm:$0xff]
  %v9983 = vld [vmem:[%s5 + $0x98] sm:$0xff]
  %v9984 = vld [vmem:[%s5 + $0xa0] sm:$0xff]
  %v9985 = vld [vmem:[%s5 + $0xa8] sm:$0xff]
  %v9986 = vld [vmem:[%s5 + $0xb0] sm:$0xff]
  %v9987 = vld [vmem:[%s5 + $0xb8] sm:$0xff]
  %v9988 = vld [vmem:[%s5 + $0xc0] sm:$0xff]
  %v9989 = vld [vmem:[%s5 + $0xc8] sm:$0xff]
  %v9990 = vld [vmem:[%s5 + $0xd0] sm:$0xff]
  %v9991 = vld [vmem:[%s5 + $0xd8] sm:$0xff]
  %v9992 = vld [vmem:[%s5 + $0xe0] sm:$0xff]
  %v9993 = vld [vmem:[%s5 + $0xe8] sm:$0xff]
  %v9994 = vld [vmem:[%s5 + $0xf0] sm:$0xff]
  %v9995 = vld [vmem:[%s5 + $0xf8] sm:$0xff]
  %v9996 = vld [vmem:[%s5 + $0x100] sm:$0xff]
  %v9997 = vld [vmem:[%s5 + $0x108] sm:$0xff]
  %v9998 = vld [vmem:[%s5 + $0x110] sm:$0xff]
  %v9999 = vld [vmem:[%s5 + $0x118] sm:$0xff]
  %v10000 = vld [vmem:[%s5 + $0x120] sm:$0xff]
  %v10001 = vld [vmem:[%s5 + $0x128] sm:$0xff]
  %v10002 = vld [vmem:[%s5 + $0x130] sm:$0xff]
  %v10003 = vld [vmem:[%s5 + $0x138] sm:$0xff]
  %v10004 = vld [vmem:[%s5 + $0x140] sm:$0xff]
  %v10005 = vld [vmem:[%s5 + $0x148] sm:$0xff]
  %v10006 = vld [vmem:[%s5 + $0x150] sm:$0xff]
  %v10007 = vld [vmem:[%s5 + $0x158] sm:$0xff]
  %v10008 = vld [vmem:[%s5 + $0x160] sm:$0xff]
  %v10009 = vld [vmem:[%s5 + $0x168] sm:$0xff]
  %v10010 = vld [vmem:[%s5 + $0x170] sm:$0xff]
  %v10011 = vld [vmem:[%s5 + $0x178] sm:$0xff]
  %v10012 = vld [vmem:[%s5 + $0x180] sm:$0xff]
  %v10013 = vld [vmem:[%s5 + $0x188] sm:$0xff]
  %v10014 = vld [vmem:[%s5 + $0x190] sm:$0xff]
  %v10015 = vld [vmem:[%s5 + $0x198] sm:$0xff]
  %v10016 = vld [vmem:[%s5 + $0x1a0] sm:$0xff]
  %v10017 = vld [vmem:[%s5 + $0x1a8] sm:$0xff]
  %v10018 = vld [vmem:[%s5 + $0x1b0] sm:$0xff]
  %v10019 = vld [vmem:[%s5 + $0x1b8] sm:$0xff]
  %v10020 = vld [vmem:[%s5 + $0x1c0] sm:$0xff]
  %v10021 = vld [vmem:[%s5 + $0x1c8] sm:$0xff]
  %v10022 = vld [vmem:[%s5 + $0x1d0] sm:$0xff]
  %v10023 = vld [vmem:[%s5 + $0x1d8] sm:$0xff]
  %v10024 = vld [vmem:[%s5 + $0x1e0] sm:$0xff]
  %v10025 = vld [vmem:[%s5 + $0x1e8] sm:$0xff]
  %v10026 = vld [vmem:[%s5 + $0x1f0] sm:$0xff]
  %v10027 = vld [vmem:[%s5 + $0x1f8] sm:$0xff]
  %v10028 = vld [vmem:[%s6] sm:$0x3]
  %v10030 = vlaneseq
  %v10031 = vshrl.u32 %v10030, 7
  %v10032 = vsub.s32 0, %v10031
  %v10033 = vrot.slane %v10028, %v10032
  %v10034 = vlaneseq
  %v10035 = vshrl.u32 %v10034, 7
  %v10036 = vsub.s32 1, %v10035
  %v10037 = vrot.slane %v10028, %v10036
  %v10104 = vunpack.c.l.b16 %v9964
  %v10105 = vunpack.c.h.b16 %v9964
  %v10106 = vunpack.c.l.b16 %v9965
  %v10107 = vunpack.c.h.b16 %v9965
  %v10108 = vunpack.c.l.b16 %v9966
  %v10109 = vunpack.c.h.b16 %v9966
  %v10110 = vunpack.c.l.b16 %v9967
  %v10111 = vunpack.c.h.b16 %v9967
  %v10112 = vunpack.c.l.b16 %v9968
  %v10113 = vunpack.c.h.b16 %v9968
  %v10114 = vunpack.c.l.b16 %v9969
  %v10115 = vunpack.c.h.b16 %v9969
  %v10116 = vunpack.c.l.b16 %v9970
  %v10117 = vunpack.c.h.b16 %v9970
  %v10118 = vunpack.c.l.b16 %v9971
  %v10119 = vunpack.c.h.b16 %v9971
  %v10120 = vunpack.c.l.b16 %v9972
  %v10121 = vunpack.c.h.b16 %v9972
  %v10122 = vunpack.c.l.b16 %v9973
  %v10123 = vunpack.c.h.b16 %v9973
  %v10124 = vunpack.c.l.b16 %v9974
  %v10125 = vunpack.c.h.b16 %v9974
  %v10126 = vunpack.c.l.b16 %v9975
  %v10127 = vunpack.c.h.b16 %v9975
  %v10128 = vunpack.c.l.b16 %v9976
  %v10129 = vunpack.c.h.b16 %v9976
  %v10130 = vunpack.c.l.b16 %v9977
  %v10131 = vunpack.c.h.b16 %v9977
  %v10132 = vunpack.c.l.b16 %v9978
  %v10133 = vunpack.c.h.b16 %v9978
  %v10134 = vunpack.c.l.b16 %v9979
  %v10135 = vunpack.c.h.b16 %v9979
  %v10136 = vunpack.c.l.b16 %v9980
  %v10137 = vunpack.c.h.b16 %v9980
  %v10138 = vunpack.c.l.b16 %v9981
  %v10139 = vunpack.c.h.b16 %v9981
  %v10140 = vunpack.c.l.b16 %v9982
  %v10141 = vunpack.c.h.b16 %v9982
  %v10142 = vunpack.c.l.b16 %v9983
  %v10143 = vunpack.c.h.b16 %v9983
  %v10144 = vunpack.c.l.b16 %v9984
  %v10145 = vunpack.c.h.b16 %v9984
  %v10146 = vunpack.c.l.b16 %v9985
  %v10147 = vunpack.c.h.b16 %v9985
  %v10148 = vunpack.c.l.b16 %v9986
  %v10149 = vunpack.c.h.b16 %v9986
  %v10150 = vunpack.c.l.b16 %v9987
  %v10151 = vunpack.c.h.b16 %v9987
  %v10152 = vunpack.c.l.b16 %v9988
  %v10153 = vunpack.c.h.b16 %v9988
  %v10154 = vunpack.c.l.b16 %v9989
  %v10155 = vunpack.c.h.b16 %v9989
  %v10156 = vunpack.c.l.b16 %v9990
  %v10157 = vunpack.c.h.b16 %v9990
  %v10158 = vunpack.c.l.b16 %v9991
  %v10159 = vunpack.c.h.b16 %v9991
  %v10160 = vunpack.c.l.b16 %v9992
  %v10161 = vunpack.c.h.b16 %v9992
  %v10162 = vunpack.c.l.b16 %v9993
  %v10163 = vunpack.c.h.b16 %v9993
  %v10164 = vunpack.c.l.b16 %v9994
  %v10165 = vunpack.c.h.b16 %v9994
  %v10166 = vunpack.c.l.b16 %v9995
  %v10167 = vunpack.c.h.b16 %v9995
  %v10168 = vunpack.c.l.b16 %v9996
  %v10169 = vunpack.c.h.b16 %v9996
  %v10170 = vunpack.c.l.b16 %v9997
  %v10171 = vunpack.c.h.b16 %v9997
  %v10172 = vunpack.c.l.b16 %v9998
  %v10173 = vunpack.c.h.b16 %v9998
  %v10174 = vunpack.c.l.b16 %v9999
  %v10175 = vunpack.c.h.b16 %v9999
  %v10176 = vunpack.c.l.b16 %v10000
  %v10177 = vunpack.c.h.b16 %v10000
  %v10178 = vunpack.c.l.b16 %v10001
  %v10179 = vunpack.c.h.b16 %v10001
  %v10180 = vunpack.c.l.b16 %v10002
  %v10181 = vunpack.c.h.b16 %v10002
  %v10182 = vunpack.c.l.b16 %v10003
  %v10183 = vunpack.c.h.b16 %v10003
  %v10184 = vunpack.c.l.b16 %v10004
  %v10185 = vunpack.c.h.b16 %v10004
  %v10186 = vunpack.c.l.b16 %v10005
  %v10187 = vunpack.c.h.b16 %v10005
  %v10188 = vunpack.c.l.b16 %v10006
  %v10189 = vunpack.c.h.b16 %v10006
  %v10190 = vunpack.c.l.b16 %v10007
  %v10191 = vunpack.c.h.b16 %v10007
  %v10192 = vunpack.c.l.b16 %v10008
  %v10193 = vunpack.c.h.b16 %v10008
  %v10194 = vunpack.c.l.b16 %v10009
  %v10195 = vunpack.c.h.b16 %v10009
  %v10196 = vunpack.c.l.b16 %v10010
  %v10197 = vunpack.c.h.b16 %v10010
  %v10198 = vunpack.c.l.b16 %v10011
  %v10199 = vunpack.c.h.b16 %v10011
  %v10200 = vunpack.c.l.b16 %v10012
  %v10201 = vunpack.c.h.b16 %v10012
  %v10202 = vunpack.c.l.b16 %v10013
  %v10203 = vunpack.c.h.b16 %v10013
  %v10204 = vunpack.c.l.b16 %v10014
  %v10205 = vunpack.c.h.b16 %v10014
  %v10206 = vunpack.c.l.b16 %v10015
  %v10207 = vunpack.c.h.b16 %v10015
  %v10208 = vunpack.c.l.b16 %v10016
  %v10209 = vunpack.c.h.b16 %v10016
  %v10210 = vunpack.c.l.b16 %v10017
  %v10211 = vunpack.c.h.b16 %v10017
  %v10212 = vunpack.c.l.b16 %v10018
  %v10213 = vunpack.c.h.b16 %v10018
  %v10214 = vunpack.c.l.b16 %v10019
  %v10215 = vunpack.c.h.b16 %v10019
  %v10216 = vunpack.c.l.b16 %v10020
  %v10217 = vunpack.c.h.b16 %v10020
  %v10218 = vunpack.c.l.b16 %v10021
  %v10219 = vunpack.c.h.b16 %v10021
  %v10220 = vunpack.c.l.b16 %v10022
  %v10221 = vunpack.c.h.b16 %v10022
  %v10222 = vunpack.c.l.b16 %v10023
  %v10223 = vunpack.c.h.b16 %v10023
  %v10224 = vunpack.c.l.b16 %v10024
  %v10225 = vunpack.c.h.b16 %v10024
  %v10226 = vunpack.c.l.b16 %v10025
  %v10227 = vunpack.c.h.b16 %v10025
  %v10228 = vunpack.c.l.b16 %v10026
  %v10229 = vunpack.c.h.b16 %v10026
  %v10230 = vunpack.c.l.b16 %v10027
  %v10231 = vunpack.c.h.b16 %v10027
  %v10232 = vpack.c.b16 %v10106, %v10104
  %v10233 = vpack.c.b16 %v10107, %v10105
  %v10234 = vpack.c.b16 %v10110, %v10108
  %v10235 = vpack.c.b16 %v10111, %v10109
  %v10236 = vpack.c.b16 %v10114, %v10112
  %v10237 = vpack.c.b16 %v10115, %v10113
  %v10238 = vpack.c.b16 %v10118, %v10116
  %v10239 = vpack.c.b16 %v10119, %v10117
  %v10240 = vpack.c.b16 %v10122, %v10120
  %v10241 = vpack.c.b16 %v10123, %v10121
  %v10242 = vpack.c.b16 %v10126, %v10124
  %v10243 = vpack.c.b16 %v10127, %v10125
  %v10244 = vpack.c.b16 %v10130, %v10128
  %v10245 = vpack.c.b16 %v10131, %v10129
  %v10246 = vpack.c.b16 %v10134, %v10132
  %v10247 = vpack.c.b16 %v10135, %v10133
  %v10248 = vpack.c.b16 %v10138, %v10136
  %v10249 = vpack.c.b16 %v10139, %v10137
  %v10250 = vpack.c.b16 %v10142, %v10140
  %v10251 = vpack.c.b16 %v10143, %v10141
  %v10252 = vpack.c.b16 %v10146, %v10144
  %v10253 = vpack.c.b16 %v10147, %v10145
  %v10254 = vpack.c.b16 %v10150, %v10148
  %v10255 = vpack.c.b16 %v10151, %v10149
  %v10256 = vpack.c.b16 %v10154, %v10152
  %v10257 = vpack.c.b16 %v10155, %v10153
  %v10258 = vpack.c.b16 %v10158, %v10156
  %v10259 = vpack.c.b16 %v10159, %v10157
  %v10260 = vpack.c.b16 %v10162, %v10160
  %v10261 = vpack.c.b16 %v10163, %v10161
  %v10262 = vpack.c.b16 %v10166, %v10164
  %v10263 = vpack.c.b16 %v10167, %v10165
  %v10264 = vpack.c.b16 %v10170, %v10168
  %v10265 = vpack.c.b16 %v10171, %v10169
  %v10266 = vpack.c.b16 %v10174, %v10172
  %v10267 = vpack.c.b16 %v10175, %v10173
  %v10268 = vpack.c.b16 %v10178, %v10176
  %v10269 = vpack.c.b16 %v10179, %v10177
  %v10270 = vpack.c.b16 %v10182, %v10180
  %v10271 = vpack.c.b16 %v10183, %v10181
  %v10272 = vpack.c.b16 %v10186, %v10184
  %v10273 = vpack.c.b16 %v10187, %v10185
  %v10274 = vpack.c.b16 %v10190, %v10188
  %v10275 = vpack.c.b16 %v10191, %v10189
  %v10276 = vpack.c.b16 %v10194, %v10192
  %v10277 = vpack.c.b16 %v10195, %v10193
  %v10278 = vpack.c.b16 %v10198, %v10196
  %v10279 = vpack.c.b16 %v10199, %v10197
  %v10280 = vpack.c.b16 %v10202, %v10200
  %v10281 = vpack.c.b16 %v10203, %v10201
  %v10282 = vpack.c.b16 %v10206, %v10204
  %v10283 = vpack.c.b16 %v10207, %v10205
  %v10284 = vpack.c.b16 %v10210, %v10208
  %v10285 = vpack.c.b16 %v10211, %v10209
  %v10286 = vpack.c.b16 %v10214, %v10212
  %v10287 = vpack.c.b16 %v10215, %v10213
  %v10288 = vpack.c.b16 %v10218, %v10216
  %v10289 = vpack.c.b16 %v10219, %v10217
  %v10290 = vpack.c.b16 %v10222, %v10220
  %v10291 = vpack.c.b16 %v10223, %v10221
  %v10292 = vpack.c.b16 %v10226, %v10224
  %v10293 = vpack.c.b16 %v10227, %v10225
  %v10294 = vpack.c.b16 %v10230, %v10228
  %v10295 = vpack.c.b16 %v10231, %v10229
  %10360 = vmatprep.subr.bf16.mxu0 %v10233
  %10361 = vmatpush1.bf16.msra.mxu0 %v10232
  %10362 = vmatprep.subr.bf16.mxu0 %v10235
  %10363 = vmatpush1.bf16.msra.mxu0 %v10234
  %10364 = vmatprep.subr.bf16.mxu0 %v10237
  %10365 = vmatpush1.bf16.msra.mxu0 %v10236
  %10366 = vmatprep.subr.bf16.mxu0 %v10239
  %10367 = vmatpush1.bf16.msra.mxu0 %v10238
  %10368 = vmatprep.subr.bf16.mxu0 %v10241
  %10369 = vmatpush1.bf16.msra.mxu0 %v10240
  %10370 = vmatprep.subr.bf16.mxu0 %v10243
  %10371 = vmatpush1.bf16.msra.mxu0 %v10242
  %10372 = vmatprep.subr.bf16.mxu0 %v10245
  %10373 = vmatpush1.bf16.msra.mxu0 %v10244
  %10374 = vmatprep.subr.bf16.mxu0 %v10247
  %10375 = vmatpush1.bf16.msra.mxu0 %v10246
  %10376 = vmatprep.subr.bf16.mxu0 %v10249
  %10377 = vmatpush1.bf16.msra.mxu0 %v10248
  %10378 = vmatprep.subr.bf16.mxu0 %v10251
  %10379 = vmatpush1.bf16.msra.mxu0 %v10250
  %10380 = vmatprep.subr.bf16.mxu0 %v10253
  %10381 = vmatpush1.bf16.msra.mxu0 %v10252
  %10382 = vmatprep.subr.bf16.mxu0 %v10255
  %10383 = vmatpush1.bf16.msra.mxu0 %v10254
  %10384 = vmatprep.subr.bf16.mxu0 %v10257
  %10385 = vmatpush1.bf16.msra.mxu0 %v10256
  %10386 = vmatprep.subr.bf16.mxu0 %v10259
  %10387 = vmatpush1.bf16.msra.mxu0 %v10258
  %10388 = vmatprep.subr.bf16.mxu0 %v10261
  %10389 = vmatpush1.bf16.msra.mxu0 %v10260
  %10390 = vmatprep.subr.bf16.mxu0 %v10263
  %10391 = vmatpush1.bf16.msra.mxu0 %v10262
  %10392 = vmatprep.mubr.bf16.mxu0 %v9901
  %10393 = vmatmul.mubr.bf16.gmra.mrb[0].mxu0 %v9900
  %v10394 = vpop.f32.mrb[0].mxu0
  %v10395 = vadd.f32 %v10033, %v10394
  %v10396 = vpop.f32.mrb[0].mxu0
  %v10397 = vadd.f32 %v10037, %v10396
  %v10398 = vpop.f32.mrb[0].mxu0
  %v10399 = vadd.f32 %v10033, %v10398
  %v10400 = vpop.f32.mrb[0].mxu0
  %v10401 = vadd.f32 %v10037, %v10400
  %10402 = vmatprep.mubr.bf16.mxu0 %v9905
  %10403 = vmatmul.mubr.bf16.gmra.mrb[0].mxu0 %v9904
  %v10404 = vpop.f32.mrb[0].mxu0
  %v10405 = vadd.f32 %v10033, %v10404
  %v10406 = vpop.f32.mrb[0].mxu0
  %v10407 = vadd.f32 %v10037, %v10406
  %v10408 = vpop.f32.mrb[0].mxu0
  %v10409 = vadd.f32 %v10033, %v10408
  %v10410 = vpop.f32.mrb[0].mxu0
  %v10411 = vadd.f32 %v10037, %v10410
  %10412 = vmatprep.mubr.bf16.mxu0 %v9909
  %10413 = vmatmul.mubr.bf16.gmra.mrb[0].mxu0 %v9908
  %v10414 = vpop.f32.mrb[0].mxu0
  %v10415 = vadd.f32 %v10033, %v10414
  %v10416 = vpop.f32.mrb[0].mxu0
  %v10417 = vadd.f32 %v10037, %v10416
  %v10418 = vpop.f32.mrb[0].mxu0
  %v10419 = vadd.f32 %v10033, %v10418
  %v10420 = vpop.f32.mrb[0].mxu0
  %v10421 = vadd.f32 %v10037, %v10420
  %10422 = vmatprep.mubr.bf16.mxu0 %v9913
  %10423 = vmatmul.mubr.bf16.gmra.mrb[0].mxu0 %v9912
  %v10424 = vpop.f32.mrb[0].mxu0
  %v10425 = vadd.f32 %v10033, %v10424
  %v10426 = vpop.f32.mrb[0].mxu0
  %v10427 = vadd.f32 %v10037, %v10426
  %v10428 = vpop.f32.mrb[0].mxu0
  %v10429 = vadd.f32 %v10033, %v10428
  %v10430 = vpop.f32.mrb[0].mxu0
  %v10431 = vadd.f32 %v10037, %v10430
  %10432 = vmatprep.mubr.bf16.mxu0 %v9917
  %10433 = vmatmul.mubr.bf16.gmra.mrb[0].mxu0 %v9916
  %v10434 = vpop.f32.mrb[0].mxu0
  %v10435 = vadd.f32 %v10033, %v10434
  %v10436 = vpop.f32.mrb[0].mxu0
  %v10437 = vadd.f32 %v10037, %v10436
  %v10438 = vpop.f32.mrb[0].mxu0
  %v10439 = vadd.f32 %v10033, %v10438
  %v10440 = vpop.f32.mrb[0].mxu0
  %v10441 = vadd.f32 %v10037, %v10440
  %10442 = vmatprep.mubr.bf16.mxu0 %v9921
  %10443 = vmatmul.mubr.bf16.gmra.mrb[0].mxu0 %v9920
  %v10444 = vpop.f32.mrb[0].mxu0
  %v10445 = vadd.f32 %v10033, %v10444
  %v10446 = vpop.f32.mrb[0].mxu0
  %v10447 = vadd.f32 %v10037, %v10446
  %v10448 = vpop.f32.mrb[0].mxu0
  %v10449 = vadd.f32 %v10033, %v10448
  %v10450 = vpop.f32.mrb[0].mxu0
  %v10451 = vadd.f32 %v10037, %v10450
  %10452 = vmatprep.mubr.bf16.mxu0 %v9925
  %10453 = vmatmul.mubr.bf16.gmra.mrb[0].mxu0 %v9924
  %v10454 = vpop.f32.mrb[0].mxu0
  %v10455 = vadd.f32 %v10033, %v10454
  %v10456 = vpop.f32.mrb[0].mxu0
  %v10457 = vadd.f32 %v10037, %v10456
  %v10458 = vpop.f32.mrb[0].mxu0
  %v10459 = vadd.f32 %v10033, %v10458
  %v10460 = vpop.f32.mrb[0].mxu0
  %v10461 = vadd.f32 %v10037, %v10460
  %10462 = vmatprep.mubr.bf16.mxu0 %v9929
  %10463 = vmatmul.mubr.bf16.gmra.mrb[0].mxu0 %v9928
  %v10464 = vpop.f32.mrb[0].mxu0
  %v10465 = vadd.f32 %v10033, %v10464
  %v10466 = vpop.f32.mrb[0].mxu0
  %v10467 = vadd.f32 %v10037, %v10466
  %v10468 = vpop.f32.mrb[0].mxu0
  %v10469 = vadd.f32 %v10033, %v10468
  %v10470 = vpop.f32.mrb[0].mxu0
  %v10471 = vadd.f32 %v10037, %v10470
  %10472 = vmatprep.mubr.bf16.mxu0 %v9933
  %10473 = vmatmul.mubr.bf16.gmra.mrb[0].mxu0 %v9932
  %v10474 = vpop.f32.mrb[0].mxu0
  %v10475 = vadd.f32 %v10033, %v10474
  %v10476 = vpop.f32.mrb[0].mxu0
  %v10477 = vadd.f32 %v10037, %v10476
  %v10478 = vpop.f32.mrb[0].mxu0
  %v10479 = vadd.f32 %v10033, %v10478
  %v10480 = vpop.f32.mrb[0].mxu0
  %v10481 = vadd.f32 %v10037, %v10480
  %10482 = vmatprep.mubr.bf16.mxu0 %v9937
  %10483 = vmatmul.mubr.bf16.gmra.mrb[0].mxu0 %v9936
  %v10484 = vpop.f32.mrb[0].mxu0
  %v10485 = vadd.f32 %v10033, %v10484
  %v10486 = vpop.f32.mrb[0].mxu0
  %v10487 = vadd.f32 %v10037, %v10486
  %v10488 = vpop.f32.mrb[0].mxu0
  %v10489 = vadd.f32 %v10033, %v10488
  %v10490 = vpop.f32.mrb[0].mxu0
  %v10491 = vadd.f32 %v10037, %v10490
  %10492 = vmatprep.mubr.bf16.mxu0 %v9941
  %10493 = vmatmul.mubr.bf16.gmra.mrb[0].mxu0 %v9940
  %v10494 = vpop.f32.mrb[0].mxu0
  %v10495 = vadd.f32 %v10033, %v10494
  %v10496 = vpop.f32.mrb[0].mxu0
  %v10497 = vadd.f32 %v10037, %v10496
  %v10498 = vpop.f32.mrb[0].mxu0
  %v10499 = vadd.f32 %v10033, %v10498
  %v10500 = vpop.f32.mrb[0].mxu0
  %v10501 = vadd.f32 %v10037, %v10500
  %10502 = vmatprep.mubr.bf16.mxu0 %v9945
  %10503 = vmatmul.mubr.bf16.gmra.mrb[0].mxu0 %v9944
  %v10504 = vpop.f32.mrb[0].mxu0
  %v10505 = vadd.f32 %v10033, %v10504
  %v10506 = vpop.f32.mrb[0].mxu0
  %v10507 = vadd.f32 %v10037, %v10506
  %v10508 = vpop.f32.mrb[0].mxu0
  %v10509 = vadd.f32 %v10033, %v10508
  %v10510 = vpop.f32.mrb[0].mxu0
  %v10511 = vadd.f32 %v10037, %v10510
  %10512 = vmatprep.mubr.bf16.mxu0 %v9949
  %10513 = vmatmul.mubr.bf16.gmra.mrb[0].mxu0 %v9948
  %v10514 = vpop.f32.mrb[0].mxu0
  %v10515 = vadd.f32 %v10033, %v10514
  %v10516 = vpop.f32.mrb[0].mxu0
  %v10517 = vadd.f32 %v10037, %v10516
  %v10518 = vpop.f32.mrb[0].mxu0
  %v10519 = vadd.f32 %v10033, %v10518
  %v10520 = vpop.f32.mrb[0].mxu0
  %v10521 = vadd.f32 %v10037, %v10520
  %10522 = vmatprep.mubr.bf16.mxu0 %v9953
  %10523 = vmatmul.mubr.bf16.gmra.mrb[0].mxu0 %v9952
  %v10524 = vpop.f32.mrb[0].mxu0
  %v10525 = vadd.f32 %v10033, %v10524
  %v10526 = vpop.f32.mrb[0].mxu0
  %v10527 = vadd.f32 %v10037, %v10526
  %v10528 = vpop.f32.mrb[0].mxu0
  %v10529 = vadd.f32 %v10033, %v10528
  %v10530 = vpop.f32.mrb[0].mxu0
  %v10531 = vadd.f32 %v10037, %v10530
  %10532 = vmatprep.mubr.bf16.mxu0 %v9957
  %10533 = vmatmul.mubr.bf16.gmra.mrb[0].mxu0 %v9956
  %v10534 = vpop.f32.mrb[0].mxu0
  %v10535 = vadd.f32 %v10033, %v10534
  %v10536 = vpop.f32.mrb[0].mxu0
  %v10537 = vadd.f32 %v10037, %v10536
  %v10538 = vpop.f32.mrb[0].mxu0
  %v10539 = vadd.f32 %v10033, %v10538
  %v10540 = vpop.f32.mrb[0].mxu0
  %v10541 = vadd.f32 %v10037, %v10540
  %10542 = vmatprep.mubr.bf16.mxu0 %v9961
  %10543 = vmatmul.mubr.bf16.gmra.mrb[0].mxu0 %v9960
  %v10544 = vpop.f32.mrb[0].mxu0
  %v10545 = vadd.f32 %v10033, %v10544
  %v10546 = vpop.f32.mrb[0].mxu0
  %v10547 = vadd.f32 %v10037, %v10546
  %v10548 = vpop.f32.mrb[0].mxu0
  %v10549 = vadd.f32 %v10033, %v10548
  %v10550 = vpop.f32.mrb[0].mxu0
  %v10551 = vadd.f32 %v10037, %v10550
  %10552 = vdwg.mxu0
  %10553 = vmatprep.subr.bf16.mxu0 %v10265
  %10554 = vmatpush1.bf16.msra.mxu0 %v10264
  %10555 = vmatprep.subr.bf16.mxu0 %v10267
  %10556 = vmatpush1.bf16.msra.mxu0 %v10266
  %10557 = vmatprep.subr.bf16.mxu0 %v10269
  %10558 = vmatpush1.bf16.msra.mxu0 %v10268
  %10559 = vmatprep.subr.bf16.mxu0 %v10271
  %10560 = vmatpush1.bf16.msra.mxu0 %v10270
  %10561 = vmatprep.subr.bf16.mxu0 %v10273
  %10562 = vmatpush1.bf16.msra.mxu0 %v10272
  %10563 = vmatprep.subr.bf16.mxu0 %v10275
  %10564 = vmatpush1.bf16.msra.mxu0 %v10274
  %10565 = vmatprep.subr.bf16.mxu0 %v10277
  %10566 = vmatpush1.bf16.msra.mxu0 %v10276
  %10567 = vmatprep.subr.bf16.mxu0 %v10279
  %10568 = vmatpush1.bf16.msra.mxu0 %v10278
  %10569 = vmatprep.subr.bf16.mxu0 %v10281
  %10570 = vmatpush1.bf16.msra.mxu0 %v10280
  %10571 = vmatprep.subr.bf16.mxu0 %v10283
  %10572 = vmatpush1.bf16.msra.mxu0 %v10282
  %10573 = vmatprep.subr.bf16.mxu0 %v10285
  %10574 = vmatpush1.bf16.msra.mxu0 %v10284
  %10575 = vmatprep.subr.bf16.mxu0 %v10287
  %10576 = vmatpush1.bf16.msra.mxu0 %v10286
  %10577 = vmatprep.subr.bf16.mxu0 %v10289
  %10578 = vmatpush1.bf16.msra.mxu0 %v10288
  %10579 = vmatprep.subr.bf16.mxu0 %v10291
  %10580 = vmatpush1.bf16.msra.mxu0 %v10290
  %10581 = vmatprep.subr.bf16.mxu0 %v10293
  %10582 = vmatpush1.bf16.msra.mxu0 %v10292
  %10583 = vmatprep.subr.bf16.mxu0 %v10295
  %10584 = vmatpush1.bf16.msra.mxu0 %v10294
  %10585 = vmatprep.mubr.bf16.mxu0 %v9903
  %10586 = vmatmul.mubr.bf16.gmra.mrb[0].mxu0 %v9902
  %v10587 = vpop.f32.mrb[0].mxu0
  %v10588 = vadd.f32 %v10395, %v10587
  %v10589 = vpop.f32.mrb[0].mxu0
  %v10590 = vadd.f32 %v10397, %v10589
  %v10591 = vpop.f32.mrb[0].mxu0
  %v10592 = vadd.f32 %v10399, %v10591
  %v10593 = vpop.f32.mrb[0].mxu0
  %v10594 = vadd.f32 %v10401, %v10593
  %10595 = vmatprep.mubr.bf16.mxu0 %v9907
  %10596 = vmatmul.mubr.bf16.gmra.mrb[0].mxu0 %v9906
  %v10597 = vpop.f32.mrb[0].mxu0
  %v10598 = vadd.f32 %v10405, %v10597
  %v10599 = vpop.f32.mrb[0].mxu0
  %v10600 = vadd.f32 %v10407, %v10599
  %v10601 = vpop.f32.mrb[0].mxu0
  %v10602 = vadd.f32 %v10409, %v10601
  %v10603 = vpop.f32.mrb[0].mxu0
  %v10604 = vadd.f32 %v10411, %v10603
  %10605 = vmatprep.mubr.bf16.mxu0 %v9911
  %10606 = vmatmul.mubr.bf16.gmra.mrb[0].mxu0 %v9910
  %v10607 = vpop.f32.mrb[0].mxu0
  %v10608 = vadd.f32 %v10415, %v10607
  %v10609 = vpop.f32.mrb[0].mxu0
  %v10610 = vadd.f32 %v10417, %v10609
  %v10611 = vpop.f32.mrb[0].mxu0
  %v10612 = vadd.f32 %v10419, %v10611
  %v10613 = vpop.f32.mrb[0].mxu0
  %v10614 = vadd.f32 %v10421, %v10613
  %10615 = vmatprep.mubr.bf16.mxu0 %v9915
  %10616 = vmatmul.mubr.bf16.gmra.mrb[0].mxu0 %v9914
  %v10617 = vpop.f32.mrb[0].mxu0
  %v10618 = vadd.f32 %v10425, %v10617
  %v10619 = vpop.f32.mrb[0].mxu0
  %v10620 = vadd.f32 %v10427, %v10619
  %v10621 = vpop.f32.mrb[0].mxu0
  %v10622 = vadd.f32 %v10429, %v10621
  %v10623 = vpop.f32.mrb[0].mxu0
  %v10624 = vadd.f32 %v10431, %v10623
  %10625 = vmatprep.mubr.bf16.mxu0 %v9919
  %10626 = vmatmul.mubr.bf16.gmra.mrb[0].mxu0 %v9918
  %v10627 = vpop.f32.mrb[0].mxu0
  %v10628 = vadd.f32 %v10435, %v10627
  %v10629 = vpop.f32.mrb[0].mxu0
  %v10630 = vadd.f32 %v10437, %v10629
  %v10631 = vpop.f32.mrb[0].mxu0
  %v10632 = vadd.f32 %v10439, %v10631
  %v10633 = vpop.f32.mrb[0].mxu0
  %v10634 = vadd.f32 %v10441, %v10633
  %10635 = vmatprep.mubr.bf16.mxu0 %v9923
  %10636 = vmatmul.mubr.bf16.gmra.mrb[0].mxu0 %v9922
  %v10637 = vpop.f32.mrb[0].mxu0
  %v10638 = vadd.f32 %v10445, %v10637
  %v10639 = vpop.f32.mrb[0].mxu0
  %v10640 = vadd.f32 %v10447, %v10639
  %v10641 = vpop.f32.mrb[0].mxu0
  %v10642 = vadd.f32 %v10449, %v10641
  %v10643 = vpop.f32.mrb[0].mxu0
  %v10644 = vadd.f32 %v10451, %v10643
  %10645 = vmatprep.mubr.bf16.mxu0 %v9927
  %10646 = vmatmul.mubr.bf16.gmra.mrb[0].mxu0 %v9926
  %v10647 = vpop.f32.mrb[0].mxu0
  %v10648 = vadd.f32 %v10455, %v10647
  %v10649 = vpop.f32.mrb[0].mxu0
  %v10650 = vadd.f32 %v10457, %v10649
  %v10651 = vpop.f32.mrb[0].mxu0
  %v10652 = vadd.f32 %v10459, %v10651
  %v10653 = vpop.f32.mrb[0].mxu0
  %v10654 = vadd.f32 %v10461, %v10653
  %10655 = vmatprep.mubr.bf16.mxu0 %v9931
  %10656 = vmatmul.mubr.bf16.gmra.mrb[0].mxu0 %v9930
  %v10657 = vpop.f32.mrb[0].mxu0
  %v10658 = vadd.f32 %v10465, %v10657
  %v10659 = vpop.f32.mrb[0].mxu0
  %v10660 = vadd.f32 %v10467, %v10659
  %v10661 = vpop.f32.mrb[0].mxu0
  %v10662 = vadd.f32 %v10469, %v10661
  %v10663 = vpop.f32.mrb[0].mxu0
  %v10664 = vadd.f32 %v10471, %v10663
  %10665 = vmatprep.mubr.bf16.mxu0 %v9935
  %10666 = vmatmul.mubr.bf16.gmra.mrb[0].mxu0 %v9934
  %v10667 = vpop.f32.mrb[0].mxu0
  %v10668 = vadd.f32 %v10475, %v10667
  %v10669 = vpop.f32.mrb[0].mxu0
  %v10670 = vadd.f32 %v10477, %v10669
  %v10671 = vpop.f32.mrb[0].mxu0
  %v10672 = vadd.f32 %v10479, %v10671
  %v10673 = vpop.f32.mrb[0].mxu0
  %v10674 = vadd.f32 %v10481, %v10673
  %10675 = vmatprep.mubr.bf16.mxu0 %v9939
  %10676 = vmatmul.mubr.bf16.gmra.mrb[0].mxu0 %v9938
  %v10677 = vpop.f32.mrb[0].mxu0
  %v10678 = vadd.f32 %v10485, %v10677
  %v10679 = vpop.f32.mrb[0].mxu0
  %v10680 = vadd.f32 %v10487, %v10679
  %v10681 = vpop.f32.mrb[0].mxu0
  %v10682 = vadd.f32 %v10489, %v10681
  %v10683 = vpop.f32.mrb[0].mxu0
  %v10684 = vadd.f32 %v10491, %v10683
  %10685 = vmatprep.mubr.bf16.mxu0 %v9943
  %10686 = vmatmul.mubr.bf16.gmra.mrb[0].mxu0 %v9942
  %v10687 = vpop.f32.mrb[0].mxu0
  %v10688 = vadd.f32 %v10495, %v10687
  %v10689 = vpop.f32.mrb[0].mxu0
  %v10690 = vadd.f32 %v10497, %v10689
  %v10691 = vpop.f32.mrb[0].mxu0
  %v10692 = vadd.f32 %v10499, %v10691
  %v10693 = vpop.f32.mrb[0].mxu0
  %v10694 = vadd.f32 %v10501, %v10693
  %10695 = vmatprep.mubr.bf16.mxu0 %v9947
  %10696 = vmatmul.mubr.bf16.gmra.mrb[0].mxu0 %v9946
  %v10697 = vpop.f32.mrb[0].mxu0
  %v10698 = vadd.f32 %v10505, %v10697
  %v10699 = vpop.f32.mrb[0].mxu0
  %v10700 = vadd.f32 %v10507, %v10699
  %v10701 = vpop.f32.mrb[0].mxu0
  %v10702 = vadd.f32 %v10509, %v10701
  %v10703 = vpop.f32.mrb[0].mxu0
  %v10704 = vadd.f32 %v10511, %v10703
  %10705 = vmatprep.mubr.bf16.mxu0 %v9951
  %10706 = vmatmul.mubr.bf16.gmra.mrb[0].mxu0 %v9950
  %v10707 = vpop.f32.mrb[0].mxu0
  %v10708 = vadd.f32 %v10515, %v10707
  %v10709 = vpop.f32.mrb[0].mxu0
  %v10710 = vadd.f32 %v10517, %v10709
  %v10711 = vpop.f32.mrb[0].mxu0
  %v10712 = vadd.f32 %v10519, %v10711
  %v10713 = vpop.f32.mrb[0].mxu0
  %v10714 = vadd.f32 %v10521, %v10713
  %10715 = vmatprep.mubr.bf16.mxu0 %v9955
  %10716 = vmatmul.mubr.bf16.gmra.mrb[0].mxu0 %v9954
  %v10717 = vpop.f32.mrb[0].mxu0
  %v10718 = vadd.f32 %v10525, %v10717
  %v10719 = vpop.f32.mrb[0].mxu0
  %v10720 = vadd.f32 %v10527, %v10719
  %v10721 = vpop.f32.mrb[0].mxu0
  %v10722 = vadd.f32 %v10529, %v10721
  %v10723 = vpop.f32.mrb[0].mxu0
  %v10724 = vadd.f32 %v10531, %v10723
  %10725 = vmatprep.mubr.bf16.mxu0 %v9959
  %10726 = vmatmul.mubr.bf16.gmra.mrb[0].mxu0 %v9958
  %v10727 = vpop.f32.mrb[0].mxu0
  %v10728 = vadd.f32 %v10535, %v10727
  %v10729 = vpop.f32.mrb[0].mxu0
  %v10730 = vadd.f32 %v10537, %v10729
  %v10731 = vpop.f32.mrb[0].mxu0
  %v10732 = vadd.f32 %v10539, %v10731
  %v10733 = vpop.f32.mrb[0].mxu0
  %v10734 = vadd.f32 %v10541, %v10733
  %10735 = vmatprep.mubr.bf16.mxu0 %v9963
  %10736 = vmatmul.mubr.bf16.gmra.mrb[0].mxu0 %v9962
  %v10737 = vpop.f32.mrb[0].mxu0
  %v10738 = vadd.f32 %v10545, %v10737
  %v10739 = vpop.f32.mrb[0].mxu0
  %v10740 = vadd.f32 %v10547, %v10739
  %v10741 = vpop.f32.mrb[0].mxu0
  %v10742 = vadd.f32 %v10549, %v10741
  %v10743 = vpop.f32.mrb[0].mxu0
  %v10744 = vadd.f32 %v10551, %v10743
  %10745 = vdwg.mxu0
  %v10746 = vmul.f32 %v10588, 0.2
  %v10747 = vmul.f32 %v10590, 0.2
  %v10748 = vmul.f32 %v10592, 0.2
  %v10749 = vmul.f32 %v10594, 0.2
  %v10750 = vmul.f32 %v10598, 0.2
  %v10751 = vmul.f32 %v10600, 0.2
  %v10752 = vmul.f32 %v10602, 0.2
  %v10753 = vmul.f32 %v10604, 0.2
  %v10754 = vmul.f32 %v10608, 0.2
  %v10755 = vmul.f32 %v10610, 0.2
  %v10756 = vmul.f32 %v10612, 0.2
  %v10757 = vmul.f32 %v10614, 0.2
  %v10758 = vmul.f32 %v10618, 0.2
  %v10759 = vmul.f32 %v10620, 0.2
  %v10760 = vmul.f32 %v10622, 0.2
  %v10761 = vmul.f32 %v10624, 0.2
  %v10762 = vmul.f32 %v10628, 0.2
  %v10763 = vmul.f32 %v10630, 0.2
  %v10764 = vmul.f32 %v10632, 0.2
  %v10765 = vmul.f32 %v10634, 0.2
  %v10766 = vmul.f32 %v10638, 0.2
  %v10767 = vmul.f32 %v10640, 0.2
  %v10768 = vmul.f32 %v10642, 0.2
  %v10769 = vmul.f32 %v10644, 0.2
  %v10770 = vmul.f32 %v10648, 0.2
  %v10771 = vmul.f32 %v10650, 0.2
  %v10772 = vmul.f32 %v10652, 0.2
  %v10773 = vmul.f32 %v10654, 0.2
  %v10774 = vmul.f32 %v10658, 0.2
  %v10775 = vmul.f32 %v10660, 0.2
  %v10776 = vmul.f32 %v10662, 0.2
  %v10777 = vmul.f32 %v10664, 0.2
  %v10778 = vmul.f32 %v10668, 0.2
  %v10779 = vmul.f32 %v10670, 0.2
  %v10780 = vmul.f32 %v10672, 0.2
  %v10781 = vmul.f32 %v10674, 0.2
  %v10782 = vmul.f32 %v10678, 0.2
  %v10783 = vmul.f32 %v10680, 0.2
  %v10784 = vmul.f32 %v10682, 0.2
  %v10785 = vmul.f32 %v10684, 0.2
  %v10786 = vmul.f32 %v10688, 0.2
  %v10787 = vmul.f32 %v10690, 0.2
  %v10788 = vmul.f32 %v10692, 0.2
  %v10789 = vmul.f32 %v10694, 0.2
  %v10790 = vmul.f32 %v10698, 0.2
  %v10791 = vmul.f32 %v10700, 0.2
  %v10792 = vmul.f32 %v10702, 0.2
  %v10793 = vmul.f32 %v10704, 0.2
  %v10794 = vmul.f32 %v10708, 0.2
  %v10795 = vmul.f32 %v10710, 0.2
  %v10796 = vmul.f32 %v10712, 0.2
  %v10797 = vmul.f32 %v10714, 0.2
  %v10798 = vmul.f32 %v10718, 0.2
  %v10799 = vmul.f32 %v10720, 0.2
  %v10800 = vmul.f32 %v10722, 0.2
  %v10801 = vmul.f32 %v10724, 0.2
  %v10802 = vmul.f32 %v10728, 0.2
  %v10803 = vmul.f32 %v10730, 0.2
  %v10804 = vmul.f32 %v10732, 0.2
  %v10805 = vmul.f32 %v10734, 0.2
  %v10806 = vmul.f32 %v10738, 0.2
  %v10807 = vmul.f32 %v10740, 0.2
  %v10808 = vmul.f32 %v10742, 0.2
  %v10809 = vmul.f32 %v10744, 0.2
  %v10810 = vmax.f32 %v10588, %v10746
  %v10811 = vmax.f32 %v10590, %v10747
  %v10812 = vmax.f32 %v10592, %v10748
  %v10813 = vmax.f32 %v10594, %v10749
  %v10814 = vmax.f32 %v10598, %v10750
  %v10815 = vmax.f32 %v10600, %v10751
  %v10816 = vmax.f32 %v10602, %v10752
  %v10817 = vmax.f32 %v10604, %v10753
  %v10818 = vmax.f32 %v10608, %v10754
  %v10819 = vmax.f32 %v10610, %v10755
  %v10820 = vmax.f32 %v10612, %v10756
  %v10821 = vmax.f32 %v10614, %v10757
  %v10822 = vmax.f32 %v10618, %v10758
  %v10823 = vmax.f32 %v10620, %v10759
  %v10824 = vmax.f32 %v10622, %v10760
  %v10825 = vmax.f32 %v10624, %v10761
  %v10826 = vmax.f32 %v10628, %v10762
  %v10827 = vmax.f32 %v10630, %v10763
  %v10828 = vmax.f32 %v10632, %v10764
  %v10829 = vmax.f32 %v10634, %v10765
  %v10830 = vmax.f32 %v10638, %v10766
  %v10831 = vmax.f32 %v10640, %v10767
  %v10832 = vmax.f32 %v10642, %v10768
  %v10833 = vmax.f32 %v10644, %v10769
  %v10834 = vmax.f32 %v10648, %v10770
  %v10835 = vmax.f32 %v10650, %v10771
  %v10836 = vmax.f32 %v10652, %v10772
  %v10837 = vmax.f32 %v10654, %v10773
  %v10838 = vmax.f32 %v10658, %v10774
  %v10839 = vmax.f32 %v10660, %v10775
  %v10840 = vmax.f32 %v10662, %v10776
  %v10841 = vmax.f32 %v10664, %v10777
  %v10842 = vmax.f32 %v10668, %v10778
  %v10843 = vmax.f32 %v10670, %v10779
  %v10844 = vmax.f32 %v10672, %v10780
  %v10845 = vmax.f32 %v10674, %v10781
  %v10846 = vmax.f32 %v10678, %v10782
  %v10847 = vmax.f32 %v10680, %v10783
  %v10848 = vmax.f32 %v10682, %v10784
  %v10849 = vmax.f32 %v10684, %v10785
  %v10850 = vmax.f32 %v10688, %v10786
  %v10851 = vmax.f32 %v10690, %v10787
  %v10852 = vmax.f32 %v10692, %v10788
  %v10853 = vmax.f32 %v10694, %v10789
  %v10854 = vmax.f32 %v10698, %v10790
  %v10855 = vmax.f32 %v10700, %v10791
  %v10856 = vmax.f32 %v10702, %v10792
  %v10857 = vmax.f32 %v10704, %v10793
  %v10858 = vmax.f32 %v10708, %v10794
  %v10859 = vmax.f32 %v10710, %v10795
  %v10860 = vmax.f32 %v10712, %v10796
  %v10861 = vmax.f32 %v10714, %v10797
  %v10862 = vmax.f32 %v10718, %v10798
  %v10863 = vmax.f32 %v10720, %v10799
  %v10864 = vmax.f32 %v10722, %v10800
  %v10865 = vmax.f32 %v10724, %v10801
  %v10866 = vmax.f32 %v10728, %v10802
  %v10867 = vmax.f32 %v10730, %v10803
  %v10868 = vmax.f32 %v10732, %v10804
  %v10869 = vmax.f32 %v10734, %v10805
  %v10870 = vmax.f32 %v10738, %v10806
  %v10871 = vmax.f32 %v10740, %v10807
  %v10872 = vmax.f32 %v10742, %v10808
  %v10873 = vmax.f32 %v10744, %v10809
  %v10874 = vld [vmem:[%s7] sm:$0x3]
  %v10876 = vlaneseq
  %v10877 = vshrl.u32 %v10876, 7
  %v10878 = vsub.s32 0, %v10877
  %v10879 = vrot.slane %v10874, %v10878
  %v10880 = vlaneseq
  %v10881 = vshrl.u32 %v10880, 7
  %v10882 = vsub.s32 1, %v10881
  %v10883 = vrot.slane %v10874, %v10882
  %v10886 = vmul.f32 %v10810, %v10879
  %v10887 = vmul.f32 %v10811, %v10883
  %v10888 = vmul.f32 %v10812, %v10879
  %v10889 = vmul.f32 %v10813, %v10883
  %v10890 = vmul.f32 %v10814, %v10879
  %v10891 = vmul.f32 %v10815, %v10883
  %v10892 = vmul.f32 %v10816, %v10879
  %v10893 = vmul.f32 %v10817, %v10883
  %v10894 = vmul.f32 %v10818, %v10879
  %v10895 = vmul.f32 %v10819, %v10883
  %v10896 = vmul.f32 %v10820, %v10879
  %v10897 = vmul.f32 %v10821, %v10883
  %v10898 = vmul.f32 %v10822, %v10879
  %v10899 = vmul.f32 %v10823, %v10883
  %v10900 = vmul.f32 %v10824, %v10879
  %v10901 = vmul.f32 %v10825, %v10883
  %v10902 = vmul.f32 %v10826, %v10879
  %v10903 = vmul.f32 %v10827, %v10883
  %v10904 = vmul.f32 %v10828, %v10879
  %v10905 = vmul.f32 %v10829, %v10883
  %v10906 = vmul.f32 %v10830, %v10879
  %v10907 = vmul.f32 %v10831, %v10883
  %v10908 = vmul.f32 %v10832, %v10879
  %v10909 = vmul.f32 %v10833, %v10883
  %v10910 = vmul.f32 %v10834, %v10879
  %v10911 = vmul.f32 %v10835, %v10883
  %v10912 = vmul.f32 %v10836, %v10879
  %v10913 = vmul.f32 %v10837, %v10883
  %v10914 = vmul.f32 %v10838, %v10879
  %v10915 = vmul.f32 %v10839, %v10883
  %v10916 = vmul.f32 %v10840, %v10879
  %v10917 = vmul.f32 %v10841, %v10883
  %v10918 = vmul.f32 %v10842, %v10879
  %v10919 = vmul.f32 %v10843, %v10883
  %v10920 = vmul.f32 %v10844, %v10879
  %v10921 = vmul.f32 %v10845, %v10883
  %v10922 = vmul.f32 %v10846, %v10879
  %v10923 = vmul.f32 %v10847, %v10883
  %v10924 = vmul.f32 %v10848, %v10879
  %v10925 = vmul.f32 %v10849, %v10883
  %v10926 = vmul.f32 %v10850, %v10879
  %v10927 = vmul.f32 %v10851, %v10883
  %v10928 = vmul.f32 %v10852, %v10879
  %v10929 = vmul.f32 %v10853, %v10883
  %v10930 = vmul.f32 %v10854, %v10879
  %v10931 = vmul.f32 %v10855, %v10883
  %v10932 = vmul.f32 %v10856, %v10879
  %v10933 = vmul.f32 %v10857, %v10883
  %v10934 = vmul.f32 %v10858, %v10879
  %v10935 = vmul.f32 %v10859, %v10883
  %v10936 = vmul.f32 %v10860, %v10879
  %v10937 = vmul.f32 %v10861, %v10883
  %v10938 = vmul.f32 %v10862, %v10879
  %v10939 = vmul.f32 %v10863, %v10883
  %v10940 = vmul.f32 %v10864, %v10879
  %v10941 = vmul.f32 %v10865, %v10883
  %v10942 = vmul.f32 %v10866, %v10879
  %v10943 = vmul.f32 %v10867, %v10883
  %v10944 = vmul.f32 %v10868, %v10879
  %v10945 = vmul.f32 %v10869, %v10883
  %v10946 = vmul.f32 %v10870, %v10879
  %v10947 = vmul.f32 %v10871, %v10883
  %v10948 = vmul.f32 %v10872, %v10879
  %v10949 = vmul.f32 %v10873, %v10883
  %v10950 = vadd.f32 %v10886, %v10887
  %10951 = vadd.xlane.f32.xlu0 %v10950
  %v10952 = vpop.xlane.xlu0 %10951
  %v10953 = vadd.f32 %v10888, %v10889
  %10954 = vadd.xlane.f32.xlu0 %v10953
  %v10955 = vpop.xlane.xlu0 %10954
  %v10956 = vadd.f32 %v10890, %v10891
  %10957 = vadd.xlane.f32.xlu0 %v10956
  %v10958 = vpop.xlane.xlu0 %10957
  %v10959 = vadd.f32 %v10892, %v10893
  %10960 = vadd.xlane.f32.xlu0 %v10959
  %v10961 = vpop.xlane.xlu0 %10960
  %v10962 = vadd.f32 %v10894, %v10895
  %10963 = vadd.xlane.f32.xlu0 %v10962
  %v10964 = vpop.xlane.xlu0 %10963
  %v10965 = vadd.f32 %v10896, %v10897
  %10966 = vadd.xlane.f32.xlu0 %v10965
  %v10967 = vpop.xlane.xlu0 %10966
  %v10968 = vadd.f32 %v10898, %v10899
  %10969 = vadd.xlane.f32.xlu0 %v10968
  %v10970 = vpop.xlane.xlu0 %10969
  %v10971 = vadd.f32 %v10900, %v10901
  %10972 = vadd.xlane.f32.xlu0 %v10971
  %v10973 = vpop.xlane.xlu0 %10972
  %v10974 = vadd.f32 %v10902, %v10903
  %10975 = vadd.xlane.f32.xlu0 %v10974
  %v10976 = vpop.xlane.xlu0 %10975
  %v10977 = vadd.f32 %v10904, %v10905
  %10978 = vadd.xlane.f32.xlu0 %v10977
  %v10979 = vpop.xlane.xlu0 %10978
  %v10980 = vadd.f32 %v10906, %v10907
  %10981 = vadd.xlane.f32.xlu0 %v10980
  %v10982 = vpop.xlane.xlu0 %10981
  %v10983 = vadd.f32 %v10908, %v10909
  %10984 = vadd.xlane.f32.xlu0 %v10983
  %v10985 = vpop.xlane.xlu0 %10984
  %v10986 = vadd.f32 %v10910, %v10911
  %10987 = vadd.xlane.f32.xlu0 %v10986
  %v10988 = vpop.xlane.xlu0 %10987
  %v10989 = vadd.f32 %v10912, %v10913
  %10990 = vadd.xlane.f32.xlu0 %v10989
  %v10991 = vpop.xlane.xlu0 %10990
  %v10992 = vadd.f32 %v10914, %v10915
  %10993 = vadd.xlane.f32.xlu0 %v10992
  %v10994 = vpop.xlane.xlu0 %10993
  %v10995 = vadd.f32 %v10916, %v10917
  %10996 = vadd.xlane.f32.xlu0 %v10995
  %v10997 = vpop.xlane.xlu0 %10996
  %v10998 = vadd.f32 %v10918, %v10919
  %10999 = vadd.xlane.f32.xlu0 %v10998
  %v11000 = vpop.xlane.xlu0 %10999
  %v11001 = vadd.f32 %v10920, %v10921
  %11002 = vadd.xlane.f32.xlu0 %v11001
  %v11003 = vpop.xlane.xlu0 %11002
  %v11004 = vadd.f32 %v10922, %v10923
  %11005 = vadd.xlane.f32.xlu0 %v11004
  %v11006 = vpop.xlane.xlu0 %11005
  %v11007 = vadd.f32 %v10924, %v10925
  %11008 = vadd.xlane.f32.xlu0 %v11007
  %v11009 = vpop.xlane.xlu0 %11008
  %v11010 = vadd.f32 %v10926, %v10927
  %11011 = vadd.xlane.f32.xlu0 %v11010
  %v11012 = vpop.xlane.xlu0 %11011
  %v11013 = vadd.f32 %v10928, %v10929
  %11014 = vadd.xlane.f32.xlu0 %v11013
  %v11015 = vpop.xlane.xlu0 %11014
  %v11016 = vadd.f32 %v10930, %v10931
  %11017 = vadd.xlane.f32.xlu0 %v11016
  %v11018 = vpop.xlane.xlu0 %11017
  %v11019 = vadd.f32 %v10932, %v10933
  %11020 = vadd.xlane.f32.xlu0 %v11019
  %v11021 = vpop.xlane.xlu0 %11020
  %v11022 = vadd.f32 %v10934, %v10935
  %11023 = vadd.xlane.f32.xlu0 %v11022
  %v11024 = vpop.xlane.xlu0 %11023
  %v11025 = vadd.f32 %v10936, %v10937
  %11026 = vadd.xlane.f32.xlu0 %v11025
  %v11027 = vpop.xlane.xlu0 %11026
  %v11028 = vadd.f32 %v10938, %v10939
  %11029 = vadd.xlane.f32.xlu0 %v11028
  %v11030 = vpop.xlane.xlu0 %11029
  %v11031 = vadd.f32 %v10940, %v10941
  %11032 = vadd.xlane.f32.xlu0 %v11031
  %v11033 = vpop.xlane.xlu0 %11032
  %v11034 = vadd.f32 %v10942, %v10943
  %11035 = vadd.xlane.f32.xlu0 %v11034
  %v11036 = vpop.xlane.xlu0 %11035
  %v11037 = vadd.f32 %v10944, %v10945
  %11038 = vadd.xlane.f32.xlu0 %v11037
  %v11039 = vpop.xlane.xlu0 %11038
  %v11040 = vadd.f32 %v10946, %v10947
  %11041 = vadd.xlane.f32.xlu0 %v11040
  %v11042 = vpop.xlane.xlu0 %11041
  %v11043 = vadd.f32 %v10948, %v10949
  %11044 = vadd.xlane.f32.xlu0 %v11043
  %v11045 = vpop.xlane.xlu0 %11044
  %v11046 = vld [vmem:[#allocation2] sm:$0x1]
  %v11048 = vlaneseq
  %v11049 = vshrl.u32 %v11048, 7
  %v11050 = vsub.s32 0, %v11049
  %v11051 = vrot.slane %v11046, %v11050
  %v11053 = vadd.f32 %v10952, %v11051
  %v11054 = vadd.f32 %v10955, %v11051
  %v11055 = vadd.f32 %v10958, %v11051
  %v11056 = vadd.f32 %v10961, %v11051
  %v11057 = vadd.f32 %v10964, %v11051
  %v11058 = vadd.f32 %v10967, %v11051
  %v11059 = vadd.f32 %v10970, %v11051
  %v11060 = vadd.f32 %v10973, %v11051
  %v11061 = vadd.f32 %v10976, %v11051
  %v11062 = vadd.f32 %v10979, %v11051
  %v11063 = vadd.f32 %v10982, %v11051
  %v11064 = vadd.f32 %v10985, %v11051
  %v11065 = vadd.f32 %v10988, %v11051
  %v11066 = vadd.f32 %v10991, %v11051
  %v11067 = vadd.f32 %v10994, %v11051
  %v11068 = vadd.f32 %v10997, %v11051
  %v11069 = vadd.f32 %v11000, %v11051
  %v11070 = vadd.f32 %v11003, %v11051
  %v11071 = vadd.f32 %v11006, %v11051
  %v11072 = vadd.f32 %v11009, %v11051
  %v11073 = vadd.f32 %v11012, %v11051
  %v11074 = vadd.f32 %v11015, %v11051
  %v11075 = vadd.f32 %v11018, %v11051
  %v11076 = vadd.f32 %v11021, %v11051
  %v11077 = vadd.f32 %v11024, %v11051
  %v11078 = vadd.f32 %v11027, %v11051
  %v11079 = vadd.f32 %v11030, %v11051
  %v11080 = vadd.f32 %v11033, %v11051
  %v11081 = vadd.f32 %v11036, %v11051
  %v11082 = vadd.f32 %v11039, %v11051
  %v11083 = vadd.f32 %v11042, %v11051
  %v11084 = vadd.f32 %v11045, %v11051
  %v11085 = vxor.u32 %v11053, 2147483648
  %v11086 = vxor.u32 %v11054, 2147483648
  %v11087 = vxor.u32 %v11055, 2147483648
  %v11088 = vxor.u32 %v11056, 2147483648
  %v11089 = vxor.u32 %v11057, 2147483648
  %v11090 = vxor.u32 %v11058, 2147483648
  %v11091 = vxor.u32 %v11059, 2147483648
  %v11092 = vxor.u32 %v11060, 2147483648
  %v11093 = vxor.u32 %v11061, 2147483648
  %v11094 = vxor.u32 %v11062, 2147483648
  %v11095 = vxor.u32 %v11063, 2147483648
  %v11096 = vxor.u32 %v11064, 2147483648
  %v11097 = vxor.u32 %v11065, 2147483648
  %v11098 = vxor.u32 %v11066, 2147483648
  %v11099 = vxor.u32 %v11067, 2147483648
  %v11100 = vxor.u32 %v11068, 2147483648
  %v11101 = vxor.u32 %v11069, 2147483648
  %v11102 = vxor.u32 %v11070, 2147483648
  %v11103 = vxor.u32 %v11071, 2147483648
  %v11104 = vxor.u32 %v11072, 2147483648
  %v11105 = vxor.u32 %v11073, 2147483648
  %v11106 = vxor.u32 %v11074, 2147483648
  %v11107 = vxor.u32 %v11075, 2147483648
  %v11108 = vxor.u32 %v11076, 2147483648
  %v11109 = vxor.u32 %v11077, 2147483648
  %v11110 = vxor.u32 %v11078, 2147483648
  %v11111 = vxor.u32 %v11079, 2147483648
  %v11112 = vxor.u32 %v11080, 2147483648
  %v11113 = vxor.u32 %v11081, 2147483648
  %v11114 = vxor.u32 %v11082, 2147483648
  %v11115 = vxor.u32 %v11083, 2147483648
  %v11116 = vxor.u32 %v11084, 2147483648
  %v11117 = vmul.f32 %v11085, 1.442695
  %v11118 = vpow.pop %v11117
  %v11119 = vmul.f32 %v11086, 1.442695
  %v11120 = vpow.pop %v11119
  %v11121 = vmul.f32 %v11087, 1.442695
  %v11122 = vpow.pop %v11121
  %v11123 = vmul.f32 %v11088, 1.442695
  %v11124 = vpow.pop %v11123
  %v11125 = vmul.f32 %v11089, 1.442695
  %v11126 = vpow.pop %v11125
  %v11127 = vmul.f32 %v11090, 1.442695
  %v11128 = vpow.pop %v11127
  %v11129 = vmul.f32 %v11091, 1.442695
  %v11130 = vpow.pop %v11129
  %v11131 = vmul.f32 %v11092, 1.442695
  %v11132 = vpow.pop %v11131
  %v11133 = vmul.f32 %v11093, 1.442695
  %v11134 = vpow.pop %v11133
  %v11135 = vmul.f32 %v11094, 1.442695
  %v11136 = vpow.pop %v11135
  %v11137 = vmul.f32 %v11095, 1.442695
  %v11138 = vpow.pop %v11137
  %v11139 = vmul.f32 %v11096, 1.442695
  %v11140 = vpow.pop %v11139
  %v11141 = vmul.f32 %v11097, 1.442695
  %v11142 = vpow.pop %v11141
  %v11143 = vmul.f32 %v11098, 1.442695
  %v11144 = vpow.pop %v11143
  %v11145 = vmul.f32 %v11099, 1.442695
  %v11146 = vpow.pop %v11145
  %v11147 = vmul.f32 %v11100, 1.442695
  %v11148 = vpow.pop %v11147
  %v11149 = vmul.f32 %v11101, 1.442695
  %v11150 = vpow.pop %v11149
  %v11151 = vmul.f32 %v11102, 1.442695
  %v11152 = vpow.pop %v11151
  %v11153 = vmul.f32 %v11103, 1.442695
  %v11154 = vpow.pop %v11153
  %v11155 = vmul.f32 %v11104, 1.442695
  %v11156 = vpow.pop %v11155
  %v11157 = vmul.f32 %v11105, 1.442695
  %v11158 = vpow.pop %v11157
  %v11159 = vmul.f32 %v11106, 1.442695
  %v11160 = vpow.pop %v11159
  %v11161 = vmul.f32 %v11107, 1.442695
  %v11162 = vpow.pop %v11161
  %v11163 = vmul.f32 %v11108, 1.442695
  %v11164 = vpow.pop %v11163
  %v11165 = vmul.f32 %v11109, 1.442695
  %v11166 = vpow.pop %v11165
  %v11167 = vmul.f32 %v11110, 1.442695
  %v11168 = vpow.pop %v11167
  %v11169 = vmul.f32 %v11111, 1.442695
  %v11170 = vpow.pop %v11169
  %v11171 = vmul.f32 %v11112, 1.442695
  %v11172 = vpow.pop %v11171
  %v11173 = vmul.f32 %v11113, 1.442695
  %v11174 = vpow.pop %v11173
  %v11175 = vmul.f32 %v11114, 1.442695
  %v11176 = vpow.pop %v11175
  %v11177 = vmul.f32 %v11115, 1.442695
  %v11178 = vpow.pop %v11177
  %v11179 = vmul.f32 %v11116, 1.442695
  %v11180 = vpow.pop %v11179
  %v11181 = vadd.f32 %v11118, 1.0
  %v11182 = vadd.f32 %v11120, 1.0
  %v11183 = vadd.f32 %v11122, 1.0
  %v11184 = vadd.f32 %v11124, 1.0
  %v11185 = vadd.f32 %v11126, 1.0
  %v11186 = vadd.f32 %v11128, 1.0
  %v11187 = vadd.f32 %v11130, 1.0
  %v11188 = vadd.f32 %v11132, 1.0
  %v11189 = vadd.f32 %v11134, 1.0
  %v11190 = vadd.f32 %v11136, 1.0
  %v11191 = vadd.f32 %v11138, 1.0
  %v11192 = vadd.f32 %v11140, 1.0
  %v11193 = vadd.f32 %v11142, 1.0
  %v11194 = vadd.f32 %v11144, 1.0
  %v11195 = vadd.f32 %v11146, 1.0
  %v11196 = vadd.f32 %v11148, 1.0
  %v11197 = vadd.f32 %v11150, 1.0
  %v11198 = vadd.f32 %v11152, 1.0
  %v11199 = vadd.f32 %v11154, 1.0
  %v11200 = vadd.f32 %v11156, 1.0
  %v11201 = vadd.f32 %v11158, 1.0
  %v11202 = vadd.f32 %v11160, 1.0
  %v11203 = vadd.f32 %v11162, 1.0
  %v11204 = vadd.f32 %v11164, 1.0
  %v11205 = vadd.f32 %v11166, 1.0
  %v11206 = vadd.f32 %v11168, 1.0
  %v11207 = vadd.f32 %v11170, 1.0
  %v11208 = vadd.f32 %v11172, 1.0
  %v11209 = vadd.f32 %v11174, 1.0
  %v11210 = vadd.f32 %v11176, 1.0
  %v11211 = vadd.f32 %v11178, 1.0
  %v11212 = vadd.f32 %v11180, 1.0
  %v11213 = vrcp.pop %v11181
  %v11214 = vmul.f32 1.0, %v11213
  %v11215 = vrcp.pop %v11182
  %v11216 = vmul.f32 1.0, %v11215
  %v11217 = vrcp.pop %v11183
  %v11218 = vmul.f32 1.0, %v11217
  %v11219 = vrcp.pop %v11184
  %v11220 = vmul.f32 1.0, %v11219
  %v11221 = vrcp.pop %v11185
  %v11222 = vmul.f32 1.0, %v11221
  %v11223 = vrcp.pop %v11186
  %v11224 = vmul.f32 1.0, %v11223
  %v11225 = vrcp.pop %v11187
  %v11226 = vmul.f32 1.0, %v11225
  %v11227 = vrcp.pop %v11188
  %v11228 = vmul.f32 1.0, %v11227
  %v11229 = vrcp.pop %v11189
  %v11230 = vmul.f32 1.0, %v11229
  %v11231 = vrcp.pop %v11190
  %v11232 = vmul.f32 1.0, %v11231
  %v11233 = vrcp.pop %v11191
  %v11234 = vmul.f32 1.0, %v11233
  %v11235 = vrcp.pop %v11192
  %v11236 = vmul.f32 1.0, %v11235
  %v11237 = vrcp.pop %v11193
  %v11238 = vmul.f32 1.0, %v11237
  %v11239 = vrcp.pop %v11194
  %v11240 = vmul.f32 1.0, %v11239
  %v11241 = vrcp.pop %v11195
  %v11242 = vmul.f32 1.0, %v11241
  %v11243 = vrcp.pop %v11196
  %v11244 = vmul.f32 1.0, %v11243
  %v11245 = vrcp.pop %v11197
  %v11246 = vmul.f32 1.0, %v11245
  %v11247 = vrcp.pop %v11198
  %v11248 = vmul.f32 1.0, %v11247
  %v11249 = vrcp.pop %v11199
  %v11250 = vmul.f32 1.0, %v11249
  %v11251 = vrcp.pop %v11200
  %v11252 = vmul.f32 1.0, %v11251
  %v11253 = vrcp.pop %v11201
  %v11254 = vmul.f32 1.0, %v11253
  %v11255 = vrcp.pop %v11202
  %v11256 = vmul.f32 1.0, %v11255
  %v11257 = vrcp.pop %v11203
  %v11258 = vmul.f32 1.0, %v11257
  %v11259 = vrcp.pop %v11204
  %v11260 = vmul.f32 1.0, %v11259
  %v11261 = vrcp.pop %v11205
  %v11262 = vmul.f32 1.0, %v11261
  %v11263 = vrcp.pop %v11206
  %v11264 = vmul.f32 1.0, %v11263
  %v11265 = vrcp.pop %v11207
  %v11266 = vmul.f32 1.0, %v11265
  %v11267 = vrcp.pop %v11208
  %v11268 = vmul.f32 1.0, %v11267
  %v11269 = vrcp.pop %v11209
  %v11270 = vmul.f32 1.0, %v11269
  %v11271 = vrcp.pop %v11210
  %v11272 = vmul.f32 1.0, %v11271
  %v11273 = vrcp.pop %v11211
  %v11274 = vmul.f32 1.0, %v11273
  %v11275 = vrcp.pop %v11212
  %v11276 = vmul.f32 1.0, %v11275
  %vm11277 = vcmask 7168
  %11278 = vst.msk [vmem:[%s9] sm:$0xff] %vm11277, %v11214
  %11279 = vst.msk [vmem:[%s9 + $0x8] sm:$0xff] %vm11277, %v11216
  %11280 = vst.msk [vmem:[%s9 + $0x10] sm:$0xff] %vm11277, %v11218
  %11281 = vst.msk [vmem:[%s9 + $0x18] sm:$0xff] %vm11277, %v11220
  %11282 = vst.msk [vmem:[%s9 + $0x20] sm:$0xff] %vm11277, %v11222
  %11283 = vst.msk [vmem:[%s9 + $0x28] sm:$0xff] %vm11277, %v11224
  %11284 = vst.msk [vmem:[%s9 + $0x30] sm:$0xff] %vm11277, %v11226
  %11285 = vst.msk [vmem:[%s9 + $0x38] sm:$0xff] %vm11277, %v11228
  %11286 = vst.msk [vmem:[%s9 + $0x40] sm:$0xff] %vm11277, %v11230
  %11287 = vst.msk [vmem:[%s9 + $0x48] sm:$0xff] %vm11277, %v11232
  %11288 = vst.msk [vmem:[%s9 + $0x50] sm:$0xff] %vm11277, %v11234
  %11289 = vst.msk [vmem:[%s9 + $0x58] sm:$0xff] %vm11277, %v11236
  %11290 = vst.msk [vmem:[%s9 + $0x60] sm:$0xff] %vm11277, %v11238
  %11291 = vst.msk [vmem:[%s9 + $0x68] sm:$0xff] %vm11277, %v11240
  %11292 = vst.msk [vmem:[%s9 + $0x70] sm:$0xff] %vm11277, %v11242
  %11293 = vst.msk [vmem:[%s9 + $0x78] sm:$0xff] %vm11277, %v11244
  %11294 = vst.msk [vmem:[%s9 + $0x80] sm:$0xff] %vm11277, %v11246
  %11295 = vst.msk [vmem:[%s9 + $0x88] sm:$0xff] %vm11277, %v11248
  %11296 = vst.msk [vmem:[%s9 + $0x90] sm:$0xff] %vm11277, %v11250
  %11297 = vst.msk [vmem:[%s9 + $0x98] sm:$0xff] %vm11277, %v11252
  %11298 = vst.msk [vmem:[%s9 + $0xa0] sm:$0xff] %vm11277, %v11254
  %11299 = vst.msk [vmem:[%s9 + $0xa8] sm:$0xff] %vm11277, %v11256
  %11300 = vst.msk [vmem:[%s9 + $0xb0] sm:$0xff] %vm11277, %v11258
  %11301 = vst.msk [vmem:[%s9 + $0xb8] sm:$0xff] %vm11277, %v11260
  %11302 = vst.msk [vmem:[%s9 + $0xc0] sm:$0xff] %vm11277, %v11262
  %11303 = vst.msk [vmem:[%s9 + $0xc8] sm:$0xff] %vm11277, %v11264
  %11304 = vst.msk [vmem:[%s9 + $0xd0] sm:$0xff] %vm11277, %v11266
  %11305 = vst.msk [vmem:[%s9 + $0xd8] sm:$0xff] %vm11277, %v11268
  %11306 = vst.msk [vmem:[%s9 + $0xe0] sm:$0xff] %vm11277, %v11270
  %11307 = vst.msk [vmem:[%s9 + $0xe8] sm:$0xff] %vm11277, %v11272
  %11308 = vst.msk [vmem:[%s9 + $0xf0] sm:$0xff] %vm11277, %v11274
  %11309 = vst.msk [vmem:[%s9 + $0xf8] sm:$0xff] %vm11277, %v11276
  // Predicated region
  $region38: #{discriminator_forward.1} parent=0 // pred_check
    _
  $region39: #{discriminator_forward.1} parent=0 // pred_check_branch
    %11311 = sbr.rel (0) target = $region41
  $region40: #{discriminator_forward.1} parent=0 // pred_region
    _
  $region41: #{discriminator_forward.1} parent=0 // pred_fallthru
    _
  // Predicated region
  $region42: #{discriminator_forward.1} parent=0 // pred_check
    _
  $region43: #{discriminator_forward.1} parent=0 // pred_check_branch
    %11313 = sbr.rel (0) target = $region45
  $region44: #{discriminator_forward.1} parent=0 // pred_region
    _
  $region45: #{discriminator_forward.1} parent=0 // pred_fallthru
    _

</llo_original>
